<compile_context>
chip_gen: v7x
topology: tpu7x:2x2x1
jax: 0.10.0
libtpu: 0.0.40
codegen_flags: <defaults>
</compile_context>

<pallas_src>
import jax
import jax.numpy as jnp
from jax.experimental import pallas as pl
from jax.experimental.pallas import tpu as pltpu

# ------------------------- model hyper-params (scaled-down stand-ins) ----------------------
PATCH = 4            # backbone stand-in downsample factor
C_FEAT = 128         # feature channels (stands in for 2048)
POOL = 7             # ROIAlign output size (same as module)
SR = 2               # ROIAlign sampling_ratio (same as module)
HIDDEN = 256         # classifier hidden (stands in for 1024)
OUT = 128            # classifier output (same as module)
D_PAD = 128          # patch-vector lane dim padded 48 -> 128 (vreg/MXU alignment)
ROW_TILE_CAP = 1024  # kernel A row tile cap (mem-bound: bigger tiles amortize pipeline overhead)


# ============================== Pallas kernels ==============================

def _backbone_attention_kernel(xp_ref, wp_ref, aux_ref, o_ref):
    """Fused backbone projection + AttentionModule (one row-tile per grid step).

    h = relu(xp @ wp + bp)                          (MXU bf16 in / f32 acc)
    a = sigmoid(sum(h * w_att, lanes) + b_att)      (VPU mul + XLU reduce + EUP)
    out = h * a                                     (stored bf16)
    aux rows: 0 = bp, 1 = w_att (1x1 conv weight), 2 = b_att (broadcast across lanes).
    """
    h = jnp.dot(xp_ref[...], wp_ref[...], preferred_element_type=jnp.float32)
    h = jnp.maximum(h + aux_ref[0:1, :], 0.0)
    a = jnp.sum(h * aux_ref[1:2, :], axis=-1, keepdims=True) + aux_ref[2:3, 0:1]
    o_ref[...] = (h * jax.nn.sigmoid(a)).astype(o_ref.dtype)


def _roi_classifier_kernel(s_ref, f0_ref, w1_ref, b1_ref, w2_ref, b2_ref, o_ref):
    """Fused ROIAlign gather + classifier, single grid step (toy sizes fit VMEM easily).

      R   = S_flat @ F0                 one (49*K_pad, HW) x (HW, C) MXU pass (M=49*K_pad)
      acc = sum_p R[p] @ W1r[p]         batched einsum + leading-axis sum (local accumulator,
                                        no VMEM read-modify-write)
      out = relu(acc + b1) @ W2 + b2    Dropout(0.5) is eval-mode identity
    """
    kp = o_ref.shape[0]
    f0 = f0_ref[...].astype(jnp.float32)
    r = jnp.dot(s_ref[...], f0, preferred_element_type=jnp.float32)      # (49*kp, C)
    r3 = r.reshape(POOL * POOL, kp, C_FEAT)                              # free split of leading dim
    part = jnp.einsum('pkc,pch->pkh', r3, w1_ref[...],
                      preferred_element_type=jnp.float32)                # (49, kp, HIDDEN)
    acc = jnp.sum(part, axis=0)                                          # (kp, HIDDEN)
    h = jnp.maximum(acc + b1_ref[...], 0.0)
    # TODO(synk): Dropout(0.5) modeled as eval-mode identity (training parity needs pltpu.prng_*).
    o_ref[...] = jnp.dot(h, w2_ref[...], preferred_element_type=jnp.float32) + b2_ref[...]


# ================= ROIAlign sampling weights (glue, scatter-add, torchvision semantics) =================

def _roi_sampling_tensor(boxes, hf, wf, k_pad):
    """Bilinear sampling weights reproducing torchvision roi_align(aligned=False,
    spatial_scale=1, sampling_ratio=2).  Returns S of shape (POOL*POOL*k_pad, hf*wf)
    with rows ordered (pool_bin, box) -- i.e. already flattened for kernel B's single
    batched MXU pass."""
    boxes = boxes.astype(jnp.float32)
    k = boxes.shape[0]
    x1, y1, x2, y2 = boxes[:, 0], boxes[:, 1], boxes[:, 2], boxes[:, 3]
    roi_w = jnp.maximum(x2 - x1, 1.0)
    roi_h = jnp.maximum(y2 - y1, 1.0)
    bin_w = roi_w / POOL
    bin_h = roi_h / POOL

    ph = jnp.arange(POOL, dtype=jnp.float32).reshape(1, POOL, 1, 1, 1)
    pw = jnp.arange(POOL, dtype=jnp.float32).reshape(1, 1, POOL, 1, 1)
    iy = ((jnp.arange(SR, dtype=jnp.float32) + 0.5) / SR).reshape(1, 1, 1, SR, 1)
    ix = ((jnp.arange(SR, dtype=jnp.float32) + 0.5) / SR).reshape(1, 1, 1, 1, SR)

    y = y1.reshape(-1, 1, 1, 1, 1) + (ph + iy) * bin_h.reshape(-1, 1, 1, 1, 1)
    x = x1.reshape(-1, 1, 1, 1, 1) + (pw + ix) * bin_w.reshape(-1, 1, 1, 1, 1)
    y, x = jnp.broadcast_arrays(y, x)                                   # (K,7,7,2,2)

    valid = (y >= -1.0) & (y <= hf) & (x >= -1.0) & (x <= wf)

    yc = jnp.maximum(y, 0.0)
    xc = jnp.maximum(x, 0.0)
    y_low = jnp.minimum(jnp.floor(yc), hf - 1.0)
    x_low = jnp.minimum(jnp.floor(xc), wf - 1.0)
    y_high = jnp.minimum(y_low + 1.0, hf - 1.0)
    x_high = jnp.minimum(x_low + 1.0, wf - 1.0)
    yc = jnp.minimum(yc, hf - 1.0)
    xc = jnp.minimum(xc, wf - 1.0)

    ly = yc - y_low
    lx = xc - x_low
    hy = 1.0 - ly
    hx = 1.0 - lx
    w_taps = jnp.stack([hy * hx, hy * lx, ly * hx, ly * lx], axis=-1)   # (K,7,7,2,2,4)
    w_taps = w_taps * valid[..., None].astype(jnp.float32) / float(SR * SR)

    idx = jnp.stack(
        [y_low * wf + x_low, y_low * wf + x_high, y_high * wf + x_low, y_high * wf + x_high],
        axis=-1,
    ).astype(jnp.int32)                                                 # (K,7,7,2,2,4)

    pool_idx = (jnp.arange(POOL, dtype=jnp.int32)[:, None] * POOL
                + jnp.arange(POOL, dtype=jnp.int32)[None, :])           # (7,7)
    p_idx = jnp.broadcast_to(pool_idx.reshape(1, POOL, POOL, 1, 1, 1), idx.shape)
    k_idx = jnp.broadcast_to(jnp.arange(k, dtype=jnp.int32).reshape(k, 1, 1, 1, 1, 1), idx.shape)

    s = jnp.zeros((POOL * POOL, k_pad, hf * wf), jnp.float32)
    s = s.at[p_idx.ravel(), k_idx.ravel(), idx.ravel()].add(w_taps.ravel())
    return s.reshape(POOL * POOL * k_pad, hf * wf)                      # rows ordered (p, k)


# ============================== full forward ==============================

def _row_tiling(rows):
    """Row tile + padded row count for kernel A.  Single tile when it fits (min per-step
    overhead on 1-TC chips); otherwise an even number of 8-aligned tiles so v7x's two
    TensorCores split the 'parallel' grid evenly."""
    rows8 = ((rows + 7) // 8) * 8
    if rows8 <= ROW_TILE_CAP:
        return rows8, rows8
    steps = -(-rows8 // ROW_TILE_CAP)
    if steps % 2:
        steps += 1
    tile = ((-(-rows8 // steps)) + 7) // 8 * 8
    return tile, tile * steps


@jax.jit
def key_head_detector_forward(x, boxes, params):
    n, cin, h, w = x.shape
    hf, wf = h // PATCH, w // PATCH
    rows = n * hf * wf
    hw = hf * wf

    # backbone stand-in: NCHW -> patchify -> (rows, Cin*P*P), lane-pad 48 -> D_PAD, bf16 stream
    xp = (
        x.reshape(n, cin, hf, PATCH, wf, PATCH)
        .transpose(0, 2, 4, 1, 3, 5)
        .reshape(rows, cin * PATCH * PATCH)
    )
    d_patch = cin * PATCH * PATCH
    xp = jnp.pad(xp, ((0, 0), (0, D_PAD - d_patch)))

    tile, rows_pad = _row_tiling(rows)
    if rows_pad != rows:
        xp = jnp.pad(xp, ((0, rows_pad - rows), (0, 0)))
    xp = xp.astype(jnp.bfloat16)

    # ---- kernel A: fused backbone projection + attention (HBM-bound, bf16 streamed) -----
    attended = pl.pallas_call(
        _backbone_attention_kernel,
        out_shape=jax.ShapeDtypeStruct((rows_pad, C_FEAT), jnp.bfloat16),
        grid=(rows_pad // tile,),
        in_specs=[
            pl.BlockSpec((tile, D_PAD), lambda i: (i, 0)),
            pl.BlockSpec((D_PAD, C_FEAT), lambda i: (0, 0)),
            pl.BlockSpec((3, C_FEAT), lambda i: (0, 0)),
        ],
        out_specs=pl.BlockSpec((tile, C_FEAT), lambda i: (i, 0)),
        compiler_params=pltpu.CompilerParams(dimension_semantics=("parallel",)),
    )(xp, params["wp"], params["aux"])

    # ---- ROIAlign glue ------------------------------------------------------------------
    # boxes_list = [boxes.float()] -> all boxes belong to image 0.
    # spatial_scale == 1 because the module passes the *feature-map* shape as the image
    # shape to MultiScaleRoIAlign (invariant of the original module; documented here).
    f0 = attended[:hw]                                                  # (HW, C), row = y*wf + x
    k = boxes.shape[0]
    k_pad = max(8, ((k + 7) // 8) * 8)
    s = _roi_sampling_tensor(boxes, hf, wf, k_pad)                      # (49*k_pad, HW) f32

    # ---- kernel B: fused ROI gather + classifier, single grid step -----------------------
    out_pad = pl.pallas_call(
        _roi_classifier_kernel,
        out_shape=jax.ShapeDtypeStruct((k_pad, OUT), jnp.float32),
    )(s, f0, params["w1r"], params["b1"], params["w2"], params["b2"])

    return out_pad[:k]


def init_params(key):
    ks = jax.random.split(key, 8)
    bp = jax.random.normal(ks[1], (1, C_FEAT), jnp.float32) * 0.01
    w_att = jax.random.normal(ks[2], (1, C_FEAT), jnp.float32) * 0.05   # 1x1 conv weight (row)
    b_att = jax.random.normal(ks[3], (1, 1), jnp.float32) * 0.01
    return {
        # only the first Cin*PATCH*PATCH (=48) rows are "real"; the remainder multiply the
        # zero-padded lanes of xp, so lane-padding the backbone matmul is free.
        "wp": (jax.random.normal(ks[0], (D_PAD, C_FEAT), jnp.float32) * 0.05).astype(jnp.bfloat16),
        # packed attention params: row 0 = bp, row 1 = w_att, row 2 = b_att broadcast
        "aux": jnp.concatenate(
            [bp, w_att, jnp.broadcast_to(b_att, (1, C_FEAT))], axis=0
        ),
        # classifier fc1 stored pool-major: w1r[p, c, :] == PyTorch fc1.weight[:, c*49 + p].T,
        # i.e. the channel-major roi-flatten permutation is folded into the layout at init.
        "w1r": jax.random.normal(ks[4], (POOL * POOL, C_FEAT, HIDDEN), jnp.float32) * 0.02,
        "b1": jax.random.normal(ks[5], (1, HIDDEN), jnp.float32) * 0.01,
        "w2": jax.random.normal(ks[6], (HIDDEN, OUT), jnp.float32) * 0.02,
        "b2": jax.random.normal(ks[7], (1, OUT), jnp.float32) * 0.01,
    }


if __name__ == "__main__":
    key = jax.random.PRNGKey(0)
    k_param, k_x = jax.random.split(key)

    params = init_params(k_param)

    # small input consistent with the module: NCHW image, boxes (x1,y1,x2,y2) for image 0
    x = jax.random.normal(k_x, (2, 3, 32, 32), jnp.float32)   # -> feature map (2, C_FEAT, 8, 8)
    boxes = jnp.array(
        [[1.0, 1.0, 6.0, 6.0],
         [0.0, 2.0, 5.5, 7.5],
         [2.5, 0.5, 7.0, 4.0]], dtype=jnp.float32
    )

    out = key_head_detector_forward(x, boxes, params)
    jax.block_until_ready(out)
    assert out.shape == (boxes.shape[0], OUT) and out.dtype == jnp.float32
    print("KERNEL_OK")
</pallas_src>

<mosaic_0001>
module attributes {stable_mosaic.version = 11 : i64} {
  func.func private @main(%arg0: i32) attributes {dimension_semantics = [#tpu.dimension_semantics<core_parallel>], iteration_bounds = array<i64: 2>, tpu.core_type = #tpu.core_type<sc_scalar_subcore>, window_params = []} {
    return
  }
}

module attributes {stable_mosaic.version = 11 : i64} {
  func.func private @main(%arg0: i32) attributes {dimension_semantics = [#tpu.dimension_semantics<core_parallel>], iteration_bounds = array<i64: 2>, tpu.core_type = #tpu.core_type<sc_scalar_subcore>, window_params = []} {
    return
  }
}

module attributes {stable_mosaic.version = 11 : i64} {
  func.func @_backbone_attention_kernel(%arg0: i32, %arg1: memref<128x128xbf16, #tpu.memory_space<vmem>>, %arg2: memref<128x128xbf16, #tpu.memory_space<vmem>>, %arg3: memref<3x128xf32, #tpu.memory_space<vmem>>, %arg4: memref<128x128xbf16, #tpu.memory_space<vmem>>) attributes {dimension_semantics = [#tpu.dimension_semantics<parallel>], iteration_bounds = array<i64: 1>, scalar_prefetch = 0 : i64, scratch_operands = 0 : i64, tpu.core_type = #tpu.core_type<tc>, window_params = [{transform_indices = @transform_0, window_bounds = array<i64: 128, 128>}, {pipeline_mode = #tpu.pipeline_mode<synchronous>, transform_indices = @transform_1, window_bounds = array<i64: 128, 128>}, {pipeline_mode = #tpu.pipeline_mode<synchronous>, transform_indices = @transform_2, window_bounds = array<i64: 3, 128>}, {transform_indices = @transform_3, window_bounds = array<i64: 128, 128>}]} {
    %c0 = arith.constant 0 : index
    %c0_0 = arith.constant 0 : index
    %0 = vector.load %arg1[%c0, %c0_0] : memref<128x128xbf16, #tpu.memory_space<vmem>>, vector<128x128xbf16>
    %c0_1 = arith.constant 0 : index
    %c0_2 = arith.constant 0 : index
    %1 = vector.load %arg2[%c0_1, %c0_2] : memref<128x128xbf16, #tpu.memory_space<vmem>>, vector<128x128xbf16>
    %cst = arith.constant dense<0.000000e+00> : vector<128x128xf32>
    %2 = tpu.matmul %0, %1, %cst {dimension_numbers = #tpu.dot_dimension_numbers<[1], [0], [0], [1], [0, 0, 1, 1], [], []>} : vector<128x128xbf16>, vector<128x128xbf16>, vector<128x128xf32> -> vector<128x128xf32>
    %c0_3 = arith.constant 0 : index
    %c0_4 = arith.constant 0 : index
    %3 = vector.load %arg3[%c0_3, %c0_4] : memref<3x128xf32, #tpu.memory_space<vmem>>, vector<1x128xf32>
    %4 = vector.broadcast %3 : vector<1x128xf32> to vector<128x128xf32>
    %5 = arith.addf %2, %4 : vector<128x128xf32>
    %cst_5 = arith.constant 0.000000e+00 : f32
    %6 = vector.broadcast %cst_5 : f32 to vector<128x128xf32>
    %7 = arith.maximumf %5, %6 : vector<128x128xf32>
    %c1 = arith.constant 1 : index
    %c0_6 = arith.constant 0 : index
    %8 = vector.load %arg3[%c1, %c0_6] : memref<3x128xf32, #tpu.memory_space<vmem>>, vector<1x128xf32>
    %9 = vector.broadcast %8 : vector<1x128xf32> to vector<128x128xf32>
    %10 = arith.mulf %7, %9 : vector<128x128xf32>
    %cst_7 = arith.constant dense<0.000000e+00> : vector<128xf32>
    %11 = vector.multi_reduction <add>, %10, %cst_7 [1] : vector<128x128xf32> to vector<128xf32>
    %12 = vector.shape_cast %11 : vector<128xf32> to vector<128x1xf32>
    %c2 = arith.constant 2 : index
    %c0_8 = arith.constant 0 : index
    %13 = vector.load %arg3[%c2, %c0_8] : memref<3x128xf32, #tpu.memory_space<vmem>>, vector<1x1xf32>
    %14 = vector.broadcast %13 : vector<1x1xf32> to vector<128x1xf32>
    %15 = arith.addf %12, %14 : vector<128x1xf32>
    %16 = arith.negf %15 : vector<128x1xf32>
    %17 = math.exp %16 : vector<128x1xf32>
    %cst_9 = arith.constant 1.000000e+00 : f32
    %18 = vector.broadcast %cst_9 : f32 to vector<128x1xf32>
    %19 = arith.addf %18, %17 : vector<128x1xf32>
    %20 = arith.divf %18, %19 : vector<128x1xf32>
    %21 = vector.broadcast %20 : vector<128x1xf32> to vector<128x128xf32>
    %22 = arith.mulf %7, %21 : vector<128x128xf32>
    %23 = arith.truncf %22 : vector<128x128xf32> to vector<128x128xbf16>
    %c0_10 = arith.constant 0 : index
    %c0_11 = arith.constant 0 : index
    %24 = vector.load %arg4[%c0_10, %c0_11] : memref<128x128xbf16, #tpu.memory_space<vmem>>, vector<128x128xbf16>
    tpu.vector_store %arg4[%c0_10, %c0_11], %23 {strides = array<i32>} : memref<128x128xbf16, #tpu.memory_space<vmem>>, vector<128x128xbf16>,
    return
  }
  func.func @transform_0(%arg0: i32) -> (i32, i32) {
    %c0_i32 = arith.constant 0 : i32
    %c0_i32_0 = arith.constant 0 : i32
    return %arg0, %c0_i32 : i32, i32
  }
  func.func @transform_1(%arg0: i32) -> (i32, i32) {
    %c0_i32 = arith.constant 0 : i32
    %c0_i32_0 = arith.constant 0 : i32
    %c0_i32_1 = arith.constant 0 : i32
    return %c0_i32, %c0_i32_0 : i32, i32
  }
  func.func @transform_2(%arg0: i32) -> (i32, i32) {
    %c0_i32 = arith.constant 0 : i32
    %c0_i32_0 = arith.constant 0 : i32
    %c0_i32_1 = arith.constant 0 : i32
    return %c0_i32, %c0_i32_0 : i32, i32
  }
  func.func @transform_3(%arg0: i32) -> (i32, i32) {
    %c0_i32 = arith.constant 0 : i32
    %c0_i32_0 = arith.constant 0 : i32
    return %arg0, %c0_i32 : i32, i32
  }
}

module attributes {stable_mosaic.version = 11 : i64} {
  func.func @_roi_classifier_kernel(%arg0: memref<392x64xf32, #tpu.memory_space<vmem>>, %arg1: memref<64x128xbf16, #tpu.memory_space<vmem>>, %arg2: memref<49x128x256xf32, #tpu.memory_space<vmem>>, %arg3: memref<1x256xf32, #tpu.memory_space<vmem>>, %arg4: memref<256x128xf32, #tpu.memory_space<vmem>>, %arg5: memref<1x128xf32, #tpu.memory_space<vmem>>, %arg6: memref<8x128xf32, #tpu.memory_space<vmem>>) attributes {dimension_semantics = [], scalar_prefetch = 0 : i64, scratch_operands = 0 : i64, tpu.core_type = #tpu.core_type<tc>} {
    %c0 = arith.constant 0 : index
    %c0_0 = arith.constant 0 : index
    %0 = vector.load %arg1[%c0, %c0_0] : memref<64x128xbf16, #tpu.memory_space<vmem>>, vector<64x128xbf16>
    %1 = arith.extf %0 : vector<64x128xbf16> to vector<64x128xf32>
    %c0_1 = arith.constant 0 : index
    %c0_2 = arith.constant 0 : index
    %2 = vector.load %arg0[%c0_1, %c0_2] : memref<392x64xf32, #tpu.memory_space<vmem>>, vector<392x64xf32>
    %cst = arith.constant dense<0.000000e+00> : vector<392x128xf32>
    %3 = tpu.matmul %2, %1, %cst {dimension_numbers = #tpu.dot_dimension_numbers<[1], [0], [0], [1], [0, 0, 1, 1], [], []>} : vector<392x64xf32>, vector<64x128xf32>, vector<392x128xf32> -> vector<392x128xf32>
    %4 = vector.shape_cast %3 : vector<392x128xf32> to vector<49x8x128xf32>
    %c0_3 = arith.constant 0 : index
    %c0_4 = arith.constant 0 : index
    %c0_5 = arith.constant 0 : index
    %5 = vector.load %arg2[%c0_3, %c0_4, %c0_5] : memref<49x128x256xf32, #tpu.memory_space<vmem>>, vector<49x128x256xf32>
    "tpu.trace_start"() <{level = 10 : i32, message = "pkc,pch->pkh"}> : () -> ()
    %cst_6 = arith.constant dense<0.000000e+00> : vector<49x8x256xf32>
    %6 = tpu.matmul %4, %5, %cst_6 {dimension_numbers = #tpu.dot_dimension_numbers<[2], [1], [1], [2], [0, 0, 0, 1, 1, 2], [0], [0]>} : vector<49x8x128xf32>, vector<49x128x256xf32>, vector<49x8x256xf32> -> vector<49x8x256xf32>
    "tpu.trace_stop"() : () -> ()
    %cst_7 = arith.constant dense<0.000000e+00> : vector<8x256xf32>
    %7 = vector.multi_reduction <add>, %6, %cst_7 [0] : vector<49x8x256xf32> to vector<8x256xf32>
    %c0_8 = arith.constant 0 : index
    %c0_9 = arith.constant 0 : index
    %8 = vector.load %arg3[%c0_8, %c0_9] : memref<1x256xf32, #tpu.memory_space<vmem>>, vector<1x256xf32>
    %9 = vector.broadcast %8 : vector<1x256xf32> to vector<8x256xf32>
    %10 = arith.addf %7, %9 : vector<8x256xf32>
    %cst_10 = arith.constant 0.000000e+00 : f32
    %11 = vector.broadcast %cst_10 : f32 to vector<8x256xf32>
    %12 = arith.maximumf %10, %11 : vector<8x256xf32>
    %c0_11 = arith.constant 0 : index
    %c0_12 = arith.constant 0 : index
    %13 = vector.load %arg4[%c0_11, %c0_12] : memref<256x128xf32, #tpu.memory_space<vmem>>, vector<256x128xf32>
    %cst_13 = arith.constant dense<0.000000e+00> : vector<8x128xf32>
    %14 = tpu.matmul %12, %13, %cst_13 {dimension_numbers = #tpu.dot_dimension_numbers<[1], [0], [0], [1], [0, 0, 1, 1], [], []>} : vector<8x256xf32>, vector<256x128xf32>, vector<8x128xf32> -> vector<8x128xf32>
    %c0_14 = arith.constant 0 : index
    %c0_15 = arith.constant 0 : index
    %15 = vector.load %arg5[%c0_14, %c0_15] : memref<1x128xf32, #tpu.memory_space<vmem>>, vector<1x128xf32>
    %16 = vector.broadcast %15 : vector<1x128xf32> to vector<8x128xf32>
    %17 = arith.addf %14, %16 : vector<8x128xf32>
    %c0_16 = arith.constant 0 : index
    %c0_17 = arith.constant 0 : index
    %18 = vector.load %arg6[%c0_16, %c0_17] : memref<8x128xf32, #tpu.memory_space<vmem>>, vector<8x128xf32>
    tpu.vector_store %arg6[%c0_16, %c0_17], %17 {strides = array<i32>} : memref<8x128xf32, #tpu.memory_space<vmem>>, vector<8x128xf32>,
    return
  }
}

</mosaic_0001>

<llo_original>
// kernel: key_head_detector_forward.2
$region0: #{key_head_detector_forward.2}
  #allocation0 [shape = 'u32[]', space=smem, size = 0x4, offset = 0x4, fixed_abs, tag = 'smem constant byte address 0x4 - core index']
  #allocation1 [shape = 'u32[144,128]{1,0:T(1,128)}', space=vmem, size = 0x12000, scoped, tag = 'internal scratch']
  %s0 = inlined_call_operand.vmem [shape: bf16[128,128], index: 0, kind: input, shape index: {}]
  %s1 = inlined_call_operand.vmem [shape: bf16[128,128], index: 1, kind: input, shape index: {}]
  %s2 = inlined_call_operand.vmem [shape: f32[3,128], index: 2, kind: input, shape index: {}]
  %s3 = inlined_call_operand.vmem [shape: bf16[128,128], index: 3, kind: output, shape index: {}]
  %s4 = sld [smem:[#allocation0]]
  $region22: #{key_head_detector_forward.2} parent=0
    _
  %s6 = ssub.s32 1, %s4
  %s7 = scalar_select 0, %s6, %s4
  // Predicated region
  $region2: #{key_head_detector_forward.2} parent=0 // pred_check
    _
  $region3: #{key_head_detector_forward.2} parent=0 // pred_check_branch
    %9 = sbr.rel (0) target = $region5
  $region4: #{key_head_detector_forward.2} parent=0 // pred_region
    _
  $region5: #{key_head_detector_forward.2} parent=0 // pred_fallthru
    _
  // Predicated region
  $region6: #{key_head_detector_forward.2} parent=0 // pred_check
    _
  $region7: #{key_head_detector_forward.2} parent=0 // pred_check_branch
    %11 = sbr.rel (0) target = $region9
  $region8: #{key_head_detector_forward.2} parent=0 // pred_region
    _
  $region9: #{key_head_detector_forward.2} parent=0 // pred_fallthru
    _
  // Predicated region
  $region10: #{key_head_detector_forward.2} parent=0 // pred_check
    _
  $region11: #{key_head_detector_forward.2} parent=0 // pred_check_branch
    %13 = sbr.rel (0) target = $region13
  $region12: #{key_head_detector_forward.2} parent=0 // pred_region
    _
  $region13: #{key_head_detector_forward.2} parent=0 // pred_fallthru
    _
  %v15 = vld [vmem:[%s0] sm:$0xf]
  %v16 = vld [vmem:[%s0 + $0x4] sm:$0xf]
  %v17 = vld [vmem:[%s0 + $0x8] sm:$0xf]
  %v18 = vld [vmem:[%s0 + $0xc] sm:$0xf]
  %v19 = vld [vmem:[%s0 + $0x10] sm:$0xf]
  %v20 = vld [vmem:[%s0 + $0x14] sm:$0xf]
  %v21 = vld [vmem:[%s0 + $0x18] sm:$0xf]
  %v22 = vld [vmem:[%s0 + $0x1c] sm:$0xf]
  %v23 = vld [vmem:[%s0 + $0x20] sm:$0xf]
  %v24 = vld [vmem:[%s0 + $0x24] sm:$0xf]
  %v25 = vld [vmem:[%s0 + $0x28] sm:$0xf]
  %v26 = vld [vmem:[%s0 + $0x2c] sm:$0xf]
  %v27 = vld [vmem:[%s0 + $0x30] sm:$0xf]
  %v28 = vld [vmem:[%s0 + $0x34] sm:$0xf]
  %v29 = vld [vmem:[%s0 + $0x38] sm:$0xf]
  %v30 = vld [vmem:[%s0 + $0x3c] sm:$0xf]
  %v31 = vld [vmem:[%s1] sm:$0xf]
  %v32 = vld [vmem:[%s1 + $0x4] sm:$0xf]
  %v33 = vld [vmem:[%s1 + $0x8] sm:$0xf]
  %v34 = vld [vmem:[%s1 + $0xc] sm:$0xf]
  %v35 = vld [vmem:[%s1 + $0x10] sm:$0xf]
  %v36 = vld [vmem:[%s1 + $0x14] sm:$0xf]
  %v37 = vld [vmem:[%s1 + $0x18] sm:$0xf]
  %v38 = vld [vmem:[%s1 + $0x1c] sm:$0xf]
  %v39 = vld [vmem:[%s1 + $0x20] sm:$0xf]
  %v40 = vld [vmem:[%s1 + $0x24] sm:$0xf]
  %v41 = vld [vmem:[%s1 + $0x28] sm:$0xf]
  %v42 = vld [vmem:[%s1 + $0x2c] sm:$0xf]
  %v43 = vld [vmem:[%s1 + $0x30] sm:$0xf]
  %v44 = vld [vmem:[%s1 + $0x34] sm:$0xf]
  %v45 = vld [vmem:[%s1 + $0x38] sm:$0xf]
  %v46 = vld [vmem:[%s1 + $0x3c] sm:$0xf]
  %v47 = vld [vmem:[%s2] sm:$0x1]
  %v48 = vlaneseq
  %v49 = vshrl.u32 %v48, 7
  %v50 = vsub.s32 0, %v49
  %v51 = vrot.slane %v47, %v50
  %v68 = vunpack.c.l.b16 %v15
  %v69 = vunpack.c.l.b16 %v16
  %v70 = vunpack.c.l.b16 %v17
  %v71 = vunpack.c.l.b16 %v18
  %v72 = vunpack.c.l.b16 %v19
  %v73 = vunpack.c.l.b16 %v20
  %v74 = vunpack.c.l.b16 %v21
  %v75 = vunpack.c.l.b16 %v22
  %v76 = vunpack.c.l.b16 %v23
  %v77 = vunpack.c.l.b16 %v24
  %v78 = vunpack.c.l.b16 %v25
  %v79 = vunpack.c.l.b16 %v26
  %v80 = vunpack.c.l.b16 %v27
  %v81 = vunpack.c.l.b16 %v28
  %v82 = vunpack.c.l.b16 %v29
  %v83 = vunpack.c.l.b16 %v30
  %v84 = vpack.c.b16 %v69, %v68
  %v85 = vpack.c.b16 %v71, %v70
  %v86 = vpack.c.b16 %v73, %v72
  %v87 = vpack.c.b16 %v75, %v74
  %v88 = vpack.c.b16 %v77, %v76
  %v89 = vpack.c.b16 %v79, %v78
  %v90 = vpack.c.b16 %v81, %v80
  %v91 = vpack.c.b16 %v83, %v82
  %v116 = vunpack.c.l.b16 %v31
  %v117 = vunpack.c.l.b16 %v32
  %v118 = vunpack.c.l.b16 %v33
  %v119 = vunpack.c.l.b16 %v34
  %v120 = vunpack.c.l.b16 %v35
  %v121 = vunpack.c.l.b16 %v36
  %v122 = vunpack.c.l.b16 %v37
  %v123 = vunpack.c.l.b16 %v38
  %v124 = vunpack.c.l.b16 %v39
  %v125 = vunpack.c.l.b16 %v40
  %v126 = vunpack.c.l.b16 %v41
  %v127 = vunpack.c.l.b16 %v42
  %v128 = vunpack.c.l.b16 %v43
  %v129 = vunpack.c.l.b16 %v44
  %v130 = vunpack.c.l.b16 %v45
  %v131 = vunpack.c.l.b16 %v46
  %v132 = vpack.c.b16 %v117, %v116
  %v133 = vpack.c.b16 %v119, %v118
  %v134 = vpack.c.b16 %v121, %v120
  %v135 = vpack.c.b16 %v123, %v122
  %v136 = vpack.c.b16 %v125, %v124
  %v137 = vpack.c.b16 %v127, %v126
  %v138 = vpack.c.b16 %v129, %v128
  %v139 = vpack.c.b16 %v131, %v130
  %148 = vmatprep.subr.bf16.mxu0 0
  %149 = vmatpush1.bf16.msra.mxu0 %v132
  %150 = vmatprep.subr.bf16.mxu0 0
  %151 = vmatpush1.bf16.msra.mxu0 %v133
  %152 = vmatprep.subr.bf16.mxu0 0
  %153 = vmatpush1.bf16.msra.mxu0 %v134
  %154 = vmatprep.subr.bf16.mxu0 0
  %155 = vmatpush1.bf16.msra.mxu0 %v135
  %156 = vmatprep.subr.bf16.mxu0 0
  %157 = vmatpush1.bf16.msra.mxu0 %v136
  %158 = vmatprep.subr.bf16.mxu0 0
  %159 = vmatpush1.bf16.msra.mxu0 %v137
  %160 = vmatprep.subr.bf16.mxu0 0
  %161 = vmatpush1.bf16.msra.mxu0 %v138
  %162 = vmatprep.subr.bf16.mxu0 0
  %163 = vmatpush1.bf16.msra.mxu0 %v139
  %164 = vmatprep.subr.bf16.mxu0 0
  %165 = vmatpush1.bf16.msra.mxu0 0
  %166 = vmatprep.subr.bf16.mxu0 0
  %167 = vmatpush1.bf16.msra.mxu0 0
  %168 = vmatprep.subr.bf16.mxu0 0
  %169 = vmatpush1.bf16.msra.mxu0 0
  %170 = vmatprep.subr.bf16.mxu0 0
  %171 = vmatpush1.bf16.msra.mxu0 0
  %172 = vmatprep.subr.bf16.mxu0 0
  %173 = vmatpush1.bf16.msra.mxu0 0
  %174 = vmatprep.subr.bf16.mxu0 0
  %175 = vmatpush1.bf16.msra.mxu0 0
  %176 = vmatprep.subr.bf16.mxu0 0
  %177 = vmatpush1.bf16.msra.mxu0 0
  %178 = vmatprep.subr.bf16.mxu0 0
  %179 = vmatpush1.bf16.msra.mxu0 0
  %180 = vmatprep.mubr.bf16.mxu0 0
  %181 = vmatmul.mubr.bf16.gmra.mrb[0].mxu0 %v84
  %v182 = vpop.f32.mrb[0].mxu0
  %v183 = vadd.f32 %v51, %v182
  %v184 = vpop.f32.mrb[0].mxu0
  %v185 = vpop.f32.mrb[0].mxu0
  %v186 = vadd.f32 %v51, %v185
  %v187 = vpop.f32.mrb[0].mxu0
  %188 = vmatprep.mubr.bf16.mxu0 0
  %189 = vmatmul.mubr.bf16.gmra.mrb[0].mxu0 %v85
  %v190 = vpop.f32.mrb[0].mxu0
  %v191 = vadd.f32 %v51, %v190
  %v192 = vpop.f32.mrb[0].mxu0
  %v193 = vpop.f32.mrb[0].mxu0
  %v194 = vadd.f32 %v51, %v193
  %v195 = vpop.f32.mrb[0].mxu0
  %196 = vmatprep.mubr.bf16.mxu0 0
  %197 = vmatmul.mubr.bf16.gmra.mrb[0].mxu0 %v86
  %v198 = vpop.f32.mrb[0].mxu0
  %v199 = vadd.f32 %v51, %v198
  %v200 = vpop.f32.mrb[0].mxu0
  %v201 = vpop.f32.mrb[0].mxu0
  %v202 = vadd.f32 %v51, %v201
  %v203 = vpop.f32.mrb[0].mxu0
  %204 = vmatprep.mubr.bf16.mxu0 0
  %205 = vmatmul.mubr.bf16.gmra.mrb[0].mxu0 %v87
  %v206 = vpop.f32.mrb[0].mxu0
  %v207 = vadd.f32 %v51, %v206
  %v208 = vpop.f32.mrb[0].mxu0
  %v209 = vpop.f32.mrb[0].mxu0
  %v210 = vadd.f32 %v51, %v209
  %v211 = vpop.f32.mrb[0].mxu0
  %212 = vmatprep.mubr.bf16.mxu0 0
  %213 = vmatmul.mubr.bf16.gmra.mrb[0].mxu0 %v88
  %v214 = vpop.f32.mrb[0].mxu0
  %v215 = vadd.f32 %v51, %v214
  %v216 = vpop.f32.mrb[0].mxu0
  %v217 = vpop.f32.mrb[0].mxu0
  %v218 = vadd.f32 %v51, %v217
  %v219 = vpop.f32.mrb[0].mxu0
  %220 = vmatprep.mubr.bf16.mxu0 0
  %221 = vmatmul.mubr.bf16.gmra.mrb[0].mxu0 %v89
  %v222 = vpop.f32.mrb[0].mxu0
  %v223 = vadd.f32 %v51, %v222
  %v224 = vpop.f32.mrb[0].mxu0
  %v225 = vpop.f32.mrb[0].mxu0
  %v226 = vadd.f32 %v51, %v225
  %v227 = vpop.f32.mrb[0].mxu0
  %228 = vmatprep.mubr.bf16.mxu0 0
  %229 = vmatmul.mubr.bf16.gmra.mrb[0].mxu0 %v90
  %v230 = vpop.f32.mrb[0].mxu0
  %v231 = vadd.f32 %v51, %v230
  %v232 = vpop.f32.mrb[0].mxu0
  %v233 = vpop.f32.mrb[0].mxu0
  %v234 = vadd.f32 %v51, %v233
  %v235 = vpop.f32.mrb[0].mxu0
  %236 = vmatprep.mubr.bf16.mxu0 0
  %237 = vmatmul.mubr.bf16.gmra.mrb[0].mxu0 %v91
  %v238 = vpop.f32.mrb[0].mxu0
  %v239 = vadd.f32 %v51, %v238
  %v240 = vpop.f32.mrb[0].mxu0
  %v241 = vpop.f32.mrb[0].mxu0
  %v242 = vadd.f32 %v51, %v241
  %v243 = vpop.f32.mrb[0].mxu0
  %244 = vdwg.mxu0
  %v245 = vmax.f32 %v183, 0.0
  %v246 = vmax.f32 %v186, 0.0
  %v247 = vmax.f32 %v191, 0.0
  %v248 = vmax.f32 %v194, 0.0
  %v249 = vmax.f32 %v199, 0.0
  %v250 = vmax.f32 %v202, 0.0
  %v251 = vmax.f32 %v207, 0.0
  %v252 = vmax.f32 %v210, 0.0
  %v253 = vmax.f32 %v215, 0.0
  %v254 = vmax.f32 %v218, 0.0
  %v255 = vmax.f32 %v223, 0.0
  %v256 = vmax.f32 %v226, 0.0
  %v257 = vmax.f32 %v231, 0.0
  %v258 = vmax.f32 %v234, 0.0
  %v259 = vmax.f32 %v239, 0.0
  %v260 = vmax.f32 %v242, 0.0
  %v261 = vld [vmem:[%s2 + $0x1] sm:$0x1]
  %v262 = vlaneseq
  %v263 = vshrl.u32 %v262, 7
  %v264 = vsub.s32 0, %v263
  %v265 = vrot.slane %v261, %v264
  %v266 = vmul.f32 %v245, %v265
  %v267 = vmul.f32 %v246, %v265
  %v268 = vmul.f32 %v247, %v265
  %v269 = vmul.f32 %v248, %v265
  %v270 = vmul.f32 %v249, %v265
  %v271 = vmul.f32 %v250, %v265
  %v272 = vmul.f32 %v251, %v265
  %v273 = vmul.f32 %v252, %v265
  %v274 = vmul.f32 %v253, %v265
  %v275 = vmul.f32 %v254, %v265
  %v276 = vmul.f32 %v255, %v265
  %v277 = vmul.f32 %v256, %v265
  %v278 = vmul.f32 %v257, %v265
  %v279 = vmul.f32 %v258, %v265
  %v280 = vmul.f32 %v259, %v265
  %v281 = vmul.f32 %v260, %v265
  %282 = vadd.xlane.f32.xlu0 %v266
  %v283 = vpop.xlane.xlu0 %282
  %284 = vadd.xlane.f32.xlu0 %v267
  %v285 = vpop.xlane.xlu0 %284
  %286 = vadd.xlane.f32.xlu0 %v268
  %v287 = vpop.xlane.xlu0 %286
  %288 = vadd.xlane.f32.xlu0 %v269
  %v289 = vpop.xlane.xlu0 %288
  %290 = vadd.xlane.f32.xlu0 %v270
  %v291 = vpop.xlane.xlu0 %290
  %292 = vadd.xlane.f32.xlu0 %v271
  %v293 = vpop.xlane.xlu0 %292
  %294 = vadd.xlane.f32.xlu0 %v272
  %v295 = vpop.xlane.xlu0 %294
  %296 = vadd.xlane.f32.xlu0 %v273
  %v297 = vpop.xlane.xlu0 %296
  %298 = vadd.xlane.f32.xlu0 %v274
  %v299 = vpop.xlane.xlu0 %298
  %300 = vadd.xlane.f32.xlu0 %v275
  %v301 = vpop.xlane.xlu0 %300
  %302 = vadd.xlane.f32.xlu0 %v276
  %v303 = vpop.xlane.xlu0 %302
  %304 = vadd.xlane.f32.xlu0 %v277
  %v305 = vpop.xlane.xlu0 %304
  %306 = vadd.xlane.f32.xlu0 %v278
  %v307 = vpop.xlane.xlu0 %306
  %308 = vadd.xlane.f32.xlu0 %v279
  %v309 = vpop.xlane.xlu0 %308
  %310 = vadd.xlane.f32.xlu0 %v280
  %v311 = vpop.xlane.xlu0 %310
  %312 = vadd.xlane.f32.xlu0 %v281
  %v313 = vpop.xlane.xlu0 %312
  %v314 = vld [vmem:[%s2 + $0x2] sm:$0x1]
  %v315 = vlaneseq
  %v316 = vshrl.u32 %v315, 7
  %v317 = vsub.s32 0, %v316
  %v318 = vrot.slane %v314, %v317
  %v319 = vadd.f32 %v283, %v318
  %v320 = vadd.f32 %v285, %v318
  %v321 = vadd.f32 %v287, %v318
  %v322 = vadd.f32 %v289, %v318
  %v323 = vadd.f32 %v291, %v318
  %v324 = vadd.f32 %v293, %v318
  %v325 = vadd.f32 %v295, %v318
  %v326 = vadd.f32 %v297, %v318
  %v327 = vadd.f32 %v299, %v318
  %v328 = vadd.f32 %v301, %v318
  %v329 = vadd.f32 %v303, %v318
  %v330 = vadd.f32 %v305, %v318
  %v331 = vadd.f32 %v307, %v318
  %v332 = vadd.f32 %v309, %v318
  %v333 = vadd.f32 %v311, %v318
  %v334 = vadd.f32 %v313, %v318
  %v335 = vxor.u32 %v319, 2147483648
  %v336 = vxor.u32 %v320, 2147483648
  %v337 = vxor.u32 %v321, 2147483648
  %v338 = vxor.u32 %v322, 2147483648
  %v339 = vxor.u32 %v323, 2147483648
  %v340 = vxor.u32 %v324, 2147483648
  %v341 = vxor.u32 %v325, 2147483648
  %v342 = vxor.u32 %v326, 2147483648
  %v343 = vxor.u32 %v327, 2147483648
  %v344 = vxor.u32 %v328, 2147483648
  %v345 = vxor.u32 %v329, 2147483648
  %v346 = vxor.u32 %v330, 2147483648
  %v347 = vxor.u32 %v331, 2147483648
  %v348 = vxor.u32 %v332, 2147483648
  %v349 = vxor.u32 %v333, 2147483648
  %v350 = vxor.u32 %v334, 2147483648
  %v351 = vmul.f32 %v335, 1.442695
  %v352 = vpow.pop %v351
  %v353 = vmul.f32 %v336, 1.442695
  %v354 = vpow.pop %v353
  %v355 = vmul.f32 %v337, 1.442695
  %v356 = vpow.pop %v355
  %v357 = vmul.f32 %v338, 1.442695
  %v358 = vpow.pop %v357
  %v359 = vmul.f32 %v339, 1.442695
  %v360 = vpow.pop %v359
  %v361 = vmul.f32 %v340, 1.442695
  %v362 = vpow.pop %v361
  %v363 = vmul.f32 %v341, 1.442695
  %v364 = vpow.pop %v363
  %v365 = vmul.f32 %v342, 1.442695
  %v366 = vpow.pop %v365
  %v367 = vmul.f32 %v343, 1.442695
  %v368 = vpow.pop %v367
  %v369 = vmul.f32 %v344, 1.442695
  %v370 = vpow.pop %v369
  %v371 = vmul.f32 %v345, 1.442695
  %v372 = vpow.pop %v371
  %v373 = vmul.f32 %v346, 1.442695
  %v374 = vpow.pop %v373
  %v375 = vmul.f32 %v347, 1.442695
  %v376 = vpow.pop %v375
  %v377 = vmul.f32 %v348, 1.442695
  %v378 = vpow.pop %v377
  %v379 = vmul.f32 %v349, 1.442695
  %v380 = vpow.pop %v379
  %v381 = vmul.f32 %v350, 1.442695
  %v382 = vpow.pop %v381
  %v383 = vadd.f32 %v352, 1.0
  %v384 = vadd.f32 %v354, 1.0
  %v385 = vadd.f32 %v356, 1.0
  %v386 = vadd.f32 %v358, 1.0
  %v387 = vadd.f32 %v360, 1.0
  %v388 = vadd.f32 %v362, 1.0
  %v389 = vadd.f32 %v364, 1.0
  %v390 = vadd.f32 %v366, 1.0
  %v391 = vadd.f32 %v368, 1.0
  %v392 = vadd.f32 %v370, 1.0
  %v393 = vadd.f32 %v372, 1.0
  %v394 = vadd.f32 %v374, 1.0
  %v395 = vadd.f32 %v376, 1.0
  %v396 = vadd.f32 %v378, 1.0
  %v397 = vadd.f32 %v380, 1.0
  %v398 = vadd.f32 %v382, 1.0
  %v399 = vrcp.pop %v383
  %v400 = vmul.f32 1.0, %v399
  %v401 = vrcp.pop %v384
  %v402 = vmul.f32 1.0, %v401
  %v403 = vrcp.pop %v385
  %v404 = vmul.f32 1.0, %v403
  %v405 = vrcp.pop %v386
  %v406 = vmul.f32 1.0, %v405
  %v407 = vrcp.pop %v387
  %v408 = vmul.f32 1.0, %v407
  %v409 = vrcp.pop %v388
  %v410 = vmul.f32 1.0, %v409
  %v411 = vrcp.pop %v389
  %v412 = vmul.f32 1.0, %v411
  %v413 = vrcp.pop %v390
  %v414 = vmul.f32 1.0, %v413
  %v415 = vrcp.pop %v391
  %v416 = vmul.f32 1.0, %v415
  %v417 = vrcp.pop %v392
  %v418 = vmul.f32 1.0, %v417
  %v419 = vrcp.pop %v393
  %v420 = vmul.f32 1.0, %v419
  %v421 = vrcp.pop %v394
  %v422 = vmul.f32 1.0, %v421
  %v423 = vrcp.pop %v395
  %v424 = vmul.f32 1.0, %v423
  %v425 = vrcp.pop %v396
  %v426 = vmul.f32 1.0, %v425
  %v427 = vrcp.pop %v397
  %v428 = vmul.f32 1.0, %v427
  %v429 = vrcp.pop %v398
  %v430 = vmul.f32 1.0, %v429
  %432 = vset.pattern.permute.xlu0 0
  %433 = vperm.xlu0 %432, %v400
  %v434 = vpop.permute.xlu0 %433
  %437 = vset.pattern.permute.xlu0 0
  %438 = vperm.xlu0 %437, %v402
  %v439 = vpop.permute.xlu0 %438
  %442 = vset.pattern.permute.xlu0 0
  %443 = vperm.xlu0 %442, %v404
  %v444 = vpop.permute.xlu0 %443
  %447 = vset.pattern.permute.xlu0 0
  %448 = vperm.xlu0 %447, %v406
  %v449 = vpop.permute.xlu0 %448
  %452 = vset.pattern.permute.xlu0 0
  %453 = vperm.xlu0 %452, %v408
  %v454 = vpop.permute.xlu0 %453
  %457 = vset.pattern.permute.xlu0 0
  %458 = vperm.xlu0 %457, %v410
  %v459 = vpop.permute.xlu0 %458
  %462 = vset.pattern.permute.xlu0 0
  %463 = vperm.xlu0 %462, %v412
  %v464 = vpop.permute.xlu0 %463
  %467 = vset.pattern.permute.xlu0 0
  %468 = vperm.xlu0 %467, %v414
  %v469 = vpop.permute.xlu0 %468
  %472 = vset.pattern.permute.xlu0 0
  %473 = vperm.xlu0 %472, %v416
  %v474 = vpop.permute.xlu0 %473
  %477 = vset.pattern.permute.xlu0 0
  %478 = vperm.xlu0 %477, %v418
  %v479 = vpop.permute.xlu0 %478
  %482 = vset.pattern.permute.xlu0 0
  %483 = vperm.xlu0 %482, %v420
  %v484 = vpop.permute.xlu0 %483
  %487 = vset.pattern.permute.xlu0 0
  %488 = vperm.xlu0 %487, %v422
  %v489 = vpop.permute.xlu0 %488
  %492 = vset.pattern.permute.xlu0 0
  %493 = vperm.xlu0 %492, %v424
  %v494 = vpop.permute.xlu0 %493
  %497 = vset.pattern.permute.xlu0 0
  %498 = vperm.xlu0 %497, %v426
  %v499 = vpop.permute.xlu0 %498
  %502 = vset.pattern.permute.xlu0 0
  %503 = vperm.xlu0 %502, %v428
  %v504 = vpop.permute.xlu0 %503
  %507 = vset.pattern.permute.xlu0 0
  %508 = vperm.xlu0 %507, %v430
  %v509 = vpop.permute.xlu0 %508
  %v511 = vmul.f32 %v245, %v434
  %v512 = vmul.f32 %v246, %v439
  %v513 = vmul.f32 %v247, %v444
  %v514 = vmul.f32 %v248, %v449
  %v515 = vmul.f32 %v249, %v454
  %v516 = vmul.f32 %v250, %v459
  %v517 = vmul.f32 %v251, %v464
  %v518 = vmul.f32 %v252, %v469
  %v519 = vmul.f32 %v253, %v474
  %v520 = vmul.f32 %v254, %v479
  %v521 = vmul.f32 %v255, %v484
  %v522 = vmul.f32 %v256, %v489
  %v523 = vmul.f32 %v257, %v494
  %v524 = vmul.f32 %v258, %v499
  %v525 = vmul.f32 %v259, %v504
  %v526 = vmul.f32 %v260, %v509
  %v527 = vpack.c.bf16 %v512, %v511
  %v528 = vpack.c.bf16 %v514, %v513
  %v529 = vpack.c.bf16 %v516, %v515
  %v530 = vpack.c.bf16 %v518, %v517
  %v531 = vpack.c.bf16 %v520, %v519
  %v532 = vpack.c.bf16 %v522, %v521
  %v533 = vpack.c.bf16 %v524, %v523
  %v534 = vpack.c.bf16 %v526, %v525
  %v543 = vunpack.c.l.b16 %v527
  %v544 = vunpack.c.h.b16 %v527
  %v545 = vunpack.c.l.b16 %v528
  %v546 = vunpack.c.h.b16 %v528
  %v547 = vunpack.c.l.b16 %v529
  %v548 = vunpack.c.h.b16 %v529
  %v549 = vunpack.c.l.b16 %v530
  %v550 = vunpack.c.h.b16 %v530
  %v551 = vunpack.c.l.b16 %v531
  %v552 = vunpack.c.h.b16 %v531
  %v553 = vunpack.c.l.b16 %v532
  %v554 = vunpack.c.h.b16 %v532
  %v555 = vunpack.c.l.b16 %v533
  %v556 = vunpack.c.h.b16 %v533
  %v557 = vunpack.c.l.b16 %v534
  %v558 = vunpack.c.h.b16 %v534
  %v559 = vpack.c.b16 %v543, %v543
  %v560 = vpack.c.b16 %v544, %v544
  %v561 = vpack.c.b16 %v545, %v545
  %v562 = vpack.c.b16 %v546, %v546
  %v563 = vpack.c.b16 %v547, %v547
  %v564 = vpack.c.b16 %v548, %v548
  %v565 = vpack.c.b16 %v549, %v549
  %v566 = vpack.c.b16 %v550, %v550
  %v567 = vpack.c.b16 %v551, %v551
  %v568 = vpack.c.b16 %v552, %v552
  %v569 = vpack.c.b16 %v553, %v553
  %v570 = vpack.c.b16 %v554, %v554
  %v571 = vpack.c.b16 %v555, %v555
  %v572 = vpack.c.b16 %v556, %v556
  %v573 = vpack.c.b16 %v557, %v557
  %v574 = vpack.c.b16 %v558, %v558
  %591 = vst [vmem:[%s3] sm:$0xf] %v559
  %592 = vst [vmem:[%s3 + $0x4] sm:$0xf] %v560
  %593 = vst [vmem:[%s3 + $0x8] sm:$0xf] %v561
  %594 = vst [vmem:[%s3 + $0xc] sm:$0xf] %v562
  %595 = vst [vmem:[%s3 + $0x10] sm:$0xf] %v563
  %596 = vst [vmem:[%s3 + $0x14] sm:$0xf] %v564
  %597 = vst [vmem:[%s3 + $0x18] sm:$0xf] %v565
  %598 = vst [vmem:[%s3 + $0x1c] sm:$0xf] %v566
  %599 = vst [vmem:[%s3 + $0x20] sm:$0xf] %v567
  %600 = vst [vmem:[%s3 + $0x24] sm:$0xf] %v568
  %601 = vst [vmem:[%s3 + $0x28] sm:$0xf] %v569
  %602 = vst [vmem:[%s3 + $0x2c] sm:$0xf] %v570
  %603 = vst [vmem:[%s3 + $0x30] sm:$0xf] %v571
  %604 = vst [vmem:[%s3 + $0x34] sm:$0xf] %v572
  %605 = vst [vmem:[%s3 + $0x38] sm:$0xf] %v573
  %606 = vst [vmem:[%s3 + $0x3c] sm:$0xf] %v574
  // Predicated region
  $region14: #{key_head_detector_forward.2} parent=0 // pred_check
    _
  $region15: #{key_head_detector_forward.2} parent=0 // pred_check_branch
    %608 = sbr.rel (0) target = $region17
  $region16: #{key_head_detector_forward.2} parent=0 // pred_region
    _
  $region17: #{key_head_detector_forward.2} parent=0 // pred_fallthru
    _
  // Predicated region
  $region18: #{key_head_detector_forward.2} parent=0 // pred_check
    _
  $region19: #{key_head_detector_forward.2} parent=0 // pred_check_branch
    %610 = sbr.rel (0) target = $region21
  $region20: #{key_head_detector_forward.2} parent=0 // pred_region
    _
  $region21: #{key_head_detector_forward.2} parent=0 // pred_fallthru
    _

// kernel: key_head_detector_forward.3
$region0: #{key_head_detector_forward.3}
  #allocation0 [shape = 'u32[]', space=smem, size = 0x4, offset = 0x4, fixed_abs, tag = 'smem constant byte address 0x4 - core index']
  #allocation1 [shape = 'u32[144,128]{1,0:T(1,128)}', space=vmem, size = 0x12000, scoped, tag = 'internal scratch']
  %s0 = inlined_call_operand.vmem [shape: f32[392,64], index: 0, kind: input, shape index: {}]
  %s1 = inlined_call_operand.vmem [shape: bf16[64,128], index: 1, kind: input, shape index: {}]
  %s2 = inlined_call_operand.vmem [shape: f32[49,128,256], index: 2, kind: input, shape index: {}]
  %s3 = inlined_call_operand.vmem [shape: f32[1,256], index: 3, kind: input, shape index: {}]
  %s4 = inlined_call_operand.vmem [shape: f32[256,128], index: 4, kind: input, shape index: {}]
  %s5 = inlined_call_operand.vmem [shape: f32[1,128], index: 5, kind: input, shape index: {}]
  %s6 = inlined_call_operand.vmem [shape: f32[8,128], index: 6, kind: output, shape index: {}]
  %s7 = sld [smem:[#allocation0]]
  $region34: #{key_head_detector_forward.3} parent=0
    _
  %s9 = ssub.s32 1, %s7
  %s10 = scalar_select 0, %s9, %s7
  // Predicated region
  $region2: #{key_head_detector_forward.3} parent=0 // pred_check
    _
  $region3: #{key_head_detector_forward.3} parent=0 // pred_check_branch
    %12 = sbr.rel (0) target = $region5
  $region4: #{key_head_detector_forward.3} parent=0 // pred_region
    _
  $region5: #{key_head_detector_forward.3} parent=0 // pred_fallthru
    _
  // Predicated region
  $region6: #{key_head_detector_forward.3} parent=0 // pred_check
    _
  $region7: #{key_head_detector_forward.3} parent=0 // pred_check_branch
    %14 = sbr.rel (0) target = $region9
  $region8: #{key_head_detector_forward.3} parent=0 // pred_region
    _
  $region9: #{key_head_detector_forward.3} parent=0 // pred_fallthru
    _
  // Predicated region
  $region10: #{key_head_detector_forward.3} parent=0 // pred_check
    _
  $region11: #{key_head_detector_forward.3} parent=0 // pred_check_branch
    %16 = sbr.rel (0) target = $region13
  $region12: #{key_head_detector_forward.3} parent=0 // pred_region
    _
  $region13: #{key_head_detector_forward.3} parent=0 // pred_fallthru
    _
  // Predicated region
  $region14: #{key_head_detector_forward.3} parent=0 // pred_check
    _
  $region15: #{key_head_detector_forward.3} parent=0 // pred_check_branch
    %18 = sbr.rel (0) target = $region17
  $region16: #{key_head_detector_forward.3} parent=0 // pred_region
    _
  $region17: #{key_head_detector_forward.3} parent=0 // pred_fallthru
    _
  // Predicated region
  $region18: #{key_head_detector_forward.3} parent=0 // pred_check
    _
  $region19: #{key_head_detector_forward.3} parent=0 // pred_check_branch
    %20 = sbr.rel (0) target = $region21
  $region20: #{key_head_detector_forward.3} parent=0 // pred_region
    _
  $region21: #{key_head_detector_forward.3} parent=0 // pred_fallthru
    _
  // Predicated region
  $region22: #{key_head_detector_forward.3} parent=0 // pred_check
    _
  $region23: #{key_head_detector_forward.3} parent=0 // pred_check_branch
    %22 = sbr.rel (0) target = $region25
  $region24: #{key_head_detector_forward.3} parent=0 // pred_region
    _
  $region25: #{key_head_detector_forward.3} parent=0 // pred_fallthru
    _
  %v23 = vld [vmem:[%s1] sm:$0xf]
  %v24 = vld [vmem:[%s1 + $0x4] sm:$0xf]
  %v25 = vld [vmem:[%s1 + $0x8] sm:$0xf]
  %v26 = vld [vmem:[%s1 + $0xc] sm:$0xf]
  %v27 = vld [vmem:[%s1 + $0x10] sm:$0xf]
  %v28 = vld [vmem:[%s1 + $0x14] sm:$0xf]
  %v29 = vld [vmem:[%s1 + $0x18] sm:$0xf]
  %v30 = vld [vmem:[%s1 + $0x1c] sm:$0xf]
  %v31 = vunpack.c.l.bf16 %v23
  %v32 = vunpack.c.l.bf16 %v24
  %v33 = vunpack.c.l.bf16 %v25
  %v34 = vunpack.c.l.bf16 %v26
  %v35 = vunpack.c.l.bf16 %v27
  %v36 = vunpack.c.l.bf16 %v28
  %v37 = vunpack.c.l.bf16 %v29
  %v38 = vunpack.c.l.bf16 %v30
  %v39 = vld [vmem:[%s0] sm:$0xff]
  %v40 = vld [vmem:[%s0 + $0x8] sm:$0xff]
  %v41 = vld [vmem:[%s0 + $0x10] sm:$0xff]
  %v42 = vld [vmem:[%s0 + $0x18] sm:$0xff]
  %v43 = vld [vmem:[%s0 + $0x20] sm:$0xff]
  %v44 = vld [vmem:[%s0 + $0x28] sm:$0xff]
  %v45 = vld [vmem:[%s0 + $0x30] sm:$0xff]
  %v46 = vld [vmem:[%s0 + $0x38] sm:$0xff]
  %v47 = vld [vmem:[%s0 + $0x40] sm:$0xff]
  %v48 = vld [vmem:[%s0 + $0x48] sm:$0xff]
  %v49 = vld [vmem:[%s0 + $0x50] sm:$0xff]
  %v50 = vld [vmem:[%s0 + $0x58] sm:$0xff]
  %v51 = vld [vmem:[%s0 + $0x60] sm:$0xff]
  %v52 = vld [vmem:[%s0 + $0x68] sm:$0xff]
  %v53 = vld [vmem:[%s0 + $0x70] sm:$0xff]
  %v54 = vld [vmem:[%s0 + $0x78] sm:$0xff]
  %v55 = vld [vmem:[%s0 + $0x80] sm:$0xff]
  %v56 = vld [vmem:[%s0 + $0x88] sm:$0xff]
  %v57 = vld [vmem:[%s0 + $0x90] sm:$0xff]
  %v58 = vld [vmem:[%s0 + $0x98] sm:$0xff]
  %v59 = vld [vmem:[%s0 + $0xa0] sm:$0xff]
  %v60 = vld [vmem:[%s0 + $0xa8] sm:$0xff]
  %v61 = vld [vmem:[%s0 + $0xb0] sm:$0xff]
  %v62 = vld [vmem:[%s0 + $0xb8] sm:$0xff]
  %v63 = vld [vmem:[%s0 + $0xc0] sm:$0xff]
  %v64 = vld [vmem:[%s0 + $0xc8] sm:$0xff]
  %v65 = vld [vmem:[%s0 + $0xd0] sm:$0xff]
  %v66 = vld [vmem:[%s0 + $0xd8] sm:$0xff]
  %v67 = vld [vmem:[%s0 + $0xe0] sm:$0xff]
  %v68 = vld [vmem:[%s0 + $0xe8] sm:$0xff]
  %v69 = vld [vmem:[%s0 + $0xf0] sm:$0xff]
  %v70 = vld [vmem:[%s0 + $0xf8] sm:$0xff]
  %v71 = vld [vmem:[%s0 + $0x100] sm:$0xff]
  %v72 = vld [vmem:[%s0 + $0x108] sm:$0xff]
  %v73 = vld [vmem:[%s0 + $0x110] sm:$0xff]
  %v74 = vld [vmem:[%s0 + $0x118] sm:$0xff]
  %v75 = vld [vmem:[%s0 + $0x120] sm:$0xff]
  %v76 = vld [vmem:[%s0 + $0x128] sm:$0xff]
  %v77 = vld [vmem:[%s0 + $0x130] sm:$0xff]
  %v78 = vld [vmem:[%s0 + $0x138] sm:$0xff]
  %v79 = vld [vmem:[%s0 + $0x140] sm:$0xff]
  %v80 = vld [vmem:[%s0 + $0x148] sm:$0xff]
  %v81 = vld [vmem:[%s0 + $0x150] sm:$0xff]
  %v82 = vld [vmem:[%s0 + $0x158] sm:$0xff]
  %v83 = vld [vmem:[%s0 + $0x160] sm:$0xff]
  %v84 = vld [vmem:[%s0 + $0x168] sm:$0xff]
  %v85 = vld [vmem:[%s0 + $0x170] sm:$0xff]
  %v86 = vld [vmem:[%s0 + $0x178] sm:$0xff]
  %v87 = vld [vmem:[%s0 + $0x180] sm:$0xff]
  %vm88 = vcmask 523264
  %v90 = vsel %vm88, %v39, 0
  %v93 = vsel %vm88, %v40, 0
  %v96 = vsel %vm88, %v41, 0
  %v99 = vsel %vm88, %v42, 0
  %v102 = vsel %vm88, %v43, 0
  %v105 = vsel %vm88, %v44, 0
  %v108 = vsel %vm88, %v45, 0
  %v111 = vsel %vm88, %v46, 0
  %v114 = vsel %vm88, %v47, 0
  %v117 = vsel %vm88, %v48, 0
  %v120 = vsel %vm88, %v49, 0
  %v123 = vsel %vm88, %v50, 0
  %v126 = vsel %vm88, %v51, 0
  %v129 = vsel %vm88, %v52, 0
  %v132 = vsel %vm88, %v53, 0
  %v135 = vsel %vm88, %v54, 0
  %v138 = vsel %vm88, %v55, 0
  %v141 = vsel %vm88, %v56, 0
  %v144 = vsel %vm88, %v57, 0
  %v147 = vsel %vm88, %v58, 0
  %v150 = vsel %vm88, %v59, 0
  %v153 = vsel %vm88, %v60, 0
  %v156 = vsel %vm88, %v61, 0
  %v159 = vsel %vm88, %v62, 0
  %v162 = vsel %vm88, %v63, 0
  %v165 = vsel %vm88, %v64, 0
  %v168 = vsel %vm88, %v65, 0
  %v171 = vsel %vm88, %v66, 0
  %v174 = vsel %vm88, %v67, 0
  %v177 = vsel %vm88, %v68, 0
  %v180 = vsel %vm88, %v69, 0
  %v183 = vsel %vm88, %v70, 0
  %v186 = vsel %vm88, %v71, 0
  %v189 = vsel %vm88, %v72, 0
  %v192 = vsel %vm88, %v73, 0
  %v195 = vsel %vm88, %v74, 0
  %v198 = vsel %vm88, %v75, 0
  %v201 = vsel %vm88, %v76, 0
  %v204 = vsel %vm88, %v77, 0
  %v207 = vsel %vm88, %v78, 0
  %v210 = vsel %vm88, %v79, 0
  %v213 = vsel %vm88, %v80, 0
  %v216 = vsel %vm88, %v81, 0
  %v219 = vsel %vm88, %v82, 0
  %v222 = vsel %vm88, %v83, 0
  %v225 = vsel %vm88, %v84, 0
  %v228 = vsel %vm88, %v85, 0
  %v231 = vsel %vm88, %v86, 0
  %v234 = vsel %vm88, %v87, 0
  %236 = vmatprep.subr.mxu0 0.0
  %237 = vmatpush1.msra.mxu0 %v31
  %238 = vmatprep.subr.mxu0 0.0
  %239 = vmatpush1.msra.mxu0 %v32
  %240 = vmatprep.subr.mxu0 0.0
  %241 = vmatpush1.msra.mxu0 %v33
  %242 = vmatprep.subr.mxu0 0.0
  %243 = vmatpush1.msra.mxu0 %v34
  %244 = vmatprep.subr.mxu0 0.0
  %245 = vmatpush1.msra.mxu0 %v35
  %246 = vmatprep.subr.mxu0 0.0
  %247 = vmatpush1.msra.mxu0 %v36
  %248 = vmatprep.subr.mxu0 0.0
  %249 = vmatpush1.msra.mxu0 %v37
  %250 = vmatprep.subr.mxu0 0.0
  %251 = vmatpush1.msra.mxu0 %v38
  %252 = vmatprep.subr.mxu0 0.0
  %253 = vmatpush1.msra.mxu0 0.0
  %254 = vmatprep.subr.mxu0 0.0
  %255 = vmatpush1.msra.mxu0 0.0
  %256 = vmatprep.subr.mxu0 0.0
  %257 = vmatpush1.msra.mxu0 0.0
  %258 = vmatprep.subr.mxu0 0.0
  %259 = vmatpush1.msra.mxu0 0.0
  %260 = vmatprep.subr.mxu0 0.0
  %261 = vmatpush1.msra.mxu0 0.0
  %262 = vmatprep.subr.mxu0 0.0
  %263 = vmatpush1.msra.mxu0 0.0
  %264 = vmatprep.subr.mxu0 0.0
  %265 = vmatpush1.msra.mxu0 0.0
  %266 = vmatprep.subr.mxu0 0.0
  %267 = vmatpush1.msra.mxu0 0.0
  %268 = vmatprep.subr.mxu0 0.0
  %269 = vmatpush1.msra.mxu0 0.0
  %270 = vmatprep.subr.mxu0 0.0
  %271 = vmatpush1.msra.mxu0 0.0
  %272 = vmatprep.subr.mxu0 0.0
  %273 = vmatpush1.msra.mxu0 0.0
  %274 = vmatprep.subr.mxu0 0.0
  %275 = vmatpush1.msra.mxu0 0.0
  %276 = vmatprep.subr.mxu0 0.0
  %277 = vmatpush1.msra.mxu0 0.0
  %278 = vmatprep.subr.mxu0 0.0
  %279 = vmatpush1.msra.mxu0 0.0
  %280 = vmatprep.subr.mxu0 0.0
  %281 = vmatpush1.msra.mxu0 0.0
  %282 = vmatprep.subr.mxu0 0.0
  %283 = vmatpush1.msra.mxu0 0.0
  %284 = vmatprep.subr.mxu0 0.0
  %285 = vmatpush1.msra.mxu0 0.0
  %286 = vmatprep.subr.mxu0 0.0
  %287 = vmatpush1.msra.mxu0 0.0
  %288 = vmatprep.subr.mxu0 0.0
  %289 = vmatpush1.msra.mxu0 0.0
  %290 = vmatprep.subr.mxu0 0.0
  %291 = vmatpush1.msra.mxu0 0.0
  %292 = vmatprep.subr.mxu0 0.0
  %293 = vmatpush1.msra.mxu0 0.0
  %294 = vmatprep.subr.mxu0 0.0
  %295 = vmatpush1.msra.mxu0 0.0
  %296 = vmatprep.subr.mxu0 0.0
  %297 = vmatpush1.msra.mxu0 0.0
  %298 = vmatprep.subr.mxu0 0.0
  %299 = vmatpush1.msra.mxu0 0.0
  %300 = vmatprep.mubr.f32.mxu0 0.0
  %301 = vmatmul.mubr.f32.gmra.mrb[0].mxu0 %v90
  %v302 = vpop.f32.mrb[0].mxu0
  %v303 = vadd.f32 0.0, %v302
  %v304 = vpop.f32.mrb[0].mxu0
  %305 = vmatprep.mubr.f32.mxu0 0.0
  %306 = vmatmul.mubr.f32.gmra.mrb[0].mxu0 %v93
  %v307 = vpop.f32.mrb[0].mxu0
  %v308 = vadd.f32 0.0, %v307
  %v309 = vpop.f32.mrb[0].mxu0
  %310 = vmatprep.mubr.f32.mxu0 0.0
  %311 = vmatmul.mubr.f32.gmra.mrb[0].mxu0 %v96
  %v312 = vpop.f32.mrb[0].mxu0
  %v313 = vadd.f32 0.0, %v312
  %v314 = vpop.f32.mrb[0].mxu0
  %315 = vmatprep.mubr.f32.mxu0 0.0
  %316 = vmatmul.mubr.f32.gmra.mrb[0].mxu0 %v99
  %v317 = vpop.f32.mrb[0].mxu0
  %v318 = vadd.f32 0.0, %v317
  %v319 = vpop.f32.mrb[0].mxu0
  %320 = vmatprep.mubr.f32.mxu0 0.0
  %321 = vmatmul.mubr.f32.gmra.mrb[0].mxu0 %v102
  %v322 = vpop.f32.mrb[0].mxu0
  %v323 = vadd.f32 0.0, %v322
  %v324 = vpop.f32.mrb[0].mxu0
  %325 = vmatprep.mubr.f32.mxu0 0.0
  %326 = vmatmul.mubr.f32.gmra.mrb[0].mxu0 %v105
  %v327 = vpop.f32.mrb[0].mxu0
  %v328 = vadd.f32 0.0, %v327
  %v329 = vpop.f32.mrb[0].mxu0
  %330 = vmatprep.mubr.f32.mxu0 0.0
  %331 = vmatmul.mubr.f32.gmra.mrb[0].mxu0 %v108
  %v332 = vpop.f32.mrb[0].mxu0
  %v333 = vadd.f32 0.0, %v332
  %v334 = vpop.f32.mrb[0].mxu0
  %335 = vmatprep.mubr.f32.mxu0 0.0
  %336 = vmatmul.mubr.f32.gmra.mrb[0].mxu0 %v111
  %v337 = vpop.f32.mrb[0].mxu0
  %v338 = vadd.f32 0.0, %v337
  %v339 = vpop.f32.mrb[0].mxu0
  %340 = vmatprep.mubr.f32.mxu0 0.0
  %341 = vmatmul.mubr.f32.gmra.mrb[0].mxu0 %v114
  %v342 = vpop.f32.mrb[0].mxu0
  %v343 = vadd.f32 0.0, %v342
  %v344 = vpop.f32.mrb[0].mxu0
  %345 = vmatprep.mubr.f32.mxu0 0.0
  %346 = vmatmul.mubr.f32.gmra.mrb[0].mxu0 %v117
  %v347 = vpop.f32.mrb[0].mxu0
  %v348 = vadd.f32 0.0, %v347
  %v349 = vpop.f32.mrb[0].mxu0
  %350 = vmatprep.mubr.f32.mxu0 0.0
  %351 = vmatmul.mubr.f32.gmra.mrb[0].mxu0 %v120
  %v352 = vpop.f32.mrb[0].mxu0
  %v353 = vadd.f32 0.0, %v352
  %v354 = vpop.f32.mrb[0].mxu0
  %355 = vmatprep.mubr.f32.mxu0 0.0
  %356 = vmatmul.mubr.f32.gmra.mrb[0].mxu0 %v123
  %v357 = vpop.f32.mrb[0].mxu0
  %v358 = vadd.f32 0.0, %v357
  %v359 = vpop.f32.mrb[0].mxu0
  %360 = vmatprep.mubr.f32.mxu0 0.0
  %361 = vmatmul.mubr.f32.gmra.mrb[0].mxu0 %v126
  %v362 = vpop.f32.mrb[0].mxu0
  %v363 = vadd.f32 0.0, %v362
  %v364 = vpop.f32.mrb[0].mxu0
  %365 = vmatprep.mubr.f32.mxu0 0.0
  %366 = vmatmul.mubr.f32.gmra.mrb[0].mxu0 %v129
  %v367 = vpop.f32.mrb[0].mxu0
  %v368 = vadd.f32 0.0, %v367
  %v369 = vpop.f32.mrb[0].mxu0
  %370 = vmatprep.mubr.f32.mxu0 0.0
  %371 = vmatmul.mubr.f32.gmra.mrb[0].mxu0 %v132
  %v372 = vpop.f32.mrb[0].mxu0
  %v373 = vadd.f32 0.0, %v372
  %v374 = vpop.f32.mrb[0].mxu0
  %375 = vmatprep.mubr.f32.mxu0 0.0
  %376 = vmatmul.mubr.f32.gmra.mrb[0].mxu0 %v135
  %v377 = vpop.f32.mrb[0].mxu0
  %v378 = vadd.f32 0.0, %v377
  %v379 = vpop.f32.mrb[0].mxu0
  %380 = vmatprep.mubr.f32.mxu0 0.0
  %381 = vmatmul.mubr.f32.gmra.mrb[0].mxu0 %v138
  %v382 = vpop.f32.mrb[0].mxu0
  %v383 = vadd.f32 0.0, %v382
  %v384 = vpop.f32.mrb[0].mxu0
  %385 = vmatprep.mubr.f32.mxu0 0.0
  %386 = vmatmul.mubr.f32.gmra.mrb[0].mxu0 %v141
  %v387 = vpop.f32.mrb[0].mxu0
  %v388 = vadd.f32 0.0, %v387
  %v389 = vpop.f32.mrb[0].mxu0
  %390 = vmatprep.mubr.f32.mxu0 0.0
  %391 = vmatmul.mubr.f32.gmra.mrb[0].mxu0 %v144
  %v392 = vpop.f32.mrb[0].mxu0
  %v393 = vadd.f32 0.0, %v392
  %v394 = vpop.f32.mrb[0].mxu0
  %395 = vmatprep.mubr.f32.mxu0 0.0
  %396 = vmatmul.mubr.f32.gmra.mrb[0].mxu0 %v147
  %v397 = vpop.f32.mrb[0].mxu0
  %v398 = vadd.f32 0.0, %v397
  %v399 = vpop.f32.mrb[0].mxu0
  %400 = vmatprep.mubr.f32.mxu0 0.0
  %401 = vmatmul.mubr.f32.gmra.mrb[0].mxu0 %v150
  %v402 = vpop.f32.mrb[0].mxu0
  %v403 = vadd.f32 0.0, %v402
  %v404 = vpop.f32.mrb[0].mxu0
  %405 = vmatprep.mubr.f32.mxu0 0.0
  %406 = vmatmul.mubr.f32.gmra.mrb[0].mxu0 %v153
  %v407 = vpop.f32.mrb[0].mxu0
  %v408 = vadd.f32 0.0, %v407
  %v409 = vpop.f32.mrb[0].mxu0
  %410 = vmatprep.mubr.f32.mxu0 0.0
  %411 = vmatmul.mubr.f32.gmra.mrb[0].mxu0 %v156
  %v412 = vpop.f32.mrb[0].mxu0
  %v413 = vadd.f32 0.0, %v412
  %v414 = vpop.f32.mrb[0].mxu0
  %415 = vmatprep.mubr.f32.mxu0 0.0
  %416 = vmatmul.mubr.f32.gmra.mrb[0].mxu0 %v159
  %v417 = vpop.f32.mrb[0].mxu0
  %v418 = vadd.f32 0.0, %v417
  %v419 = vpop.f32.mrb[0].mxu0
  %420 = vmatprep.mubr.f32.mxu0 0.0
  %421 = vmatmul.mubr.f32.gmra.mrb[0].mxu0 %v162
  %v422 = vpop.f32.mrb[0].mxu0
  %v423 = vadd.f32 0.0, %v422
  %v424 = vpop.f32.mrb[0].mxu0
  %425 = vmatprep.mubr.f32.mxu0 0.0
  %426 = vmatmul.mubr.f32.gmra.mrb[0].mxu0 %v165
  %v427 = vpop.f32.mrb[0].mxu0
  %v428 = vadd.f32 0.0, %v427
  %v429 = vpop.f32.mrb[0].mxu0
  %430 = vmatprep.mubr.f32.mxu0 0.0
  %431 = vmatmul.mubr.f32.gmra.mrb[0].mxu0 %v168
  %v432 = vpop.f32.mrb[0].mxu0
  %v433 = vadd.f32 0.0, %v432
  %v434 = vpop.f32.mrb[0].mxu0
  %435 = vmatprep.mubr.f32.mxu0 0.0
  %436 = vmatmul.mubr.f32.gmra.mrb[0].mxu0 %v171
  %v437 = vpop.f32.mrb[0].mxu0
  %v438 = vadd.f32 0.0, %v437
  %v439 = vpop.f32.mrb[0].mxu0
  %440 = vmatprep.mubr.f32.mxu0 0.0
  %441 = vmatmul.mubr.f32.gmra.mrb[0].mxu0 %v174
  %v442 = vpop.f32.mrb[0].mxu0
  %v443 = vadd.f32 0.0, %v442
  %v444 = vpop.f32.mrb[0].mxu0
  %445 = vmatprep.mubr.f32.mxu0 0.0
  %446 = vmatmul.mubr.f32.gmra.mrb[0].mxu0 %v177
  %v447 = vpop.f32.mrb[0].mxu0
  %v448 = vadd.f32 0.0, %v447
  %v449 = vpop.f32.mrb[0].mxu0
  %450 = vmatprep.mubr.f32.mxu0 0.0
  %451 = vmatmul.mubr.f32.gmra.mrb[0].mxu0 %v180
  %v452 = vpop.f32.mrb[0].mxu0
  %v453 = vadd.f32 0.0, %v452
  %v454 = vpop.f32.mrb[0].mxu0
  %455 = vmatprep.mubr.f32.mxu0 0.0
  %456 = vmatmul.mubr.f32.gmra.mrb[0].mxu0 %v183
  %v457 = vpop.f32.mrb[0].mxu0
  %v458 = vadd.f32 0.0, %v457
  %v459 = vpop.f32.mrb[0].mxu0
  %460 = vmatprep.mubr.f32.mxu0 0.0
  %461 = vmatmul.mubr.f32.gmra.mrb[0].mxu0 %v186
  %v462 = vpop.f32.mrb[0].mxu0
  %v463 = vadd.f32 0.0, %v462
  %v464 = vpop.f32.mrb[0].mxu0
  %465 = vmatprep.mubr.f32.mxu0 0.0
  %466 = vmatmul.mubr.f32.gmra.mrb[0].mxu0 %v189
  %v467 = vpop.f32.mrb[0].mxu0
  %v468 = vadd.f32 0.0, %v467
  %v469 = vpop.f32.mrb[0].mxu0
  %470 = vmatprep.mubr.f32.mxu0 0.0
  %471 = vmatmul.mubr.f32.gmra.mrb[0].mxu0 %v192
  %v472 = vpop.f32.mrb[0].mxu0
  %v473 = vadd.f32 0.0, %v472
  %v474 = vpop.f32.mrb[0].mxu0
  %475 = vmatprep.mubr.f32.mxu0 0.0
  %476 = vmatmul.mubr.f32.gmra.mrb[0].mxu0 %v195
  %v477 = vpop.f32.mrb[0].mxu0
  %v478 = vadd.f32 0.0, %v477
  %v479 = vpop.f32.mrb[0].mxu0
  %480 = vmatprep.mubr.f32.mxu0 0.0
  %481 = vmatmul.mubr.f32.gmra.mrb[0].mxu0 %v198
  %v482 = vpop.f32.mrb[0].mxu0
  %v483 = vadd.f32 0.0, %v482
  %v484 = vpop.f32.mrb[0].mxu0
  %485 = vmatprep.mubr.f32.mxu0 0.0
  %486 = vmatmul.mubr.f32.gmra.mrb[0].mxu0 %v201
  %v487 = vpop.f32.mrb[0].mxu0
  %v488 = vadd.f32 0.0, %v487
  %v489 = vpop.f32.mrb[0].mxu0
  %490 = vmatprep.mubr.f32.mxu0 0.0
  %491 = vmatmul.mubr.f32.gmra.mrb[0].mxu0 %v204
  %v492 = vpop.f32.mrb[0].mxu0
  %v493 = vadd.f32 0.0, %v492
  %v494 = vpop.f32.mrb[0].mxu0
  %495 = vmatprep.mubr.f32.mxu0 0.0
  %496 = vmatmul.mubr.f32.gmra.mrb[0].mxu0 %v207
  %v497 = vpop.f32.mrb[0].mxu0
  %v498 = vadd.f32 0.0, %v497
  %v499 = vpop.f32.mrb[0].mxu0
  %500 = vmatprep.mubr.f32.mxu0 0.0
  %501 = vmatmul.mubr.f32.gmra.mrb[0].mxu0 %v210
  %v502 = vpop.f32.mrb[0].mxu0
  %v503 = vadd.f32 0.0, %v502
  %v504 = vpop.f32.mrb[0].mxu0
  %505 = vmatprep.mubr.f32.mxu0 0.0
  %506 = vmatmul.mubr.f32.gmra.mrb[0].mxu0 %v213
  %v507 = vpop.f32.mrb[0].mxu0
  %v508 = vadd.f32 0.0, %v507
  %v509 = vpop.f32.mrb[0].mxu0
  %510 = vmatprep.mubr.f32.mxu0 0.0
  %511 = vmatmul.mubr.f32.gmra.mrb[0].mxu0 %v216
  %v512 = vpop.f32.mrb[0].mxu0
  %v513 = vadd.f32 0.0, %v512
  %v514 = vpop.f32.mrb[0].mxu0
  %515 = vmatprep.mubr.f32.mxu0 0.0
  %516 = vmatmul.mubr.f32.gmra.mrb[0].mxu0 %v219
  %v517 = vpop.f32.mrb[0].mxu0
  %v518 = vadd.f32 0.0, %v517
  %v519 = vpop.f32.mrb[0].mxu0
  %520 = vmatprep.mubr.f32.mxu0 0.0
  %521 = vmatmul.mubr.f32.gmra.mrb[0].mxu0 %v222
  %v522 = vpop.f32.mrb[0].mxu0
  %v523 = vadd.f32 0.0, %v522
  %v524 = vpop.f32.mrb[0].mxu0
  %525 = vmatprep.mubr.f32.mxu0 0.0
  %526 = vmatmul.mubr.f32.gmra.mrb[0].mxu0 %v225
  %v527 = vpop.f32.mrb[0].mxu0
  %v528 = vadd.f32 0.0, %v527
  %v529 = vpop.f32.mrb[0].mxu0
  %530 = vmatprep.mubr.f32.mxu0 0.0
  %531 = vmatmul.mubr.f32.gmra.mrb[0].mxu0 %v228
  %v532 = vpop.f32.mrb[0].mxu0
  %v533 = vadd.f32 0.0, %v532
  %v534 = vpop.f32.mrb[0].mxu0
  %535 = vmatprep.mubr.f32.mxu0 0.0
  %536 = vmatmul.mubr.f32.gmra.mrb[0].mxu0 %v231
  %v537 = vpop.f32.mrb[0].mxu0
  %v538 = vadd.f32 0.0, %v537
  %v539 = vpop.f32.mrb[0].mxu0
  %540 = vmatprep.mubr.f32.mxu0 0.0
  %541 = vmatmul.mubr.f32.gmra.mrb[0].mxu0 %v234
  %v542 = vpop.f32.mrb[0].mxu0
  %v543 = vadd.f32 0.0, %v542
  %v544 = vpop.f32.mrb[0].mxu0
  %545 = vdwg.mxu0
  %v546 = vld [vmem:[%s2] sm:$0xff]
  %v547 = vld [vmem:[%s2 + $0x8] sm:$0xff]
  %v548 = vld [vmem:[%s2 + $0x10] sm:$0xff]
  %v549 = vld [vmem:[%s2 + $0x18] sm:$0xff]
  %v550 = vld [vmem:[%s2 + $0x20] sm:$0xff]
  %v551 = vld [vmem:[%s2 + $0x28] sm:$0xff]
  %v552 = vld [vmem:[%s2 + $0x30] sm:$0xff]
  %v553 = vld [vmem:[%s2 + $0x38] sm:$0xff]
  %v554 = vld [vmem:[%s2 + $0x40] sm:$0xff]
  %v555 = vld [vmem:[%s2 + $0x48] sm:$0xff]
  %v556 = vld [vmem:[%s2 + $0x50] sm:$0xff]
  %v557 = vld [vmem:[%s2 + $0x58] sm:$0xff]
  %v558 = vld [vmem:[%s2 + $0x60] sm:$0xff]
  %v559 = vld [vmem:[%s2 + $0x68] sm:$0xff]
  %v560 = vld [vmem:[%s2 + $0x70] sm:$0xff]
  %v561 = vld [vmem:[%s2 + $0x78] sm:$0xff]
  %v562 = vld [vmem:[%s2 + $0x80] sm:$0xff]
  %v563 = vld [vmem:[%s2 + $0x88] sm:$0xff]
  %v564 = vld [vmem:[%s2 + $0x90] sm:$0xff]
  %v565 = vld [vmem:[%s2 + $0x98] sm:$0xff]
  %v566 = vld [vmem:[%s2 + $0xa0] sm:$0xff]
  %v567 = vld [vmem:[%s2 + $0xa8] sm:$0xff]
  %v568 = vld [vmem:[%s2 + $0xb0] sm:$0xff]
  %v569 = vld [vmem:[%s2 + $0xb8] sm:$0xff]
  %v570 = vld [vmem:[%s2 + $0xc0] sm:$0xff]
  %v571 = vld [vmem:[%s2 + $0xc8] sm:$0xff]
  %v572 = vld [vmem:[%s2 + $0xd0] sm:$0xff]
  %v573 = vld [vmem:[%s2 + $0xd8] sm:$0xff]
  %v574 = vld [vmem:[%s2 + $0xe0] sm:$0xff]
  %v575 = vld [vmem:[%s2 + $0xe8] sm:$0xff]
  %v576 = vld [vmem:[%s2 + $0xf0] sm:$0xff]
  %v577 = vld [vmem:[%s2 + $0xf8] sm:$0xff]
  %v578 = vld [vmem:[%s2 + $0x100] sm:$0xff]
  %v579 = vld [vmem:[%s2 + $0x108] sm:$0xff]
  %v580 = vld [vmem:[%s2 + $0x110] sm:$0xff]
  %v581 = vld [vmem:[%s2 + $0x118] sm:$0xff]
  %v582 = vld [vmem:[%s2 + $0x120] sm:$0xff]
  %v583 = vld [vmem:[%s2 + $0x128] sm:$0xff]
  %v584 = vld [vmem:[%s2 + $0x130] sm:$0xff]
  %v585 = vld [vmem:[%s2 + $0x138] sm:$0xff]
  %v586 = vld [vmem:[%s2 + $0x140] sm:$0xff]
  %v587 = vld [vmem:[%s2 + $0x148] sm:$0xff]
  %v588 = vld [vmem:[%s2 + $0x150] sm:$0xff]
  %v589 = vld [vmem:[%s2 + $0x158] sm:$0xff]
  %v590 = vld [vmem:[%s2 + $0x160] sm:$0xff]
  %v591 = vld [vmem:[%s2 + $0x168] sm:$0xff]
  %v592 = vld [vmem:[%s2 + $0x170] sm:$0xff]
  %v593 = vld [vmem:[%s2 + $0x178] sm:$0xff]
  %v594 = vld [vmem:[%s2 + $0x180] sm:$0xff]
  %v595 = vld [vmem:[%s2 + $0x188] sm:$0xff]
  %v596 = vld [vmem:[%s2 + $0x190] sm:$0xff]
  %v597 = vld [vmem:[%s2 + $0x198] sm:$0xff]
  %v598 = vld [vmem:[%s2 + $0x1a0] sm:$0xff]
  %v599 = vld [vmem:[%s2 + $0x1a8] sm:$0xff]
  %v600 = vld [vmem:[%s2 + $0x1b0] sm:$0xff]
  %v601 = vld [vmem:[%s2 + $0x1b8] sm:$0xff]
  %v602 = vld [vmem:[%s2 + $0x1c0] sm:$0xff]
  %v603 = vld [vmem:[%s2 + $0x1c8] sm:$0xff]
  %v604 = vld [vmem:[%s2 + $0x1d0] sm:$0xff]
  %v605 = vld [vmem:[%s2 + $0x1d8] sm:$0xff]
  %v606 = vld [vmem:[%s2 + $0x1e0] sm:$0xff]
  %v607 = vld [vmem:[%s2 + $0x1e8] sm:$0xff]
  %v608 = vld [vmem:[%s2 + $0x1f0] sm:$0xff]
  %v609 = vld [vmem:[%s2 + $0x1f8] sm:$0xff]
  %v610 = vld [vmem:[%s2 + $0x200] sm:$0xff]
  %v611 = vld [vmem:[%s2 + $0x208] sm:$0xff]
  %v612 = vld [vmem:[%s2 + $0x210] sm:$0xff]
  %v613 = vld [vmem:[%s2 + $0x218] sm:$0xff]
  %v614 = vld [vmem:[%s2 + $0x220] sm:$0xff]
  %v615 = vld [vmem:[%s2 + $0x228] sm:$0xff]
  %v616 = vld [vmem:[%s2 + $0x230] sm:$0xff]
  %v617 = vld [vmem:[%s2 + $0x238] sm:$0xff]
  %v618 = vld [vmem:[%s2 + $0x240] sm:$0xff]
  %v619 = vld [vmem:[%s2 + $0x248] sm:$0xff]
  %v620 = vld [vmem:[%s2 + $0x250] sm:$0xff]
  %v621 = vld [vmem:[%s2 + $0x258] sm:$0xff]
  %v622 = vld [vmem:[%s2 + $0x260] sm:$0xff]
  %v623 = vld [vmem:[%s2 + $0x268] sm:$0xff]
  %v624 = vld [vmem:[%s2 + $0x270] sm:$0xff]
  %v625 = vld [vmem:[%s2 + $0x278] sm:$0xff]
  %v626 = vld [vmem:[%s2 + $0x280] sm:$0xff]
  %v627 = vld [vmem:[%s2 + $0x288] sm:$0xff]
  %v628 = vld [vmem:[%s2 + $0x290] sm:$0xff]
  %v629 = vld [vmem:[%s2 + $0x298] sm:$0xff]
  %v630 = vld [vmem:[%s2 + $0x2a0] sm:$0xff]
  %v631 = vld [vmem:[%s2 + $0x2a8] sm:$0xff]
  %v632 = vld [vmem:[%s2 + $0x2b0] sm:$0xff]
  %v633 = vld [vmem:[%s2 + $0x2b8] sm:$0xff]
  %v634 = vld [vmem:[%s2 + $0x2c0] sm:$0xff]
  %v635 = vld [vmem:[%s2 + $0x2c8] sm:$0xff]
  %v636 = vld [vmem:[%s2 + $0x2d0] sm:$0xff]
  %v637 = vld [vmem:[%s2 + $0x2d8] sm:$0xff]
  %v638 = vld [vmem:[%s2 + $0x2e0] sm:$0xff]
  %v639 = vld [vmem:[%s2 + $0x2e8] sm:$0xff]
  %v640 = vld [vmem:[%s2 + $0x2f0] sm:$0xff]
  %v641 = vld [vmem:[%s2 + $0x2f8] sm:$0xff]
  %v642 = vld [vmem:[%s2 + $0x300] sm:$0xff]
  %v643 = vld [vmem:[%s2 + $0x308] sm:$0xff]
  %v644 = vld [vmem:[%s2 + $0x310] sm:$0xff]
  %v645 = vld [vmem:[%s2 + $0x318] sm:$0xff]
  %v646 = vld [vmem:[%s2 + $0x320] sm:$0xff]
  %v647 = vld [vmem:[%s2 + $0x328] sm:$0xff]
  %v648 = vld [vmem:[%s2 + $0x330] sm:$0xff]
  %v649 = vld [vmem:[%s2 + $0x338] sm:$0xff]
  %v650 = vld [vmem:[%s2 + $0x340] sm:$0xff]
  %v651 = vld [vmem:[%s2 + $0x348] sm:$0xff]
  %v652 = vld [vmem:[%s2 + $0x350] sm:$0xff]
  %v653 = vld [vmem:[%s2 + $0x358] sm:$0xff]
  %v654 = vld [vmem:[%s2 + $0x360] sm:$0xff]
  %v655 = vld [vmem:[%s2 + $0x368] sm:$0xff]
  %v656 = vld [vmem:[%s2 + $0x370] sm:$0xff]
  %v657 = vld [vmem:[%s2 + $0x378] sm:$0xff]
  %v658 = vld [vmem:[%s2 + $0x380] sm:$0xff]
  %v659 = vld [vmem:[%s2 + $0x388] sm:$0xff]
  %v660 = vld [vmem:[%s2 + $0x390] sm:$0xff]
  %v661 = vld [vmem:[%s2 + $0x398] sm:$0xff]
  %v662 = vld [vmem:[%s2 + $0x3a0] sm:$0xff]
  %v663 = vld [vmem:[%s2 + $0x3a8] sm:$0xff]
  %v664 = vld [vmem:[%s2 + $0x3b0] sm:$0xff]
  %v665 = vld [vmem:[%s2 + $0x3b8] sm:$0xff]
  %v666 = vld [vmem:[%s2 + $0x3c0] sm:$0xff]
  %v667 = vld [vmem:[%s2 + $0x3c8] sm:$0xff]
  %v668 = vld [vmem:[%s2 + $0x3d0] sm:$0xff]
  %v669 = vld [vmem:[%s2 + $0x3d8] sm:$0xff]
  %v670 = vld [vmem:[%s2 + $0x3e0] sm:$0xff]
  %v671 = vld [vmem:[%s2 + $0x3e8] sm:$0xff]
  %v672 = vld [vmem:[%s2 + $0x3f0] sm:$0xff]
  %v673 = vld [vmem:[%s2 + $0x3f8] sm:$0xff]
  %v674 = vld [vmem:[%s2 + $0x400] sm:$0xff]
  %v675 = vld [vmem:[%s2 + $0x408] sm:$0xff]
  %v676 = vld [vmem:[%s2 + $0x410] sm:$0xff]
  %v677 = vld [vmem:[%s2 + $0x418] sm:$0xff]
  %v678 = vld [vmem:[%s2 + $0x420] sm:$0xff]
  %v679 = vld [vmem:[%s2 + $0x428] sm:$0xff]
  %v680 = vld [vmem:[%s2 + $0x430] sm:$0xff]
  %v681 = vld [vmem:[%s2 + $0x438] sm:$0xff]
  %v682 = vld [vmem:[%s2 + $0x440] sm:$0xff]
  %v683 = vld [vmem:[%s2 + $0x448] sm:$0xff]
  %v684 = vld [vmem:[%s2 + $0x450] sm:$0xff]
  %v685 = vld [vmem:[%s2 + $0x458] sm:$0xff]
  %v686 = vld [vmem:[%s2 + $0x460] sm:$0xff]
  %v687 = vld [vmem:[%s2 + $0x468] sm:$0xff]
  %v688 = vld [vmem:[%s2 + $0x470] sm:$0xff]
  %v689 = vld [vmem:[%s2 + $0x478] sm:$0xff]
  %v690 = vld [vmem:[%s2 + $0x480] sm:$0xff]
  %v691 = vld [vmem:[%s2 + $0x488] sm:$0xff]
  %v692 = vld [vmem:[%s2 + $0x490] sm:$0xff]
  %v693 = vld [vmem:[%s2 + $0x498] sm:$0xff]
  %v694 = vld [vmem:[%s2 + $0x4a0] sm:$0xff]
  %v695 = vld [vmem:[%s2 + $0x4a8] sm:$0xff]
  %v696 = vld [vmem:[%s2 + $0x4b0] sm:$0xff]
  %v697 = vld [vmem:[%s2 + $0x4b8] sm:$0xff]
  %v698 = vld [vmem:[%s2 + $0x4c0] sm:$0xff]
  %v699 = vld [vmem:[%s2 + $0x4c8] sm:$0xff]
  %v700 = vld [vmem:[%s2 + $0x4d0] sm:$0xff]
  %v701 = vld [vmem:[%s2 + $0x4d8] sm:$0xff]
  %v702 = vld [vmem:[%s2 + $0x4e0] sm:$0xff]
  %v703 = vld [vmem:[%s2 + $0x4e8] sm:$0xff]
  %v704 = vld [vmem:[%s2 + $0x4f0] sm:$0xff]
  %v705 = vld [vmem:[%s2 + $0x4f8] sm:$0xff]
  %v706 = vld [vmem:[%s2 + $0x500] sm:$0xff]
  %v707 = vld [vmem:[%s2 + $0x508] sm:$0xff]
  %v708 = vld [vmem:[%s2 + $0x510] sm:$0xff]
  %v709 = vld [vmem:[%s2 + $0x518] sm:$0xff]
  %v710 = vld [vmem:[%s2 + $0x520] sm:$0xff]
  %v711 = vld [vmem:[%s2 + $0x528] sm:$0xff]
  %v712 = vld [vmem:[%s2 + $0x530] sm:$0xff]
  %v713 = vld [vmem:[%s2 + $0x538] sm:$0xff]
  %v714 = vld [vmem:[%s2 + $0x540] sm:$0xff]
  %v715 = vld [vmem:[%s2 + $0x548] sm:$0xff]
  %v716 = vld [vmem:[%s2 + $0x550] sm:$0xff]
  %v717 = vld [vmem:[%s2 + $0x558] sm:$0xff]
  %v718 = vld [vmem:[%s2 + $0x560] sm:$0xff]
  %v719 = vld [vmem:[%s2 + $0x568] sm:$0xff]
  %v720 = vld [vmem:[%s2 + $0x570] sm:$0xff]
  %v721 = vld [vmem:[%s2 + $0x578] sm:$0xff]
  %v722 = vld [vmem:[%s2 + $0x580] sm:$0xff]
  %v723 = vld [vmem:[%s2 + $0x588] sm:$0xff]
  %v724 = vld [vmem:[%s2 + $0x590] sm:$0xff]
  %v725 = vld [vmem:[%s2 + $0x598] sm:$0xff]
  %v726 = vld [vmem:[%s2 + $0x5a0] sm:$0xff]
  %v727 = vld [vmem:[%s2 + $0x5a8] sm:$0xff]
  %v728 = vld [vmem:[%s2 + $0x5b0] sm:$0xff]
  %v729 = vld [vmem:[%s2 + $0x5b8] sm:$0xff]
  %v730 = vld [vmem:[%s2 + $0x5c0] sm:$0xff]
  %v731 = vld [vmem:[%s2 + $0x5c8] sm:$0xff]
  %v732 = vld [vmem:[%s2 + $0x5d0] sm:$0xff]
  %v733 = vld [vmem:[%s2 + $0x5d8] sm:$0xff]
  %v734 = vld [vmem:[%s2 + $0x5e0] sm:$0xff]
  %v735 = vld [vmem:[%s2 + $0x5e8] sm:$0xff]
  %v736 = vld [vmem:[%s2 + $0x5f0] sm:$0xff]
  %v737 = vld [vmem:[%s2 + $0x5f8] sm:$0xff]
  %v738 = vld [vmem:[%s2 + $0x600] sm:$0xff]
  %v739 = vld [vmem:[%s2 + $0x608] sm:$0xff]
  %v740 = vld [vmem:[%s2 + $0x610] sm:$0xff]
  %v741 = vld [vmem:[%s2 + $0x618] sm:$0xff]
  %v742 = vld [vmem:[%s2 + $0x620] sm:$0xff]
  %v743 = vld [vmem:[%s2 + $0x628] sm:$0xff]
  %v744 = vld [vmem:[%s2 + $0x630] sm:$0xff]
  %v745 = vld [vmem:[%s2 + $0x638] sm:$0xff]
  %v746 = vld [vmem:[%s2 + $0x640] sm:$0xff]
  %v747 = vld [vmem:[%s2 + $0x648] sm:$0xff]
  %v748 = vld [vmem:[%s2 + $0x650] sm:$0xff]
  %v749 = vld [vmem:[%s2 + $0x658] sm:$0xff]
  %v750 = vld [vmem:[%s2 + $0x660] sm:$0xff]
  %v751 = vld [vmem:[%s2 + $0x668] sm:$0xff]
  %v752 = vld [vmem:[%s2 + $0x670] sm:$0xff]
  %v753 = vld [vmem:[%s2 + $0x678] sm:$0xff]
  %v754 = vld [vmem:[%s2 + $0x680] sm:$0xff]
  %v755 = vld [vmem:[%s2 + $0x688] sm:$0xff]
  %v756 = vld [vmem:[%s2 + $0x690] sm:$0xff]
  %v757 = vld [vmem:[%s2 + $0x698] sm:$0xff]
  %v758 = vld [vmem:[%s2 + $0x6a0] sm:$0xff]
  %v759 = vld [vmem:[%s2 + $0x6a8] sm:$0xff]
  %v760 = vld [vmem:[%s2 + $0x6b0] sm:$0xff]
  %v761 = vld [vmem:[%s2 + $0x6b8] sm:$0xff]
  %v762 = vld [vmem:[%s2 + $0x6c0] sm:$0xff]
  %v763 = vld [vmem:[%s2 + $0x6c8] sm:$0xff]
  %v764 = vld [vmem:[%s2 + $0x6d0] sm:$0xff]
  %v765 = vld [vmem:[%s2 + $0x6d8] sm:$0xff]
  %v766 = vld [vmem:[%s2 + $0x6e0] sm:$0xff]
  %v767 = vld [vmem:[%s2 + $0x6e8] sm:$0xff]
  %v768 = vld [vmem:[%s2 + $0x6f0] sm:$0xff]
  %v769 = vld [vmem:[%s2 + $0x6f8] sm:$0xff]
  %v770 = vld [vmem:[%s2 + $0x700] sm:$0xff]
  %v771 = vld [vmem:[%s2 + $0x708] sm:$0xff]
  %v772 = vld [vmem:[%s2 + $0x710] sm:$0xff]
  %v773 = vld [vmem:[%s2 + $0x718] sm:$0xff]
  %v774 = vld [vmem:[%s2 + $0x720] sm:$0xff]
  %v775 = vld [vmem:[%s2 + $0x728] sm:$0xff]
  %v776 = vld [vmem:[%s2 + $0x730] sm:$0xff]
  %v777 = vld [vmem:[%s2 + $0x738] sm:$0xff]
  %v778 = vld [vmem:[%s2 + $0x740] sm:$0xff]
  %v779 = vld [vmem:[%s2 + $0x748] sm:$0xff]
  %v780 = vld [vmem:[%s2 + $0x750] sm:$0xff]
  %v781 = vld [vmem:[%s2 + $0x758] sm:$0xff]
  %v782 = vld [vmem:[%s2 + $0x760] sm:$0xff]
  %v783 = vld [vmem:[%s2 + $0x768] sm:$0xff]
  %v784 = vld [vmem:[%s2 + $0x770] sm:$0xff]
  %v785 = vld [vmem:[%s2 + $0x778] sm:$0xff]
  %v786 = vld [vmem:[%s2 + $0x780] sm:$0xff]
  %v787 = vld [vmem:[%s2 + $0x788] sm:$0xff]
  %v788 = vld [vmem:[%s2 + $0x790] sm:$0xff]
  %v789 = vld [vmem:[%s2 + $0x798] sm:$0xff]
  %v790 = vld [vmem:[%s2 + $0x7a0] sm:$0xff]
  %v791 = vld [vmem:[%s2 + $0x7a8] sm:$0xff]
  %v792 = vld [vmem:[%s2 + $0x7b0] sm:$0xff]
  %v793 = vld [vmem:[%s2 + $0x7b8] sm:$0xff]
  %v794 = vld [vmem:[%s2 + $0x7c0] sm:$0xff]
  %v795 = vld [vmem:[%s2 + $0x7c8] sm:$0xff]
  %v796 = vld [vmem:[%s2 + $0x7d0] sm:$0xff]
  %v797 = vld [vmem:[%s2 + $0x7d8] sm:$0xff]
  %v798 = vld [vmem:[%s2 + $0x7e0] sm:$0xff]
  %v799 = vld [vmem:[%s2 + $0x7e8] sm:$0xff]
  %v800 = vld [vmem:[%s2 + $0x7f0] sm:$0xff]
  %v801 = vld [vmem:[%s2 + $0x7f8] sm:$0xff]
  %v802 = vld [vmem:[%s2 + $0x800] sm:$0xff]
  %v803 = vld [vmem:[%s2 + $0x808] sm:$0xff]
  %v804 = vld [vmem:[%s2 + $0x810] sm:$0xff]
  %v805 = vld [vmem:[%s2 + $0x818] sm:$0xff]
  %v806 = vld [vmem:[%s2 + $0x820] sm:$0xff]
  %v807 = vld [vmem:[%s2 + $0x828] sm:$0xff]
  %v808 = vld [vmem:[%s2 + $0x830] sm:$0xff]
  %v809 = vld [vmem:[%s2 + $0x838] sm:$0xff]
  %v810 = vld [vmem:[%s2 + $0x840] sm:$0xff]
  %v811 = vld [vmem:[%s2 + $0x848] sm:$0xff]
  %v812 = vld [vmem:[%s2 + $0x850] sm:$0xff]
  %v813 = vld [vmem:[%s2 + $0x858] sm:$0xff]
  %v814 = vld [vmem:[%s2 + $0x860] sm:$0xff]
  %v815 = vld [vmem:[%s2 + $0x868] sm:$0xff]
  %v816 = vld [vmem:[%s2 + $0x870] sm:$0xff]
  %v817 = vld [vmem:[%s2 + $0x878] sm:$0xff]
  %v818 = vld [vmem:[%s2 + $0x880] sm:$0xff]
  %v819 = vld [vmem:[%s2 + $0x888] sm:$0xff]
  %v820 = vld [vmem:[%s2 + $0x890] sm:$0xff]
  %v821 = vld [vmem:[%s2 + $0x898] sm:$0xff]
  %v822 = vld [vmem:[%s2 + $0x8a0] sm:$0xff]
  %v823 = vld [vmem:[%s2 + $0x8a8] sm:$0xff]
  %v824 = vld [vmem:[%s2 + $0x8b0] sm:$0xff]
  %v825 = vld [vmem:[%s2 + $0x8b8] sm:$0xff]
  %v826 = vld [vmem:[%s2 + $0x8c0] sm:$0xff]
  %v827 = vld [vmem:[%s2 + $0x8c8] sm:$0xff]
  %v828 = vld [vmem:[%s2 + $0x8d0] sm:$0xff]
  %v829 = vld [vmem:[%s2 + $0x8d8] sm:$0xff]
  %v830 = vld [vmem:[%s2 + $0x8e0] sm:$0xff]
  %v831 = vld [vmem:[%s2 + $0x8e8] sm:$0xff]
  %v832 = vld [vmem:[%s2 + $0x8f0] sm:$0xff]
  %v833 = vld [vmem:[%s2 + $0x8f8] sm:$0xff]
  %v834 = vld [vmem:[%s2 + $0x900] sm:$0xff]
  %v835 = vld [vmem:[%s2 + $0x908] sm:$0xff]
  %v836 = vld [vmem:[%s2 + $0x910] sm:$0xff]
  %v837 = vld [vmem:[%s2 + $0x918] sm:$0xff]
  %v838 = vld [vmem:[%s2 + $0x920] sm:$0xff]
  %v839 = vld [vmem:[%s2 + $0x928] sm:$0xff]
  %v840 = vld [vmem:[%s2 + $0x930] sm:$0xff]
  %v841 = vld [vmem:[%s2 + $0x938] sm:$0xff]
  %v842 = vld [vmem:[%s2 + $0x940] sm:$0xff]
  %v843 = vld [vmem:[%s2 + $0x948] sm:$0xff]
  %v844 = vld [vmem:[%s2 + $0x950] sm:$0xff]
  %v845 = vld [vmem:[%s2 + $0x958] sm:$0xff]
  %v846 = vld [vmem:[%s2 + $0x960] sm:$0xff]
  %v847 = vld [vmem:[%s2 + $0x968] sm:$0xff]
  %v848 = vld [vmem:[%s2 + $0x970] sm:$0xff]
  %v849 = vld [vmem:[%s2 + $0x978] sm:$0xff]
  %v850 = vld [vmem:[%s2 + $0x980] sm:$0xff]
  %v851 = vld [vmem:[%s2 + $0x988] sm:$0xff]
  %v852 = vld [vmem:[%s2 + $0x990] sm:$0xff]
  %v853 = vld [vmem:[%s2 + $0x998] sm:$0xff]
  %v854 = vld [vmem:[%s2 + $0x9a0] sm:$0xff]
  %v855 = vld [vmem:[%s2 + $0x9a8] sm:$0xff]
  %v856 = vld [vmem:[%s2 + $0x9b0] sm:$0xff]
  %v857 = vld [vmem:[%s2 + $0x9b8] sm:$0xff]
  %v858 = vld [vmem:[%s2 + $0x9c0] sm:$0xff]
  %v859 = vld [vmem:[%s2 + $0x9c8] sm:$0xff]
  %v860 = vld [vmem:[%s2 + $0x9d0] sm:$0xff]
  %v861 = vld [vmem:[%s2 + $0x9d8] sm:$0xff]
  %v862 = vld [vmem:[%s2 + $0x9e0] sm:$0xff]
  %v863 = vld [vmem:[%s2 + $0x9e8] sm:$0xff]
  %v864 = vld [vmem:[%s2 + $0x9f0] sm:$0xff]
  %v865 = vld [vmem:[%s2 + $0x9f8] sm:$0xff]
  %v866 = vld [vmem:[%s2 + $0xa00] sm:$0xff]
  %v867 = vld [vmem:[%s2 + $0xa08] sm:$0xff]
  %v868 = vld [vmem:[%s2 + $0xa10] sm:$0xff]
  %v869 = vld [vmem:[%s2 + $0xa18] sm:$0xff]
  %v870 = vld [vmem:[%s2 + $0xa20] sm:$0xff]
  %v871 = vld [vmem:[%s2 + $0xa28] sm:$0xff]
  %v872 = vld [vmem:[%s2 + $0xa30] sm:$0xff]
  %v873 = vld [vmem:[%s2 + $0xa38] sm:$0xff]
  %v874 = vld [vmem:[%s2 + $0xa40] sm:$0xff]
  %v875 = vld [vmem:[%s2 + $0xa48] sm:$0xff]
  %v876 = vld [vmem:[%s2 + $0xa50] sm:$0xff]
  %v877 = vld [vmem:[%s2 + $0xa58] sm:$0xff]
  %v878 = vld [vmem:[%s2 + $0xa60] sm:$0xff]
  %v879 = vld [vmem:[%s2 + $0xa68] sm:$0xff]
  %v880 = vld [vmem:[%s2 + $0xa70] sm:$0xff]
  %v881 = vld [vmem:[%s2 + $0xa78] sm:$0xff]
  %v882 = vld [vmem:[%s2 + $0xa80] sm:$0xff]
  %v883 = vld [vmem:[%s2 + $0xa88] sm:$0xff]
  %v884 = vld [vmem:[%s2 + $0xa90] sm:$0xff]
  %v885 = vld [vmem:[%s2 + $0xa98] sm:$0xff]
  %v886 = vld [vmem:[%s2 + $0xaa0] sm:$0xff]
  %v887 = vld [vmem:[%s2 + $0xaa8] sm:$0xff]
  %v888 = vld [vmem:[%s2 + $0xab0] sm:$0xff]
  %v889 = vld [vmem:[%s2 + $0xab8] sm:$0xff]
  %v890 = vld [vmem:[%s2 + $0xac0] sm:$0xff]
  %v891 = vld [vmem:[%s2 + $0xac8] sm:$0xff]
  %v892 = vld [vmem:[%s2 + $0xad0] sm:$0xff]
  %v893 = vld [vmem:[%s2 + $0xad8] sm:$0xff]
  %v894 = vld [vmem:[%s2 + $0xae0] sm:$0xff]
  %v895 = vld [vmem:[%s2 + $0xae8] sm:$0xff]
  %v896 = vld [vmem:[%s2 + $0xaf0] sm:$0xff]
  %v897 = vld [vmem:[%s2 + $0xaf8] sm:$0xff]
  %v898 = vld [vmem:[%s2 + $0xb00] sm:$0xff]
  %v899 = vld [vmem:[%s2 + $0xb08] sm:$0xff]
  %v900 = vld [vmem:[%s2 + $0xb10] sm:$0xff]
  %v901 = vld [vmem:[%s2 + $0xb18] sm:$0xff]
  %v902 = vld [vmem:[%s2 + $0xb20] sm:$0xff]
  %v903 = vld [vmem:[%s2 + $0xb28] sm:$0xff]
  %v904 = vld [vmem:[%s2 + $0xb30] sm:$0xff]
  %v905 = vld [vmem:[%s2 + $0xb38] sm:$0xff]
  %v906 = vld [vmem:[%s2 + $0xb40] sm:$0xff]
  %v907 = vld [vmem:[%s2 + $0xb48] sm:$0xff]
  %v908 = vld [vmem:[%s2 + $0xb50] sm:$0xff]
  %v909 = vld [vmem:[%s2 + $0xb58] sm:$0xff]
  %v910 = vld [vmem:[%s2 + $0xb60] sm:$0xff]
  %v911 = vld [vmem:[%s2 + $0xb68] sm:$0xff]
  %v912 = vld [vmem:[%s2 + $0xb70] sm:$0xff]
  %v913 = vld [vmem:[%s2 + $0xb78] sm:$0xff]
  %v914 = vld [vmem:[%s2 + $0xb80] sm:$0xff]
  %v915 = vld [vmem:[%s2 + $0xb88] sm:$0xff]
  %v916 = vld [vmem:[%s2 + $0xb90] sm:$0xff]
  %v917 = vld [vmem:[%s2 + $0xb98] sm:$0xff]
  %v918 = vld [vmem:[%s2 + $0xba0] sm:$0xff]
  %v919 = vld [vmem:[%s2 + $0xba8] sm:$0xff]
  %v920 = vld [vmem:[%s2 + $0xbb0] sm:$0xff]
  %v921 = vld [vmem:[%s2 + $0xbb8] sm:$0xff]
  %v922 = vld [vmem:[%s2 + $0xbc0] sm:$0xff]
  %v923 = vld [vmem:[%s2 + $0xbc8] sm:$0xff]
  %v924 = vld [vmem:[%s2 + $0xbd0] sm:$0xff]
  %v925 = vld [vmem:[%s2 + $0xbd8] sm:$0xff]
  %v926 = vld [vmem:[%s2 + $0xbe0] sm:$0xff]
  %v927 = vld [vmem:[%s2 + $0xbe8] sm:$0xff]
  %v928 = vld [vmem:[%s2 + $0xbf0] sm:$0xff]
  %v929 = vld [vmem:[%s2 + $0xbf8] sm:$0xff]
  %v930 = vld [vmem:[%s2 + $0xc00] sm:$0xff]
  %v931 = vld [vmem:[%s2 + $0xc08] sm:$0xff]
  %v932 = vld [vmem:[%s2 + $0xc10] sm:$0xff]
  %v933 = vld [vmem:[%s2 + $0xc18] sm:$0xff]
  %v934 = vld [vmem:[%s2 + $0xc20] sm:$0xff]
  %v935 = vld [vmem:[%s2 + $0xc28] sm:$0xff]
  %v936 = vld [vmem:[%s2 + $0xc30] sm:$0xff]
  %v937 = vld [vmem:[%s2 + $0xc38] sm:$0xff]
  %v938 = vld [vmem:[%s2 + $0xc40] sm:$0xff]
  %v939 = vld [vmem:[%s2 + $0xc48] sm:$0xff]
  %v940 = vld [vmem:[%s2 + $0xc50] sm:$0xff]
  %v941 = vld [vmem:[%s2 + $0xc58] sm:$0xff]
  %v942 = vld [vmem:[%s2 + $0xc60] sm:$0xff]
  %v943 = vld [vmem:[%s2 + $0xc68] sm:$0xff]
  %v944 = vld [vmem:[%s2 + $0xc70] sm:$0xff]
  %v945 = vld [vmem:[%s2 + $0xc78] sm:$0xff]
  %v946 = vld [vmem:[%s2 + $0xc80] sm:$0xff]
  %v947 = vld [vmem:[%s2 + $0xc88] sm:$0xff]
  %v948 = vld [vmem:[%s2 + $0xc90] sm:$0xff]
  %v949 = vld [vmem:[%s2 + $0xc98] sm:$0xff]
  %v950 = vld [vmem:[%s2 + $0xca0] sm:$0xff]
  %v951 = vld [vmem:[%s2 + $0xca8] sm:$0xff]
  %v952 = vld [vmem:[%s2 + $0xcb0] sm:$0xff]
  %v953 = vld [vmem:[%s2 + $0xcb8] sm:$0xff]
  %v954 = vld [vmem:[%s2 + $0xcc0] sm:$0xff]
  %v955 = vld [vmem:[%s2 + $0xcc8] sm:$0xff]
  %v956 = vld [vmem:[%s2 + $0xcd0] sm:$0xff]
  %v957 = vld [vmem:[%s2 + $0xcd8] sm:$0xff]
  %v958 = vld [vmem:[%s2 + $0xce0] sm:$0xff]
  %v959 = vld [vmem:[%s2 + $0xce8] sm:$0xff]
  %v960 = vld [vmem:[%s2 + $0xcf0] sm:$0xff]
  %v961 = vld [vmem:[%s2 + $0xcf8] sm:$0xff]
  %v962 = vld [vmem:[%s2 + $0xd00] sm:$0xff]
  %v963 = vld [vmem:[%s2 + $0xd08] sm:$0xff]
  %v964 = vld [vmem:[%s2 + $0xd10] sm:$0xff]
  %v965 = vld [vmem:[%s2 + $0xd18] sm:$0xff]
  %v966 = vld [vmem:[%s2 + $0xd20] sm:$0xff]
  %v967 = vld [vmem:[%s2 + $0xd28] sm:$0xff]
  %v968 = vld [vmem:[%s2 + $0xd30] sm:$0xff]
  %v969 = vld [vmem:[%s2 + $0xd38] sm:$0xff]
  %v970 = vld [vmem:[%s2 + $0xd40] sm:$0xff]
  %v971 = vld [vmem:[%s2 + $0xd48] sm:$0xff]
  %v972 = vld [vmem:[%s2 + $0xd50] sm:$0xff]
  %v973 = vld [vmem:[%s2 + $0xd58] sm:$0xff]
  %v974 = vld [vmem:[%s2 + $0xd60] sm:$0xff]
  %v975 = vld [vmem:[%s2 + $0xd68] sm:$0xff]
  %v976 = vld [vmem:[%s2 + $0xd70] sm:$0xff]
  %v977 = vld [vmem:[%s2 + $0xd78] sm:$0xff]
  %v978 = vld [vmem:[%s2 + $0xd80] sm:$0xff]
  %v979 = vld [vmem:[%s2 + $0xd88] sm:$0xff]
  %v980 = vld [vmem:[%s2 + $0xd90] sm:$0xff]
  %v981 = vld [vmem:[%s2 + $0xd98] sm:$0xff]
  %v982 = vld [vmem:[%s2 + $0xda0] sm:$0xff]
  %v983 = vld [vmem:[%s2 + $0xda8] sm:$0xff]
  %v984 = vld [vmem:[%s2 + $0xdb0] sm:$0xff]
  %v985 = vld [vmem:[%s2 + $0xdb8] sm:$0xff]
  %v986 = vld [vmem:[%s2 + $0xdc0] sm:$0xff]
  %v987 = vld [vmem:[%s2 + $0xdc8] sm:$0xff]
  %v988 = vld [vmem:[%s2 + $0xdd0] sm:$0xff]
  %v989 = vld [vmem:[%s2 + $0xdd8] sm:$0xff]
  %v990 = vld [vmem:[%s2 + $0xde0] sm:$0xff]
  %v991 = vld [vmem:[%s2 + $0xde8] sm:$0xff]
  %v992 = vld [vmem:[%s2 + $0xdf0] sm:$0xff]
  %v993 = vld [vmem:[%s2 + $0xdf8] sm:$0xff]
  %v994 = vld [vmem:[%s2 + $0xe00] sm:$0xff]
  %v995 = vld [vmem:[%s2 + $0xe08] sm:$0xff]
  %v996 = vld [vmem:[%s2 + $0xe10] sm:$0xff]
  %v997 = vld [vmem:[%s2 + $0xe18] sm:$0xff]
  %v998 = vld [vmem:[%s2 + $0xe20] sm:$0xff]
  %v999 = vld [vmem:[%s2 + $0xe28] sm:$0xff]
  %v1000 = vld [vmem:[%s2 + $0xe30] sm:$0xff]
  %v1001 = vld [vmem:[%s2 + $0xe38] sm:$0xff]
  %v1002 = vld [vmem:[%s2 + $0xe40] sm:$0xff]
  %v1003 = vld [vmem:[%s2 + $0xe48] sm:$0xff]
  %v1004 = vld [vmem:[%s2 + $0xe50] sm:$0xff]
  %v1005 = vld [vmem:[%s2 + $0xe58] sm:$0xff]
  %v1006 = vld [vmem:[%s2 + $0xe60] sm:$0xff]
  %v1007 = vld [vmem:[%s2 + $0xe68] sm:$0xff]
  %v1008 = vld [vmem:[%s2 + $0xe70] sm:$0xff]
  %v1009 = vld [vmem:[%s2 + $0xe78] sm:$0xff]
  %v1010 = vld [vmem:[%s2 + $0xe80] sm:$0xff]
  %v1011 = vld [vmem:[%s2 + $0xe88] sm:$0xff]
  %v1012 = vld [vmem:[%s2 + $0xe90] sm:$0xff]
  %v1013 = vld [vmem:[%s2 + $0xe98] sm:$0xff]
  %v1014 = vld [vmem:[%s2 + $0xea0] sm:$0xff]
  %v1015 = vld [vmem:[%s2 + $0xea8] sm:$0xff]
  %v1016 = vld [vmem:[%s2 + $0xeb0] sm:$0xff]
  %v1017 = vld [vmem:[%s2 + $0xeb8] sm:$0xff]
  %v1018 = vld [vmem:[%s2 + $0xec0] sm:$0xff]
  %v1019 = vld [vmem:[%s2 + $0xec8] sm:$0xff]
  %v1020 = vld [vmem:[%s2 + $0xed0] sm:$0xff]
  %v1021 = vld [vmem:[%s2 + $0xed8] sm:$0xff]
  %v1022 = vld [vmem:[%s2 + $0xee0] sm:$0xff]
  %v1023 = vld [vmem:[%s2 + $0xee8] sm:$0xff]
  %v1024 = vld [vmem:[%s2 + $0xef0] sm:$0xff]
  %v1025 = vld [vmem:[%s2 + $0xef8] sm:$0xff]
  %v1026 = vld [vmem:[%s2 + $0xf00] sm:$0xff]
  %v1027 = vld [vmem:[%s2 + $0xf08] sm:$0xff]
  %v1028 = vld [vmem:[%s2 + $0xf10] sm:$0xff]
  %v1029 = vld [vmem:[%s2 + $0xf18] sm:$0xff]
  %v1030 = vld [vmem:[%s2 + $0xf20] sm:$0xff]
  %v1031 = vld [vmem:[%s2 + $0xf28] sm:$0xff]
  %v1032 = vld [vmem:[%s2 + $0xf30] sm:$0xff]
  %v1033 = vld [vmem:[%s2 + $0xf38] sm:$0xff]
  %v1034 = vld [vmem:[%s2 + $0xf40] sm:$0xff]
  %v1035 = vld [vmem:[%s2 + $0xf48] sm:$0xff]
  %v1036 = vld [vmem:[%s2 + $0xf50] sm:$0xff]
  %v1037 = vld [vmem:[%s2 + $0xf58] sm:$0xff]
  %v1038 = vld [vmem:[%s2 + $0xf60] sm:$0xff]
  %v1039 = vld [vmem:[%s2 + $0xf68] sm:$0xff]
  %v1040 = vld [vmem:[%s2 + $0xf70] sm:$0xff]
  %v1041 = vld [vmem:[%s2 + $0xf78] sm:$0xff]
  %v1042 = vld [vmem:[%s2 + $0xf80] sm:$0xff]
  %v1043 = vld [vmem:[%s2 + $0xf88] sm:$0xff]
  %v1044 = vld [vmem:[%s2 + $0xf90] sm:$0xff]
  %v1045 = vld [vmem:[%s2 + $0xf98] sm:$0xff]
  %v1046 = vld [vmem:[%s2 + $0xfa0] sm:$0xff]
  %v1047 = vld [vmem:[%s2 + $0xfa8] sm:$0xff]
  %v1048 = vld [vmem:[%s2 + $0xfb0] sm:$0xff]
  %v1049 = vld [vmem:[%s2 + $0xfb8] sm:$0xff]
  %v1050 = vld [vmem:[%s2 + $0xfc0] sm:$0xff]
  %v1051 = vld [vmem:[%s2 + $0xfc8] sm:$0xff]
  %v1052 = vld [vmem:[%s2 + $0xfd0] sm:$0xff]
  %v1053 = vld [vmem:[%s2 + $0xfd8] sm:$0xff]
  %v1054 = vld [vmem:[%s2 + $0xfe0] sm:$0xff]
  %v1055 = vld [vmem:[%s2 + $0xfe8] sm:$0xff]
  %v1056 = vld [vmem:[%s2 + $0xff0] sm:$0xff]
  %v1057 = vld [vmem:[%s2 + $0xff8] sm:$0xff]
  %v1058 = vld [vmem:[%s2 + $0x1000] sm:$0xff]
  %v1059 = vld [vmem:[%s2 + $0x1008] sm:$0xff]
  %v1060 = vld [vmem:[%s2 + $0x1010] sm:$0xff]
  %v1061 = vld [vmem:[%s2 + $0x1018] sm:$0xff]
  %v1062 = vld [vmem:[%s2 + $0x1020] sm:$0xff]
  %v1063 = vld [vmem:[%s2 + $0x1028] sm:$0xff]
  %v1064 = vld [vmem:[%s2 + $0x1030] sm:$0xff]
  %v1065 = vld [vmem:[%s2 + $0x1038] sm:$0xff]
  %v1066 = vld [vmem:[%s2 + $0x1040] sm:$0xff]
  %v1067 = vld [vmem:[%s2 + $0x1048] sm:$0xff]
  %v1068 = vld [vmem:[%s2 + $0x1050] sm:$0xff]
  %v1069 = vld [vmem:[%s2 + $0x1058] sm:$0xff]
  %v1070 = vld [vmem:[%s2 + $0x1060] sm:$0xff]
  %v1071 = vld [vmem:[%s2 + $0x1068] sm:$0xff]
  %v1072 = vld [vmem:[%s2 + $0x1070] sm:$0xff]
  %v1073 = vld [vmem:[%s2 + $0x1078] sm:$0xff]
  %v1074 = vld [vmem:[%s2 + $0x1080] sm:$0xff]
  %v1075 = vld [vmem:[%s2 + $0x1088] sm:$0xff]
  %v1076 = vld [vmem:[%s2 + $0x1090] sm:$0xff]
  %v1077 = vld [vmem:[%s2 + $0x1098] sm:$0xff]
  %v1078 = vld [vmem:[%s2 + $0x10a0] sm:$0xff]
  %v1079 = vld [vmem:[%s2 + $0x10a8] sm:$0xff]
  %v1080 = vld [vmem:[%s2 + $0x10b0] sm:$0xff]
  %v1081 = vld [vmem:[%s2 + $0x10b8] sm:$0xff]
  %v1082 = vld [vmem:[%s2 + $0x10c0] sm:$0xff]
  %v1083 = vld [vmem:[%s2 + $0x10c8] sm:$0xff]
  %v1084 = vld [vmem:[%s2 + $0x10d0] sm:$0xff]
  %v1085 = vld [vmem:[%s2 + $0x10d8] sm:$0xff]
  %v1086 = vld [vmem:[%s2 + $0x10e0] sm:$0xff]
  %v1087 = vld [vmem:[%s2 + $0x10e8] sm:$0xff]
  %v1088 = vld [vmem:[%s2 + $0x10f0] sm:$0xff]
  %v1089 = vld [vmem:[%s2 + $0x10f8] sm:$0xff]
  %v1090 = vld [vmem:[%s2 + $0x1100] sm:$0xff]
  %v1091 = vld [vmem:[%s2 + $0x1108] sm:$0xff]
  %v1092 = vld [vmem:[%s2 + $0x1110] sm:$0xff]
  %v1093 = vld [vmem:[%s2 + $0x1118] sm:$0xff]
  %v1094 = vld [vmem:[%s2 + $0x1120] sm:$0xff]
  %v1095 = vld [vmem:[%s2 + $0x1128] sm:$0xff]
  %v1096 = vld [vmem:[%s2 + $0x1130] sm:$0xff]
  %v1097 = vld [vmem:[%s2 + $0x1138] sm:$0xff]
  %v1098 = vld [vmem:[%s2 + $0x1140] sm:$0xff]
  %v1099 = vld [vmem:[%s2 + $0x1148] sm:$0xff]
  %v1100 = vld [vmem:[%s2 + $0x1150] sm:$0xff]
  %v1101 = vld [vmem:[%s2 + $0x1158] sm:$0xff]
  %v1102 = vld [vmem:[%s2 + $0x1160] sm:$0xff]
  %v1103 = vld [vmem:[%s2 + $0x1168] sm:$0xff]
  %v1104 = vld [vmem:[%s2 + $0x1170] sm:$0xff]
  %v1105 = vld [vmem:[%s2 + $0x1178] sm:$0xff]
  %v1106 = vld [vmem:[%s2 + $0x1180] sm:$0xff]
  %v1107 = vld [vmem:[%s2 + $0x1188] sm:$0xff]
  %v1108 = vld [vmem:[%s2 + $0x1190] sm:$0xff]
  %v1109 = vld [vmem:[%s2 + $0x1198] sm:$0xff]
  %v1110 = vld [vmem:[%s2 + $0x11a0] sm:$0xff]
  %v1111 = vld [vmem:[%s2 + $0x11a8] sm:$0xff]
  %v1112 = vld [vmem:[%s2 + $0x11b0] sm:$0xff]
  %v1113 = vld [vmem:[%s2 + $0x11b8] sm:$0xff]
  %v1114 = vld [vmem:[%s2 + $0x11c0] sm:$0xff]
  %v1115 = vld [vmem:[%s2 + $0x11c8] sm:$0xff]
  %v1116 = vld [vmem:[%s2 + $0x11d0] sm:$0xff]
  %v1117 = vld [vmem:[%s2 + $0x11d8] sm:$0xff]
  %v1118 = vld [vmem:[%s2 + $0x11e0] sm:$0xff]
  %v1119 = vld [vmem:[%s2 + $0x11e8] sm:$0xff]
  %v1120 = vld [vmem:[%s2 + $0x11f0] sm:$0xff]
  %v1121 = vld [vmem:[%s2 + $0x11f8] sm:$0xff]
  %v1122 = vld [vmem:[%s2 + $0x1200] sm:$0xff]
  %v1123 = vld [vmem:[%s2 + $0x1208] sm:$0xff]
  %v1124 = vld [vmem:[%s2 + $0x1210] sm:$0xff]
  %v1125 = vld [vmem:[%s2 + $0x1218] sm:$0xff]
  %v1126 = vld [vmem:[%s2 + $0x1220] sm:$0xff]
  %v1127 = vld [vmem:[%s2 + $0x1228] sm:$0xff]
  %v1128 = vld [vmem:[%s2 + $0x1230] sm:$0xff]
  %v1129 = vld [vmem:[%s2 + $0x1238] sm:$0xff]
  %v1130 = vld [vmem:[%s2 + $0x1240] sm:$0xff]
  %v1131 = vld [vmem:[%s2 + $0x1248] sm:$0xff]
  %v1132 = vld [vmem:[%s2 + $0x1250] sm:$0xff]
  %v1133 = vld [vmem:[%s2 + $0x1258] sm:$0xff]
  %v1134 = vld [vmem:[%s2 + $0x1260] sm:$0xff]
  %v1135 = vld [vmem:[%s2 + $0x1268] sm:$0xff]
  %v1136 = vld [vmem:[%s2 + $0x1270] sm:$0xff]
  %v1137 = vld [vmem:[%s2 + $0x1278] sm:$0xff]
  %v1138 = vld [vmem:[%s2 + $0x1280] sm:$0xff]
  %v1139 = vld [vmem:[%s2 + $0x1288] sm:$0xff]
  %v1140 = vld [vmem:[%s2 + $0x1290] sm:$0xff]
  %v1141 = vld [vmem:[%s2 + $0x1298] sm:$0xff]
  %v1142 = vld [vmem:[%s2 + $0x12a0] sm:$0xff]
  %v1143 = vld [vmem:[%s2 + $0x12a8] sm:$0xff]
  %v1144 = vld [vmem:[%s2 + $0x12b0] sm:$0xff]
  %v1145 = vld [vmem:[%s2 + $0x12b8] sm:$0xff]
  %v1146 = vld [vmem:[%s2 + $0x12c0] sm:$0xff]
  %v1147 = vld [vmem:[%s2 + $0x12c8] sm:$0xff]
  %v1148 = vld [vmem:[%s2 + $0x12d0] sm:$0xff]
  %v1149 = vld [vmem:[%s2 + $0x12d8] sm:$0xff]
  %v1150 = vld [vmem:[%s2 + $0x12e0] sm:$0xff]
  %v1151 = vld [vmem:[%s2 + $0x12e8] sm:$0xff]
  %v1152 = vld [vmem:[%s2 + $0x12f0] sm:$0xff]
  %v1153 = vld [vmem:[%s2 + $0x12f8] sm:$0xff]
  %v1154 = vld [vmem:[%s2 + $0x1300] sm:$0xff]
  %v1155 = vld [vmem:[%s2 + $0x1308] sm:$0xff]
  %v1156 = vld [vmem:[%s2 + $0x1310] sm:$0xff]
  %v1157 = vld [vmem:[%s2 + $0x1318] sm:$0xff]
  %v1158 = vld [vmem:[%s2 + $0x1320] sm:$0xff]
  %v1159 = vld [vmem:[%s2 + $0x1328] sm:$0xff]
  %v1160 = vld [vmem:[%s2 + $0x1330] sm:$0xff]
  %v1161 = vld [vmem:[%s2 + $0x1338] sm:$0xff]
  %v1162 = vld [vmem:[%s2 + $0x1340] sm:$0xff]
  %v1163 = vld [vmem:[%s2 + $0x1348] sm:$0xff]
  %v1164 = vld [vmem:[%s2 + $0x1350] sm:$0xff]
  %v1165 = vld [vmem:[%s2 + $0x1358] sm:$0xff]
  %v1166 = vld [vmem:[%s2 + $0x1360] sm:$0xff]
  %v1167 = vld [vmem:[%s2 + $0x1368] sm:$0xff]
  %v1168 = vld [vmem:[%s2 + $0x1370] sm:$0xff]
  %v1169 = vld [vmem:[%s2 + $0x1378] sm:$0xff]
  %v1170 = vld [vmem:[%s2 + $0x1380] sm:$0xff]
  %v1171 = vld [vmem:[%s2 + $0x1388] sm:$0xff]
  %v1172 = vld [vmem:[%s2 + $0x1390] sm:$0xff]
  %v1173 = vld [vmem:[%s2 + $0x1398] sm:$0xff]
  %v1174 = vld [vmem:[%s2 + $0x13a0] sm:$0xff]
  %v1175 = vld [vmem:[%s2 + $0x13a8] sm:$0xff]
  %v1176 = vld [vmem:[%s2 + $0x13b0] sm:$0xff]
  %v1177 = vld [vmem:[%s2 + $0x13b8] sm:$0xff]
  %v1178 = vld [vmem:[%s2 + $0x13c0] sm:$0xff]
  %v1179 = vld [vmem:[%s2 + $0x13c8] sm:$0xff]
  %v1180 = vld [vmem:[%s2 + $0x13d0] sm:$0xff]
  %v1181 = vld [vmem:[%s2 + $0x13d8] sm:$0xff]
  %v1182 = vld [vmem:[%s2 + $0x13e0] sm:$0xff]
  %v1183 = vld [vmem:[%s2 + $0x13e8] sm:$0xff]
  %v1184 = vld [vmem:[%s2 + $0x13f0] sm:$0xff]
  %v1185 = vld [vmem:[%s2 + $0x13f8] sm:$0xff]
  %v1186 = vld [vmem:[%s2 + $0x1400] sm:$0xff]
  %v1187 = vld [vmem:[%s2 + $0x1408] sm:$0xff]
  %v1188 = vld [vmem:[%s2 + $0x1410] sm:$0xff]
  %v1189 = vld [vmem:[%s2 + $0x1418] sm:$0xff]
  %v1190 = vld [vmem:[%s2 + $0x1420] sm:$0xff]
  %v1191 = vld [vmem:[%s2 + $0x1428] sm:$0xff]
  %v1192 = vld [vmem:[%s2 + $0x1430] sm:$0xff]
  %v1193 = vld [vmem:[%s2 + $0x1438] sm:$0xff]
  %v1194 = vld [vmem:[%s2 + $0x1440] sm:$0xff]
  %v1195 = vld [vmem:[%s2 + $0x1448] sm:$0xff]
  %v1196 = vld [vmem:[%s2 + $0x1450] sm:$0xff]
  %v1197 = vld [vmem:[%s2 + $0x1458] sm:$0xff]
  %v1198 = vld [vmem:[%s2 + $0x1460] sm:$0xff]
  %v1199 = vld [vmem:[%s2 + $0x1468] sm:$0xff]
  %v1200 = vld [vmem:[%s2 + $0x1470] sm:$0xff]
  %v1201 = vld [vmem:[%s2 + $0x1478] sm:$0xff]
  %v1202 = vld [vmem:[%s2 + $0x1480] sm:$0xff]
  %v1203 = vld [vmem:[%s2 + $0x1488] sm:$0xff]
  %v1204 = vld [vmem:[%s2 + $0x1490] sm:$0xff]
  %v1205 = vld [vmem:[%s2 + $0x1498] sm:$0xff]
  %v1206 = vld [vmem:[%s2 + $0x14a0] sm:$0xff]
  %v1207 = vld [vmem:[%s2 + $0x14a8] sm:$0xff]
  %v1208 = vld [vmem:[%s2 + $0x14b0] sm:$0xff]
  %v1209 = vld [vmem:[%s2 + $0x14b8] sm:$0xff]
  %v1210 = vld [vmem:[%s2 + $0x14c0] sm:$0xff]
  %v1211 = vld [vmem:[%s2 + $0x14c8] sm:$0xff]
  %v1212 = vld [vmem:[%s2 + $0x14d0] sm:$0xff]
  %v1213 = vld [vmem:[%s2 + $0x14d8] sm:$0xff]
  %v1214 = vld [vmem:[%s2 + $0x14e0] sm:$0xff]
  %v1215 = vld [vmem:[%s2 + $0x14e8] sm:$0xff]
  %v1216 = vld [vmem:[%s2 + $0x14f0] sm:$0xff]
  %v1217 = vld [vmem:[%s2 + $0x14f8] sm:$0xff]
  %v1218 = vld [vmem:[%s2 + $0x1500] sm:$0xff]
  %v1219 = vld [vmem:[%s2 + $0x1508] sm:$0xff]
  %v1220 = vld [vmem:[%s2 + $0x1510] sm:$0xff]
  %v1221 = vld [vmem:[%s2 + $0x1518] sm:$0xff]
  %v1222 = vld [vmem:[%s2 + $0x1520] sm:$0xff]
  %v1223 = vld [vmem:[%s2 + $0x1528] sm:$0xff]
  %v1224 = vld [vmem:[%s2 + $0x1530] sm:$0xff]
  %v1225 = vld [vmem:[%s2 + $0x1538] sm:$0xff]
  %v1226 = vld [vmem:[%s2 + $0x1540] sm:$0xff]
  %v1227 = vld [vmem:[%s2 + $0x1548] sm:$0xff]
  %v1228 = vld [vmem:[%s2 + $0x1550] sm:$0xff]
  %v1229 = vld [vmem:[%s2 + $0x1558] sm:$0xff]
  %v1230 = vld [vmem:[%s2 + $0x1560] sm:$0xff]
  %v1231 = vld [vmem:[%s2 + $0x1568] sm:$0xff]
  %v1232 = vld [vmem:[%s2 + $0x1570] sm:$0xff]
  %v1233 = vld [vmem:[%s2 + $0x1578] sm:$0xff]
  %v1234 = vld [vmem:[%s2 + $0x1580] sm:$0xff]
  %v1235 = vld [vmem:[%s2 + $0x1588] sm:$0xff]
  %v1236 = vld [vmem:[%s2 + $0x1590] sm:$0xff]
  %v1237 = vld [vmem:[%s2 + $0x1598] sm:$0xff]
  %v1238 = vld [vmem:[%s2 + $0x15a0] sm:$0xff]
  %v1239 = vld [vmem:[%s2 + $0x15a8] sm:$0xff]
  %v1240 = vld [vmem:[%s2 + $0x15b0] sm:$0xff]
  %v1241 = vld [vmem:[%s2 + $0x15b8] sm:$0xff]
  %v1242 = vld [vmem:[%s2 + $0x15c0] sm:$0xff]
  %v1243 = vld [vmem:[%s2 + $0x15c8] sm:$0xff]
  %v1244 = vld [vmem:[%s2 + $0x15d0] sm:$0xff]
  %v1245 = vld [vmem:[%s2 + $0x15d8] sm:$0xff]
  %v1246 = vld [vmem:[%s2 + $0x15e0] sm:$0xff]
  %v1247 = vld [vmem:[%s2 + $0x15e8] sm:$0xff]
  %v1248 = vld [vmem:[%s2 + $0x15f0] sm:$0xff]
  %v1249 = vld [vmem:[%s2 + $0x15f8] sm:$0xff]
  %v1250 = vld [vmem:[%s2 + $0x1600] sm:$0xff]
  %v1251 = vld [vmem:[%s2 + $0x1608] sm:$0xff]
  %v1252 = vld [vmem:[%s2 + $0x1610] sm:$0xff]
  %v1253 = vld [vmem:[%s2 + $0x1618] sm:$0xff]
  %v1254 = vld [vmem:[%s2 + $0x1620] sm:$0xff]
  %v1255 = vld [vmem:[%s2 + $0x1628] sm:$0xff]
  %v1256 = vld [vmem:[%s2 + $0x1630] sm:$0xff]
  %v1257 = vld [vmem:[%s2 + $0x1638] sm:$0xff]
  %v1258 = vld [vmem:[%s2 + $0x1640] sm:$0xff]
  %v1259 = vld [vmem:[%s2 + $0x1648] sm:$0xff]
  %v1260 = vld [vmem:[%s2 + $0x1650] sm:$0xff]
  %v1261 = vld [vmem:[%s2 + $0x1658] sm:$0xff]
  %v1262 = vld [vmem:[%s2 + $0x1660] sm:$0xff]
  %v1263 = vld [vmem:[%s2 + $0x1668] sm:$0xff]
  %v1264 = vld [vmem:[%s2 + $0x1670] sm:$0xff]
  %v1265 = vld [vmem:[%s2 + $0x1678] sm:$0xff]
  %v1266 = vld [vmem:[%s2 + $0x1680] sm:$0xff]
  %v1267 = vld [vmem:[%s2 + $0x1688] sm:$0xff]
  %v1268 = vld [vmem:[%s2 + $0x1690] sm:$0xff]
  %v1269 = vld [vmem:[%s2 + $0x1698] sm:$0xff]
  %v1270 = vld [vmem:[%s2 + $0x16a0] sm:$0xff]
  %v1271 = vld [vmem:[%s2 + $0x16a8] sm:$0xff]
  %v1272 = vld [vmem:[%s2 + $0x16b0] sm:$0xff]
  %v1273 = vld [vmem:[%s2 + $0x16b8] sm:$0xff]
  %v1274 = vld [vmem:[%s2 + $0x16c0] sm:$0xff]
  %v1275 = vld [vmem:[%s2 + $0x16c8] sm:$0xff]
  %v1276 = vld [vmem:[%s2 + $0x16d0] sm:$0xff]
  %v1277 = vld [vmem:[%s2 + $0x16d8] sm:$0xff]
  %v1278 = vld [vmem:[%s2 + $0x16e0] sm:$0xff]
  %v1279 = vld [vmem:[%s2 + $0x16e8] sm:$0xff]
  %v1280 = vld [vmem:[%s2 + $0x16f0] sm:$0xff]
  %v1281 = vld [vmem:[%s2 + $0x16f8] sm:$0xff]
  %v1282 = vld [vmem:[%s2 + $0x1700] sm:$0xff]
  %v1283 = vld [vmem:[%s2 + $0x1708] sm:$0xff]
  %v1284 = vld [vmem:[%s2 + $0x1710] sm:$0xff]
  %v1285 = vld [vmem:[%s2 + $0x1718] sm:$0xff]
  %v1286 = vld [vmem:[%s2 + $0x1720] sm:$0xff]
  %v1287 = vld [vmem:[%s2 + $0x1728] sm:$0xff]
  %v1288 = vld [vmem:[%s2 + $0x1730] sm:$0xff]
  %v1289 = vld [vmem:[%s2 + $0x1738] sm:$0xff]
  %v1290 = vld [vmem:[%s2 + $0x1740] sm:$0xff]
  %v1291 = vld [vmem:[%s2 + $0x1748] sm:$0xff]
  %v1292 = vld [vmem:[%s2 + $0x1750] sm:$0xff]
  %v1293 = vld [vmem:[%s2 + $0x1758] sm:$0xff]
  %v1294 = vld [vmem:[%s2 + $0x1760] sm:$0xff]
  %v1295 = vld [vmem:[%s2 + $0x1768] sm:$0xff]
  %v1296 = vld [vmem:[%s2 + $0x1770] sm:$0xff]
  %v1297 = vld [vmem:[%s2 + $0x1778] sm:$0xff]
  %v1298 = vld [vmem:[%s2 + $0x1780] sm:$0xff]
  %v1299 = vld [vmem:[%s2 + $0x1788] sm:$0xff]
  %v1300 = vld [vmem:[%s2 + $0x1790] sm:$0xff]
  %v1301 = vld [vmem:[%s2 + $0x1798] sm:$0xff]
  %v1302 = vld [vmem:[%s2 + $0x17a0] sm:$0xff]
  %v1303 = vld [vmem:[%s2 + $0x17a8] sm:$0xff]
  %v1304 = vld [vmem:[%s2 + $0x17b0] sm:$0xff]
  %v1305 = vld [vmem:[%s2 + $0x17b8] sm:$0xff]
  %v1306 = vld [vmem:[%s2 + $0x17c0] sm:$0xff]
  %v1307 = vld [vmem:[%s2 + $0x17c8] sm:$0xff]
  %v1308 = vld [vmem:[%s2 + $0x17d0] sm:$0xff]
  %v1309 = vld [vmem:[%s2 + $0x17d8] sm:$0xff]
  %v1310 = vld [vmem:[%s2 + $0x17e0] sm:$0xff]
  %v1311 = vld [vmem:[%s2 + $0x17e8] sm:$0xff]
  %v1312 = vld [vmem:[%s2 + $0x17f0] sm:$0xff]
  %v1313 = vld [vmem:[%s2 + $0x17f8] sm:$0xff]
  %v1314 = vld [vmem:[%s2 + $0x1800] sm:$0xff]
  %v1315 = vld [vmem:[%s2 + $0x1808] sm:$0xff]
  %v1316 = vld [vmem:[%s2 + $0x1810] sm:$0xff]
  %v1317 = vld [vmem:[%s2 + $0x1818] sm:$0xff]
  %v1318 = vld [vmem:[%s2 + $0x1820] sm:$0xff]
  %v1319 = vld [vmem:[%s2 + $0x1828] sm:$0xff]
  %v1320 = vld [vmem:[%s2 + $0x1830] sm:$0xff]
  %v1321 = vld [vmem:[%s2 + $0x1838] sm:$0xff]
  %v1322 = vld [vmem:[%s2 + $0x1840] sm:$0xff]
  %v1323 = vld [vmem:[%s2 + $0x1848] sm:$0xff]
  %v1324 = vld [vmem:[%s2 + $0x1850] sm:$0xff]
  %v1325 = vld [vmem:[%s2 + $0x1858] sm:$0xff]
  %v1326 = vld [vmem:[%s2 + $0x1860] sm:$0xff]
  %v1327 = vld [vmem:[%s2 + $0x1868] sm:$0xff]
  %v1328 = vld [vmem:[%s2 + $0x1870] sm:$0xff]
  %v1329 = vld [vmem:[%s2 + $0x1878] sm:$0xff]
  %v1330 = vld [vmem:[%s2 + $0x1880] sm:$0xff]
  %v1331 = vld [vmem:[%s2 + $0x1888] sm:$0xff]
  %v1332 = vld [vmem:[%s2 + $0x1890] sm:$0xff]
  %v1333 = vld [vmem:[%s2 + $0x1898] sm:$0xff]
  %v1334 = vld [vmem:[%s2 + $0x18a0] sm:$0xff]
  %v1335 = vld [vmem:[%s2 + $0x18a8] sm:$0xff]
  %v1336 = vld [vmem:[%s2 + $0x18b0] sm:$0xff]
  %v1337 = vld [vmem:[%s2 + $0x18b8] sm:$0xff]
  %v1338 = vld [vmem:[%s2 + $0x18c0] sm:$0xff]
  %v1339 = vld [vmem:[%s2 + $0x18c8] sm:$0xff]
  %v1340 = vld [vmem:[%s2 + $0x18d0] sm:$0xff]
  %v1341 = vld [vmem:[%s2 + $0x18d8] sm:$0xff]
  %v1342 = vld [vmem:[%s2 + $0x18e0] sm:$0xff]
  %v1343 = vld [vmem:[%s2 + $0x18e8] sm:$0xff]
  %v1344 = vld [vmem:[%s2 + $0x18f0] sm:$0xff]
  %v1345 = vld [vmem:[%s2 + $0x18f8] sm:$0xff]
  %v1346 = vld [vmem:[%s2 + $0x1900] sm:$0xff]
  %v1347 = vld [vmem:[%s2 + $0x1908] sm:$0xff]
  %v1348 = vld [vmem:[%s2 + $0x1910] sm:$0xff]
  %v1349 = vld [vmem:[%s2 + $0x1918] sm:$0xff]
  %v1350 = vld [vmem:[%s2 + $0x1920] sm:$0xff]
  %v1351 = vld [vmem:[%s2 + $0x1928] sm:$0xff]
  %v1352 = vld [vmem:[%s2 + $0x1930] sm:$0xff]
  %v1353 = vld [vmem:[%s2 + $0x1938] sm:$0xff]
  %v1354 = vld [vmem:[%s2 + $0x1940] sm:$0xff]
  %v1355 = vld [vmem:[%s2 + $0x1948] sm:$0xff]
  %v1356 = vld [vmem:[%s2 + $0x1950] sm:$0xff]
  %v1357 = vld [vmem:[%s2 + $0x1958] sm:$0xff]
  %v1358 = vld [vmem:[%s2 + $0x1960] sm:$0xff]
  %v1359 = vld [vmem:[%s2 + $0x1968] sm:$0xff]
  %v1360 = vld [vmem:[%s2 + $0x1970] sm:$0xff]
  %v1361 = vld [vmem:[%s2 + $0x1978] sm:$0xff]
  %v1362 = vld [vmem:[%s2 + $0x1980] sm:$0xff]
  %v1363 = vld [vmem:[%s2 + $0x1988] sm:$0xff]
  %v1364 = vld [vmem:[%s2 + $0x1990] sm:$0xff]
  %v1365 = vld [vmem:[%s2 + $0x1998] sm:$0xff]
  %v1366 = vld [vmem:[%s2 + $0x19a0] sm:$0xff]
  %v1367 = vld [vmem:[%s2 + $0x19a8] sm:$0xff]
  %v1368 = vld [vmem:[%s2 + $0x19b0] sm:$0xff]
  %v1369 = vld [vmem:[%s2 + $0x19b8] sm:$0xff]
  %v1370 = vld [vmem:[%s2 + $0x19c0] sm:$0xff]
  %v1371 = vld [vmem:[%s2 + $0x19c8] sm:$0xff]
  %v1372 = vld [vmem:[%s2 + $0x19d0] sm:$0xff]
  %v1373 = vld [vmem:[%s2 + $0x19d8] sm:$0xff]
  %v1374 = vld [vmem:[%s2 + $0x19e0] sm:$0xff]
  %v1375 = vld [vmem:[%s2 + $0x19e8] sm:$0xff]
  %v1376 = vld [vmem:[%s2 + $0x19f0] sm:$0xff]
  %v1377 = vld [vmem:[%s2 + $0x19f8] sm:$0xff]
  %v1378 = vld [vmem:[%s2 + $0x1a00] sm:$0xff]
  %v1379 = vld [vmem:[%s2 + $0x1a08] sm:$0xff]
  %v1380 = vld [vmem:[%s2 + $0x1a10] sm:$0xff]
  %v1381 = vld [vmem:[%s2 + $0x1a18] sm:$0xff]
  %v1382 = vld [vmem:[%s2 + $0x1a20] sm:$0xff]
  %v1383 = vld [vmem:[%s2 + $0x1a28] sm:$0xff]
  %v1384 = vld [vmem:[%s2 + $0x1a30] sm:$0xff]
  %v1385 = vld [vmem:[%s2 + $0x1a38] sm:$0xff]
  %v1386 = vld [vmem:[%s2 + $0x1a40] sm:$0xff]
  %v1387 = vld [vmem:[%s2 + $0x1a48] sm:$0xff]
  %v1388 = vld [vmem:[%s2 + $0x1a50] sm:$0xff]
  %v1389 = vld [vmem:[%s2 + $0x1a58] sm:$0xff]
  %v1390 = vld [vmem:[%s2 + $0x1a60] sm:$0xff]
  %v1391 = vld [vmem:[%s2 + $0x1a68] sm:$0xff]
  %v1392 = vld [vmem:[%s2 + $0x1a70] sm:$0xff]
  %v1393 = vld [vmem:[%s2 + $0x1a78] sm:$0xff]
  %v1394 = vld [vmem:[%s2 + $0x1a80] sm:$0xff]
  %v1395 = vld [vmem:[%s2 + $0x1a88] sm:$0xff]
  %v1396 = vld [vmem:[%s2 + $0x1a90] sm:$0xff]
  %v1397 = vld [vmem:[%s2 + $0x1a98] sm:$0xff]
  %v1398 = vld [vmem:[%s2 + $0x1aa0] sm:$0xff]
  %v1399 = vld [vmem:[%s2 + $0x1aa8] sm:$0xff]
  %v1400 = vld [vmem:[%s2 + $0x1ab0] sm:$0xff]
  %v1401 = vld [vmem:[%s2 + $0x1ab8] sm:$0xff]
  %v1402 = vld [vmem:[%s2 + $0x1ac0] sm:$0xff]
  %v1403 = vld [vmem:[%s2 + $0x1ac8] sm:$0xff]
  %v1404 = vld [vmem:[%s2 + $0x1ad0] sm:$0xff]
  %v1405 = vld [vmem:[%s2 + $0x1ad8] sm:$0xff]
  %v1406 = vld [vmem:[%s2 + $0x1ae0] sm:$0xff]
  %v1407 = vld [vmem:[%s2 + $0x1ae8] sm:$0xff]
  %v1408 = vld [vmem:[%s2 + $0x1af0] sm:$0xff]
  %v1409 = vld [vmem:[%s2 + $0x1af8] sm:$0xff]
  %v1410 = vld [vmem:[%s2 + $0x1b00] sm:$0xff]
  %v1411 = vld [vmem:[%s2 + $0x1b08] sm:$0xff]
  %v1412 = vld [vmem:[%s2 + $0x1b10] sm:$0xff]
  %v1413 = vld [vmem:[%s2 + $0x1b18] sm:$0xff]
  %v1414 = vld [vmem:[%s2 + $0x1b20] sm:$0xff]
  %v1415 = vld [vmem:[%s2 + $0x1b28] sm:$0xff]
  %v1416 = vld [vmem:[%s2 + $0x1b30] sm:$0xff]
  %v1417 = vld [vmem:[%s2 + $0x1b38] sm:$0xff]
  %v1418 = vld [vmem:[%s2 + $0x1b40] sm:$0xff]
  %v1419 = vld [vmem:[%s2 + $0x1b48] sm:$0xff]
  %v1420 = vld [vmem:[%s2 + $0x1b50] sm:$0xff]
  %v1421 = vld [vmem:[%s2 + $0x1b58] sm:$0xff]
  %v1422 = vld [vmem:[%s2 + $0x1b60] sm:$0xff]
  %v1423 = vld [vmem:[%s2 + $0x1b68] sm:$0xff]
  %v1424 = vld [vmem:[%s2 + $0x1b70] sm:$0xff]
  %v1425 = vld [vmem:[%s2 + $0x1b78] sm:$0xff]
  %v1426 = vld [vmem:[%s2 + $0x1b80] sm:$0xff]
  %v1427 = vld [vmem:[%s2 + $0x1b88] sm:$0xff]
  %v1428 = vld [vmem:[%s2 + $0x1b90] sm:$0xff]
  %v1429 = vld [vmem:[%s2 + $0x1b98] sm:$0xff]
  %v1430 = vld [vmem:[%s2 + $0x1ba0] sm:$0xff]
  %v1431 = vld [vmem:[%s2 + $0x1ba8] sm:$0xff]
  %v1432 = vld [vmem:[%s2 + $0x1bb0] sm:$0xff]
  %v1433 = vld [vmem:[%s2 + $0x1bb8] sm:$0xff]
  %v1434 = vld [vmem:[%s2 + $0x1bc0] sm:$0xff]
  %v1435 = vld [vmem:[%s2 + $0x1bc8] sm:$0xff]
  %v1436 = vld [vmem:[%s2 + $0x1bd0] sm:$0xff]
  %v1437 = vld [vmem:[%s2 + $0x1bd8] sm:$0xff]
  %v1438 = vld [vmem:[%s2 + $0x1be0] sm:$0xff]
  %v1439 = vld [vmem:[%s2 + $0x1be8] sm:$0xff]
  %v1440 = vld [vmem:[%s2 + $0x1bf0] sm:$0xff]
  %v1441 = vld [vmem:[%s2 + $0x1bf8] sm:$0xff]
  %v1442 = vld [vmem:[%s2 + $0x1c00] sm:$0xff]
  %v1443 = vld [vmem:[%s2 + $0x1c08] sm:$0xff]
  %v1444 = vld [vmem:[%s2 + $0x1c10] sm:$0xff]
  %v1445 = vld [vmem:[%s2 + $0x1c18] sm:$0xff]
  %v1446 = vld [vmem:[%s2 + $0x1c20] sm:$0xff]
  %v1447 = vld [vmem:[%s2 + $0x1c28] sm:$0xff]
  %v1448 = vld [vmem:[%s2 + $0x1c30] sm:$0xff]
  %v1449 = vld [vmem:[%s2 + $0x1c38] sm:$0xff]
  %v1450 = vld [vmem:[%s2 + $0x1c40] sm:$0xff]
  %v1451 = vld [vmem:[%s2 + $0x1c48] sm:$0xff]
  %v1452 = vld [vmem:[%s2 + $0x1c50] sm:$0xff]
  %v1453 = vld [vmem:[%s2 + $0x1c58] sm:$0xff]
  %v1454 = vld [vmem:[%s2 + $0x1c60] sm:$0xff]
  %v1455 = vld [vmem:[%s2 + $0x1c68] sm:$0xff]
  %v1456 = vld [vmem:[%s2 + $0x1c70] sm:$0xff]
  %v1457 = vld [vmem:[%s2 + $0x1c78] sm:$0xff]
  %v1458 = vld [vmem:[%s2 + $0x1c80] sm:$0xff]
  %v1459 = vld [vmem:[%s2 + $0x1c88] sm:$0xff]
  %v1460 = vld [vmem:[%s2 + $0x1c90] sm:$0xff]
  %v1461 = vld [vmem:[%s2 + $0x1c98] sm:$0xff]
  %v1462 = vld [vmem:[%s2 + $0x1ca0] sm:$0xff]
  %v1463 = vld [vmem:[%s2 + $0x1ca8] sm:$0xff]
  %v1464 = vld [vmem:[%s2 + $0x1cb0] sm:$0xff]
  %v1465 = vld [vmem:[%s2 + $0x1cb8] sm:$0xff]
  %v1466 = vld [vmem:[%s2 + $0x1cc0] sm:$0xff]
  %v1467 = vld [vmem:[%s2 + $0x1cc8] sm:$0xff]
  %v1468 = vld [vmem:[%s2 + $0x1cd0] sm:$0xff]
  %v1469 = vld [vmem:[%s2 + $0x1cd8] sm:$0xff]
  %v1470 = vld [vmem:[%s2 + $0x1ce0] sm:$0xff]
  %v1471 = vld [vmem:[%s2 + $0x1ce8] sm:$0xff]
  %v1472 = vld [vmem:[%s2 + $0x1cf0] sm:$0xff]
  %v1473 = vld [vmem:[%s2 + $0x1cf8] sm:$0xff]
  %v1474 = vld [vmem:[%s2 + $0x1d00] sm:$0xff]
  %v1475 = vld [vmem:[%s2 + $0x1d08] sm:$0xff]
  %v1476 = vld [vmem:[%s2 + $0x1d10] sm:$0xff]
  %v1477 = vld [vmem:[%s2 + $0x1d18] sm:$0xff]
  %v1478 = vld [vmem:[%s2 + $0x1d20] sm:$0xff]
  %v1479 = vld [vmem:[%s2 + $0x1d28] sm:$0xff]
  %v1480 = vld [vmem:[%s2 + $0x1d30] sm:$0xff]
  %v1481 = vld [vmem:[%s2 + $0x1d38] sm:$0xff]
  %v1482 = vld [vmem:[%s2 + $0x1d40] sm:$0xff]
  %v1483 = vld [vmem:[%s2 + $0x1d48] sm:$0xff]
  %v1484 = vld [vmem:[%s2 + $0x1d50] sm:$0xff]
  %v1485 = vld [vmem:[%s2 + $0x1d58] sm:$0xff]
  %v1486 = vld [vmem:[%s2 + $0x1d60] sm:$0xff]
  %v1487 = vld [vmem:[%s2 + $0x1d68] sm:$0xff]
  %v1488 = vld [vmem:[%s2 + $0x1d70] sm:$0xff]
  %v1489 = vld [vmem:[%s2 + $0x1d78] sm:$0xff]
  %v1490 = vld [vmem:[%s2 + $0x1d80] sm:$0xff]
  %v1491 = vld [vmem:[%s2 + $0x1d88] sm:$0xff]
  %v1492 = vld [vmem:[%s2 + $0x1d90] sm:$0xff]
  %v1493 = vld [vmem:[%s2 + $0x1d98] sm:$0xff]
  %v1494 = vld [vmem:[%s2 + $0x1da0] sm:$0xff]
  %v1495 = vld [vmem:[%s2 + $0x1da8] sm:$0xff]
  %v1496 = vld [vmem:[%s2 + $0x1db0] sm:$0xff]
  %v1497 = vld [vmem:[%s2 + $0x1db8] sm:$0xff]
  %v1498 = vld [vmem:[%s2 + $0x1dc0] sm:$0xff]
  %v1499 = vld [vmem:[%s2 + $0x1dc8] sm:$0xff]
  %v1500 = vld [vmem:[%s2 + $0x1dd0] sm:$0xff]
  %v1501 = vld [vmem:[%s2 + $0x1dd8] sm:$0xff]
  %v1502 = vld [vmem:[%s2 + $0x1de0] sm:$0xff]
  %v1503 = vld [vmem:[%s2 + $0x1de8] sm:$0xff]
  %v1504 = vld [vmem:[%s2 + $0x1df0] sm:$0xff]
  %v1505 = vld [vmem:[%s2 + $0x1df8] sm:$0xff]
  %v1506 = vld [vmem:[%s2 + $0x1e00] sm:$0xff]
  %v1507 = vld [vmem:[%s2 + $0x1e08] sm:$0xff]
  %v1508 = vld [vmem:[%s2 + $0x1e10] sm:$0xff]
  %v1509 = vld [vmem:[%s2 + $0x1e18] sm:$0xff]
  %v1510 = vld [vmem:[%s2 + $0x1e20] sm:$0xff]
  %v1511 = vld [vmem:[%s2 + $0x1e28] sm:$0xff]
  %v1512 = vld [vmem:[%s2 + $0x1e30] sm:$0xff]
  %v1513 = vld [vmem:[%s2 + $0x1e38] sm:$0xff]
  %v1514 = vld [vmem:[%s2 + $0x1e40] sm:$0xff]
  %v1515 = vld [vmem:[%s2 + $0x1e48] sm:$0xff]
  %v1516 = vld [vmem:[%s2 + $0x1e50] sm:$0xff]
  %v1517 = vld [vmem:[%s2 + $0x1e58] sm:$0xff]
  %v1518 = vld [vmem:[%s2 + $0x1e60] sm:$0xff]
  %v1519 = vld [vmem:[%s2 + $0x1e68] sm:$0xff]
  %v1520 = vld [vmem:[%s2 + $0x1e70] sm:$0xff]
  %v1521 = vld [vmem:[%s2 + $0x1e78] sm:$0xff]
  %v1522 = vld [vmem:[%s2 + $0x1e80] sm:$0xff]
  %v1523 = vld [vmem:[%s2 + $0x1e88] sm:$0xff]
  %v1524 = vld [vmem:[%s2 + $0x1e90] sm:$0xff]
  %v1525 = vld [vmem:[%s2 + $0x1e98] sm:$0xff]
  %v1526 = vld [vmem:[%s2 + $0x1ea0] sm:$0xff]
  %v1527 = vld [vmem:[%s2 + $0x1ea8] sm:$0xff]
  %v1528 = vld [vmem:[%s2 + $0x1eb0] sm:$0xff]
  %v1529 = vld [vmem:[%s2 + $0x1eb8] sm:$0xff]
  %v1530 = vld [vmem:[%s2 + $0x1ec0] sm:$0xff]
  %v1531 = vld [vmem:[%s2 + $0x1ec8] sm:$0xff]
  %v1532 = vld [vmem:[%s2 + $0x1ed0] sm:$0xff]
  %v1533 = vld [vmem:[%s2 + $0x1ed8] sm:$0xff]
  %v1534 = vld [vmem:[%s2 + $0x1ee0] sm:$0xff]
  %v1535 = vld [vmem:[%s2 + $0x1ee8] sm:$0xff]
  %v1536 = vld [vmem:[%s2 + $0x1ef0] sm:$0xff]
  %v1537 = vld [vmem:[%s2 + $0x1ef8] sm:$0xff]
  %v1538 = vld [vmem:[%s2 + $0x1f00] sm:$0xff]
  %v1539 = vld [vmem:[%s2 + $0x1f08] sm:$0xff]
  %v1540 = vld [vmem:[%s2 + $0x1f10] sm:$0xff]
  %v1541 = vld [vmem:[%s2 + $0x1f18] sm:$0xff]
  %v1542 = vld [vmem:[%s2 + $0x1f20] sm:$0xff]
  %v1543 = vld [vmem:[%s2 + $0x1f28] sm:$0xff]
  %v1544 = vld [vmem:[%s2 + $0x1f30] sm:$0xff]
  %v1545 = vld [vmem:[%s2 + $0x1f38] sm:$0xff]
  %v1546 = vld [vmem:[%s2 + $0x1f40] sm:$0xff]
  %v1547 = vld [vmem:[%s2 + $0x1f48] sm:$0xff]
  %v1548 = vld [vmem:[%s2 + $0x1f50] sm:$0xff]
  %v1549 = vld [vmem:[%s2 + $0x1f58] sm:$0xff]
  %v1550 = vld [vmem:[%s2 + $0x1f60] sm:$0xff]
  %v1551 = vld [vmem:[%s2 + $0x1f68] sm:$0xff]
  %v1552 = vld [vmem:[%s2 + $0x1f70] sm:$0xff]
  %v1553 = vld [vmem:[%s2 + $0x1f78] sm:$0xff]
  %v1554 = vld [vmem:[%s2 + $0x1f80] sm:$0xff]
  %v1555 = vld [vmem:[%s2 + $0x1f88] sm:$0xff]
  %v1556 = vld [vmem:[%s2 + $0x1f90] sm:$0xff]
  %v1557 = vld [vmem:[%s2 + $0x1f98] sm:$0xff]
  %v1558 = vld [vmem:[%s2 + $0x1fa0] sm:$0xff]
  %v1559 = vld [vmem:[%s2 + $0x1fa8] sm:$0xff]
  %v1560 = vld [vmem:[%s2 + $0x1fb0] sm:$0xff]
  %v1561 = vld [vmem:[%s2 + $0x1fb8] sm:$0xff]
  %v1562 = vld [vmem:[%s2 + $0x1fc0] sm:$0xff]
  %v1563 = vld [vmem:[%s2 + $0x1fc8] sm:$0xff]
  %v1564 = vld [vmem:[%s2 + $0x1fd0] sm:$0xff]
  %v1565 = vld [vmem:[%s2 + $0x1fd8] sm:$0xff]
  %v1566 = vld [vmem:[%s2 + $0x1fe0] sm:$0xff]
  %v1567 = vld [vmem:[%s2 + $0x1fe8] sm:$0xff]
  %v1568 = vld [vmem:[%s2 + $0x1ff0] sm:$0xff]
  %v1569 = vld [vmem:[%s2 + $0x1ff8] sm:$0xff]
  %v1570 = vld [vmem:[%s2 + $0x2000] sm:$0xff]
  %v1571 = vld [vmem:[%s2 + $0x2008] sm:$0xff]
  %v1572 = vld [vmem:[%s2 + $0x2010] sm:$0xff]
  %v1573 = vld [vmem:[%s2 + $0x2018] sm:$0xff]
  %v1574 = vld [vmem:[%s2 + $0x2020] sm:$0xff]
  %v1575 = vld [vmem:[%s2 + $0x2028] sm:$0xff]
  %v1576 = vld [vmem:[%s2 + $0x2030] sm:$0xff]
  %v1577 = vld [vmem:[%s2 + $0x2038] sm:$0xff]
  %v1578 = vld [vmem:[%s2 + $0x2040] sm:$0xff]
  %v1579 = vld [vmem:[%s2 + $0x2048] sm:$0xff]
  %v1580 = vld [vmem:[%s2 + $0x2050] sm:$0xff]
  %v1581 = vld [vmem:[%s2 + $0x2058] sm:$0xff]
  %v1582 = vld [vmem:[%s2 + $0x2060] sm:$0xff]
  %v1583 = vld [vmem:[%s2 + $0x2068] sm:$0xff]
  %v1584 = vld [vmem:[%s2 + $0x2070] sm:$0xff]
  %v1585 = vld [vmem:[%s2 + $0x2078] sm:$0xff]
  %v1586 = vld [vmem:[%s2 + $0x2080] sm:$0xff]
  %v1587 = vld [vmem:[%s2 + $0x2088] sm:$0xff]
  %v1588 = vld [vmem:[%s2 + $0x2090] sm:$0xff]
  %v1589 = vld [vmem:[%s2 + $0x2098] sm:$0xff]
  %v1590 = vld [vmem:[%s2 + $0x20a0] sm:$0xff]
  %v1591 = vld [vmem:[%s2 + $0x20a8] sm:$0xff]
  %v1592 = vld [vmem:[%s2 + $0x20b0] sm:$0xff]
  %v1593 = vld [vmem:[%s2 + $0x20b8] sm:$0xff]
  %v1594 = vld [vmem:[%s2 + $0x20c0] sm:$0xff]
  %v1595 = vld [vmem:[%s2 + $0x20c8] sm:$0xff]
  %v1596 = vld [vmem:[%s2 + $0x20d0] sm:$0xff]
  %v1597 = vld [vmem:[%s2 + $0x20d8] sm:$0xff]
  %v1598 = vld [vmem:[%s2 + $0x20e0] sm:$0xff]
  %v1599 = vld [vmem:[%s2 + $0x20e8] sm:$0xff]
  %v1600 = vld [vmem:[%s2 + $0x20f0] sm:$0xff]
  %v1601 = vld [vmem:[%s2 + $0x20f8] sm:$0xff]
  %v1602 = vld [vmem:[%s2 + $0x2100] sm:$0xff]
  %v1603 = vld [vmem:[%s2 + $0x2108] sm:$0xff]
  %v1604 = vld [vmem:[%s2 + $0x2110] sm:$0xff]
  %v1605 = vld [vmem:[%s2 + $0x2118] sm:$0xff]
  %v1606 = vld [vmem:[%s2 + $0x2120] sm:$0xff]
  %v1607 = vld [vmem:[%s2 + $0x2128] sm:$0xff]
  %v1608 = vld [vmem:[%s2 + $0x2130] sm:$0xff]
  %v1609 = vld [vmem:[%s2 + $0x2138] sm:$0xff]
  %v1610 = vld [vmem:[%s2 + $0x2140] sm:$0xff]
  %v1611 = vld [vmem:[%s2 + $0x2148] sm:$0xff]
  %v1612 = vld [vmem:[%s2 + $0x2150] sm:$0xff]
  %v1613 = vld [vmem:[%s2 + $0x2158] sm:$0xff]
  %v1614 = vld [vmem:[%s2 + $0x2160] sm:$0xff]
  %v1615 = vld [vmem:[%s2 + $0x2168] sm:$0xff]
  %v1616 = vld [vmem:[%s2 + $0x2170] sm:$0xff]
  %v1617 = vld [vmem:[%s2 + $0x2178] sm:$0xff]
  %v1618 = vld [vmem:[%s2 + $0x2180] sm:$0xff]
  %v1619 = vld [vmem:[%s2 + $0x2188] sm:$0xff]
  %v1620 = vld [vmem:[%s2 + $0x2190] sm:$0xff]
  %v1621 = vld [vmem:[%s2 + $0x2198] sm:$0xff]
  %v1622 = vld [vmem:[%s2 + $0x21a0] sm:$0xff]
  %v1623 = vld [vmem:[%s2 + $0x21a8] sm:$0xff]
  %v1624 = vld [vmem:[%s2 + $0x21b0] sm:$0xff]
  %v1625 = vld [vmem:[%s2 + $0x21b8] sm:$0xff]
  %v1626 = vld [vmem:[%s2 + $0x21c0] sm:$0xff]
  %v1627 = vld [vmem:[%s2 + $0x21c8] sm:$0xff]
  %v1628 = vld [vmem:[%s2 + $0x21d0] sm:$0xff]
  %v1629 = vld [vmem:[%s2 + $0x21d8] sm:$0xff]
  %v1630 = vld [vmem:[%s2 + $0x21e0] sm:$0xff]
  %v1631 = vld [vmem:[%s2 + $0x21e8] sm:$0xff]
  %v1632 = vld [vmem:[%s2 + $0x21f0] sm:$0xff]
  %v1633 = vld [vmem:[%s2 + $0x21f8] sm:$0xff]
  %v1634 = vld [vmem:[%s2 + $0x2200] sm:$0xff]
  %v1635 = vld [vmem:[%s2 + $0x2208] sm:$0xff]
  %v1636 = vld [vmem:[%s2 + $0x2210] sm:$0xff]
  %v1637 = vld [vmem:[%s2 + $0x2218] sm:$0xff]
  %v1638 = vld [vmem:[%s2 + $0x2220] sm:$0xff]
  %v1639 = vld [vmem:[%s2 + $0x2228] sm:$0xff]
  %v1640 = vld [vmem:[%s2 + $0x2230] sm:$0xff]
  %v1641 = vld [vmem:[%s2 + $0x2238] sm:$0xff]
  %v1642 = vld [vmem:[%s2 + $0x2240] sm:$0xff]
  %v1643 = vld [vmem:[%s2 + $0x2248] sm:$0xff]
  %v1644 = vld [vmem:[%s2 + $0x2250] sm:$0xff]
  %v1645 = vld [vmem:[%s2 + $0x2258] sm:$0xff]
  %v1646 = vld [vmem:[%s2 + $0x2260] sm:$0xff]
  %v1647 = vld [vmem:[%s2 + $0x2268] sm:$0xff]
  %v1648 = vld [vmem:[%s2 + $0x2270] sm:$0xff]
  %v1649 = vld [vmem:[%s2 + $0x2278] sm:$0xff]
  %v1650 = vld [vmem:[%s2 + $0x2280] sm:$0xff]
  %v1651 = vld [vmem:[%s2 + $0x2288] sm:$0xff]
  %v1652 = vld [vmem:[%s2 + $0x2290] sm:$0xff]
  %v1653 = vld [vmem:[%s2 + $0x2298] sm:$0xff]
  %v1654 = vld [vmem:[%s2 + $0x22a0] sm:$0xff]
  %v1655 = vld [vmem:[%s2 + $0x22a8] sm:$0xff]
  %v1656 = vld [vmem:[%s2 + $0x22b0] sm:$0xff]
  %v1657 = vld [vmem:[%s2 + $0x22b8] sm:$0xff]
  %v1658 = vld [vmem:[%s2 + $0x22c0] sm:$0xff]
  %v1659 = vld [vmem:[%s2 + $0x22c8] sm:$0xff]
  %v1660 = vld [vmem:[%s2 + $0x22d0] sm:$0xff]
  %v1661 = vld [vmem:[%s2 + $0x22d8] sm:$0xff]
  %v1662 = vld [vmem:[%s2 + $0x22e0] sm:$0xff]
  %v1663 = vld [vmem:[%s2 + $0x22e8] sm:$0xff]
  %v1664 = vld [vmem:[%s2 + $0x22f0] sm:$0xff]
  %v1665 = vld [vmem:[%s2 + $0x22f8] sm:$0xff]
  %v1666 = vld [vmem:[%s2 + $0x2300] sm:$0xff]
  %v1667 = vld [vmem:[%s2 + $0x2308] sm:$0xff]
  %v1668 = vld [vmem:[%s2 + $0x2310] sm:$0xff]
  %v1669 = vld [vmem:[%s2 + $0x2318] sm:$0xff]
  %v1670 = vld [vmem:[%s2 + $0x2320] sm:$0xff]
  %v1671 = vld [vmem:[%s2 + $0x2328] sm:$0xff]
  %v1672 = vld [vmem:[%s2 + $0x2330] sm:$0xff]
  %v1673 = vld [vmem:[%s2 + $0x2338] sm:$0xff]
  %v1674 = vld [vmem:[%s2 + $0x2340] sm:$0xff]
  %v1675 = vld [vmem:[%s2 + $0x2348] sm:$0xff]
  %v1676 = vld [vmem:[%s2 + $0x2350] sm:$0xff]
  %v1677 = vld [vmem:[%s2 + $0x2358] sm:$0xff]
  %v1678 = vld [vmem:[%s2 + $0x2360] sm:$0xff]
  %v1679 = vld [vmem:[%s2 + $0x2368] sm:$0xff]
  %v1680 = vld [vmem:[%s2 + $0x2370] sm:$0xff]
  %v1681 = vld [vmem:[%s2 + $0x2378] sm:$0xff]
  %v1682 = vld [vmem:[%s2 + $0x2380] sm:$0xff]
  %v1683 = vld [vmem:[%s2 + $0x2388] sm:$0xff]
  %v1684 = vld [vmem:[%s2 + $0x2390] sm:$0xff]
  %v1685 = vld [vmem:[%s2 + $0x2398] sm:$0xff]
  %v1686 = vld [vmem:[%s2 + $0x23a0] sm:$0xff]
  %v1687 = vld [vmem:[%s2 + $0x23a8] sm:$0xff]
  %v1688 = vld [vmem:[%s2 + $0x23b0] sm:$0xff]
  %v1689 = vld [vmem:[%s2 + $0x23b8] sm:$0xff]
  %v1690 = vld [vmem:[%s2 + $0x23c0] sm:$0xff]
  %v1691 = vld [vmem:[%s2 + $0x23c8] sm:$0xff]
  %v1692 = vld [vmem:[%s2 + $0x23d0] sm:$0xff]
  %v1693 = vld [vmem:[%s2 + $0x23d8] sm:$0xff]
  %v1694 = vld [vmem:[%s2 + $0x23e0] sm:$0xff]
  %v1695 = vld [vmem:[%s2 + $0x23e8] sm:$0xff]
  %v1696 = vld [vmem:[%s2 + $0x23f0] sm:$0xff]
  %v1697 = vld [vmem:[%s2 + $0x23f8] sm:$0xff]
  %v1698 = vld [vmem:[%s2 + $0x2400] sm:$0xff]
  %v1699 = vld [vmem:[%s2 + $0x2408] sm:$0xff]
  %v1700 = vld [vmem:[%s2 + $0x2410] sm:$0xff]
  %v1701 = vld [vmem:[%s2 + $0x2418] sm:$0xff]
  %v1702 = vld [vmem:[%s2 + $0x2420] sm:$0xff]
  %v1703 = vld [vmem:[%s2 + $0x2428] sm:$0xff]
  %v1704 = vld [vmem:[%s2 + $0x2430] sm:$0xff]
  %v1705 = vld [vmem:[%s2 + $0x2438] sm:$0xff]
  %v1706 = vld [vmem:[%s2 + $0x2440] sm:$0xff]
  %v1707 = vld [vmem:[%s2 + $0x2448] sm:$0xff]
  %v1708 = vld [vmem:[%s2 + $0x2450] sm:$0xff]
  %v1709 = vld [vmem:[%s2 + $0x2458] sm:$0xff]
  %v1710 = vld [vmem:[%s2 + $0x2460] sm:$0xff]
  %v1711 = vld [vmem:[%s2 + $0x2468] sm:$0xff]
  %v1712 = vld [vmem:[%s2 + $0x2470] sm:$0xff]
  %v1713 = vld [vmem:[%s2 + $0x2478] sm:$0xff]
  %v1714 = vld [vmem:[%s2 + $0x2480] sm:$0xff]
  %v1715 = vld [vmem:[%s2 + $0x2488] sm:$0xff]
  %v1716 = vld [vmem:[%s2 + $0x2490] sm:$0xff]
  %v1717 = vld [vmem:[%s2 + $0x2498] sm:$0xff]
  %v1718 = vld [vmem:[%s2 + $0x24a0] sm:$0xff]
  %v1719 = vld [vmem:[%s2 + $0x24a8] sm:$0xff]
  %v1720 = vld [vmem:[%s2 + $0x24b0] sm:$0xff]
  %v1721 = vld [vmem:[%s2 + $0x24b8] sm:$0xff]
  %v1722 = vld [vmem:[%s2 + $0x24c0] sm:$0xff]
  %v1723 = vld [vmem:[%s2 + $0x24c8] sm:$0xff]
  %v1724 = vld [vmem:[%s2 + $0x24d0] sm:$0xff]
  %v1725 = vld [vmem:[%s2 + $0x24d8] sm:$0xff]
  %v1726 = vld [vmem:[%s2 + $0x24e0] sm:$0xff]
  %v1727 = vld [vmem:[%s2 + $0x24e8] sm:$0xff]
  %v1728 = vld [vmem:[%s2 + $0x24f0] sm:$0xff]
  %v1729 = vld [vmem:[%s2 + $0x24f8] sm:$0xff]
  %v1730 = vld [vmem:[%s2 + $0x2500] sm:$0xff]
  %v1731 = vld [vmem:[%s2 + $0x2508] sm:$0xff]
  %v1732 = vld [vmem:[%s2 + $0x2510] sm:$0xff]
  %v1733 = vld [vmem:[%s2 + $0x2518] sm:$0xff]
  %v1734 = vld [vmem:[%s2 + $0x2520] sm:$0xff]
  %v1735 = vld [vmem:[%s2 + $0x2528] sm:$0xff]
  %v1736 = vld [vmem:[%s2 + $0x2530] sm:$0xff]
  %v1737 = vld [vmem:[%s2 + $0x2538] sm:$0xff]
  %v1738 = vld [vmem:[%s2 + $0x2540] sm:$0xff]
  %v1739 = vld [vmem:[%s2 + $0x2548] sm:$0xff]
  %v1740 = vld [vmem:[%s2 + $0x2550] sm:$0xff]
  %v1741 = vld [vmem:[%s2 + $0x2558] sm:$0xff]
  %v1742 = vld [vmem:[%s2 + $0x2560] sm:$0xff]
  %v1743 = vld [vmem:[%s2 + $0x2568] sm:$0xff]
  %v1744 = vld [vmem:[%s2 + $0x2570] sm:$0xff]
  %v1745 = vld [vmem:[%s2 + $0x2578] sm:$0xff]
  %v1746 = vld [vmem:[%s2 + $0x2580] sm:$0xff]
  %v1747 = vld [vmem:[%s2 + $0x2588] sm:$0xff]
  %v1748 = vld [vmem:[%s2 + $0x2590] sm:$0xff]
  %v1749 = vld [vmem:[%s2 + $0x2598] sm:$0xff]
  %v1750 = vld [vmem:[%s2 + $0x25a0] sm:$0xff]
  %v1751 = vld [vmem:[%s2 + $0x25a8] sm:$0xff]
  %v1752 = vld [vmem:[%s2 + $0x25b0] sm:$0xff]
  %v1753 = vld [vmem:[%s2 + $0x25b8] sm:$0xff]
  %v1754 = vld [vmem:[%s2 + $0x25c0] sm:$0xff]
  %v1755 = vld [vmem:[%s2 + $0x25c8] sm:$0xff]
  %v1756 = vld [vmem:[%s2 + $0x25d0] sm:$0xff]
  %v1757 = vld [vmem:[%s2 + $0x25d8] sm:$0xff]
  %v1758 = vld [vmem:[%s2 + $0x25e0] sm:$0xff]
  %v1759 = vld [vmem:[%s2 + $0x25e8] sm:$0xff]
  %v1760 = vld [vmem:[%s2 + $0x25f0] sm:$0xff]
  %v1761 = vld [vmem:[%s2 + $0x25f8] sm:$0xff]
  %v1762 = vld [vmem:[%s2 + $0x2600] sm:$0xff]
  %v1763 = vld [vmem:[%s2 + $0x2608] sm:$0xff]
  %v1764 = vld [vmem:[%s2 + $0x2610] sm:$0xff]
  %v1765 = vld [vmem:[%s2 + $0x2618] sm:$0xff]
  %v1766 = vld [vmem:[%s2 + $0x2620] sm:$0xff]
  %v1767 = vld [vmem:[%s2 + $0x2628] sm:$0xff]
  %v1768 = vld [vmem:[%s2 + $0x2630] sm:$0xff]
  %v1769 = vld [vmem:[%s2 + $0x2638] sm:$0xff]
  %v1770 = vld [vmem:[%s2 + $0x2640] sm:$0xff]
  %v1771 = vld [vmem:[%s2 + $0x2648] sm:$0xff]
  %v1772 = vld [vmem:[%s2 + $0x2650] sm:$0xff]
  %v1773 = vld [vmem:[%s2 + $0x2658] sm:$0xff]
  %v1774 = vld [vmem:[%s2 + $0x2660] sm:$0xff]
  %v1775 = vld [vmem:[%s2 + $0x2668] sm:$0xff]
  %v1776 = vld [vmem:[%s2 + $0x2670] sm:$0xff]
  %v1777 = vld [vmem:[%s2 + $0x2678] sm:$0xff]
  %v1778 = vld [vmem:[%s2 + $0x2680] sm:$0xff]
  %v1779 = vld [vmem:[%s2 + $0x2688] sm:$0xff]
  %v1780 = vld [vmem:[%s2 + $0x2690] sm:$0xff]
  %v1781 = vld [vmem:[%s2 + $0x2698] sm:$0xff]
  %v1782 = vld [vmem:[%s2 + $0x26a0] sm:$0xff]
  %v1783 = vld [vmem:[%s2 + $0x26a8] sm:$0xff]
  %v1784 = vld [vmem:[%s2 + $0x26b0] sm:$0xff]
  %v1785 = vld [vmem:[%s2 + $0x26b8] sm:$0xff]
  %v1786 = vld [vmem:[%s2 + $0x26c0] sm:$0xff]
  %v1787 = vld [vmem:[%s2 + $0x26c8] sm:$0xff]
  %v1788 = vld [vmem:[%s2 + $0x26d0] sm:$0xff]
  %v1789 = vld [vmem:[%s2 + $0x26d8] sm:$0xff]
  %v1790 = vld [vmem:[%s2 + $0x26e0] sm:$0xff]
  %v1791 = vld [vmem:[%s2 + $0x26e8] sm:$0xff]
  %v1792 = vld [vmem:[%s2 + $0x26f0] sm:$0xff]
  %v1793 = vld [vmem:[%s2 + $0x26f8] sm:$0xff]
  %v1794 = vld [vmem:[%s2 + $0x2700] sm:$0xff]
  %v1795 = vld [vmem:[%s2 + $0x2708] sm:$0xff]
  %v1796 = vld [vmem:[%s2 + $0x2710] sm:$0xff]
  %v1797 = vld [vmem:[%s2 + $0x2718] sm:$0xff]
  %v1798 = vld [vmem:[%s2 + $0x2720] sm:$0xff]
  %v1799 = vld [vmem:[%s2 + $0x2728] sm:$0xff]
  %v1800 = vld [vmem:[%s2 + $0x2730] sm:$0xff]
  %v1801 = vld [vmem:[%s2 + $0x2738] sm:$0xff]
  %v1802 = vld [vmem:[%s2 + $0x2740] sm:$0xff]
  %v1803 = vld [vmem:[%s2 + $0x2748] sm:$0xff]
  %v1804 = vld [vmem:[%s2 + $0x2750] sm:$0xff]
  %v1805 = vld [vmem:[%s2 + $0x2758] sm:$0xff]
  %v1806 = vld [vmem:[%s2 + $0x2760] sm:$0xff]
  %v1807 = vld [vmem:[%s2 + $0x2768] sm:$0xff]
  %v1808 = vld [vmem:[%s2 + $0x2770] sm:$0xff]
  %v1809 = vld [vmem:[%s2 + $0x2778] sm:$0xff]
  %v1810 = vld [vmem:[%s2 + $0x2780] sm:$0xff]
  %v1811 = vld [vmem:[%s2 + $0x2788] sm:$0xff]
  %v1812 = vld [vmem:[%s2 + $0x2790] sm:$0xff]
  %v1813 = vld [vmem:[%s2 + $0x2798] sm:$0xff]
  %v1814 = vld [vmem:[%s2 + $0x27a0] sm:$0xff]
  %v1815 = vld [vmem:[%s2 + $0x27a8] sm:$0xff]
  %v1816 = vld [vmem:[%s2 + $0x27b0] sm:$0xff]
  %v1817 = vld [vmem:[%s2 + $0x27b8] sm:$0xff]
  %v1818 = vld [vmem:[%s2 + $0x27c0] sm:$0xff]
  %v1819 = vld [vmem:[%s2 + $0x27c8] sm:$0xff]
  %v1820 = vld [vmem:[%s2 + $0x27d0] sm:$0xff]
  %v1821 = vld [vmem:[%s2 + $0x27d8] sm:$0xff]
  %v1822 = vld [vmem:[%s2 + $0x27e0] sm:$0xff]
  %v1823 = vld [vmem:[%s2 + $0x27e8] sm:$0xff]
  %v1824 = vld [vmem:[%s2 + $0x27f0] sm:$0xff]
  %v1825 = vld [vmem:[%s2 + $0x27f8] sm:$0xff]
  %v1826 = vld [vmem:[%s2 + $0x2800] sm:$0xff]
  %v1827 = vld [vmem:[%s2 + $0x2808] sm:$0xff]
  %v1828 = vld [vmem:[%s2 + $0x2810] sm:$0xff]
  %v1829 = vld [vmem:[%s2 + $0x2818] sm:$0xff]
  %v1830 = vld [vmem:[%s2 + $0x2820] sm:$0xff]
  %v1831 = vld [vmem:[%s2 + $0x2828] sm:$0xff]
  %v1832 = vld [vmem:[%s2 + $0x2830] sm:$0xff]
  %v1833 = vld [vmem:[%s2 + $0x2838] sm:$0xff]
  %v1834 = vld [vmem:[%s2 + $0x2840] sm:$0xff]
  %v1835 = vld [vmem:[%s2 + $0x2848] sm:$0xff]
  %v1836 = vld [vmem:[%s2 + $0x2850] sm:$0xff]
  %v1837 = vld [vmem:[%s2 + $0x2858] sm:$0xff]
  %v1838 = vld [vmem:[%s2 + $0x2860] sm:$0xff]
  %v1839 = vld [vmem:[%s2 + $0x2868] sm:$0xff]
  %v1840 = vld [vmem:[%s2 + $0x2870] sm:$0xff]
  %v1841 = vld [vmem:[%s2 + $0x2878] sm:$0xff]
  %v1842 = vld [vmem:[%s2 + $0x2880] sm:$0xff]
  %v1843 = vld [vmem:[%s2 + $0x2888] sm:$0xff]
  %v1844 = vld [vmem:[%s2 + $0x2890] sm:$0xff]
  %v1845 = vld [vmem:[%s2 + $0x2898] sm:$0xff]
  %v1846 = vld [vmem:[%s2 + $0x28a0] sm:$0xff]
  %v1847 = vld [vmem:[%s2 + $0x28a8] sm:$0xff]
  %v1848 = vld [vmem:[%s2 + $0x28b0] sm:$0xff]
  %v1849 = vld [vmem:[%s2 + $0x28b8] sm:$0xff]
  %v1850 = vld [vmem:[%s2 + $0x28c0] sm:$0xff]
  %v1851 = vld [vmem:[%s2 + $0x28c8] sm:$0xff]
  %v1852 = vld [vmem:[%s2 + $0x28d0] sm:$0xff]
  %v1853 = vld [vmem:[%s2 + $0x28d8] sm:$0xff]
  %v1854 = vld [vmem:[%s2 + $0x28e0] sm:$0xff]
  %v1855 = vld [vmem:[%s2 + $0x28e8] sm:$0xff]
  %v1856 = vld [vmem:[%s2 + $0x28f0] sm:$0xff]
  %v1857 = vld [vmem:[%s2 + $0x28f8] sm:$0xff]
  %v1858 = vld [vmem:[%s2 + $0x2900] sm:$0xff]
  %v1859 = vld [vmem:[%s2 + $0x2908] sm:$0xff]
  %v1860 = vld [vmem:[%s2 + $0x2910] sm:$0xff]
  %v1861 = vld [vmem:[%s2 + $0x2918] sm:$0xff]
  %v1862 = vld [vmem:[%s2 + $0x2920] sm:$0xff]
  %v1863 = vld [vmem:[%s2 + $0x2928] sm:$0xff]
  %v1864 = vld [vmem:[%s2 + $0x2930] sm:$0xff]
  %v1865 = vld [vmem:[%s2 + $0x2938] sm:$0xff]
  %v1866 = vld [vmem:[%s2 + $0x2940] sm:$0xff]
  %v1867 = vld [vmem:[%s2 + $0x2948] sm:$0xff]
  %v1868 = vld [vmem:[%s2 + $0x2950] sm:$0xff]
  %v1869 = vld [vmem:[%s2 + $0x2958] sm:$0xff]
  %v1870 = vld [vmem:[%s2 + $0x2960] sm:$0xff]
  %v1871 = vld [vmem:[%s2 + $0x2968] sm:$0xff]
  %v1872 = vld [vmem:[%s2 + $0x2970] sm:$0xff]
  %v1873 = vld [vmem:[%s2 + $0x2978] sm:$0xff]
  %v1874 = vld [vmem:[%s2 + $0x2980] sm:$0xff]
  %v1875 = vld [vmem:[%s2 + $0x2988] sm:$0xff]
  %v1876 = vld [vmem:[%s2 + $0x2990] sm:$0xff]
  %v1877 = vld [vmem:[%s2 + $0x2998] sm:$0xff]
  %v1878 = vld [vmem:[%s2 + $0x29a0] sm:$0xff]
  %v1879 = vld [vmem:[%s2 + $0x29a8] sm:$0xff]
  %v1880 = vld [vmem:[%s2 + $0x29b0] sm:$0xff]
  %v1881 = vld [vmem:[%s2 + $0x29b8] sm:$0xff]
  %v1882 = vld [vmem:[%s2 + $0x29c0] sm:$0xff]
  %v1883 = vld [vmem:[%s2 + $0x29c8] sm:$0xff]
  %v1884 = vld [vmem:[%s2 + $0x29d0] sm:$0xff]
  %v1885 = vld [vmem:[%s2 + $0x29d8] sm:$0xff]
  %v1886 = vld [vmem:[%s2 + $0x29e0] sm:$0xff]
  %v1887 = vld [vmem:[%s2 + $0x29e8] sm:$0xff]
  %v1888 = vld [vmem:[%s2 + $0x29f0] sm:$0xff]
  %v1889 = vld [vmem:[%s2 + $0x29f8] sm:$0xff]
  %v1890 = vld [vmem:[%s2 + $0x2a00] sm:$0xff]
  %v1891 = vld [vmem:[%s2 + $0x2a08] sm:$0xff]
  %v1892 = vld [vmem:[%s2 + $0x2a10] sm:$0xff]
  %v1893 = vld [vmem:[%s2 + $0x2a18] sm:$0xff]
  %v1894 = vld [vmem:[%s2 + $0x2a20] sm:$0xff]
  %v1895 = vld [vmem:[%s2 + $0x2a28] sm:$0xff]
  %v1896 = vld [vmem:[%s2 + $0x2a30] sm:$0xff]
  %v1897 = vld [vmem:[%s2 + $0x2a38] sm:$0xff]
  %v1898 = vld [vmem:[%s2 + $0x2a40] sm:$0xff]
  %v1899 = vld [vmem:[%s2 + $0x2a48] sm:$0xff]
  %v1900 = vld [vmem:[%s2 + $0x2a50] sm:$0xff]
  %v1901 = vld [vmem:[%s2 + $0x2a58] sm:$0xff]
  %v1902 = vld [vmem:[%s2 + $0x2a60] sm:$0xff]
  %v1903 = vld [vmem:[%s2 + $0x2a68] sm:$0xff]
  %v1904 = vld [vmem:[%s2 + $0x2a70] sm:$0xff]
  %v1905 = vld [vmem:[%s2 + $0x2a78] sm:$0xff]
  %v1906 = vld [vmem:[%s2 + $0x2a80] sm:$0xff]
  %v1907 = vld [vmem:[%s2 + $0x2a88] sm:$0xff]
  %v1908 = vld [vmem:[%s2 + $0x2a90] sm:$0xff]
  %v1909 = vld [vmem:[%s2 + $0x2a98] sm:$0xff]
  %v1910 = vld [vmem:[%s2 + $0x2aa0] sm:$0xff]
  %v1911 = vld [vmem:[%s2 + $0x2aa8] sm:$0xff]
  %v1912 = vld [vmem:[%s2 + $0x2ab0] sm:$0xff]
  %v1913 = vld [vmem:[%s2 + $0x2ab8] sm:$0xff]
  %v1914 = vld [vmem:[%s2 + $0x2ac0] sm:$0xff]
  %v1915 = vld [vmem:[%s2 + $0x2ac8] sm:$0xff]
  %v1916 = vld [vmem:[%s2 + $0x2ad0] sm:$0xff]
  %v1917 = vld [vmem:[%s2 + $0x2ad8] sm:$0xff]
  %v1918 = vld [vmem:[%s2 + $0x2ae0] sm:$0xff]
  %v1919 = vld [vmem:[%s2 + $0x2ae8] sm:$0xff]
  %v1920 = vld [vmem:[%s2 + $0x2af0] sm:$0xff]
  %v1921 = vld [vmem:[%s2 + $0x2af8] sm:$0xff]
  %v1922 = vld [vmem:[%s2 + $0x2b00] sm:$0xff]
  %v1923 = vld [vmem:[%s2 + $0x2b08] sm:$0xff]
  %v1924 = vld [vmem:[%s2 + $0x2b10] sm:$0xff]
  %v1925 = vld [vmem:[%s2 + $0x2b18] sm:$0xff]
  %v1926 = vld [vmem:[%s2 + $0x2b20] sm:$0xff]
  %v1927 = vld [vmem:[%s2 + $0x2b28] sm:$0xff]
  %v1928 = vld [vmem:[%s2 + $0x2b30] sm:$0xff]
  %v1929 = vld [vmem:[%s2 + $0x2b38] sm:$0xff]
  %v1930 = vld [vmem:[%s2 + $0x2b40] sm:$0xff]
  %v1931 = vld [vmem:[%s2 + $0x2b48] sm:$0xff]
  %v1932 = vld [vmem:[%s2 + $0x2b50] sm:$0xff]
  %v1933 = vld [vmem:[%s2 + $0x2b58] sm:$0xff]
  %v1934 = vld [vmem:[%s2 + $0x2b60] sm:$0xff]
  %v1935 = vld [vmem:[%s2 + $0x2b68] sm:$0xff]
  %v1936 = vld [vmem:[%s2 + $0x2b70] sm:$0xff]
  %v1937 = vld [vmem:[%s2 + $0x2b78] sm:$0xff]
  %v1938 = vld [vmem:[%s2 + $0x2b80] sm:$0xff]
  %v1939 = vld [vmem:[%s2 + $0x2b88] sm:$0xff]
  %v1940 = vld [vmem:[%s2 + $0x2b90] sm:$0xff]
  %v1941 = vld [vmem:[%s2 + $0x2b98] sm:$0xff]
  %v1942 = vld [vmem:[%s2 + $0x2ba0] sm:$0xff]
  %v1943 = vld [vmem:[%s2 + $0x2ba8] sm:$0xff]
  %v1944 = vld [vmem:[%s2 + $0x2bb0] sm:$0xff]
  %v1945 = vld [vmem:[%s2 + $0x2bb8] sm:$0xff]
  %v1946 = vld [vmem:[%s2 + $0x2bc0] sm:$0xff]
  %v1947 = vld [vmem:[%s2 + $0x2bc8] sm:$0xff]
  %v1948 = vld [vmem:[%s2 + $0x2bd0] sm:$0xff]
  %v1949 = vld [vmem:[%s2 + $0x2bd8] sm:$0xff]
  %v1950 = vld [vmem:[%s2 + $0x2be0] sm:$0xff]
  %v1951 = vld [vmem:[%s2 + $0x2be8] sm:$0xff]
  %v1952 = vld [vmem:[%s2 + $0x2bf0] sm:$0xff]
  %v1953 = vld [vmem:[%s2 + $0x2bf8] sm:$0xff]
  %v1954 = vld [vmem:[%s2 + $0x2c00] sm:$0xff]
  %v1955 = vld [vmem:[%s2 + $0x2c08] sm:$0xff]
  %v1956 = vld [vmem:[%s2 + $0x2c10] sm:$0xff]
  %v1957 = vld [vmem:[%s2 + $0x2c18] sm:$0xff]
  %v1958 = vld [vmem:[%s2 + $0x2c20] sm:$0xff]
  %v1959 = vld [vmem:[%s2 + $0x2c28] sm:$0xff]
  %v1960 = vld [vmem:[%s2 + $0x2c30] sm:$0xff]
  %v1961 = vld [vmem:[%s2 + $0x2c38] sm:$0xff]
  %v1962 = vld [vmem:[%s2 + $0x2c40] sm:$0xff]
  %v1963 = vld [vmem:[%s2 + $0x2c48] sm:$0xff]
  %v1964 = vld [vmem:[%s2 + $0x2c50] sm:$0xff]
  %v1965 = vld [vmem:[%s2 + $0x2c58] sm:$0xff]
  %v1966 = vld [vmem:[%s2 + $0x2c60] sm:$0xff]
  %v1967 = vld [vmem:[%s2 + $0x2c68] sm:$0xff]
  %v1968 = vld [vmem:[%s2 + $0x2c70] sm:$0xff]
  %v1969 = vld [vmem:[%s2 + $0x2c78] sm:$0xff]
  %v1970 = vld [vmem:[%s2 + $0x2c80] sm:$0xff]
  %v1971 = vld [vmem:[%s2 + $0x2c88] sm:$0xff]
  %v1972 = vld [vmem:[%s2 + $0x2c90] sm:$0xff]
  %v1973 = vld [vmem:[%s2 + $0x2c98] sm:$0xff]
  %v1974 = vld [vmem:[%s2 + $0x2ca0] sm:$0xff]
  %v1975 = vld [vmem:[%s2 + $0x2ca8] sm:$0xff]
  %v1976 = vld [vmem:[%s2 + $0x2cb0] sm:$0xff]
  %v1977 = vld [vmem:[%s2 + $0x2cb8] sm:$0xff]
  %v1978 = vld [vmem:[%s2 + $0x2cc0] sm:$0xff]
  %v1979 = vld [vmem:[%s2 + $0x2cc8] sm:$0xff]
  %v1980 = vld [vmem:[%s2 + $0x2cd0] sm:$0xff]
  %v1981 = vld [vmem:[%s2 + $0x2cd8] sm:$0xff]
  %v1982 = vld [vmem:[%s2 + $0x2ce0] sm:$0xff]
  %v1983 = vld [vmem:[%s2 + $0x2ce8] sm:$0xff]
  %v1984 = vld [vmem:[%s2 + $0x2cf0] sm:$0xff]
  %v1985 = vld [vmem:[%s2 + $0x2cf8] sm:$0xff]
  %v1986 = vld [vmem:[%s2 + $0x2d00] sm:$0xff]
  %v1987 = vld [vmem:[%s2 + $0x2d08] sm:$0xff]
  %v1988 = vld [vmem:[%s2 + $0x2d10] sm:$0xff]
  %v1989 = vld [vmem:[%s2 + $0x2d18] sm:$0xff]
  %v1990 = vld [vmem:[%s2 + $0x2d20] sm:$0xff]
  %v1991 = vld [vmem:[%s2 + $0x2d28] sm:$0xff]
  %v1992 = vld [vmem:[%s2 + $0x2d30] sm:$0xff]
  %v1993 = vld [vmem:[%s2 + $0x2d38] sm:$0xff]
  %v1994 = vld [vmem:[%s2 + $0x2d40] sm:$0xff]
  %v1995 = vld [vmem:[%s2 + $0x2d48] sm:$0xff]
  %v1996 = vld [vmem:[%s2 + $0x2d50] sm:$0xff]
  %v1997 = vld [vmem:[%s2 + $0x2d58] sm:$0xff]
  %v1998 = vld [vmem:[%s2 + $0x2d60] sm:$0xff]
  %v1999 = vld [vmem:[%s2 + $0x2d68] sm:$0xff]
  %v2000 = vld [vmem:[%s2 + $0x2d70] sm:$0xff]
  %v2001 = vld [vmem:[%s2 + $0x2d78] sm:$0xff]
  %v2002 = vld [vmem:[%s2 + $0x2d80] sm:$0xff]
  %v2003 = vld [vmem:[%s2 + $0x2d88] sm:$0xff]
  %v2004 = vld [vmem:[%s2 + $0x2d90] sm:$0xff]
  %v2005 = vld [vmem:[%s2 + $0x2d98] sm:$0xff]
  %v2006 = vld [vmem:[%s2 + $0x2da0] sm:$0xff]
  %v2007 = vld [vmem:[%s2 + $0x2da8] sm:$0xff]
  %v2008 = vld [vmem:[%s2 + $0x2db0] sm:$0xff]
  %v2009 = vld [vmem:[%s2 + $0x2db8] sm:$0xff]
  %v2010 = vld [vmem:[%s2 + $0x2dc0] sm:$0xff]
  %v2011 = vld [vmem:[%s2 + $0x2dc8] sm:$0xff]
  %v2012 = vld [vmem:[%s2 + $0x2dd0] sm:$0xff]
  %v2013 = vld [vmem:[%s2 + $0x2dd8] sm:$0xff]
  %v2014 = vld [vmem:[%s2 + $0x2de0] sm:$0xff]
  %v2015 = vld [vmem:[%s2 + $0x2de8] sm:$0xff]
  %v2016 = vld [vmem:[%s2 + $0x2df0] sm:$0xff]
  %v2017 = vld [vmem:[%s2 + $0x2df8] sm:$0xff]
  %v2018 = vld [vmem:[%s2 + $0x2e00] sm:$0xff]
  %v2019 = vld [vmem:[%s2 + $0x2e08] sm:$0xff]
  %v2020 = vld [vmem:[%s2 + $0x2e10] sm:$0xff]
  %v2021 = vld [vmem:[%s2 + $0x2e18] sm:$0xff]
  %v2022 = vld [vmem:[%s2 + $0x2e20] sm:$0xff]
  %v2023 = vld [vmem:[%s2 + $0x2e28] sm:$0xff]
  %v2024 = vld [vmem:[%s2 + $0x2e30] sm:$0xff]
  %v2025 = vld [vmem:[%s2 + $0x2e38] sm:$0xff]
  %v2026 = vld [vmem:[%s2 + $0x2e40] sm:$0xff]
  %v2027 = vld [vmem:[%s2 + $0x2e48] sm:$0xff]
  %v2028 = vld [vmem:[%s2 + $0x2e50] sm:$0xff]
  %v2029 = vld [vmem:[%s2 + $0x2e58] sm:$0xff]
  %v2030 = vld [vmem:[%s2 + $0x2e60] sm:$0xff]
  %v2031 = vld [vmem:[%s2 + $0x2e68] sm:$0xff]
  %v2032 = vld [vmem:[%s2 + $0x2e70] sm:$0xff]
  %v2033 = vld [vmem:[%s2 + $0x2e78] sm:$0xff]
  %v2034 = vld [vmem:[%s2 + $0x2e80] sm:$0xff]
  %v2035 = vld [vmem:[%s2 + $0x2e88] sm:$0xff]
  %v2036 = vld [vmem:[%s2 + $0x2e90] sm:$0xff]
  %v2037 = vld [vmem:[%s2 + $0x2e98] sm:$0xff]
  %v2038 = vld [vmem:[%s2 + $0x2ea0] sm:$0xff]
  %v2039 = vld [vmem:[%s2 + $0x2ea8] sm:$0xff]
  %v2040 = vld [vmem:[%s2 + $0x2eb0] sm:$0xff]
  %v2041 = vld [vmem:[%s2 + $0x2eb8] sm:$0xff]
  %v2042 = vld [vmem:[%s2 + $0x2ec0] sm:$0xff]
  %v2043 = vld [vmem:[%s2 + $0x2ec8] sm:$0xff]
  %v2044 = vld [vmem:[%s2 + $0x2ed0] sm:$0xff]
  %v2045 = vld [vmem:[%s2 + $0x2ed8] sm:$0xff]
  %v2046 = vld [vmem:[%s2 + $0x2ee0] sm:$0xff]
  %v2047 = vld [vmem:[%s2 + $0x2ee8] sm:$0xff]
  %v2048 = vld [vmem:[%s2 + $0x2ef0] sm:$0xff]
  %v2049 = vld [vmem:[%s2 + $0x2ef8] sm:$0xff]
  %v2050 = vld [vmem:[%s2 + $0x2f00] sm:$0xff]
  %v2051 = vld [vmem:[%s2 + $0x2f08] sm:$0xff]
  %v2052 = vld [vmem:[%s2 + $0x2f10] sm:$0xff]
  %v2053 = vld [vmem:[%s2 + $0x2f18] sm:$0xff]
  %v2054 = vld [vmem:[%s2 + $0x2f20] sm:$0xff]
  %v2055 = vld [vmem:[%s2 + $0x2f28] sm:$0xff]
  %v2056 = vld [vmem:[%s2 + $0x2f30] sm:$0xff]
  %v2057 = vld [vmem:[%s2 + $0x2f38] sm:$0xff]
  %v2058 = vld [vmem:[%s2 + $0x2f40] sm:$0xff]
  %v2059 = vld [vmem:[%s2 + $0x2f48] sm:$0xff]
  %v2060 = vld [vmem:[%s2 + $0x2f50] sm:$0xff]
  %v2061 = vld [vmem:[%s2 + $0x2f58] sm:$0xff]
  %v2062 = vld [vmem:[%s2 + $0x2f60] sm:$0xff]
  %v2063 = vld [vmem:[%s2 + $0x2f68] sm:$0xff]
  %v2064 = vld [vmem:[%s2 + $0x2f70] sm:$0xff]
  %v2065 = vld [vmem:[%s2 + $0x2f78] sm:$0xff]
  %v2066 = vld [vmem:[%s2 + $0x2f80] sm:$0xff]
  %v2067 = vld [vmem:[%s2 + $0x2f88] sm:$0xff]
  %v2068 = vld [vmem:[%s2 + $0x2f90] sm:$0xff]
  %v2069 = vld [vmem:[%s2 + $0x2f98] sm:$0xff]
  %v2070 = vld [vmem:[%s2 + $0x2fa0] sm:$0xff]
  %v2071 = vld [vmem:[%s2 + $0x2fa8] sm:$0xff]
  %v2072 = vld [vmem:[%s2 + $0x2fb0] sm:$0xff]
  %v2073 = vld [vmem:[%s2 + $0x2fb8] sm:$0xff]
  %v2074 = vld [vmem:[%s2 + $0x2fc0] sm:$0xff]
  %v2075 = vld [vmem:[%s2 + $0x2fc8] sm:$0xff]
  %v2076 = vld [vmem:[%s2 + $0x2fd0] sm:$0xff]
  %v2077 = vld [vmem:[%s2 + $0x2fd8] sm:$0xff]
  %v2078 = vld [vmem:[%s2 + $0x2fe0] sm:$0xff]
  %v2079 = vld [vmem:[%s2 + $0x2fe8] sm:$0xff]
  %v2080 = vld [vmem:[%s2 + $0x2ff0] sm:$0xff]
  %v2081 = vld [vmem:[%s2 + $0x2ff8] sm:$0xff]
  %v2082 = vld [vmem:[%s2 + $0x3000] sm:$0xff]
  %v2083 = vld [vmem:[%s2 + $0x3008] sm:$0xff]
  %v2084 = vld [vmem:[%s2 + $0x3010] sm:$0xff]
  %v2085 = vld [vmem:[%s2 + $0x3018] sm:$0xff]
  %v2086 = vld [vmem:[%s2 + $0x3020] sm:$0xff]
  %v2087 = vld [vmem:[%s2 + $0x3028] sm:$0xff]
  %v2088 = vld [vmem:[%s2 + $0x3030] sm:$0xff]
  %v2089 = vld [vmem:[%s2 + $0x3038] sm:$0xff]
  %v2090 = vld [vmem:[%s2 + $0x3040] sm:$0xff]
  %v2091 = vld [vmem:[%s2 + $0x3048] sm:$0xff]
  %v2092 = vld [vmem:[%s2 + $0x3050] sm:$0xff]
  %v2093 = vld [vmem:[%s2 + $0x3058] sm:$0xff]
  %v2094 = vld [vmem:[%s2 + $0x3060] sm:$0xff]
  %v2095 = vld [vmem:[%s2 + $0x3068] sm:$0xff]
  %v2096 = vld [vmem:[%s2 + $0x3070] sm:$0xff]
  %v2097 = vld [vmem:[%s2 + $0x3078] sm:$0xff]
  %v2098 = vld [vmem:[%s2 + $0x3080] sm:$0xff]
  %v2099 = vld [vmem:[%s2 + $0x3088] sm:$0xff]
  %v2100 = vld [vmem:[%s2 + $0x3090] sm:$0xff]
  %v2101 = vld [vmem:[%s2 + $0x3098] sm:$0xff]
  %v2102 = vld [vmem:[%s2 + $0x30a0] sm:$0xff]
  %v2103 = vld [vmem:[%s2 + $0x30a8] sm:$0xff]
  %v2104 = vld [vmem:[%s2 + $0x30b0] sm:$0xff]
  %v2105 = vld [vmem:[%s2 + $0x30b8] sm:$0xff]
  %v2106 = vld [vmem:[%s2 + $0x30c0] sm:$0xff]
  %v2107 = vld [vmem:[%s2 + $0x30c8] sm:$0xff]
  %v2108 = vld [vmem:[%s2 + $0x30d0] sm:$0xff]
  %v2109 = vld [vmem:[%s2 + $0x30d8] sm:$0xff]
  %v2110 = vld [vmem:[%s2 + $0x30e0] sm:$0xff]
  %v2111 = vld [vmem:[%s2 + $0x30e8] sm:$0xff]
  %v2112 = vld [vmem:[%s2 + $0x30f0] sm:$0xff]
  %v2113 = vld [vmem:[%s2 + $0x30f8] sm:$0xff]
  %2114 = vmatprep.subr.mxu0 %v547
  %2115 = vmatpush1.msra.mxu0 %v546
  %2116 = vmatprep.subr.mxu0 %v549
  %2117 = vmatpush1.msra.mxu0 %v548
  %2118 = vmatprep.subr.mxu0 %v551
  %2119 = vmatpush1.msra.mxu0 %v550
  %2120 = vmatprep.subr.mxu0 %v553
  %2121 = vmatpush1.msra.mxu0 %v552
  %2122 = vmatprep.subr.mxu0 %v555
  %2123 = vmatpush1.msra.mxu0 %v554
  %2124 = vmatprep.subr.mxu0 %v557
  %2125 = vmatpush1.msra.mxu0 %v556
  %2126 = vmatprep.subr.mxu0 %v559
  %2127 = vmatpush1.msra.mxu0 %v558
  %2128 = vmatprep.subr.mxu0 %v561
  %2129 = vmatpush1.msra.mxu0 %v560
  %2130 = vmatprep.subr.mxu0 %v563
  %2131 = vmatpush1.msra.mxu0 %v562
  %2132 = vmatprep.subr.mxu0 %v565
  %2133 = vmatpush1.msra.mxu0 %v564
  %2134 = vmatprep.subr.mxu0 %v567
  %2135 = vmatpush1.msra.mxu0 %v566
  %2136 = vmatprep.subr.mxu0 %v569
  %2137 = vmatpush1.msra.mxu0 %v568
  %2138 = vmatprep.subr.mxu0 %v571
  %2139 = vmatpush1.msra.mxu0 %v570
  %2140 = vmatprep.subr.mxu0 %v573
  %2141 = vmatpush1.msra.mxu0 %v572
  %2142 = vmatprep.subr.mxu0 %v575
  %2143 = vmatpush1.msra.mxu0 %v574
  %2144 = vmatprep.subr.mxu0 %v577
  %2145 = vmatpush1.msra.mxu0 %v576
  %2146 = vmatprep.subr.mxu0 0.0
  %2147 = vmatpush1.msra.mxu0 0.0
  %2148 = vmatprep.subr.mxu0 0.0
  %2149 = vmatpush1.msra.mxu0 0.0
  %2150 = vmatprep.subr.mxu0 0.0
  %2151 = vmatpush1.msra.mxu0 0.0
  %2152 = vmatprep.subr.mxu0 0.0
  %2153 = vmatpush1.msra.mxu0 0.0
  %2154 = vmatprep.subr.mxu0 0.0
  %2155 = vmatpush1.msra.mxu0 0.0
  %2156 = vmatprep.subr.mxu0 0.0
  %2157 = vmatpush1.msra.mxu0 0.0
  %2158 = vmatprep.subr.mxu0 0.0
  %2159 = vmatpush1.msra.mxu0 0.0
  %2160 = vmatprep.subr.mxu0 0.0
  %2161 = vmatpush1.msra.mxu0 0.0
  %2162 = vmatprep.subr.mxu0 0.0
  %2163 = vmatpush1.msra.mxu0 0.0
  %2164 = vmatprep.subr.mxu0 0.0
  %2165 = vmatpush1.msra.mxu0 0.0
  %2166 = vmatprep.subr.mxu0 0.0
  %2167 = vmatpush1.msra.mxu0 0.0
  %2168 = vmatprep.subr.mxu0 0.0
  %2169 = vmatpush1.msra.mxu0 0.0
  %2170 = vmatprep.subr.mxu0 0.0
  %2171 = vmatpush1.msra.mxu0 0.0
  %2172 = vmatprep.subr.mxu0 0.0
  %2173 = vmatpush1.msra.mxu0 0.0
  %2174 = vmatprep.subr.mxu0 0.0
  %2175 = vmatpush1.msra.mxu0 0.0
  %2176 = vmatprep.subr.mxu0 0.0
  %2177 = vmatpush1.msra.mxu0 0.0
  %2178 = vmatprep.mubr.f32.mxu0 0.0
  %2179 = vmatmul.mubr.f32.gmra.mrb[0].mxu0 %v303
  %v2180 = vpop.f32.mrb[0].mxu0
  %v2181 = vadd.f32 0.0, %v2180
  %v2182 = vpop.f32.mrb[0].mxu0
  %v2183 = vadd.f32 0.0, %v2182
  %2184 = vdwg.mxu0
  %2185 = vmatprep.subr.mxu0 %v579
  %2186 = vmatpush1.msra.mxu0 %v578
  %2187 = vmatprep.subr.mxu0 %v581
  %2188 = vmatpush1.msra.mxu0 %v580
  %2189 = vmatprep.subr.mxu0 %v583
  %2190 = vmatpush1.msra.mxu0 %v582
  %2191 = vmatprep.subr.mxu0 %v585
  %2192 = vmatpush1.msra.mxu0 %v584
  %2193 = vmatprep.subr.mxu0 %v587
  %2194 = vmatpush1.msra.mxu0 %v586
  %2195 = vmatprep.subr.mxu0 %v589
  %2196 = vmatpush1.msra.mxu0 %v588
  %2197 = vmatprep.subr.mxu0 %v591
  %2198 = vmatpush1.msra.mxu0 %v590
  %2199 = vmatprep.subr.mxu0 %v593
  %2200 = vmatpush1.msra.mxu0 %v592
  %2201 = vmatprep.subr.mxu0 %v595
  %2202 = vmatpush1.msra.mxu0 %v594
  %2203 = vmatprep.subr.mxu0 %v597
  %2204 = vmatpush1.msra.mxu0 %v596
  %2205 = vmatprep.subr.mxu0 %v599
  %2206 = vmatpush1.msra.mxu0 %v598
  %2207 = vmatprep.subr.mxu0 %v601
  %2208 = vmatpush1.msra.mxu0 %v600
  %2209 = vmatprep.subr.mxu0 %v603
  %2210 = vmatpush1.msra.mxu0 %v602
  %2211 = vmatprep.subr.mxu0 %v605
  %2212 = vmatpush1.msra.mxu0 %v604
  %2213 = vmatprep.subr.mxu0 %v607
  %2214 = vmatpush1.msra.mxu0 %v606
  %2215 = vmatprep.subr.mxu0 %v609
  %2216 = vmatpush1.msra.mxu0 %v608
  %2217 = vmatprep.subr.mxu0 0.0
  %2218 = vmatpush1.msra.mxu0 0.0
  %2219 = vmatprep.subr.mxu0 0.0
  %2220 = vmatpush1.msra.mxu0 0.0
  %2221 = vmatprep.subr.mxu0 0.0
  %2222 = vmatpush1.msra.mxu0 0.0
  %2223 = vmatprep.subr.mxu0 0.0
  %2224 = vmatpush1.msra.mxu0 0.0
  %2225 = vmatprep.subr.mxu0 0.0
  %2226 = vmatpush1.msra.mxu0 0.0
  %2227 = vmatprep.subr.mxu0 0.0
  %2228 = vmatpush1.msra.mxu0 0.0
  %2229 = vmatprep.subr.mxu0 0.0
  %2230 = vmatpush1.msra.mxu0 0.0
  %2231 = vmatprep.subr.mxu0 0.0
  %2232 = vmatpush1.msra.mxu0 0.0
  %2233 = vmatprep.subr.mxu0 0.0
  %2234 = vmatpush1.msra.mxu0 0.0
  %2235 = vmatprep.subr.mxu0 0.0
  %2236 = vmatpush1.msra.mxu0 0.0
  %2237 = vmatprep.subr.mxu0 0.0
  %2238 = vmatpush1.msra.mxu0 0.0
  %2239 = vmatprep.subr.mxu0 0.0
  %2240 = vmatpush1.msra.mxu0 0.0
  %2241 = vmatprep.subr.mxu0 0.0
  %2242 = vmatpush1.msra.mxu0 0.0
  %2243 = vmatprep.subr.mxu0 0.0
  %2244 = vmatpush1.msra.mxu0 0.0
  %2245 = vmatprep.subr.mxu0 0.0
  %2246 = vmatpush1.msra.mxu0 0.0
  %2247 = vmatprep.subr.mxu0 0.0
  %2248 = vmatpush1.msra.mxu0 0.0
  %2249 = vmatprep.mubr.f32.mxu0 0.0
  %2250 = vmatmul.mubr.f32.gmra.mrb[0].mxu0 %v308
  %v2251 = vpop.f32.mrb[0].mxu0
  %v2252 = vadd.f32 0.0, %v2251
  %v2253 = vpop.f32.mrb[0].mxu0
  %v2254 = vadd.f32 0.0, %v2253
  %2255 = vdwg.mxu0
  %2256 = vmatprep.subr.mxu0 %v611
  %2257 = vmatpush1.msra.mxu0 %v610
  %2258 = vmatprep.subr.mxu0 %v613
  %2259 = vmatpush1.msra.mxu0 %v612
  %2260 = vmatprep.subr.mxu0 %v615
  %2261 = vmatpush1.msra.mxu0 %v614
  %2262 = vmatprep.subr.mxu0 %v617
  %2263 = vmatpush1.msra.mxu0 %v616
  %2264 = vmatprep.subr.mxu0 %v619
  %2265 = vmatpush1.msra.mxu0 %v618
  %2266 = vmatprep.subr.mxu0 %v621
  %2267 = vmatpush1.msra.mxu0 %v620
  %2268 = vmatprep.subr.mxu0 %v623
  %2269 = vmatpush1.msra.mxu0 %v622
  %2270 = vmatprep.subr.mxu0 %v625
  %2271 = vmatpush1.msra.mxu0 %v624
  %2272 = vmatprep.subr.mxu0 %v627
  %2273 = vmatpush1.msra.mxu0 %v626
  %2274 = vmatprep.subr.mxu0 %v629
  %2275 = vmatpush1.msra.mxu0 %v628
  %2276 = vmatprep.subr.mxu0 %v631
  %2277 = vmatpush1.msra.mxu0 %v630
  %2278 = vmatprep.subr.mxu0 %v633
  %2279 = vmatpush1.msra.mxu0 %v632
  %2280 = vmatprep.subr.mxu0 %v635
  %2281 = vmatpush1.msra.mxu0 %v634
  %2282 = vmatprep.subr.mxu0 %v637
  %2283 = vmatpush1.msra.mxu0 %v636
  %2284 = vmatprep.subr.mxu0 %v639
  %2285 = vmatpush1.msra.mxu0 %v638
  %2286 = vmatprep.subr.mxu0 %v641
  %2287 = vmatpush1.msra.mxu0 %v640
  %2288 = vmatprep.subr.mxu0 0.0
  %2289 = vmatpush1.msra.mxu0 0.0
  %2290 = vmatprep.subr.mxu0 0.0
  %2291 = vmatpush1.msra.mxu0 0.0
  %2292 = vmatprep.subr.mxu0 0.0
  %2293 = vmatpush1.msra.mxu0 0.0
  %2294 = vmatprep.subr.mxu0 0.0
  %2295 = vmatpush1.msra.mxu0 0.0
  %2296 = vmatprep.subr.mxu0 0.0
  %2297 = vmatpush1.msra.mxu0 0.0
  %2298 = vmatprep.subr.mxu0 0.0
  %2299 = vmatpush1.msra.mxu0 0.0
  %2300 = vmatprep.subr.mxu0 0.0
  %2301 = vmatpush1.msra.mxu0 0.0
  %2302 = vmatprep.subr.mxu0 0.0
  %2303 = vmatpush1.msra.mxu0 0.0
  %2304 = vmatprep.subr.mxu0 0.0
  %2305 = vmatpush1.msra.mxu0 0.0
  %2306 = vmatprep.subr.mxu0 0.0
  %2307 = vmatpush1.msra.mxu0 0.0
  %2308 = vmatprep.subr.mxu0 0.0
  %2309 = vmatpush1.msra.mxu0 0.0
  %2310 = vmatprep.subr.mxu0 0.0
  %2311 = vmatpush1.msra.mxu0 0.0
  %2312 = vmatprep.subr.mxu0 0.0
  %2313 = vmatpush1.msra.mxu0 0.0
  %2314 = vmatprep.subr.mxu0 0.0
  %2315 = vmatpush1.msra.mxu0 0.0
  %2316 = vmatprep.subr.mxu0 0.0
  %2317 = vmatpush1.msra.mxu0 0.0
  %2318 = vmatprep.subr.mxu0 0.0
  %2319 = vmatpush1.msra.mxu0 0.0
  %2320 = vmatprep.mubr.f32.mxu0 0.0
  %2321 = vmatmul.mubr.f32.gmra.mrb[0].mxu0 %v313
  %v2322 = vpop.f32.mrb[0].mxu0
  %v2323 = vadd.f32 0.0, %v2322
  %v2324 = vpop.f32.mrb[0].mxu0
  %v2325 = vadd.f32 0.0, %v2324
  %2326 = vdwg.mxu0
  %2327 = vmatprep.subr.mxu0 %v643
  %2328 = vmatpush1.msra.mxu0 %v642
  %2329 = vmatprep.subr.mxu0 %v645
  %2330 = vmatpush1.msra.mxu0 %v644
  %2331 = vmatprep.subr.mxu0 %v647
  %2332 = vmatpush1.msra.mxu0 %v646
  %2333 = vmatprep.subr.mxu0 %v649
  %2334 = vmatpush1.msra.mxu0 %v648
  %2335 = vmatprep.subr.mxu0 %v651
  %2336 = vmatpush1.msra.mxu0 %v650
  %2337 = vmatprep.subr.mxu0 %v653
  %2338 = vmatpush1.msra.mxu0 %v652
  %2339 = vmatprep.subr.mxu0 %v655
  %2340 = vmatpush1.msra.mxu0 %v654
  %2341 = vmatprep.subr.mxu0 %v657
  %2342 = vmatpush1.msra.mxu0 %v656
  %2343 = vmatprep.subr.mxu0 %v659
  %2344 = vmatpush1.msra.mxu0 %v658
  %2345 = vmatprep.subr.mxu0 %v661
  %2346 = vmatpush1.msra.mxu0 %v660
  %2347 = vmatprep.subr.mxu0 %v663
  %2348 = vmatpush1.msra.mxu0 %v662
  %2349 = vmatprep.subr.mxu0 %v665
  %2350 = vmatpush1.msra.mxu0 %v664
  %2351 = vmatprep.subr.mxu0 %v667
  %2352 = vmatpush1.msra.mxu0 %v666
  %2353 = vmatprep.subr.mxu0 %v669
  %2354 = vmatpush1.msra.mxu0 %v668
  %2355 = vmatprep.subr.mxu0 %v671
  %2356 = vmatpush1.msra.mxu0 %v670
  %2357 = vmatprep.subr.mxu0 %v673
  %2358 = vmatpush1.msra.mxu0 %v672
  %2359 = vmatprep.subr.mxu0 0.0
  %2360 = vmatpush1.msra.mxu0 0.0
  %2361 = vmatprep.subr.mxu0 0.0
  %2362 = vmatpush1.msra.mxu0 0.0
  %2363 = vmatprep.subr.mxu0 0.0
  %2364 = vmatpush1.msra.mxu0 0.0
  %2365 = vmatprep.subr.mxu0 0.0
  %2366 = vmatpush1.msra.mxu0 0.0
  %2367 = vmatprep.subr.mxu0 0.0
  %2368 = vmatpush1.msra.mxu0 0.0
  %2369 = vmatprep.subr.mxu0 0.0
  %2370 = vmatpush1.msra.mxu0 0.0
  %2371 = vmatprep.subr.mxu0 0.0
  %2372 = vmatpush1.msra.mxu0 0.0
  %2373 = vmatprep.subr.mxu0 0.0
  %2374 = vmatpush1.msra.mxu0 0.0
  %2375 = vmatprep.subr.mxu0 0.0
  %2376 = vmatpush1.msra.mxu0 0.0
  %2377 = vmatprep.subr.mxu0 0.0
  %2378 = vmatpush1.msra.mxu0 0.0
  %2379 = vmatprep.subr.mxu0 0.0
  %2380 = vmatpush1.msra.mxu0 0.0
  %2381 = vmatprep.subr.mxu0 0.0
  %2382 = vmatpush1.msra.mxu0 0.0
  %2383 = vmatprep.subr.mxu0 0.0
  %2384 = vmatpush1.msra.mxu0 0.0
  %2385 = vmatprep.subr.mxu0 0.0
  %2386 = vmatpush1.msra.mxu0 0.0
  %2387 = vmatprep.subr.mxu0 0.0
  %2388 = vmatpush1.msra.mxu0 0.0
  %2389 = vmatprep.subr.mxu0 0.0
  %2390 = vmatpush1.msra.mxu0 0.0
  %2391 = vmatprep.mubr.f32.mxu0 0.0
  %2392 = vmatmul.mubr.f32.gmra.mrb[0].mxu0 %v318
  %v2393 = vpop.f32.mrb[0].mxu0
  %v2394 = vadd.f32 0.0, %v2393
  %v2395 = vpop.f32.mrb[0].mxu0
  %v2396 = vadd.f32 0.0, %v2395
  %2397 = vdwg.mxu0
  %2398 = vmatprep.subr.mxu0 %v675
  %2399 = vmatpush1.msra.mxu0 %v674
  %2400 = vmatprep.subr.mxu0 %v677
  %2401 = vmatpush1.msra.mxu0 %v676
  %2402 = vmatprep.subr.mxu0 %v679
  %2403 = vmatpush1.msra.mxu0 %v678
  %2404 = vmatprep.subr.mxu0 %v681
  %2405 = vmatpush1.msra.mxu0 %v680
  %2406 = vmatprep.subr.mxu0 %v683
  %2407 = vmatpush1.msra.mxu0 %v682
  %2408 = vmatprep.subr.mxu0 %v685
  %2409 = vmatpush1.msra.mxu0 %v684
  %2410 = vmatprep.subr.mxu0 %v687
  %2411 = vmatpush1.msra.mxu0 %v686
  %2412 = vmatprep.subr.mxu0 %v689
  %2413 = vmatpush1.msra.mxu0 %v688
  %2414 = vmatprep.subr.mxu0 %v691
  %2415 = vmatpush1.msra.mxu0 %v690
  %2416 = vmatprep.subr.mxu0 %v693
  %2417 = vmatpush1.msra.mxu0 %v692
  %2418 = vmatprep.subr.mxu0 %v695
  %2419 = vmatpush1.msra.mxu0 %v694
  %2420 = vmatprep.subr.mxu0 %v697
  %2421 = vmatpush1.msra.mxu0 %v696
  %2422 = vmatprep.subr.mxu0 %v699
  %2423 = vmatpush1.msra.mxu0 %v698
  %2424 = vmatprep.subr.mxu0 %v701
  %2425 = vmatpush1.msra.mxu0 %v700
  %2426 = vmatprep.subr.mxu0 %v703
  %2427 = vmatpush1.msra.mxu0 %v702
  %2428 = vmatprep.subr.mxu0 %v705
  %2429 = vmatpush1.msra.mxu0 %v704
  %2430 = vmatprep.subr.mxu0 0.0
  %2431 = vmatpush1.msra.mxu0 0.0
  %2432 = vmatprep.subr.mxu0 0.0
  %2433 = vmatpush1.msra.mxu0 0.0
  %2434 = vmatprep.subr.mxu0 0.0
  %2435 = vmatpush1.msra.mxu0 0.0
  %2436 = vmatprep.subr.mxu0 0.0
  %2437 = vmatpush1.msra.mxu0 0.0
  %2438 = vmatprep.subr.mxu0 0.0
  %2439 = vmatpush1.msra.mxu0 0.0
  %2440 = vmatprep.subr.mxu0 0.0
  %2441 = vmatpush1.msra.mxu0 0.0
  %2442 = vmatprep.subr.mxu0 0.0
  %2443 = vmatpush1.msra.mxu0 0.0
  %2444 = vmatprep.subr.mxu0 0.0
  %2445 = vmatpush1.msra.mxu0 0.0
  %2446 = vmatprep.subr.mxu0 0.0
  %2447 = vmatpush1.msra.mxu0 0.0
  %2448 = vmatprep.subr.mxu0 0.0
  %2449 = vmatpush1.msra.mxu0 0.0
  %2450 = vmatprep.subr.mxu0 0.0
  %2451 = vmatpush1.msra.mxu0 0.0
  %2452 = vmatprep.subr.mxu0 0.0
  %2453 = vmatpush1.msra.mxu0 0.0
  %2454 = vmatprep.subr.mxu0 0.0
  %2455 = vmatpush1.msra.mxu0 0.0
  %2456 = vmatprep.subr.mxu0 0.0
  %2457 = vmatpush1.msra.mxu0 0.0
  %2458 = vmatprep.subr.mxu0 0.0
  %2459 = vmatpush1.msra.mxu0 0.0
  %2460 = vmatprep.subr.mxu0 0.0
  %2461 = vmatpush1.msra.mxu0 0.0
  %2462 = vmatprep.mubr.f32.mxu0 0.0
  %2463 = vmatmul.mubr.f32.gmra.mrb[0].mxu0 %v323
  %v2464 = vpop.f32.mrb[0].mxu0
  %v2465 = vadd.f32 0.0, %v2464
  %v2466 = vpop.f32.mrb[0].mxu0
  %v2467 = vadd.f32 0.0, %v2466
  %2468 = vdwg.mxu0
  %2469 = vmatprep.subr.mxu0 %v707
  %2470 = vmatpush1.msra.mxu0 %v706
  %2471 = vmatprep.subr.mxu0 %v709
  %2472 = vmatpush1.msra.mxu0 %v708
  %2473 = vmatprep.subr.mxu0 %v711
  %2474 = vmatpush1.msra.mxu0 %v710
  %2475 = vmatprep.subr.mxu0 %v713
  %2476 = vmatpush1.msra.mxu0 %v712
  %2477 = vmatprep.subr.mxu0 %v715
  %2478 = vmatpush1.msra.mxu0 %v714
  %2479 = vmatprep.subr.mxu0 %v717
  %2480 = vmatpush1.msra.mxu0 %v716
  %2481 = vmatprep.subr.mxu0 %v719
  %2482 = vmatpush1.msra.mxu0 %v718
  %2483 = vmatprep.subr.mxu0 %v721
  %2484 = vmatpush1.msra.mxu0 %v720
  %2485 = vmatprep.subr.mxu0 %v723
  %2486 = vmatpush1.msra.mxu0 %v722
  %2487 = vmatprep.subr.mxu0 %v725
  %2488 = vmatpush1.msra.mxu0 %v724
  %2489 = vmatprep.subr.mxu0 %v727
  %2490 = vmatpush1.msra.mxu0 %v726
  %2491 = vmatprep.subr.mxu0 %v729
  %2492 = vmatpush1.msra.mxu0 %v728
  %2493 = vmatprep.subr.mxu0 %v731
  %2494 = vmatpush1.msra.mxu0 %v730
  %2495 = vmatprep.subr.mxu0 %v733
  %2496 = vmatpush1.msra.mxu0 %v732
  %2497 = vmatprep.subr.mxu0 %v735
  %2498 = vmatpush1.msra.mxu0 %v734
  %2499 = vmatprep.subr.mxu0 %v737
  %2500 = vmatpush1.msra.mxu0 %v736
  %2501 = vmatprep.subr.mxu0 0.0
  %2502 = vmatpush1.msra.mxu0 0.0
  %2503 = vmatprep.subr.mxu0 0.0
  %2504 = vmatpush1.msra.mxu0 0.0
  %2505 = vmatprep.subr.mxu0 0.0
  %2506 = vmatpush1.msra.mxu0 0.0
  %2507 = vmatprep.subr.mxu0 0.0
  %2508 = vmatpush1.msra.mxu0 0.0
  %2509 = vmatprep.subr.mxu0 0.0
  %2510 = vmatpush1.msra.mxu0 0.0
  %2511 = vmatprep.subr.mxu0 0.0
  %2512 = vmatpush1.msra.mxu0 0.0
  %2513 = vmatprep.subr.mxu0 0.0
  %2514 = vmatpush1.msra.mxu0 0.0
  %2515 = vmatprep.subr.mxu0 0.0
  %2516 = vmatpush1.msra.mxu0 0.0
  %2517 = vmatprep.subr.mxu0 0.0
  %2518 = vmatpush1.msra.mxu0 0.0
  %2519 = vmatprep.subr.mxu0 0.0
  %2520 = vmatpush1.msra.mxu0 0.0
  %2521 = vmatprep.subr.mxu0 0.0
  %2522 = vmatpush1.msra.mxu0 0.0
  %2523 = vmatprep.subr.mxu0 0.0
  %2524 = vmatpush1.msra.mxu0 0.0
  %2525 = vmatprep.subr.mxu0 0.0
  %2526 = vmatpush1.msra.mxu0 0.0
  %2527 = vmatprep.subr.mxu0 0.0
  %2528 = vmatpush1.msra.mxu0 0.0
  %2529 = vmatprep.subr.mxu0 0.0
  %2530 = vmatpush1.msra.mxu0 0.0
  %2531 = vmatprep.subr.mxu0 0.0
  %2532 = vmatpush1.msra.mxu0 0.0
  %2533 = vmatprep.mubr.f32.mxu0 0.0
  %2534 = vmatmul.mubr.f32.gmra.mrb[0].mxu0 %v328
  %v2535 = vpop.f32.mrb[0].mxu0
  %v2536 = vadd.f32 0.0, %v2535
  %v2537 = vpop.f32.mrb[0].mxu0
  %v2538 = vadd.f32 0.0, %v2537
  %2539 = vdwg.mxu0
  %2540 = vmatprep.subr.mxu0 %v739
  %2541 = vmatpush1.msra.mxu0 %v738
  %2542 = vmatprep.subr.mxu0 %v741
  %2543 = vmatpush1.msra.mxu0 %v740
  %2544 = vmatprep.subr.mxu0 %v743
  %2545 = vmatpush1.msra.mxu0 %v742
  %2546 = vmatprep.subr.mxu0 %v745
  %2547 = vmatpush1.msra.mxu0 %v744
  %2548 = vmatprep.subr.mxu0 %v747
  %2549 = vmatpush1.msra.mxu0 %v746
  %2550 = vmatprep.subr.mxu0 %v749
  %2551 = vmatpush1.msra.mxu0 %v748
  %2552 = vmatprep.subr.mxu0 %v751
  %2553 = vmatpush1.msra.mxu0 %v750
  %2554 = vmatprep.subr.mxu0 %v753
  %2555 = vmatpush1.msra.mxu0 %v752
  %2556 = vmatprep.subr.mxu0 %v755
  %2557 = vmatpush1.msra.mxu0 %v754
  %2558 = vmatprep.subr.mxu0 %v757
  %2559 = vmatpush1.msra.mxu0 %v756
  %2560 = vmatprep.subr.mxu0 %v759
  %2561 = vmatpush1.msra.mxu0 %v758
  %2562 = vmatprep.subr.mxu0 %v761
  %2563 = vmatpush1.msra.mxu0 %v760
  %2564 = vmatprep.subr.mxu0 %v763
  %2565 = vmatpush1.msra.mxu0 %v762
  %2566 = vmatprep.subr.mxu0 %v765
  %2567 = vmatpush1.msra.mxu0 %v764
  %2568 = vmatprep.subr.mxu0 %v767
  %2569 = vmatpush1.msra.mxu0 %v766
  %2570 = vmatprep.subr.mxu0 %v769
  %2571 = vmatpush1.msra.mxu0 %v768
  %2572 = vmatprep.subr.mxu0 0.0
  %2573 = vmatpush1.msra.mxu0 0.0
  %2574 = vmatprep.subr.mxu0 0.0
  %2575 = vmatpush1.msra.mxu0 0.0
  %2576 = vmatprep.subr.mxu0 0.0
  %2577 = vmatpush1.msra.mxu0 0.0
  %2578 = vmatprep.subr.mxu0 0.0
  %2579 = vmatpush1.msra.mxu0 0.0
  %2580 = vmatprep.subr.mxu0 0.0
  %2581 = vmatpush1.msra.mxu0 0.0
  %2582 = vmatprep.subr.mxu0 0.0
  %2583 = vmatpush1.msra.mxu0 0.0
  %2584 = vmatprep.subr.mxu0 0.0
  %2585 = vmatpush1.msra.mxu0 0.0
  %2586 = vmatprep.subr.mxu0 0.0
  %2587 = vmatpush1.msra.mxu0 0.0
  %2588 = vmatprep.subr.mxu0 0.0
  %2589 = vmatpush1.msra.mxu0 0.0
  %2590 = vmatprep.subr.mxu0 0.0
  %2591 = vmatpush1.msra.mxu0 0.0
  %2592 = vmatprep.subr.mxu0 0.0
  %2593 = vmatpush1.msra.mxu0 0.0
  %2594 = vmatprep.subr.mxu0 0.0
  %2595 = vmatpush1.msra.mxu0 0.0
  %2596 = vmatprep.subr.mxu0 0.0
  %2597 = vmatpush1.msra.mxu0 0.0
  %2598 = vmatprep.subr.mxu0 0.0
  %2599 = vmatpush1.msra.mxu0 0.0
  %2600 = vmatprep.subr.mxu0 0.0
  %2601 = vmatpush1.msra.mxu0 0.0
  %2602 = vmatprep.subr.mxu0 0.0
  %2603 = vmatpush1.msra.mxu0 0.0
  %2604 = vmatprep.mubr.f32.mxu0 0.0
  %2605 = vmatmul.mubr.f32.gmra.mrb[0].mxu0 %v333
  %v2606 = vpop.f32.mrb[0].mxu0
  %v2607 = vadd.f32 0.0, %v2606
  %v2608 = vpop.f32.mrb[0].mxu0
  %v2609 = vadd.f32 0.0, %v2608
  %2610 = vdwg.mxu0
  %2611 = vmatprep.subr.mxu0 %v771
  %2612 = vmatpush1.msra.mxu0 %v770
  %2613 = vmatprep.subr.mxu0 %v773
  %2614 = vmatpush1.msra.mxu0 %v772
  %2615 = vmatprep.subr.mxu0 %v775
  %2616 = vmatpush1.msra.mxu0 %v774
  %2617 = vmatprep.subr.mxu0 %v777
  %2618 = vmatpush1.msra.mxu0 %v776
  %2619 = vmatprep.subr.mxu0 %v779
  %2620 = vmatpush1.msra.mxu0 %v778
  %2621 = vmatprep.subr.mxu0 %v781
  %2622 = vmatpush1.msra.mxu0 %v780
  %2623 = vmatprep.subr.mxu0 %v783
  %2624 = vmatpush1.msra.mxu0 %v782
  %2625 = vmatprep.subr.mxu0 %v785
  %2626 = vmatpush1.msra.mxu0 %v784
  %2627 = vmatprep.subr.mxu0 %v787
  %2628 = vmatpush1.msra.mxu0 %v786
  %2629 = vmatprep.subr.mxu0 %v789
  %2630 = vmatpush1.msra.mxu0 %v788
  %2631 = vmatprep.subr.mxu0 %v791
  %2632 = vmatpush1.msra.mxu0 %v790
  %2633 = vmatprep.subr.mxu0 %v793
  %2634 = vmatpush1.msra.mxu0 %v792
  %2635 = vmatprep.subr.mxu0 %v795
  %2636 = vmatpush1.msra.mxu0 %v794
  %2637 = vmatprep.subr.mxu0 %v797
  %2638 = vmatpush1.msra.mxu0 %v796
  %2639 = vmatprep.subr.mxu0 %v799
  %2640 = vmatpush1.msra.mxu0 %v798
  %2641 = vmatprep.subr.mxu0 %v801
  %2642 = vmatpush1.msra.mxu0 %v800
  %2643 = vmatprep.subr.mxu0 0.0
  %2644 = vmatpush1.msra.mxu0 0.0
  %2645 = vmatprep.subr.mxu0 0.0
  %2646 = vmatpush1.msra.mxu0 0.0
  %2647 = vmatprep.subr.mxu0 0.0
  %2648 = vmatpush1.msra.mxu0 0.0
  %2649 = vmatprep.subr.mxu0 0.0
  %2650 = vmatpush1.msra.mxu0 0.0
  %2651 = vmatprep.subr.mxu0 0.0
  %2652 = vmatpush1.msra.mxu0 0.0
  %2653 = vmatprep.subr.mxu0 0.0
  %2654 = vmatpush1.msra.mxu0 0.0
  %2655 = vmatprep.subr.mxu0 0.0
  %2656 = vmatpush1.msra.mxu0 0.0
  %2657 = vmatprep.subr.mxu0 0.0
  %2658 = vmatpush1.msra.mxu0 0.0
  %2659 = vmatprep.subr.mxu0 0.0
  %2660 = vmatpush1.msra.mxu0 0.0
  %2661 = vmatprep.subr.mxu0 0.0
  %2662 = vmatpush1.msra.mxu0 0.0
  %2663 = vmatprep.subr.mxu0 0.0
  %2664 = vmatpush1.msra.mxu0 0.0
  %2665 = vmatprep.subr.mxu0 0.0
  %2666 = vmatpush1.msra.mxu0 0.0
  %2667 = vmatprep.subr.mxu0 0.0
  %2668 = vmatpush1.msra.mxu0 0.0
  %2669 = vmatprep.subr.mxu0 0.0
  %2670 = vmatpush1.msra.mxu0 0.0
  %2671 = vmatprep.subr.mxu0 0.0
  %2672 = vmatpush1.msra.mxu0 0.0
  %2673 = vmatprep.subr.mxu0 0.0
  %2674 = vmatpush1.msra.mxu0 0.0
  %2675 = vmatprep.mubr.f32.mxu0 0.0
  %2676 = vmatmul.mubr.f32.gmra.mrb[0].mxu0 %v338
  %v2677 = vpop.f32.mrb[0].mxu0
  %v2678 = vadd.f32 0.0, %v2677
  %v2679 = vpop.f32.mrb[0].mxu0
  %v2680 = vadd.f32 0.0, %v2679
  %2681 = vdwg.mxu0
  %2682 = vmatprep.subr.mxu0 %v803
  %2683 = vmatpush1.msra.mxu0 %v802
  %2684 = vmatprep.subr.mxu0 %v805
  %2685 = vmatpush1.msra.mxu0 %v804
  %2686 = vmatprep.subr.mxu0 %v807
  %2687 = vmatpush1.msra.mxu0 %v806
  %2688 = vmatprep.subr.mxu0 %v809
  %2689 = vmatpush1.msra.mxu0 %v808
  %2690 = vmatprep.subr.mxu0 %v811
  %2691 = vmatpush1.msra.mxu0 %v810
  %2692 = vmatprep.subr.mxu0 %v813
  %2693 = vmatpush1.msra.mxu0 %v812
  %2694 = vmatprep.subr.mxu0 %v815
  %2695 = vmatpush1.msra.mxu0 %v814
  %2696 = vmatprep.subr.mxu0 %v817
  %2697 = vmatpush1.msra.mxu0 %v816
  %2698 = vmatprep.subr.mxu0 %v819
  %2699 = vmatpush1.msra.mxu0 %v818
  %2700 = vmatprep.subr.mxu0 %v821
  %2701 = vmatpush1.msra.mxu0 %v820
  %2702 = vmatprep.subr.mxu0 %v823
  %2703 = vmatpush1.msra.mxu0 %v822
  %2704 = vmatprep.subr.mxu0 %v825
  %2705 = vmatpush1.msra.mxu0 %v824
  %2706 = vmatprep.subr.mxu0 %v827
  %2707 = vmatpush1.msra.mxu0 %v826
  %2708 = vmatprep.subr.mxu0 %v829
  %2709 = vmatpush1.msra.mxu0 %v828
  %2710 = vmatprep.subr.mxu0 %v831
  %2711 = vmatpush1.msra.mxu0 %v830
  %2712 = vmatprep.subr.mxu0 %v833
  %2713 = vmatpush1.msra.mxu0 %v832
  %2714 = vmatprep.subr.mxu0 0.0
  %2715 = vmatpush1.msra.mxu0 0.0
  %2716 = vmatprep.subr.mxu0 0.0
  %2717 = vmatpush1.msra.mxu0 0.0
  %2718 = vmatprep.subr.mxu0 0.0
  %2719 = vmatpush1.msra.mxu0 0.0
  %2720 = vmatprep.subr.mxu0 0.0
  %2721 = vmatpush1.msra.mxu0 0.0
  %2722 = vmatprep.subr.mxu0 0.0
  %2723 = vmatpush1.msra.mxu0 0.0
  %2724 = vmatprep.subr.mxu0 0.0
  %2725 = vmatpush1.msra.mxu0 0.0
  %2726 = vmatprep.subr.mxu0 0.0
  %2727 = vmatpush1.msra.mxu0 0.0
  %2728 = vmatprep.subr.mxu0 0.0
  %2729 = vmatpush1.msra.mxu0 0.0
  %2730 = vmatprep.subr.mxu0 0.0
  %2731 = vmatpush1.msra.mxu0 0.0
  %2732 = vmatprep.subr.mxu0 0.0
  %2733 = vmatpush1.msra.mxu0 0.0
  %2734 = vmatprep.subr.mxu0 0.0
  %2735 = vmatpush1.msra.mxu0 0.0
  %2736 = vmatprep.subr.mxu0 0.0
  %2737 = vmatpush1.msra.mxu0 0.0
  %2738 = vmatprep.subr.mxu0 0.0
  %2739 = vmatpush1.msra.mxu0 0.0
  %2740 = vmatprep.subr.mxu0 0.0
  %2741 = vmatpush1.msra.mxu0 0.0
  %2742 = vmatprep.subr.mxu0 0.0
  %2743 = vmatpush1.msra.mxu0 0.0
  %2744 = vmatprep.subr.mxu0 0.0
  %2745 = vmatpush1.msra.mxu0 0.0
  %2746 = vmatprep.mubr.f32.mxu0 0.0
  %2747 = vmatmul.mubr.f32.gmra.mrb[0].mxu0 %v343
  %v2748 = vpop.f32.mrb[0].mxu0
  %v2749 = vadd.f32 0.0, %v2748
  %v2750 = vpop.f32.mrb[0].mxu0
  %v2751 = vadd.f32 0.0, %v2750
  %2752 = vdwg.mxu0
  %2753 = vmatprep.subr.mxu0 %v835
  %2754 = vmatpush1.msra.mxu0 %v834
  %2755 = vmatprep.subr.mxu0 %v837
  %2756 = vmatpush1.msra.mxu0 %v836
  %2757 = vmatprep.subr.mxu0 %v839
  %2758 = vmatpush1.msra.mxu0 %v838
  %2759 = vmatprep.subr.mxu0 %v841
  %2760 = vmatpush1.msra.mxu0 %v840
  %2761 = vmatprep.subr.mxu0 %v843
  %2762 = vmatpush1.msra.mxu0 %v842
  %2763 = vmatprep.subr.mxu0 %v845
  %2764 = vmatpush1.msra.mxu0 %v844
  %2765 = vmatprep.subr.mxu0 %v847
  %2766 = vmatpush1.msra.mxu0 %v846
  %2767 = vmatprep.subr.mxu0 %v849
  %2768 = vmatpush1.msra.mxu0 %v848
  %2769 = vmatprep.subr.mxu0 %v851
  %2770 = vmatpush1.msra.mxu0 %v850
  %2771 = vmatprep.subr.mxu0 %v853
  %2772 = vmatpush1.msra.mxu0 %v852
  %2773 = vmatprep.subr.mxu0 %v855
  %2774 = vmatpush1.msra.mxu0 %v854
  %2775 = vmatprep.subr.mxu0 %v857
  %2776 = vmatpush1.msra.mxu0 %v856
  %2777 = vmatprep.subr.mxu0 %v859
  %2778 = vmatpush1.msra.mxu0 %v858
  %2779 = vmatprep.subr.mxu0 %v861
  %2780 = vmatpush1.msra.mxu0 %v860
  %2781 = vmatprep.subr.mxu0 %v863
  %2782 = vmatpush1.msra.mxu0 %v862
  %2783 = vmatprep.subr.mxu0 %v865
  %2784 = vmatpush1.msra.mxu0 %v864
  %2785 = vmatprep.subr.mxu0 0.0
  %2786 = vmatpush1.msra.mxu0 0.0
  %2787 = vmatprep.subr.mxu0 0.0
  %2788 = vmatpush1.msra.mxu0 0.0
  %2789 = vmatprep.subr.mxu0 0.0
  %2790 = vmatpush1.msra.mxu0 0.0
  %2791 = vmatprep.subr.mxu0 0.0
  %2792 = vmatpush1.msra.mxu0 0.0
  %2793 = vmatprep.subr.mxu0 0.0
  %2794 = vmatpush1.msra.mxu0 0.0
  %2795 = vmatprep.subr.mxu0 0.0
  %2796 = vmatpush1.msra.mxu0 0.0
  %2797 = vmatprep.subr.mxu0 0.0
  %2798 = vmatpush1.msra.mxu0 0.0
  %2799 = vmatprep.subr.mxu0 0.0
  %2800 = vmatpush1.msra.mxu0 0.0
  %2801 = vmatprep.subr.mxu0 0.0
  %2802 = vmatpush1.msra.mxu0 0.0
  %2803 = vmatprep.subr.mxu0 0.0
  %2804 = vmatpush1.msra.mxu0 0.0
  %2805 = vmatprep.subr.mxu0 0.0
  %2806 = vmatpush1.msra.mxu0 0.0
  %2807 = vmatprep.subr.mxu0 0.0
  %2808 = vmatpush1.msra.mxu0 0.0
  %2809 = vmatprep.subr.mxu0 0.0
  %2810 = vmatpush1.msra.mxu0 0.0
  %2811 = vmatprep.subr.mxu0 0.0
  %2812 = vmatpush1.msra.mxu0 0.0
  %2813 = vmatprep.subr.mxu0 0.0
  %2814 = vmatpush1.msra.mxu0 0.0
  %2815 = vmatprep.subr.mxu0 0.0
  %2816 = vmatpush1.msra.mxu0 0.0
  %2817 = vmatprep.mubr.f32.mxu0 0.0
  %2818 = vmatmul.mubr.f32.gmra.mrb[0].mxu0 %v348
  %v2819 = vpop.f32.mrb[0].mxu0
  %v2820 = vadd.f32 0.0, %v2819
  %v2821 = vpop.f32.mrb[0].mxu0
  %v2822 = vadd.f32 0.0, %v2821
  %2823 = vdwg.mxu0
  %2824 = vmatprep.subr.mxu0 %v867
  %2825 = vmatpush1.msra.mxu0 %v866
  %2826 = vmatprep.subr.mxu0 %v869
  %2827 = vmatpush1.msra.mxu0 %v868
  %2828 = vmatprep.subr.mxu0 %v871
  %2829 = vmatpush1.msra.mxu0 %v870
  %2830 = vmatprep.subr.mxu0 %v873
  %2831 = vmatpush1.msra.mxu0 %v872
  %2832 = vmatprep.subr.mxu0 %v875
  %2833 = vmatpush1.msra.mxu0 %v874
  %2834 = vmatprep.subr.mxu0 %v877
  %2835 = vmatpush1.msra.mxu0 %v876
  %2836 = vmatprep.subr.mxu0 %v879
  %2837 = vmatpush1.msra.mxu0 %v878
  %2838 = vmatprep.subr.mxu0 %v881
  %2839 = vmatpush1.msra.mxu0 %v880
  %2840 = vmatprep.subr.mxu0 %v883
  %2841 = vmatpush1.msra.mxu0 %v882
  %2842 = vmatprep.subr.mxu0 %v885
  %2843 = vmatpush1.msra.mxu0 %v884
  %2844 = vmatprep.subr.mxu0 %v887
  %2845 = vmatpush1.msra.mxu0 %v886
  %2846 = vmatprep.subr.mxu0 %v889
  %2847 = vmatpush1.msra.mxu0 %v888
  %2848 = vmatprep.subr.mxu0 %v891
  %2849 = vmatpush1.msra.mxu0 %v890
  %2850 = vmatprep.subr.mxu0 %v893
  %2851 = vmatpush1.msra.mxu0 %v892
  %2852 = vmatprep.subr.mxu0 %v895
  %2853 = vmatpush1.msra.mxu0 %v894
  %2854 = vmatprep.subr.mxu0 %v897
  %2855 = vmatpush1.msra.mxu0 %v896
  %2856 = vmatprep.subr.mxu0 0.0
  %2857 = vmatpush1.msra.mxu0 0.0
  %2858 = vmatprep.subr.mxu0 0.0
  %2859 = vmatpush1.msra.mxu0 0.0
  %2860 = vmatprep.subr.mxu0 0.0
  %2861 = vmatpush1.msra.mxu0 0.0
  %2862 = vmatprep.subr.mxu0 0.0
  %2863 = vmatpush1.msra.mxu0 0.0
  %2864 = vmatprep.subr.mxu0 0.0
  %2865 = vmatpush1.msra.mxu0 0.0
  %2866 = vmatprep.subr.mxu0 0.0
  %2867 = vmatpush1.msra.mxu0 0.0
  %2868 = vmatprep.subr.mxu0 0.0
  %2869 = vmatpush1.msra.mxu0 0.0
  %2870 = vmatprep.subr.mxu0 0.0
  %2871 = vmatpush1.msra.mxu0 0.0
  %2872 = vmatprep.subr.mxu0 0.0
  %2873 = vmatpush1.msra.mxu0 0.0
  %2874 = vmatprep.subr.mxu0 0.0
  %2875 = vmatpush1.msra.mxu0 0.0
  %2876 = vmatprep.subr.mxu0 0.0
  %2877 = vmatpush1.msra.mxu0 0.0
  %2878 = vmatprep.subr.mxu0 0.0
  %2879 = vmatpush1.msra.mxu0 0.0
  %2880 = vmatprep.subr.mxu0 0.0
  %2881 = vmatpush1.msra.mxu0 0.0
  %2882 = vmatprep.subr.mxu0 0.0
  %2883 = vmatpush1.msra.mxu0 0.0
  %2884 = vmatprep.subr.mxu0 0.0
  %2885 = vmatpush1.msra.mxu0 0.0
  %2886 = vmatprep.subr.mxu0 0.0
  %2887 = vmatpush1.msra.mxu0 0.0
  %2888 = vmatprep.mubr.f32.mxu0 0.0
  %2889 = vmatmul.mubr.f32.gmra.mrb[0].mxu0 %v353
  %v2890 = vpop.f32.mrb[0].mxu0
  %v2891 = vadd.f32 0.0, %v2890
  %v2892 = vpop.f32.mrb[0].mxu0
  %v2893 = vadd.f32 0.0, %v2892
  %2894 = vdwg.mxu0
  %2895 = vmatprep.subr.mxu0 %v899
  %2896 = vmatpush1.msra.mxu0 %v898
  %2897 = vmatprep.subr.mxu0 %v901
  %2898 = vmatpush1.msra.mxu0 %v900
  %2899 = vmatprep.subr.mxu0 %v903
  %2900 = vmatpush1.msra.mxu0 %v902
  %2901 = vmatprep.subr.mxu0 %v905
  %2902 = vmatpush1.msra.mxu0 %v904
  %2903 = vmatprep.subr.mxu0 %v907
  %2904 = vmatpush1.msra.mxu0 %v906
  %2905 = vmatprep.subr.mxu0 %v909
  %2906 = vmatpush1.msra.mxu0 %v908
  %2907 = vmatprep.subr.mxu0 %v911
  %2908 = vmatpush1.msra.mxu0 %v910
  %2909 = vmatprep.subr.mxu0 %v913
  %2910 = vmatpush1.msra.mxu0 %v912
  %2911 = vmatprep.subr.mxu0 %v915
  %2912 = vmatpush1.msra.mxu0 %v914
  %2913 = vmatprep.subr.mxu0 %v917
  %2914 = vmatpush1.msra.mxu0 %v916
  %2915 = vmatprep.subr.mxu0 %v919
  %2916 = vmatpush1.msra.mxu0 %v918
  %2917 = vmatprep.subr.mxu0 %v921
  %2918 = vmatpush1.msra.mxu0 %v920
  %2919 = vmatprep.subr.mxu0 %v923
  %2920 = vmatpush1.msra.mxu0 %v922
  %2921 = vmatprep.subr.mxu0 %v925
  %2922 = vmatpush1.msra.mxu0 %v924
  %2923 = vmatprep.subr.mxu0 %v927
  %2924 = vmatpush1.msra.mxu0 %v926
  %2925 = vmatprep.subr.mxu0 %v929
  %2926 = vmatpush1.msra.mxu0 %v928
  %2927 = vmatprep.subr.mxu0 0.0
  %2928 = vmatpush1.msra.mxu0 0.0
  %2929 = vmatprep.subr.mxu0 0.0
  %2930 = vmatpush1.msra.mxu0 0.0
  %2931 = vmatprep.subr.mxu0 0.0
  %2932 = vmatpush1.msra.mxu0 0.0
  %2933 = vmatprep.subr.mxu0 0.0
  %2934 = vmatpush1.msra.mxu0 0.0
  %2935 = vmatprep.subr.mxu0 0.0
  %2936 = vmatpush1.msra.mxu0 0.0
  %2937 = vmatprep.subr.mxu0 0.0
  %2938 = vmatpush1.msra.mxu0 0.0
  %2939 = vmatprep.subr.mxu0 0.0
  %2940 = vmatpush1.msra.mxu0 0.0
  %2941 = vmatprep.subr.mxu0 0.0
  %2942 = vmatpush1.msra.mxu0 0.0
  %2943 = vmatprep.subr.mxu0 0.0
  %2944 = vmatpush1.msra.mxu0 0.0
  %2945 = vmatprep.subr.mxu0 0.0
  %2946 = vmatpush1.msra.mxu0 0.0
  %2947 = vmatprep.subr.mxu0 0.0
  %2948 = vmatpush1.msra.mxu0 0.0
  %2949 = vmatprep.subr.mxu0 0.0
  %2950 = vmatpush1.msra.mxu0 0.0
  %2951 = vmatprep.subr.mxu0 0.0
  %2952 = vmatpush1.msra.mxu0 0.0
  %2953 = vmatprep.subr.mxu0 0.0
  %2954 = vmatpush1.msra.mxu0 0.0
  %2955 = vmatprep.subr.mxu0 0.0
  %2956 = vmatpush1.msra.mxu0 0.0
  %2957 = vmatprep.subr.mxu0 0.0
  %2958 = vmatpush1.msra.mxu0 0.0
  %2959 = vmatprep.mubr.f32.mxu0 0.0
  %2960 = vmatmul.mubr.f32.gmra.mrb[0].mxu0 %v358
  %v2961 = vpop.f32.mrb[0].mxu0
  %v2962 = vadd.f32 0.0, %v2961
  %v2963 = vpop.f32.mrb[0].mxu0
  %v2964 = vadd.f32 0.0, %v2963
  %2965 = vdwg.mxu0
  %2966 = vmatprep.subr.mxu0 %v931
  %2967 = vmatpush1.msra.mxu0 %v930
  %2968 = vmatprep.subr.mxu0 %v933
  %2969 = vmatpush1.msra.mxu0 %v932
  %2970 = vmatprep.subr.mxu0 %v935
  %2971 = vmatpush1.msra.mxu0 %v934
  %2972 = vmatprep.subr.mxu0 %v937
  %2973 = vmatpush1.msra.mxu0 %v936
  %2974 = vmatprep.subr.mxu0 %v939
  %2975 = vmatpush1.msra.mxu0 %v938
  %2976 = vmatprep.subr.mxu0 %v941
  %2977 = vmatpush1.msra.mxu0 %v940
  %2978 = vmatprep.subr.mxu0 %v943
  %2979 = vmatpush1.msra.mxu0 %v942
  %2980 = vmatprep.subr.mxu0 %v945
  %2981 = vmatpush1.msra.mxu0 %v944
  %2982 = vmatprep.subr.mxu0 %v947
  %2983 = vmatpush1.msra.mxu0 %v946
  %2984 = vmatprep.subr.mxu0 %v949
  %2985 = vmatpush1.msra.mxu0 %v948
  %2986 = vmatprep.subr.mxu0 %v951
  %2987 = vmatpush1.msra.mxu0 %v950
  %2988 = vmatprep.subr.mxu0 %v953
  %2989 = vmatpush1.msra.mxu0 %v952
  %2990 = vmatprep.subr.mxu0 %v955
  %2991 = vmatpush1.msra.mxu0 %v954
  %2992 = vmatprep.subr.mxu0 %v957
  %2993 = vmatpush1.msra.mxu0 %v956
  %2994 = vmatprep.subr.mxu0 %v959
  %2995 = vmatpush1.msra.mxu0 %v958
  %2996 = vmatprep.subr.mxu0 %v961
  %2997 = vmatpush1.msra.mxu0 %v960
  %2998 = vmatprep.subr.mxu0 0.0
  %2999 = vmatpush1.msra.mxu0 0.0
  %3000 = vmatprep.subr.mxu0 0.0
  %3001 = vmatpush1.msra.mxu0 0.0
  %3002 = vmatprep.subr.mxu0 0.0
  %3003 = vmatpush1.msra.mxu0 0.0
  %3004 = vmatprep.subr.mxu0 0.0
  %3005 = vmatpush1.msra.mxu0 0.0
  %3006 = vmatprep.subr.mxu0 0.0
  %3007 = vmatpush1.msra.mxu0 0.0
  %3008 = vmatprep.subr.mxu0 0.0
  %3009 = vmatpush1.msra.mxu0 0.0
  %3010 = vmatprep.subr.mxu0 0.0
  %3011 = vmatpush1.msra.mxu0 0.0
  %3012 = vmatprep.subr.mxu0 0.0
  %3013 = vmatpush1.msra.mxu0 0.0
  %3014 = vmatprep.subr.mxu0 0.0
  %3015 = vmatpush1.msra.mxu0 0.0
  %3016 = vmatprep.subr.mxu0 0.0
  %3017 = vmatpush1.msra.mxu0 0.0
  %3018 = vmatprep.subr.mxu0 0.0
  %3019 = vmatpush1.msra.mxu0 0.0
  %3020 = vmatprep.subr.mxu0 0.0
  %3021 = vmatpush1.msra.mxu0 0.0
  %3022 = vmatprep.subr.mxu0 0.0
  %3023 = vmatpush1.msra.mxu0 0.0
  %3024 = vmatprep.subr.mxu0 0.0
  %3025 = vmatpush1.msra.mxu0 0.0
  %3026 = vmatprep.subr.mxu0 0.0
  %3027 = vmatpush1.msra.mxu0 0.0
  %3028 = vmatprep.subr.mxu0 0.0
  %3029 = vmatpush1.msra.mxu0 0.0
  %3030 = vmatprep.mubr.f32.mxu0 0.0
  %3031 = vmatmul.mubr.f32.gmra.mrb[0].mxu0 %v363
  %v3032 = vpop.f32.mrb[0].mxu0
  %v3033 = vadd.f32 0.0, %v3032
  %v3034 = vpop.f32.mrb[0].mxu0
  %v3035 = vadd.f32 0.0, %v3034
  %3036 = vdwg.mxu0
  %3037 = vmatprep.subr.mxu0 %v963
  %3038 = vmatpush1.msra.mxu0 %v962
  %3039 = vmatprep.subr.mxu0 %v965
  %3040 = vmatpush1.msra.mxu0 %v964
  %3041 = vmatprep.subr.mxu0 %v967
  %3042 = vmatpush1.msra.mxu0 %v966
  %3043 = vmatprep.subr.mxu0 %v969
  %3044 = vmatpush1.msra.mxu0 %v968
  %3045 = vmatprep.subr.mxu0 %v971
  %3046 = vmatpush1.msra.mxu0 %v970
  %3047 = vmatprep.subr.mxu0 %v973
  %3048 = vmatpush1.msra.mxu0 %v972
  %3049 = vmatprep.subr.mxu0 %v975
  %3050 = vmatpush1.msra.mxu0 %v974
  %3051 = vmatprep.subr.mxu0 %v977
  %3052 = vmatpush1.msra.mxu0 %v976
  %3053 = vmatprep.subr.mxu0 %v979
  %3054 = vmatpush1.msra.mxu0 %v978
  %3055 = vmatprep.subr.mxu0 %v981
  %3056 = vmatpush1.msra.mxu0 %v980
  %3057 = vmatprep.subr.mxu0 %v983
  %3058 = vmatpush1.msra.mxu0 %v982
  %3059 = vmatprep.subr.mxu0 %v985
  %3060 = vmatpush1.msra.mxu0 %v984
  %3061 = vmatprep.subr.mxu0 %v987
  %3062 = vmatpush1.msra.mxu0 %v986
  %3063 = vmatprep.subr.mxu0 %v989
  %3064 = vmatpush1.msra.mxu0 %v988
  %3065 = vmatprep.subr.mxu0 %v991
  %3066 = vmatpush1.msra.mxu0 %v990
  %3067 = vmatprep.subr.mxu0 %v993
  %3068 = vmatpush1.msra.mxu0 %v992
  %3069 = vmatprep.subr.mxu0 0.0
  %3070 = vmatpush1.msra.mxu0 0.0
  %3071 = vmatprep.subr.mxu0 0.0
  %3072 = vmatpush1.msra.mxu0 0.0
  %3073 = vmatprep.subr.mxu0 0.0
  %3074 = vmatpush1.msra.mxu0 0.0
  %3075 = vmatprep.subr.mxu0 0.0
  %3076 = vmatpush1.msra.mxu0 0.0
  %3077 = vmatprep.subr.mxu0 0.0
  %3078 = vmatpush1.msra.mxu0 0.0
  %3079 = vmatprep.subr.mxu0 0.0
  %3080 = vmatpush1.msra.mxu0 0.0
  %3081 = vmatprep.subr.mxu0 0.0
  %3082 = vmatpush1.msra.mxu0 0.0
  %3083 = vmatprep.subr.mxu0 0.0
  %3084 = vmatpush1.msra.mxu0 0.0
  %3085 = vmatprep.subr.mxu0 0.0
  %3086 = vmatpush1.msra.mxu0 0.0
  %3087 = vmatprep.subr.mxu0 0.0
  %3088 = vmatpush1.msra.mxu0 0.0
  %3089 = vmatprep.subr.mxu0 0.0
  %3090 = vmatpush1.msra.mxu0 0.0
  %3091 = vmatprep.subr.mxu0 0.0
  %3092 = vmatpush1.msra.mxu0 0.0
  %3093 = vmatprep.subr.mxu0 0.0
  %3094 = vmatpush1.msra.mxu0 0.0
  %3095 = vmatprep.subr.mxu0 0.0
  %3096 = vmatpush1.msra.mxu0 0.0
  %3097 = vmatprep.subr.mxu0 0.0
  %3098 = vmatpush1.msra.mxu0 0.0
  %3099 = vmatprep.subr.mxu0 0.0
  %3100 = vmatpush1.msra.mxu0 0.0
  %3101 = vmatprep.mubr.f32.mxu0 0.0
  %3102 = vmatmul.mubr.f32.gmra.mrb[0].mxu0 %v368
  %v3103 = vpop.f32.mrb[0].mxu0
  %v3104 = vadd.f32 0.0, %v3103
  %v3105 = vpop.f32.mrb[0].mxu0
  %v3106 = vadd.f32 0.0, %v3105
  %3107 = vdwg.mxu0
  %3108 = vmatprep.subr.mxu0 %v995
  %3109 = vmatpush1.msra.mxu0 %v994
  %3110 = vmatprep.subr.mxu0 %v997
  %3111 = vmatpush1.msra.mxu0 %v996
  %3112 = vmatprep.subr.mxu0 %v999
  %3113 = vmatpush1.msra.mxu0 %v998
  %3114 = vmatprep.subr.mxu0 %v1001
  %3115 = vmatpush1.msra.mxu0 %v1000
  %3116 = vmatprep.subr.mxu0 %v1003
  %3117 = vmatpush1.msra.mxu0 %v1002
  %3118 = vmatprep.subr.mxu0 %v1005
  %3119 = vmatpush1.msra.mxu0 %v1004
  %3120 = vmatprep.subr.mxu0 %v1007
  %3121 = vmatpush1.msra.mxu0 %v1006
  %3122 = vmatprep.subr.mxu0 %v1009
  %3123 = vmatpush1.msra.mxu0 %v1008
  %3124 = vmatprep.subr.mxu0 %v1011
  %3125 = vmatpush1.msra.mxu0 %v1010
  %3126 = vmatprep.subr.mxu0 %v1013
  %3127 = vmatpush1.msra.mxu0 %v1012
  %3128 = vmatprep.subr.mxu0 %v1015
  %3129 = vmatpush1.msra.mxu0 %v1014
  %3130 = vmatprep.subr.mxu0 %v1017
  %3131 = vmatpush1.msra.mxu0 %v1016
  %3132 = vmatprep.subr.mxu0 %v1019
  %3133 = vmatpush1.msra.mxu0 %v1018
  %3134 = vmatprep.subr.mxu0 %v1021
  %3135 = vmatpush1.msra.mxu0 %v1020
  %3136 = vmatprep.subr.mxu0 %v1023
  %3137 = vmatpush1.msra.mxu0 %v1022
  %3138 = vmatprep.subr.mxu0 %v1025
  %3139 = vmatpush1.msra.mxu0 %v1024
  %3140 = vmatprep.subr.mxu0 0.0
  %3141 = vmatpush1.msra.mxu0 0.0
  %3142 = vmatprep.subr.mxu0 0.0
  %3143 = vmatpush1.msra.mxu0 0.0
  %3144 = vmatprep.subr.mxu0 0.0
  %3145 = vmatpush1.msra.mxu0 0.0
  %3146 = vmatprep.subr.mxu0 0.0
  %3147 = vmatpush1.msra.mxu0 0.0
  %3148 = vmatprep.subr.mxu0 0.0
  %3149 = vmatpush1.msra.mxu0 0.0
  %3150 = vmatprep.subr.mxu0 0.0
  %3151 = vmatpush1.msra.mxu0 0.0
  %3152 = vmatprep.subr.mxu0 0.0
  %3153 = vmatpush1.msra.mxu0 0.0
  %3154 = vmatprep.subr.mxu0 0.0
  %3155 = vmatpush1.msra.mxu0 0.0
  %3156 = vmatprep.subr.mxu0 0.0
  %3157 = vmatpush1.msra.mxu0 0.0
  %3158 = vmatprep.subr.mxu0 0.0
  %3159 = vmatpush1.msra.mxu0 0.0
  %3160 = vmatprep.subr.mxu0 0.0
  %3161 = vmatpush1.msra.mxu0 0.0
  %3162 = vmatprep.subr.mxu0 0.0
  %3163 = vmatpush1.msra.mxu0 0.0
  %3164 = vmatprep.subr.mxu0 0.0
  %3165 = vmatpush1.msra.mxu0 0.0
  %3166 = vmatprep.subr.mxu0 0.0
  %3167 = vmatpush1.msra.mxu0 0.0
  %3168 = vmatprep.subr.mxu0 0.0
  %3169 = vmatpush1.msra.mxu0 0.0
  %3170 = vmatprep.subr.mxu0 0.0
  %3171 = vmatpush1.msra.mxu0 0.0
  %3172 = vmatprep.mubr.f32.mxu0 0.0
  %3173 = vmatmul.mubr.f32.gmra.mrb[0].mxu0 %v373
  %v3174 = vpop.f32.mrb[0].mxu0
  %v3175 = vadd.f32 0.0, %v3174
  %v3176 = vpop.f32.mrb[0].mxu0
  %v3177 = vadd.f32 0.0, %v3176
  %3178 = vdwg.mxu0
  %3179 = vmatprep.subr.mxu0 %v1027
  %3180 = vmatpush1.msra.mxu0 %v1026
  %3181 = vmatprep.subr.mxu0 %v1029
  %3182 = vmatpush1.msra.mxu0 %v1028
  %3183 = vmatprep.subr.mxu0 %v1031
  %3184 = vmatpush1.msra.mxu0 %v1030
  %3185 = vmatprep.subr.mxu0 %v1033
  %3186 = vmatpush1.msra.mxu0 %v1032
  %3187 = vmatprep.subr.mxu0 %v1035
  %3188 = vmatpush1.msra.mxu0 %v1034
  %3189 = vmatprep.subr.mxu0 %v1037
  %3190 = vmatpush1.msra.mxu0 %v1036
  %3191 = vmatprep.subr.mxu0 %v1039
  %3192 = vmatpush1.msra.mxu0 %v1038
  %3193 = vmatprep.subr.mxu0 %v1041
  %3194 = vmatpush1.msra.mxu0 %v1040
  %3195 = vmatprep.subr.mxu0 %v1043
  %3196 = vmatpush1.msra.mxu0 %v1042
  %3197 = vmatprep.subr.mxu0 %v1045
  %3198 = vmatpush1.msra.mxu0 %v1044
  %3199 = vmatprep.subr.mxu0 %v1047
  %3200 = vmatpush1.msra.mxu0 %v1046
  %3201 = vmatprep.subr.mxu0 %v1049
  %3202 = vmatpush1.msra.mxu0 %v1048
  %3203 = vmatprep.subr.mxu0 %v1051
  %3204 = vmatpush1.msra.mxu0 %v1050
  %3205 = vmatprep.subr.mxu0 %v1053
  %3206 = vmatpush1.msra.mxu0 %v1052
  %3207 = vmatprep.subr.mxu0 %v1055
  %3208 = vmatpush1.msra.mxu0 %v1054
  %3209 = vmatprep.subr.mxu0 %v1057
  %3210 = vmatpush1.msra.mxu0 %v1056
  %3211 = vmatprep.subr.mxu0 0.0
  %3212 = vmatpush1.msra.mxu0 0.0
  %3213 = vmatprep.subr.mxu0 0.0
  %3214 = vmatpush1.msra.mxu0 0.0
  %3215 = vmatprep.subr.mxu0 0.0
  %3216 = vmatpush1.msra.mxu0 0.0
  %3217 = vmatprep.subr.mxu0 0.0
  %3218 = vmatpush1.msra.mxu0 0.0
  %3219 = vmatprep.subr.mxu0 0.0
  %3220 = vmatpush1.msra.mxu0 0.0
  %3221 = vmatprep.subr.mxu0 0.0
  %3222 = vmatpush1.msra.mxu0 0.0
  %3223 = vmatprep.subr.mxu0 0.0
  %3224 = vmatpush1.msra.mxu0 0.0
  %3225 = vmatprep.subr.mxu0 0.0
  %3226 = vmatpush1.msra.mxu0 0.0
  %3227 = vmatprep.subr.mxu0 0.0
  %3228 = vmatpush1.msra.mxu0 0.0
  %3229 = vmatprep.subr.mxu0 0.0
  %3230 = vmatpush1.msra.mxu0 0.0
  %3231 = vmatprep.subr.mxu0 0.0
  %3232 = vmatpush1.msra.mxu0 0.0
  %3233 = vmatprep.subr.mxu0 0.0
  %3234 = vmatpush1.msra.mxu0 0.0
  %3235 = vmatprep.subr.mxu0 0.0
  %3236 = vmatpush1.msra.mxu0 0.0
  %3237 = vmatprep.subr.mxu0 0.0
  %3238 = vmatpush1.msra.mxu0 0.0
  %3239 = vmatprep.subr.mxu0 0.0
  %3240 = vmatpush1.msra.mxu0 0.0
  %3241 = vmatprep.subr.mxu0 0.0
  %3242 = vmatpush1.msra.mxu0 0.0
  %3243 = vmatprep.mubr.f32.mxu0 0.0
  %3244 = vmatmul.mubr.f32.gmra.mrb[0].mxu0 %v378
  %v3245 = vpop.f32.mrb[0].mxu0
  %v3246 = vadd.f32 0.0, %v3245
  %v3247 = vpop.f32.mrb[0].mxu0
  %v3248 = vadd.f32 0.0, %v3247
  %3249 = vdwg.mxu0
  %3250 = vmatprep.subr.mxu0 %v1059
  %3251 = vmatpush1.msra.mxu0 %v1058
  %3252 = vmatprep.subr.mxu0 %v1061
  %3253 = vmatpush1.msra.mxu0 %v1060
  %3254 = vmatprep.subr.mxu0 %v1063
  %3255 = vmatpush1.msra.mxu0 %v1062
  %3256 = vmatprep.subr.mxu0 %v1065
  %3257 = vmatpush1.msra.mxu0 %v1064
  %3258 = vmatprep.subr.mxu0 %v1067
  %3259 = vmatpush1.msra.mxu0 %v1066
  %3260 = vmatprep.subr.mxu0 %v1069
  %3261 = vmatpush1.msra.mxu0 %v1068
  %3262 = vmatprep.subr.mxu0 %v1071
  %3263 = vmatpush1.msra.mxu0 %v1070
  %3264 = vmatprep.subr.mxu0 %v1073
  %3265 = vmatpush1.msra.mxu0 %v1072
  %3266 = vmatprep.subr.mxu0 %v1075
  %3267 = vmatpush1.msra.mxu0 %v1074
  %3268 = vmatprep.subr.mxu0 %v1077
  %3269 = vmatpush1.msra.mxu0 %v1076
  %3270 = vmatprep.subr.mxu0 %v1079
  %3271 = vmatpush1.msra.mxu0 %v1078
  %3272 = vmatprep.subr.mxu0 %v1081
  %3273 = vmatpush1.msra.mxu0 %v1080
  %3274 = vmatprep.subr.mxu0 %v1083
  %3275 = vmatpush1.msra.mxu0 %v1082
  %3276 = vmatprep.subr.mxu0 %v1085
  %3277 = vmatpush1.msra.mxu0 %v1084
  %3278 = vmatprep.subr.mxu0 %v1087
  %3279 = vmatpush1.msra.mxu0 %v1086
  %3280 = vmatprep.subr.mxu0 %v1089
  %3281 = vmatpush1.msra.mxu0 %v1088
  %3282 = vmatprep.subr.mxu0 0.0
  %3283 = vmatpush1.msra.mxu0 0.0
  %3284 = vmatprep.subr.mxu0 0.0
  %3285 = vmatpush1.msra.mxu0 0.0
  %3286 = vmatprep.subr.mxu0 0.0
  %3287 = vmatpush1.msra.mxu0 0.0
  %3288 = vmatprep.subr.mxu0 0.0
  %3289 = vmatpush1.msra.mxu0 0.0
  %3290 = vmatprep.subr.mxu0 0.0
  %3291 = vmatpush1.msra.mxu0 0.0
  %3292 = vmatprep.subr.mxu0 0.0
  %3293 = vmatpush1.msra.mxu0 0.0
  %3294 = vmatprep.subr.mxu0 0.0
  %3295 = vmatpush1.msra.mxu0 0.0
  %3296 = vmatprep.subr.mxu0 0.0
  %3297 = vmatpush1.msra.mxu0 0.0
  %3298 = vmatprep.subr.mxu0 0.0
  %3299 = vmatpush1.msra.mxu0 0.0
  %3300 = vmatprep.subr.mxu0 0.0
  %3301 = vmatpush1.msra.mxu0 0.0
  %3302 = vmatprep.subr.mxu0 0.0
  %3303 = vmatpush1.msra.mxu0 0.0
  %3304 = vmatprep.subr.mxu0 0.0
  %3305 = vmatpush1.msra.mxu0 0.0
  %3306 = vmatprep.subr.mxu0 0.0
  %3307 = vmatpush1.msra.mxu0 0.0
  %3308 = vmatprep.subr.mxu0 0.0
  %3309 = vmatpush1.msra.mxu0 0.0
  %3310 = vmatprep.subr.mxu0 0.0
  %3311 = vmatpush1.msra.mxu0 0.0
  %3312 = vmatprep.subr.mxu0 0.0
  %3313 = vmatpush1.msra.mxu0 0.0
  %3314 = vmatprep.mubr.f32.mxu0 0.0
  %3315 = vmatmul.mubr.f32.gmra.mrb[0].mxu0 %v383
  %v3316 = vpop.f32.mrb[0].mxu0
  %v3317 = vadd.f32 0.0, %v3316
  %v3318 = vpop.f32.mrb[0].mxu0
  %v3319 = vadd.f32 0.0, %v3318
  %3320 = vdwg.mxu0
  %3321 = vmatprep.subr.mxu0 %v1091
  %3322 = vmatpush1.msra.mxu0 %v1090
  %3323 = vmatprep.subr.mxu0 %v1093
  %3324 = vmatpush1.msra.mxu0 %v1092
  %3325 = vmatprep.subr.mxu0 %v1095
  %3326 = vmatpush1.msra.mxu0 %v1094
  %3327 = vmatprep.subr.mxu0 %v1097
  %3328 = vmatpush1.msra.mxu0 %v1096
  %3329 = vmatprep.subr.mxu0 %v1099
  %3330 = vmatpush1.msra.mxu0 %v1098
  %3331 = vmatprep.subr.mxu0 %v1101
  %3332 = vmatpush1.msra.mxu0 %v1100
  %3333 = vmatprep.subr.mxu0 %v1103
  %3334 = vmatpush1.msra.mxu0 %v1102
  %3335 = vmatprep.subr.mxu0 %v1105
  %3336 = vmatpush1.msra.mxu0 %v1104
  %3337 = vmatprep.subr.mxu0 %v1107
  %3338 = vmatpush1.msra.mxu0 %v1106
  %3339 = vmatprep.subr.mxu0 %v1109
  %3340 = vmatpush1.msra.mxu0 %v1108
  %3341 = vmatprep.subr.mxu0 %v1111
  %3342 = vmatpush1.msra.mxu0 %v1110
  %3343 = vmatprep.subr.mxu0 %v1113
  %3344 = vmatpush1.msra.mxu0 %v1112
  %3345 = vmatprep.subr.mxu0 %v1115
  %3346 = vmatpush1.msra.mxu0 %v1114
  %3347 = vmatprep.subr.mxu0 %v1117
  %3348 = vmatpush1.msra.mxu0 %v1116
  %3349 = vmatprep.subr.mxu0 %v1119
  %3350 = vmatpush1.msra.mxu0 %v1118
  %3351 = vmatprep.subr.mxu0 %v1121
  %3352 = vmatpush1.msra.mxu0 %v1120
  %3353 = vmatprep.subr.mxu0 0.0
  %3354 = vmatpush1.msra.mxu0 0.0
  %3355 = vmatprep.subr.mxu0 0.0
  %3356 = vmatpush1.msra.mxu0 0.0
  %3357 = vmatprep.subr.mxu0 0.0
  %3358 = vmatpush1.msra.mxu0 0.0
  %3359 = vmatprep.subr.mxu0 0.0
  %3360 = vmatpush1.msra.mxu0 0.0
  %3361 = vmatprep.subr.mxu0 0.0
  %3362 = vmatpush1.msra.mxu0 0.0
  %3363 = vmatprep.subr.mxu0 0.0
  %3364 = vmatpush1.msra.mxu0 0.0
  %3365 = vmatprep.subr.mxu0 0.0
  %3366 = vmatpush1.msra.mxu0 0.0
  %3367 = vmatprep.subr.mxu0 0.0
  %3368 = vmatpush1.msra.mxu0 0.0
  %3369 = vmatprep.subr.mxu0 0.0
  %3370 = vmatpush1.msra.mxu0 0.0
  %3371 = vmatprep.subr.mxu0 0.0
  %3372 = vmatpush1.msra.mxu0 0.0
  %3373 = vmatprep.subr.mxu0 0.0
  %3374 = vmatpush1.msra.mxu0 0.0
  %3375 = vmatprep.subr.mxu0 0.0
  %3376 = vmatpush1.msra.mxu0 0.0
  %3377 = vmatprep.subr.mxu0 0.0
  %3378 = vmatpush1.msra.mxu0 0.0
  %3379 = vmatprep.subr.mxu0 0.0
  %3380 = vmatpush1.msra.mxu0 0.0
  %3381 = vmatprep.subr.mxu0 0.0
  %3382 = vmatpush1.msra.mxu0 0.0
  %3383 = vmatprep.subr.mxu0 0.0
  %3384 = vmatpush1.msra.mxu0 0.0
  %3385 = vmatprep.mubr.f32.mxu0 0.0
  %3386 = vmatmul.mubr.f32.gmra.mrb[0].mxu0 %v388
  %v3387 = vpop.f32.mrb[0].mxu0
  %v3388 = vadd.f32 0.0, %v3387
  %v3389 = vpop.f32.mrb[0].mxu0
  %v3390 = vadd.f32 0.0, %v3389
  %3391 = vdwg.mxu0
  %3392 = vmatprep.subr.mxu0 %v1123
  %3393 = vmatpush1.msra.mxu0 %v1122
  %3394 = vmatprep.subr.mxu0 %v1125
  %3395 = vmatpush1.msra.mxu0 %v1124
  %3396 = vmatprep.subr.mxu0 %v1127
  %3397 = vmatpush1.msra.mxu0 %v1126
  %3398 = vmatprep.subr.mxu0 %v1129
  %3399 = vmatpush1.msra.mxu0 %v1128
  %3400 = vmatprep.subr.mxu0 %v1131
  %3401 = vmatpush1.msra.mxu0 %v1130
  %3402 = vmatprep.subr.mxu0 %v1133
  %3403 = vmatpush1.msra.mxu0 %v1132
  %3404 = vmatprep.subr.mxu0 %v1135
  %3405 = vmatpush1.msra.mxu0 %v1134
  %3406 = vmatprep.subr.mxu0 %v1137
  %3407 = vmatpush1.msra.mxu0 %v1136
  %3408 = vmatprep.subr.mxu0 %v1139
  %3409 = vmatpush1.msra.mxu0 %v1138
  %3410 = vmatprep.subr.mxu0 %v1141
  %3411 = vmatpush1.msra.mxu0 %v1140
  %3412 = vmatprep.subr.mxu0 %v1143
  %3413 = vmatpush1.msra.mxu0 %v1142
  %3414 = vmatprep.subr.mxu0 %v1145
  %3415 = vmatpush1.msra.mxu0 %v1144
  %3416 = vmatprep.subr.mxu0 %v1147
  %3417 = vmatpush1.msra.mxu0 %v1146
  %3418 = vmatprep.subr.mxu0 %v1149
  %3419 = vmatpush1.msra.mxu0 %v1148
  %3420 = vmatprep.subr.mxu0 %v1151
  %3421 = vmatpush1.msra.mxu0 %v1150
  %3422 = vmatprep.subr.mxu0 %v1153
  %3423 = vmatpush1.msra.mxu0 %v1152
  %3424 = vmatprep.subr.mxu0 0.0
  %3425 = vmatpush1.msra.mxu0 0.0
  %3426 = vmatprep.subr.mxu0 0.0
  %3427 = vmatpush1.msra.mxu0 0.0
  %3428 = vmatprep.subr.mxu0 0.0
  %3429 = vmatpush1.msra.mxu0 0.0
  %3430 = vmatprep.subr.mxu0 0.0
  %3431 = vmatpush1.msra.mxu0 0.0
  %3432 = vmatprep.subr.mxu0 0.0
  %3433 = vmatpush1.msra.mxu0 0.0
  %3434 = vmatprep.subr.mxu0 0.0
  %3435 = vmatpush1.msra.mxu0 0.0
  %3436 = vmatprep.subr.mxu0 0.0
  %3437 = vmatpush1.msra.mxu0 0.0
  %3438 = vmatprep.subr.mxu0 0.0
  %3439 = vmatpush1.msra.mxu0 0.0
  %3440 = vmatprep.subr.mxu0 0.0
  %3441 = vmatpush1.msra.mxu0 0.0
  %3442 = vmatprep.subr.mxu0 0.0
  %3443 = vmatpush1.msra.mxu0 0.0
  %3444 = vmatprep.subr.mxu0 0.0
  %3445 = vmatpush1.msra.mxu0 0.0
  %3446 = vmatprep.subr.mxu0 0.0
  %3447 = vmatpush1.msra.mxu0 0.0
  %3448 = vmatprep.subr.mxu0 0.0
  %3449 = vmatpush1.msra.mxu0 0.0
  %3450 = vmatprep.subr.mxu0 0.0
  %3451 = vmatpush1.msra.mxu0 0.0
  %3452 = vmatprep.subr.mxu0 0.0
  %3453 = vmatpush1.msra.mxu0 0.0
  %3454 = vmatprep.subr.mxu0 0.0
  %3455 = vmatpush1.msra.mxu0 0.0
  %3456 = vmatprep.mubr.f32.mxu0 0.0
  %3457 = vmatmul.mubr.f32.gmra.mrb[0].mxu0 %v393
  %v3458 = vpop.f32.mrb[0].mxu0
  %v3459 = vadd.f32 0.0, %v3458
  %v3460 = vpop.f32.mrb[0].mxu0
  %v3461 = vadd.f32 0.0, %v3460
  %3462 = vdwg.mxu0
  %3463 = vmatprep.subr.mxu0 %v1155
  %3464 = vmatpush1.msra.mxu0 %v1154
  %3465 = vmatprep.subr.mxu0 %v1157
  %3466 = vmatpush1.msra.mxu0 %v1156
  %3467 = vmatprep.subr.mxu0 %v1159
  %3468 = vmatpush1.msra.mxu0 %v1158
  %3469 = vmatprep.subr.mxu0 %v1161
  %3470 = vmatpush1.msra.mxu0 %v1160
  %3471 = vmatprep.subr.mxu0 %v1163
  %3472 = vmatpush1.msra.mxu0 %v1162
  %3473 = vmatprep.subr.mxu0 %v1165
  %3474 = vmatpush1.msra.mxu0 %v1164
  %3475 = vmatprep.subr.mxu0 %v1167
  %3476 = vmatpush1.msra.mxu0 %v1166
  %3477 = vmatprep.subr.mxu0 %v1169
  %3478 = vmatpush1.msra.mxu0 %v1168
  %3479 = vmatprep.subr.mxu0 %v1171
  %3480 = vmatpush1.msra.mxu0 %v1170
  %3481 = vmatprep.subr.mxu0 %v1173
  %3482 = vmatpush1.msra.mxu0 %v1172
  %3483 = vmatprep.subr.mxu0 %v1175
  %3484 = vmatpush1.msra.mxu0 %v1174
  %3485 = vmatprep.subr.mxu0 %v1177
  %3486 = vmatpush1.msra.mxu0 %v1176
  %3487 = vmatprep.subr.mxu0 %v1179
  %3488 = vmatpush1.msra.mxu0 %v1178
  %3489 = vmatprep.subr.mxu0 %v1181
  %3490 = vmatpush1.msra.mxu0 %v1180
  %3491 = vmatprep.subr.mxu0 %v1183
  %3492 = vmatpush1.msra.mxu0 %v1182
  %3493 = vmatprep.subr.mxu0 %v1185
  %3494 = vmatpush1.msra.mxu0 %v1184
  %3495 = vmatprep.subr.mxu0 0.0
  %3496 = vmatpush1.msra.mxu0 0.0
  %3497 = vmatprep.subr.mxu0 0.0
  %3498 = vmatpush1.msra.mxu0 0.0
  %3499 = vmatprep.subr.mxu0 0.0
  %3500 = vmatpush1.msra.mxu0 0.0
  %3501 = vmatprep.subr.mxu0 0.0
  %3502 = vmatpush1.msra.mxu0 0.0
  %3503 = vmatprep.subr.mxu0 0.0
  %3504 = vmatpush1.msra.mxu0 0.0
  %3505 = vmatprep.subr.mxu0 0.0
  %3506 = vmatpush1.msra.mxu0 0.0
  %3507 = vmatprep.subr.mxu0 0.0
  %3508 = vmatpush1.msra.mxu0 0.0
  %3509 = vmatprep.subr.mxu0 0.0
  %3510 = vmatpush1.msra.mxu0 0.0
  %3511 = vmatprep.subr.mxu0 0.0
  %3512 = vmatpush1.msra.mxu0 0.0
  %3513 = vmatprep.subr.mxu0 0.0
  %3514 = vmatpush1.msra.mxu0 0.0
  %3515 = vmatprep.subr.mxu0 0.0
  %3516 = vmatpush1.msra.mxu0 0.0
  %3517 = vmatprep.subr.mxu0 0.0
  %3518 = vmatpush1.msra.mxu0 0.0
  %3519 = vmatprep.subr.mxu0 0.0
  %3520 = vmatpush1.msra.mxu0 0.0
  %3521 = vmatprep.subr.mxu0 0.0
  %3522 = vmatpush1.msra.mxu0 0.0
  %3523 = vmatprep.subr.mxu0 0.0
  %3524 = vmatpush1.msra.mxu0 0.0
  %3525 = vmatprep.subr.mxu0 0.0
  %3526 = vmatpush1.msra.mxu0 0.0
  %3527 = vmatprep.mubr.f32.mxu0 0.0
  %3528 = vmatmul.mubr.f32.gmra.mrb[0].mxu0 %v398
  %v3529 = vpop.f32.mrb[0].mxu0
  %v3530 = vadd.f32 0.0, %v3529
  %v3531 = vpop.f32.mrb[0].mxu0
  %v3532 = vadd.f32 0.0, %v3531
  %3533 = vdwg.mxu0
  %3534 = vmatprep.subr.mxu0 %v1187
  %3535 = vmatpush1.msra.mxu0 %v1186
  %3536 = vmatprep.subr.mxu0 %v1189
  %3537 = vmatpush1.msra.mxu0 %v1188
  %3538 = vmatprep.subr.mxu0 %v1191
  %3539 = vmatpush1.msra.mxu0 %v1190
  %3540 = vmatprep.subr.mxu0 %v1193
  %3541 = vmatpush1.msra.mxu0 %v1192
  %3542 = vmatprep.subr.mxu0 %v1195
  %3543 = vmatpush1.msra.mxu0 %v1194
  %3544 = vmatprep.subr.mxu0 %v1197
  %3545 = vmatpush1.msra.mxu0 %v1196
  %3546 = vmatprep.subr.mxu0 %v1199
  %3547 = vmatpush1.msra.mxu0 %v1198
  %3548 = vmatprep.subr.mxu0 %v1201
  %3549 = vmatpush1.msra.mxu0 %v1200
  %3550 = vmatprep.subr.mxu0 %v1203
  %3551 = vmatpush1.msra.mxu0 %v1202
  %3552 = vmatprep.subr.mxu0 %v1205
  %3553 = vmatpush1.msra.mxu0 %v1204
  %3554 = vmatprep.subr.mxu0 %v1207
  %3555 = vmatpush1.msra.mxu0 %v1206
  %3556 = vmatprep.subr.mxu0 %v1209
  %3557 = vmatpush1.msra.mxu0 %v1208
  %3558 = vmatprep.subr.mxu0 %v1211
  %3559 = vmatpush1.msra.mxu0 %v1210
  %3560 = vmatprep.subr.mxu0 %v1213
  %3561 = vmatpush1.msra.mxu0 %v1212
  %3562 = vmatprep.subr.mxu0 %v1215
  %3563 = vmatpush1.msra.mxu0 %v1214
  %3564 = vmatprep.subr.mxu0 %v1217
  %3565 = vmatpush1.msra.mxu0 %v1216
  %3566 = vmatprep.subr.mxu0 0.0
  %3567 = vmatpush1.msra.mxu0 0.0
  %3568 = vmatprep.subr.mxu0 0.0
  %3569 = vmatpush1.msra.mxu0 0.0
  %3570 = vmatprep.subr.mxu0 0.0
  %3571 = vmatpush1.msra.mxu0 0.0
  %3572 = vmatprep.subr.mxu0 0.0
  %3573 = vmatpush1.msra.mxu0 0.0
  %3574 = vmatprep.subr.mxu0 0.0
  %3575 = vmatpush1.msra.mxu0 0.0
  %3576 = vmatprep.subr.mxu0 0.0
  %3577 = vmatpush1.msra.mxu0 0.0
  %3578 = vmatprep.subr.mxu0 0.0
  %3579 = vmatpush1.msra.mxu0 0.0
  %3580 = vmatprep.subr.mxu0 0.0
  %3581 = vmatpush1.msra.mxu0 0.0
  %3582 = vmatprep.subr.mxu0 0.0
  %3583 = vmatpush1.msra.mxu0 0.0
  %3584 = vmatprep.subr.mxu0 0.0
  %3585 = vmatpush1.msra.mxu0 0.0
  %3586 = vmatprep.subr.mxu0 0.0
  %3587 = vmatpush1.msra.mxu0 0.0
  %3588 = vmatprep.subr.mxu0 0.0
  %3589 = vmatpush1.msra.mxu0 0.0
  %3590 = vmatprep.subr.mxu0 0.0
  %3591 = vmatpush1.msra.mxu0 0.0
  %3592 = vmatprep.subr.mxu0 0.0
  %3593 = vmatpush1.msra.mxu0 0.0
  %3594 = vmatprep.subr.mxu0 0.0
  %3595 = vmatpush1.msra.mxu0 0.0
  %3596 = vmatprep.subr.mxu0 0.0
  %3597 = vmatpush1.msra.mxu0 0.0
  %3598 = vmatprep.mubr.f32.mxu0 0.0
  %3599 = vmatmul.mubr.f32.gmra.mrb[0].mxu0 %v403
  %v3600 = vpop.f32.mrb[0].mxu0
  %v3601 = vadd.f32 0.0, %v3600
  %v3602 = vpop.f32.mrb[0].mxu0
  %v3603 = vadd.f32 0.0, %v3602
  %3604 = vdwg.mxu0
  %3605 = vmatprep.subr.mxu0 %v1219
  %3606 = vmatpush1.msra.mxu0 %v1218
  %3607 = vmatprep.subr.mxu0 %v1221
  %3608 = vmatpush1.msra.mxu0 %v1220
  %3609 = vmatprep.subr.mxu0 %v1223
  %3610 = vmatpush1.msra.mxu0 %v1222
  %3611 = vmatprep.subr.mxu0 %v1225
  %3612 = vmatpush1.msra.mxu0 %v1224
  %3613 = vmatprep.subr.mxu0 %v1227
  %3614 = vmatpush1.msra.mxu0 %v1226
  %3615 = vmatprep.subr.mxu0 %v1229
  %3616 = vmatpush1.msra.mxu0 %v1228
  %3617 = vmatprep.subr.mxu0 %v1231
  %3618 = vmatpush1.msra.mxu0 %v1230
  %3619 = vmatprep.subr.mxu0 %v1233
  %3620 = vmatpush1.msra.mxu0 %v1232
  %3621 = vmatprep.subr.mxu0 %v1235
  %3622 = vmatpush1.msra.mxu0 %v1234
  %3623 = vmatprep.subr.mxu0 %v1237
  %3624 = vmatpush1.msra.mxu0 %v1236
  %3625 = vmatprep.subr.mxu0 %v1239
  %3626 = vmatpush1.msra.mxu0 %v1238
  %3627 = vmatprep.subr.mxu0 %v1241
  %3628 = vmatpush1.msra.mxu0 %v1240
  %3629 = vmatprep.subr.mxu0 %v1243
  %3630 = vmatpush1.msra.mxu0 %v1242
  %3631 = vmatprep.subr.mxu0 %v1245
  %3632 = vmatpush1.msra.mxu0 %v1244
  %3633 = vmatprep.subr.mxu0 %v1247
  %3634 = vmatpush1.msra.mxu0 %v1246
  %3635 = vmatprep.subr.mxu0 %v1249
  %3636 = vmatpush1.msra.mxu0 %v1248
  %3637 = vmatprep.subr.mxu0 0.0
  %3638 = vmatpush1.msra.mxu0 0.0
  %3639 = vmatprep.subr.mxu0 0.0
  %3640 = vmatpush1.msra.mxu0 0.0
  %3641 = vmatprep.subr.mxu0 0.0
  %3642 = vmatpush1.msra.mxu0 0.0
  %3643 = vmatprep.subr.mxu0 0.0
  %3644 = vmatpush1.msra.mxu0 0.0
  %3645 = vmatprep.subr.mxu0 0.0
  %3646 = vmatpush1.msra.mxu0 0.0
  %3647 = vmatprep.subr.mxu0 0.0
  %3648 = vmatpush1.msra.mxu0 0.0
  %3649 = vmatprep.subr.mxu0 0.0
  %3650 = vmatpush1.msra.mxu0 0.0
  %3651 = vmatprep.subr.mxu0 0.0
  %3652 = vmatpush1.msra.mxu0 0.0
  %3653 = vmatprep.subr.mxu0 0.0
  %3654 = vmatpush1.msra.mxu0 0.0
  %3655 = vmatprep.subr.mxu0 0.0
  %3656 = vmatpush1.msra.mxu0 0.0
  %3657 = vmatprep.subr.mxu0 0.0
  %3658 = vmatpush1.msra.mxu0 0.0
  %3659 = vmatprep.subr.mxu0 0.0
  %3660 = vmatpush1.msra.mxu0 0.0
  %3661 = vmatprep.subr.mxu0 0.0
  %3662 = vmatpush1.msra.mxu0 0.0
  %3663 = vmatprep.subr.mxu0 0.0
  %3664 = vmatpush1.msra.mxu0 0.0
  %3665 = vmatprep.subr.mxu0 0.0
  %3666 = vmatpush1.msra.mxu0 0.0
  %3667 = vmatprep.subr.mxu0 0.0
  %3668 = vmatpush1.msra.mxu0 0.0
  %3669 = vmatprep.mubr.f32.mxu0 0.0
  %3670 = vmatmul.mubr.f32.gmra.mrb[0].mxu0 %v408
  %v3671 = vpop.f32.mrb[0].mxu0
  %v3672 = vadd.f32 0.0, %v3671
  %v3673 = vpop.f32.mrb[0].mxu0
  %v3674 = vadd.f32 0.0, %v3673
  %3675 = vdwg.mxu0
  %3676 = vmatprep.subr.mxu0 %v1251
  %3677 = vmatpush1.msra.mxu0 %v1250
  %3678 = vmatprep.subr.mxu0 %v1253
  %3679 = vmatpush1.msra.mxu0 %v1252
  %3680 = vmatprep.subr.mxu0 %v1255
  %3681 = vmatpush1.msra.mxu0 %v1254
  %3682 = vmatprep.subr.mxu0 %v1257
  %3683 = vmatpush1.msra.mxu0 %v1256
  %3684 = vmatprep.subr.mxu0 %v1259
  %3685 = vmatpush1.msra.mxu0 %v1258
  %3686 = vmatprep.subr.mxu0 %v1261
  %3687 = vmatpush1.msra.mxu0 %v1260
  %3688 = vmatprep.subr.mxu0 %v1263
  %3689 = vmatpush1.msra.mxu0 %v1262
  %3690 = vmatprep.subr.mxu0 %v1265
  %3691 = vmatpush1.msra.mxu0 %v1264
  %3692 = vmatprep.subr.mxu0 %v1267
  %3693 = vmatpush1.msra.mxu0 %v1266
  %3694 = vmatprep.subr.mxu0 %v1269
  %3695 = vmatpush1.msra.mxu0 %v1268
  %3696 = vmatprep.subr.mxu0 %v1271
  %3697 = vmatpush1.msra.mxu0 %v1270
  %3698 = vmatprep.subr.mxu0 %v1273
  %3699 = vmatpush1.msra.mxu0 %v1272
  %3700 = vmatprep.subr.mxu0 %v1275
  %3701 = vmatpush1.msra.mxu0 %v1274
  %3702 = vmatprep.subr.mxu0 %v1277
  %3703 = vmatpush1.msra.mxu0 %v1276
  %3704 = vmatprep.subr.mxu0 %v1279
  %3705 = vmatpush1.msra.mxu0 %v1278
  %3706 = vmatprep.subr.mxu0 %v1281
  %3707 = vmatpush1.msra.mxu0 %v1280
  %3708 = vmatprep.subr.mxu0 0.0
  %3709 = vmatpush1.msra.mxu0 0.0
  %3710 = vmatprep.subr.mxu0 0.0
  %3711 = vmatpush1.msra.mxu0 0.0
  %3712 = vmatprep.subr.mxu0 0.0
  %3713 = vmatpush1.msra.mxu0 0.0
  %3714 = vmatprep.subr.mxu0 0.0
  %3715 = vmatpush1.msra.mxu0 0.0
  %3716 = vmatprep.subr.mxu0 0.0
  %3717 = vmatpush1.msra.mxu0 0.0
  %3718 = vmatprep.subr.mxu0 0.0
  %3719 = vmatpush1.msra.mxu0 0.0
  %3720 = vmatprep.subr.mxu0 0.0
  %3721 = vmatpush1.msra.mxu0 0.0
  %3722 = vmatprep.subr.mxu0 0.0
  %3723 = vmatpush1.msra.mxu0 0.0
  %3724 = vmatprep.subr.mxu0 0.0
  %3725 = vmatpush1.msra.mxu0 0.0
  %3726 = vmatprep.subr.mxu0 0.0
  %3727 = vmatpush1.msra.mxu0 0.0
  %3728 = vmatprep.subr.mxu0 0.0
  %3729 = vmatpush1.msra.mxu0 0.0
  %3730 = vmatprep.subr.mxu0 0.0
  %3731 = vmatpush1.msra.mxu0 0.0
  %3732 = vmatprep.subr.mxu0 0.0
  %3733 = vmatpush1.msra.mxu0 0.0
  %3734 = vmatprep.subr.mxu0 0.0
  %3735 = vmatpush1.msra.mxu0 0.0
  %3736 = vmatprep.subr.mxu0 0.0
  %3737 = vmatpush1.msra.mxu0 0.0
  %3738 = vmatprep.subr.mxu0 0.0
  %3739 = vmatpush1.msra.mxu0 0.0
  %3740 = vmatprep.mubr.f32.mxu0 0.0
  %3741 = vmatmul.mubr.f32.gmra.mrb[0].mxu0 %v413
  %v3742 = vpop.f32.mrb[0].mxu0
  %v3743 = vadd.f32 0.0, %v3742
  %v3744 = vpop.f32.mrb[0].mxu0
  %v3745 = vadd.f32 0.0, %v3744
  %3746 = vdwg.mxu0
  %3747 = vmatprep.subr.mxu0 %v1283
  %3748 = vmatpush1.msra.mxu0 %v1282
  %3749 = vmatprep.subr.mxu0 %v1285
  %3750 = vmatpush1.msra.mxu0 %v1284
  %3751 = vmatprep.subr.mxu0 %v1287
  %3752 = vmatpush1.msra.mxu0 %v1286
  %3753 = vmatprep.subr.mxu0 %v1289
  %3754 = vmatpush1.msra.mxu0 %v1288
  %3755 = vmatprep.subr.mxu0 %v1291
  %3756 = vmatpush1.msra.mxu0 %v1290
  %3757 = vmatprep.subr.mxu0 %v1293
  %3758 = vmatpush1.msra.mxu0 %v1292
  %3759 = vmatprep.subr.mxu0 %v1295
  %3760 = vmatpush1.msra.mxu0 %v1294
  %3761 = vmatprep.subr.mxu0 %v1297
  %3762 = vmatpush1.msra.mxu0 %v1296
  %3763 = vmatprep.subr.mxu0 %v1299
  %3764 = vmatpush1.msra.mxu0 %v1298
  %3765 = vmatprep.subr.mxu0 %v1301
  %3766 = vmatpush1.msra.mxu0 %v1300
  %3767 = vmatprep.subr.mxu0 %v1303
  %3768 = vmatpush1.msra.mxu0 %v1302
  %3769 = vmatprep.subr.mxu0 %v1305
  %3770 = vmatpush1.msra.mxu0 %v1304
  %3771 = vmatprep.subr.mxu0 %v1307
  %3772 = vmatpush1.msra.mxu0 %v1306
  %3773 = vmatprep.subr.mxu0 %v1309
  %3774 = vmatpush1.msra.mxu0 %v1308
  %3775 = vmatprep.subr.mxu0 %v1311
  %3776 = vmatpush1.msra.mxu0 %v1310
  %3777 = vmatprep.subr.mxu0 %v1313
  %3778 = vmatpush1.msra.mxu0 %v1312
  %3779 = vmatprep.subr.mxu0 0.0
  %3780 = vmatpush1.msra.mxu0 0.0
  %3781 = vmatprep.subr.mxu0 0.0
  %3782 = vmatpush1.msra.mxu0 0.0
  %3783 = vmatprep.subr.mxu0 0.0
  %3784 = vmatpush1.msra.mxu0 0.0
  %3785 = vmatprep.subr.mxu0 0.0
  %3786 = vmatpush1.msra.mxu0 0.0
  %3787 = vmatprep.subr.mxu0 0.0
  %3788 = vmatpush1.msra.mxu0 0.0
  %3789 = vmatprep.subr.mxu0 0.0
  %3790 = vmatpush1.msra.mxu0 0.0
  %3791 = vmatprep.subr.mxu0 0.0
  %3792 = vmatpush1.msra.mxu0 0.0
  %3793 = vmatprep.subr.mxu0 0.0
  %3794 = vmatpush1.msra.mxu0 0.0
  %3795 = vmatprep.subr.mxu0 0.0
  %3796 = vmatpush1.msra.mxu0 0.0
  %3797 = vmatprep.subr.mxu0 0.0
  %3798 = vmatpush1.msra.mxu0 0.0
  %3799 = vmatprep.subr.mxu0 0.0
  %3800 = vmatpush1.msra.mxu0 0.0
  %3801 = vmatprep.subr.mxu0 0.0
  %3802 = vmatpush1.msra.mxu0 0.0
  %3803 = vmatprep.subr.mxu0 0.0
  %3804 = vmatpush1.msra.mxu0 0.0
  %3805 = vmatprep.subr.mxu0 0.0
  %3806 = vmatpush1.msra.mxu0 0.0
  %3807 = vmatprep.subr.mxu0 0.0
  %3808 = vmatpush1.msra.mxu0 0.0
  %3809 = vmatprep.subr.mxu0 0.0
  %3810 = vmatpush1.msra.mxu0 0.0
  %3811 = vmatprep.mubr.f32.mxu0 0.0
  %3812 = vmatmul.mubr.f32.gmra.mrb[0].mxu0 %v418
  %v3813 = vpop.f32.mrb[0].mxu0
  %v3814 = vadd.f32 0.0, %v3813
  %v3815 = vpop.f32.mrb[0].mxu0
  %v3816 = vadd.f32 0.0, %v3815
  %3817 = vdwg.mxu0
  %3818 = vmatprep.subr.mxu0 %v1315
  %3819 = vmatpush1.msra.mxu0 %v1314
  %3820 = vmatprep.subr.mxu0 %v1317
  %3821 = vmatpush1.msra.mxu0 %v1316
  %3822 = vmatprep.subr.mxu0 %v1319
  %3823 = vmatpush1.msra.mxu0 %v1318
  %3824 = vmatprep.subr.mxu0 %v1321
  %3825 = vmatpush1.msra.mxu0 %v1320
  %3826 = vmatprep.subr.mxu0 %v1323
  %3827 = vmatpush1.msra.mxu0 %v1322
  %3828 = vmatprep.subr.mxu0 %v1325
  %3829 = vmatpush1.msra.mxu0 %v1324
  %3830 = vmatprep.subr.mxu0 %v1327
  %3831 = vmatpush1.msra.mxu0 %v1326
  %3832 = vmatprep.subr.mxu0 %v1329
  %3833 = vmatpush1.msra.mxu0 %v1328
  %3834 = vmatprep.subr.mxu0 %v1331
  %3835 = vmatpush1.msra.mxu0 %v1330
  %3836 = vmatprep.subr.mxu0 %v1333
  %3837 = vmatpush1.msra.mxu0 %v1332
  %3838 = vmatprep.subr.mxu0 %v1335
  %3839 = vmatpush1.msra.mxu0 %v1334
  %3840 = vmatprep.subr.mxu0 %v1337
  %3841 = vmatpush1.msra.mxu0 %v1336
  %3842 = vmatprep.subr.mxu0 %v1339
  %3843 = vmatpush1.msra.mxu0 %v1338
  %3844 = vmatprep.subr.mxu0 %v1341
  %3845 = vmatpush1.msra.mxu0 %v1340
  %3846 = vmatprep.subr.mxu0 %v1343
  %3847 = vmatpush1.msra.mxu0 %v1342
  %3848 = vmatprep.subr.mxu0 %v1345
  %3849 = vmatpush1.msra.mxu0 %v1344
  %3850 = vmatprep.subr.mxu0 0.0
  %3851 = vmatpush1.msra.mxu0 0.0
  %3852 = vmatprep.subr.mxu0 0.0
  %3853 = vmatpush1.msra.mxu0 0.0
  %3854 = vmatprep.subr.mxu0 0.0
  %3855 = vmatpush1.msra.mxu0 0.0
  %3856 = vmatprep.subr.mxu0 0.0
  %3857 = vmatpush1.msra.mxu0 0.0
  %3858 = vmatprep.subr.mxu0 0.0
  %3859 = vmatpush1.msra.mxu0 0.0
  %3860 = vmatprep.subr.mxu0 0.0
  %3861 = vmatpush1.msra.mxu0 0.0
  %3862 = vmatprep.subr.mxu0 0.0
  %3863 = vmatpush1.msra.mxu0 0.0
  %3864 = vmatprep.subr.mxu0 0.0
  %3865 = vmatpush1.msra.mxu0 0.0
  %3866 = vmatprep.subr.mxu0 0.0
  %3867 = vmatpush1.msra.mxu0 0.0
  %3868 = vmatprep.subr.mxu0 0.0
  %3869 = vmatpush1.msra.mxu0 0.0
  %3870 = vmatprep.subr.mxu0 0.0
  %3871 = vmatpush1.msra.mxu0 0.0
  %3872 = vmatprep.subr.mxu0 0.0
  %3873 = vmatpush1.msra.mxu0 0.0
  %3874 = vmatprep.subr.mxu0 0.0
  %3875 = vmatpush1.msra.mxu0 0.0
  %3876 = vmatprep.subr.mxu0 0.0
  %3877 = vmatpush1.msra.mxu0 0.0
  %3878 = vmatprep.subr.mxu0 0.0
  %3879 = vmatpush1.msra.mxu0 0.0
  %3880 = vmatprep.subr.mxu0 0.0
  %3881 = vmatpush1.msra.mxu0 0.0
  %3882 = vmatprep.mubr.f32.mxu0 0.0
  %3883 = vmatmul.mubr.f32.gmra.mrb[0].mxu0 %v423
  %v3884 = vpop.f32.mrb[0].mxu0
  %v3885 = vadd.f32 0.0, %v3884
  %v3886 = vpop.f32.mrb[0].mxu0
  %v3887 = vadd.f32 0.0, %v3886
  %3888 = vdwg.mxu0
  %3889 = vmatprep.subr.mxu0 %v1347
  %3890 = vmatpush1.msra.mxu0 %v1346
  %3891 = vmatprep.subr.mxu0 %v1349
  %3892 = vmatpush1.msra.mxu0 %v1348
  %3893 = vmatprep.subr.mxu0 %v1351
  %3894 = vmatpush1.msra.mxu0 %v1350
  %3895 = vmatprep.subr.mxu0 %v1353
  %3896 = vmatpush1.msra.mxu0 %v1352
  %3897 = vmatprep.subr.mxu0 %v1355
  %3898 = vmatpush1.msra.mxu0 %v1354
  %3899 = vmatprep.subr.mxu0 %v1357
  %3900 = vmatpush1.msra.mxu0 %v1356
  %3901 = vmatprep.subr.mxu0 %v1359
  %3902 = vmatpush1.msra.mxu0 %v1358
  %3903 = vmatprep.subr.mxu0 %v1361
  %3904 = vmatpush1.msra.mxu0 %v1360
  %3905 = vmatprep.subr.mxu0 %v1363
  %3906 = vmatpush1.msra.mxu0 %v1362
  %3907 = vmatprep.subr.mxu0 %v1365
  %3908 = vmatpush1.msra.mxu0 %v1364
  %3909 = vmatprep.subr.mxu0 %v1367
  %3910 = vmatpush1.msra.mxu0 %v1366
  %3911 = vmatprep.subr.mxu0 %v1369
  %3912 = vmatpush1.msra.mxu0 %v1368
  %3913 = vmatprep.subr.mxu0 %v1371
  %3914 = vmatpush1.msra.mxu0 %v1370
  %3915 = vmatprep.subr.mxu0 %v1373
  %3916 = vmatpush1.msra.mxu0 %v1372
  %3917 = vmatprep.subr.mxu0 %v1375
  %3918 = vmatpush1.msra.mxu0 %v1374
  %3919 = vmatprep.subr.mxu0 %v1377
  %3920 = vmatpush1.msra.mxu0 %v1376
  %3921 = vmatprep.subr.mxu0 0.0
  %3922 = vmatpush1.msra.mxu0 0.0
  %3923 = vmatprep.subr.mxu0 0.0
  %3924 = vmatpush1.msra.mxu0 0.0
  %3925 = vmatprep.subr.mxu0 0.0
  %3926 = vmatpush1.msra.mxu0 0.0
  %3927 = vmatprep.subr.mxu0 0.0
  %3928 = vmatpush1.msra.mxu0 0.0
  %3929 = vmatprep.subr.mxu0 0.0
  %3930 = vmatpush1.msra.mxu0 0.0
  %3931 = vmatprep.subr.mxu0 0.0
  %3932 = vmatpush1.msra.mxu0 0.0
  %3933 = vmatprep.subr.mxu0 0.0
  %3934 = vmatpush1.msra.mxu0 0.0
  %3935 = vmatprep.subr.mxu0 0.0
  %3936 = vmatpush1.msra.mxu0 0.0
  %3937 = vmatprep.subr.mxu0 0.0
  %3938 = vmatpush1.msra.mxu0 0.0
  %3939 = vmatprep.subr.mxu0 0.0
  %3940 = vmatpush1.msra.mxu0 0.0
  %3941 = vmatprep.subr.mxu0 0.0
  %3942 = vmatpush1.msra.mxu0 0.0
  %3943 = vmatprep.subr.mxu0 0.0
  %3944 = vmatpush1.msra.mxu0 0.0
  %3945 = vmatprep.subr.mxu0 0.0
  %3946 = vmatpush1.msra.mxu0 0.0
  %3947 = vmatprep.subr.mxu0 0.0
  %3948 = vmatpush1.msra.mxu0 0.0
  %3949 = vmatprep.subr.mxu0 0.0
  %3950 = vmatpush1.msra.mxu0 0.0
  %3951 = vmatprep.subr.mxu0 0.0
  %3952 = vmatpush1.msra.mxu0 0.0
  %3953 = vmatprep.mubr.f32.mxu0 0.0
  %3954 = vmatmul.mubr.f32.gmra.mrb[0].mxu0 %v428
  %v3955 = vpop.f32.mrb[0].mxu0
  %v3956 = vadd.f32 0.0, %v3955
  %v3957 = vpop.f32.mrb[0].mxu0
  %v3958 = vadd.f32 0.0, %v3957
  %3959 = vdwg.mxu0
  %3960 = vmatprep.subr.mxu0 %v1379
  %3961 = vmatpush1.msra.mxu0 %v1378
  %3962 = vmatprep.subr.mxu0 %v1381
  %3963 = vmatpush1.msra.mxu0 %v1380
  %3964 = vmatprep.subr.mxu0 %v1383
  %3965 = vmatpush1.msra.mxu0 %v1382
  %3966 = vmatprep.subr.mxu0 %v1385
  %3967 = vmatpush1.msra.mxu0 %v1384
  %3968 = vmatprep.subr.mxu0 %v1387
  %3969 = vmatpush1.msra.mxu0 %v1386
  %3970 = vmatprep.subr.mxu0 %v1389
  %3971 = vmatpush1.msra.mxu0 %v1388
  %3972 = vmatprep.subr.mxu0 %v1391
  %3973 = vmatpush1.msra.mxu0 %v1390
  %3974 = vmatprep.subr.mxu0 %v1393
  %3975 = vmatpush1.msra.mxu0 %v1392
  %3976 = vmatprep.subr.mxu0 %v1395
  %3977 = vmatpush1.msra.mxu0 %v1394
  %3978 = vmatprep.subr.mxu0 %v1397
  %3979 = vmatpush1.msra.mxu0 %v1396
  %3980 = vmatprep.subr.mxu0 %v1399
  %3981 = vmatpush1.msra.mxu0 %v1398
  %3982 = vmatprep.subr.mxu0 %v1401
  %3983 = vmatpush1.msra.mxu0 %v1400
  %3984 = vmatprep.subr.mxu0 %v1403
  %3985 = vmatpush1.msra.mxu0 %v1402
  %3986 = vmatprep.subr.mxu0 %v1405
  %3987 = vmatpush1.msra.mxu0 %v1404
  %3988 = vmatprep.subr.mxu0 %v1407
  %3989 = vmatpush1.msra.mxu0 %v1406
  %3990 = vmatprep.subr.mxu0 %v1409
  %3991 = vmatpush1.msra.mxu0 %v1408
  %3992 = vmatprep.subr.mxu0 0.0
  %3993 = vmatpush1.msra.mxu0 0.0
  %3994 = vmatprep.subr.mxu0 0.0
  %3995 = vmatpush1.msra.mxu0 0.0
  %3996 = vmatprep.subr.mxu0 0.0
  %3997 = vmatpush1.msra.mxu0 0.0
  %3998 = vmatprep.subr.mxu0 0.0
  %3999 = vmatpush1.msra.mxu0 0.0
  %4000 = vmatprep.subr.mxu0 0.0
  %4001 = vmatpush1.msra.mxu0 0.0
  %4002 = vmatprep.subr.mxu0 0.0
  %4003 = vmatpush1.msra.mxu0 0.0
  %4004 = vmatprep.subr.mxu0 0.0
  %4005 = vmatpush1.msra.mxu0 0.0
  %4006 = vmatprep.subr.mxu0 0.0
  %4007 = vmatpush1.msra.mxu0 0.0
  %4008 = vmatprep.subr.mxu0 0.0
  %4009 = vmatpush1.msra.mxu0 0.0
  %4010 = vmatprep.subr.mxu0 0.0
  %4011 = vmatpush1.msra.mxu0 0.0
  %4012 = vmatprep.subr.mxu0 0.0
  %4013 = vmatpush1.msra.mxu0 0.0
  %4014 = vmatprep.subr.mxu0 0.0
  %4015 = vmatpush1.msra.mxu0 0.0
  %4016 = vmatprep.subr.mxu0 0.0
  %4017 = vmatpush1.msra.mxu0 0.0
  %4018 = vmatprep.subr.mxu0 0.0
  %4019 = vmatpush1.msra.mxu0 0.0
  %4020 = vmatprep.subr.mxu0 0.0
  %4021 = vmatpush1.msra.mxu0 0.0
  %4022 = vmatprep.subr.mxu0 0.0
  %4023 = vmatpush1.msra.mxu0 0.0
  %4024 = vmatprep.mubr.f32.mxu0 0.0
  %4025 = vmatmul.mubr.f32.gmra.mrb[0].mxu0 %v433
  %v4026 = vpop.f32.mrb[0].mxu0
  %v4027 = vadd.f32 0.0, %v4026
  %v4028 = vpop.f32.mrb[0].mxu0
  %v4029 = vadd.f32 0.0, %v4028
  %4030 = vdwg.mxu0
  %4031 = vmatprep.subr.mxu0 %v1411
  %4032 = vmatpush1.msra.mxu0 %v1410
  %4033 = vmatprep.subr.mxu0 %v1413
  %4034 = vmatpush1.msra.mxu0 %v1412
  %4035 = vmatprep.subr.mxu0 %v1415
  %4036 = vmatpush1.msra.mxu0 %v1414
  %4037 = vmatprep.subr.mxu0 %v1417
  %4038 = vmatpush1.msra.mxu0 %v1416
  %4039 = vmatprep.subr.mxu0 %v1419
  %4040 = vmatpush1.msra.mxu0 %v1418
  %4041 = vmatprep.subr.mxu0 %v1421
  %4042 = vmatpush1.msra.mxu0 %v1420
  %4043 = vmatprep.subr.mxu0 %v1423
  %4044 = vmatpush1.msra.mxu0 %v1422
  %4045 = vmatprep.subr.mxu0 %v1425
  %4046 = vmatpush1.msra.mxu0 %v1424
  %4047 = vmatprep.subr.mxu0 %v1427
  %4048 = vmatpush1.msra.mxu0 %v1426
  %4049 = vmatprep.subr.mxu0 %v1429
  %4050 = vmatpush1.msra.mxu0 %v1428
  %4051 = vmatprep.subr.mxu0 %v1431
  %4052 = vmatpush1.msra.mxu0 %v1430
  %4053 = vmatprep.subr.mxu0 %v1433
  %4054 = vmatpush1.msra.mxu0 %v1432
  %4055 = vmatprep.subr.mxu0 %v1435
  %4056 = vmatpush1.msra.mxu0 %v1434
  %4057 = vmatprep.subr.mxu0 %v1437
  %4058 = vmatpush1.msra.mxu0 %v1436
  %4059 = vmatprep.subr.mxu0 %v1439
  %4060 = vmatpush1.msra.mxu0 %v1438
  %4061 = vmatprep.subr.mxu0 %v1441
  %4062 = vmatpush1.msra.mxu0 %v1440
  %4063 = vmatprep.subr.mxu0 0.0
  %4064 = vmatpush1.msra.mxu0 0.0
  %4065 = vmatprep.subr.mxu0 0.0
  %4066 = vmatpush1.msra.mxu0 0.0
  %4067 = vmatprep.subr.mxu0 0.0
  %4068 = vmatpush1.msra.mxu0 0.0
  %4069 = vmatprep.subr.mxu0 0.0
  %4070 = vmatpush1.msra.mxu0 0.0
  %4071 = vmatprep.subr.mxu0 0.0
  %4072 = vmatpush1.msra.mxu0 0.0
  %4073 = vmatprep.subr.mxu0 0.0
  %4074 = vmatpush1.msra.mxu0 0.0
  %4075 = vmatprep.subr.mxu0 0.0
  %4076 = vmatpush1.msra.mxu0 0.0
  %4077 = vmatprep.subr.mxu0 0.0
  %4078 = vmatpush1.msra.mxu0 0.0
  %4079 = vmatprep.subr.mxu0 0.0
  %4080 = vmatpush1.msra.mxu0 0.0
  %4081 = vmatprep.subr.mxu0 0.0
  %4082 = vmatpush1.msra.mxu0 0.0
  %4083 = vmatprep.subr.mxu0 0.0
  %4084 = vmatpush1.msra.mxu0 0.0
  %4085 = vmatprep.subr.mxu0 0.0
  %4086 = vmatpush1.msra.mxu0 0.0
  %4087 = vmatprep.subr.mxu0 0.0
  %4088 = vmatpush1.msra.mxu0 0.0
  %4089 = vmatprep.subr.mxu0 0.0
  %4090 = vmatpush1.msra.mxu0 0.0
  %4091 = vmatprep.subr.mxu0 0.0
  %4092 = vmatpush1.msra.mxu0 0.0
  %4093 = vmatprep.subr.mxu0 0.0
  %4094 = vmatpush1.msra.mxu0 0.0
  %4095 = vmatprep.mubr.f32.mxu0 0.0
  %4096 = vmatmul.mubr.f32.gmra.mrb[0].mxu0 %v438
  %v4097 = vpop.f32.mrb[0].mxu0
  %v4098 = vadd.f32 0.0, %v4097
  %v4099 = vpop.f32.mrb[0].mxu0
  %v4100 = vadd.f32 0.0, %v4099
  %4101 = vdwg.mxu0
  %4102 = vmatprep.subr.mxu0 %v1443
  %4103 = vmatpush1.msra.mxu0 %v1442
  %4104 = vmatprep.subr.mxu0 %v1445
  %4105 = vmatpush1.msra.mxu0 %v1444
  %4106 = vmatprep.subr.mxu0 %v1447
  %4107 = vmatpush1.msra.mxu0 %v1446
  %4108 = vmatprep.subr.mxu0 %v1449
  %4109 = vmatpush1.msra.mxu0 %v1448
  %4110 = vmatprep.subr.mxu0 %v1451
  %4111 = vmatpush1.msra.mxu0 %v1450
  %4112 = vmatprep.subr.mxu0 %v1453
  %4113 = vmatpush1.msra.mxu0 %v1452
  %4114 = vmatprep.subr.mxu0 %v1455
  %4115 = vmatpush1.msra.mxu0 %v1454
  %4116 = vmatprep.subr.mxu0 %v1457
  %4117 = vmatpush1.msra.mxu0 %v1456
  %4118 = vmatprep.subr.mxu0 %v1459
  %4119 = vmatpush1.msra.mxu0 %v1458
  %4120 = vmatprep.subr.mxu0 %v1461
  %4121 = vmatpush1.msra.mxu0 %v1460
  %4122 = vmatprep.subr.mxu0 %v1463
  %4123 = vmatpush1.msra.mxu0 %v1462
  %4124 = vmatprep.subr.mxu0 %v1465
  %4125 = vmatpush1.msra.mxu0 %v1464
  %4126 = vmatprep.subr.mxu0 %v1467
  %4127 = vmatpush1.msra.mxu0 %v1466
  %4128 = vmatprep.subr.mxu0 %v1469
  %4129 = vmatpush1.msra.mxu0 %v1468
  %4130 = vmatprep.subr.mxu0 %v1471
  %4131 = vmatpush1.msra.mxu0 %v1470
  %4132 = vmatprep.subr.mxu0 %v1473
  %4133 = vmatpush1.msra.mxu0 %v1472
  %4134 = vmatprep.subr.mxu0 0.0
  %4135 = vmatpush1.msra.mxu0 0.0
  %4136 = vmatprep.subr.mxu0 0.0
  %4137 = vmatpush1.msra.mxu0 0.0
  %4138 = vmatprep.subr.mxu0 0.0
  %4139 = vmatpush1.msra.mxu0 0.0
  %4140 = vmatprep.subr.mxu0 0.0
  %4141 = vmatpush1.msra.mxu0 0.0
  %4142 = vmatprep.subr.mxu0 0.0
  %4143 = vmatpush1.msra.mxu0 0.0
  %4144 = vmatprep.subr.mxu0 0.0
  %4145 = vmatpush1.msra.mxu0 0.0
  %4146 = vmatprep.subr.mxu0 0.0
  %4147 = vmatpush1.msra.mxu0 0.0
  %4148 = vmatprep.subr.mxu0 0.0
  %4149 = vmatpush1.msra.mxu0 0.0
  %4150 = vmatprep.subr.mxu0 0.0
  %4151 = vmatpush1.msra.mxu0 0.0
  %4152 = vmatprep.subr.mxu0 0.0
  %4153 = vmatpush1.msra.mxu0 0.0
  %4154 = vmatprep.subr.mxu0 0.0
  %4155 = vmatpush1.msra.mxu0 0.0
  %4156 = vmatprep.subr.mxu0 0.0
  %4157 = vmatpush1.msra.mxu0 0.0
  %4158 = vmatprep.subr.mxu0 0.0
  %4159 = vmatpush1.msra.mxu0 0.0
  %4160 = vmatprep.subr.mxu0 0.0
  %4161 = vmatpush1.msra.mxu0 0.0
  %4162 = vmatprep.subr.mxu0 0.0
  %4163 = vmatpush1.msra.mxu0 0.0
  %4164 = vmatprep.subr.mxu0 0.0
  %4165 = vmatpush1.msra.mxu0 0.0
  %4166 = vmatprep.mubr.f32.mxu0 0.0
  %4167 = vmatmul.mubr.f32.gmra.mrb[0].mxu0 %v443
  %v4168 = vpop.f32.mrb[0].mxu0
  %v4169 = vadd.f32 0.0, %v4168
  %v4170 = vpop.f32.mrb[0].mxu0
  %v4171 = vadd.f32 0.0, %v4170
  %4172 = vdwg.mxu0
  %4173 = vmatprep.subr.mxu0 %v1475
  %4174 = vmatpush1.msra.mxu0 %v1474
  %4175 = vmatprep.subr.mxu0 %v1477
  %4176 = vmatpush1.msra.mxu0 %v1476
  %4177 = vmatprep.subr.mxu0 %v1479
  %4178 = vmatpush1.msra.mxu0 %v1478
  %4179 = vmatprep.subr.mxu0 %v1481
  %4180 = vmatpush1.msra.mxu0 %v1480
  %4181 = vmatprep.subr.mxu0 %v1483
  %4182 = vmatpush1.msra.mxu0 %v1482
  %4183 = vmatprep.subr.mxu0 %v1485
  %4184 = vmatpush1.msra.mxu0 %v1484
  %4185 = vmatprep.subr.mxu0 %v1487
  %4186 = vmatpush1.msra.mxu0 %v1486
  %4187 = vmatprep.subr.mxu0 %v1489
  %4188 = vmatpush1.msra.mxu0 %v1488
  %4189 = vmatprep.subr.mxu0 %v1491
  %4190 = vmatpush1.msra.mxu0 %v1490
  %4191 = vmatprep.subr.mxu0 %v1493
  %4192 = vmatpush1.msra.mxu0 %v1492
  %4193 = vmatprep.subr.mxu0 %v1495
  %4194 = vmatpush1.msra.mxu0 %v1494
  %4195 = vmatprep.subr.mxu0 %v1497
  %4196 = vmatpush1.msra.mxu0 %v1496
  %4197 = vmatprep.subr.mxu0 %v1499
  %4198 = vmatpush1.msra.mxu0 %v1498
  %4199 = vmatprep.subr.mxu0 %v1501
  %4200 = vmatpush1.msra.mxu0 %v1500
  %4201 = vmatprep.subr.mxu0 %v1503
  %4202 = vmatpush1.msra.mxu0 %v1502
  %4203 = vmatprep.subr.mxu0 %v1505
  %4204 = vmatpush1.msra.mxu0 %v1504
  %4205 = vmatprep.subr.mxu0 0.0
  %4206 = vmatpush1.msra.mxu0 0.0
  %4207 = vmatprep.subr.mxu0 0.0
  %4208 = vmatpush1.msra.mxu0 0.0
  %4209 = vmatprep.subr.mxu0 0.0
  %4210 = vmatpush1.msra.mxu0 0.0
  %4211 = vmatprep.subr.mxu0 0.0
  %4212 = vmatpush1.msra.mxu0 0.0
  %4213 = vmatprep.subr.mxu0 0.0
  %4214 = vmatpush1.msra.mxu0 0.0
  %4215 = vmatprep.subr.mxu0 0.0
  %4216 = vmatpush1.msra.mxu0 0.0
  %4217 = vmatprep.subr.mxu0 0.0
  %4218 = vmatpush1.msra.mxu0 0.0
  %4219 = vmatprep.subr.mxu0 0.0
  %4220 = vmatpush1.msra.mxu0 0.0
  %4221 = vmatprep.subr.mxu0 0.0
  %4222 = vmatpush1.msra.mxu0 0.0
  %4223 = vmatprep.subr.mxu0 0.0
  %4224 = vmatpush1.msra.mxu0 0.0
  %4225 = vmatprep.subr.mxu0 0.0
  %4226 = vmatpush1.msra.mxu0 0.0
  %4227 = vmatprep.subr.mxu0 0.0
  %4228 = vmatpush1.msra.mxu0 0.0
  %4229 = vmatprep.subr.mxu0 0.0
  %4230 = vmatpush1.msra.mxu0 0.0
  %4231 = vmatprep.subr.mxu0 0.0
  %4232 = vmatpush1.msra.mxu0 0.0
  %4233 = vmatprep.subr.mxu0 0.0
  %4234 = vmatpush1.msra.mxu0 0.0
  %4235 = vmatprep.subr.mxu0 0.0
  %4236 = vmatpush1.msra.mxu0 0.0
  %4237 = vmatprep.mubr.f32.mxu0 0.0
  %4238 = vmatmul.mubr.f32.gmra.mrb[0].mxu0 %v448
  %v4239 = vpop.f32.mrb[0].mxu0
  %v4240 = vadd.f32 0.0, %v4239
  %v4241 = vpop.f32.mrb[0].mxu0
  %v4242 = vadd.f32 0.0, %v4241
  %4243 = vdwg.mxu0
  %4244 = vmatprep.subr.mxu0 %v1507
  %4245 = vmatpush1.msra.mxu0 %v1506
  %4246 = vmatprep.subr.mxu0 %v1509
  %4247 = vmatpush1.msra.mxu0 %v1508
  %4248 = vmatprep.subr.mxu0 %v1511
  %4249 = vmatpush1.msra.mxu0 %v1510
  %4250 = vmatprep.subr.mxu0 %v1513
  %4251 = vmatpush1.msra.mxu0 %v1512
  %4252 = vmatprep.subr.mxu0 %v1515
  %4253 = vmatpush1.msra.mxu0 %v1514
  %4254 = vmatprep.subr.mxu0 %v1517
  %4255 = vmatpush1.msra.mxu0 %v1516
  %4256 = vmatprep.subr.mxu0 %v1519
  %4257 = vmatpush1.msra.mxu0 %v1518
  %4258 = vmatprep.subr.mxu0 %v1521
  %4259 = vmatpush1.msra.mxu0 %v1520
  %4260 = vmatprep.subr.mxu0 %v1523
  %4261 = vmatpush1.msra.mxu0 %v1522
  %4262 = vmatprep.subr.mxu0 %v1525
  %4263 = vmatpush1.msra.mxu0 %v1524
  %4264 = vmatprep.subr.mxu0 %v1527
  %4265 = vmatpush1.msra.mxu0 %v1526
  %4266 = vmatprep.subr.mxu0 %v1529
  %4267 = vmatpush1.msra.mxu0 %v1528
  %4268 = vmatprep.subr.mxu0 %v1531
  %4269 = vmatpush1.msra.mxu0 %v1530
  %4270 = vmatprep.subr.mxu0 %v1533
  %4271 = vmatpush1.msra.mxu0 %v1532
  %4272 = vmatprep.subr.mxu0 %v1535
  %4273 = vmatpush1.msra.mxu0 %v1534
  %4274 = vmatprep.subr.mxu0 %v1537
  %4275 = vmatpush1.msra.mxu0 %v1536
  %4276 = vmatprep.subr.mxu0 0.0
  %4277 = vmatpush1.msra.mxu0 0.0
  %4278 = vmatprep.subr.mxu0 0.0
  %4279 = vmatpush1.msra.mxu0 0.0
  %4280 = vmatprep.subr.mxu0 0.0
  %4281 = vmatpush1.msra.mxu0 0.0
  %4282 = vmatprep.subr.mxu0 0.0
  %4283 = vmatpush1.msra.mxu0 0.0
  %4284 = vmatprep.subr.mxu0 0.0
  %4285 = vmatpush1.msra.mxu0 0.0
  %4286 = vmatprep.subr.mxu0 0.0
  %4287 = vmatpush1.msra.mxu0 0.0
  %4288 = vmatprep.subr.mxu0 0.0
  %4289 = vmatpush1.msra.mxu0 0.0
  %4290 = vmatprep.subr.mxu0 0.0
  %4291 = vmatpush1.msra.mxu0 0.0
  %4292 = vmatprep.subr.mxu0 0.0
  %4293 = vmatpush1.msra.mxu0 0.0
  %4294 = vmatprep.subr.mxu0 0.0
  %4295 = vmatpush1.msra.mxu0 0.0
  %4296 = vmatprep.subr.mxu0 0.0
  %4297 = vmatpush1.msra.mxu0 0.0
  %4298 = vmatprep.subr.mxu0 0.0
  %4299 = vmatpush1.msra.mxu0 0.0
  %4300 = vmatprep.subr.mxu0 0.0
  %4301 = vmatpush1.msra.mxu0 0.0
  %4302 = vmatprep.subr.mxu0 0.0
  %4303 = vmatpush1.msra.mxu0 0.0
  %4304 = vmatprep.subr.mxu0 0.0
  %4305 = vmatpush1.msra.mxu0 0.0
  %4306 = vmatprep.subr.mxu0 0.0
  %4307 = vmatpush1.msra.mxu0 0.0
  %4308 = vmatprep.mubr.f32.mxu0 0.0
  %4309 = vmatmul.mubr.f32.gmra.mrb[0].mxu0 %v453
  %v4310 = vpop.f32.mrb[0].mxu0
  %v4311 = vadd.f32 0.0, %v4310
  %v4312 = vpop.f32.mrb[0].mxu0
  %v4313 = vadd.f32 0.0, %v4312
  %4314 = vdwg.mxu0
  %4315 = vmatprep.subr.mxu0 %v1539
  %4316 = vmatpush1.msra.mxu0 %v1538
  %4317 = vmatprep.subr.mxu0 %v1541
  %4318 = vmatpush1.msra.mxu0 %v1540
  %4319 = vmatprep.subr.mxu0 %v1543
  %4320 = vmatpush1.msra.mxu0 %v1542
  %4321 = vmatprep.subr.mxu0 %v1545
  %4322 = vmatpush1.msra.mxu0 %v1544
  %4323 = vmatprep.subr.mxu0 %v1547
  %4324 = vmatpush1.msra.mxu0 %v1546
  %4325 = vmatprep.subr.mxu0 %v1549
  %4326 = vmatpush1.msra.mxu0 %v1548
  %4327 = vmatprep.subr.mxu0 %v1551
  %4328 = vmatpush1.msra.mxu0 %v1550
  %4329 = vmatprep.subr.mxu0 %v1553
  %4330 = vmatpush1.msra.mxu0 %v1552
  %4331 = vmatprep.subr.mxu0 %v1555
  %4332 = vmatpush1.msra.mxu0 %v1554
  %4333 = vmatprep.subr.mxu0 %v1557
  %4334 = vmatpush1.msra.mxu0 %v1556
  %4335 = vmatprep.subr.mxu0 %v1559
  %4336 = vmatpush1.msra.mxu0 %v1558
  %4337 = vmatprep.subr.mxu0 %v1561
  %4338 = vmatpush1.msra.mxu0 %v1560
  %4339 = vmatprep.subr.mxu0 %v1563
  %4340 = vmatpush1.msra.mxu0 %v1562
  %4341 = vmatprep.subr.mxu0 %v1565
  %4342 = vmatpush1.msra.mxu0 %v1564
  %4343 = vmatprep.subr.mxu0 %v1567
  %4344 = vmatpush1.msra.mxu0 %v1566
  %4345 = vmatprep.subr.mxu0 %v1569
  %4346 = vmatpush1.msra.mxu0 %v1568
  %4347 = vmatprep.subr.mxu0 0.0
  %4348 = vmatpush1.msra.mxu0 0.0
  %4349 = vmatprep.subr.mxu0 0.0
  %4350 = vmatpush1.msra.mxu0 0.0
  %4351 = vmatprep.subr.mxu0 0.0
  %4352 = vmatpush1.msra.mxu0 0.0
  %4353 = vmatprep.subr.mxu0 0.0
  %4354 = vmatpush1.msra.mxu0 0.0
  %4355 = vmatprep.subr.mxu0 0.0
  %4356 = vmatpush1.msra.mxu0 0.0
  %4357 = vmatprep.subr.mxu0 0.0
  %4358 = vmatpush1.msra.mxu0 0.0
  %4359 = vmatprep.subr.mxu0 0.0
  %4360 = vmatpush1.msra.mxu0 0.0
  %4361 = vmatprep.subr.mxu0 0.0
  %4362 = vmatpush1.msra.mxu0 0.0
  %4363 = vmatprep.subr.mxu0 0.0
  %4364 = vmatpush1.msra.mxu0 0.0
  %4365 = vmatprep.subr.mxu0 0.0
  %4366 = vmatpush1.msra.mxu0 0.0
  %4367 = vmatprep.subr.mxu0 0.0
  %4368 = vmatpush1.msra.mxu0 0.0
  %4369 = vmatprep.subr.mxu0 0.0
  %4370 = vmatpush1.msra.mxu0 0.0
  %4371 = vmatprep.subr.mxu0 0.0
  %4372 = vmatpush1.msra.mxu0 0.0
  %4373 = vmatprep.subr.mxu0 0.0
  %4374 = vmatpush1.msra.mxu0 0.0
  %4375 = vmatprep.subr.mxu0 0.0
  %4376 = vmatpush1.msra.mxu0 0.0
  %4377 = vmatprep.subr.mxu0 0.0
  %4378 = vmatpush1.msra.mxu0 0.0
  %4379 = vmatprep.mubr.f32.mxu0 0.0
  %4380 = vmatmul.mubr.f32.gmra.mrb[0].mxu0 %v458
  %v4381 = vpop.f32.mrb[0].mxu0
  %v4382 = vadd.f32 0.0, %v4381
  %v4383 = vpop.f32.mrb[0].mxu0
  %v4384 = vadd.f32 0.0, %v4383
  %4385 = vdwg.mxu0
  %4386 = vmatprep.subr.mxu0 %v1571
  %4387 = vmatpush1.msra.mxu0 %v1570
  %4388 = vmatprep.subr.mxu0 %v1573
  %4389 = vmatpush1.msra.mxu0 %v1572
  %4390 = vmatprep.subr.mxu0 %v1575
  %4391 = vmatpush1.msra.mxu0 %v1574
  %4392 = vmatprep.subr.mxu0 %v1577
  %4393 = vmatpush1.msra.mxu0 %v1576
  %4394 = vmatprep.subr.mxu0 %v1579
  %4395 = vmatpush1.msra.mxu0 %v1578
  %4396 = vmatprep.subr.mxu0 %v1581
  %4397 = vmatpush1.msra.mxu0 %v1580
  %4398 = vmatprep.subr.mxu0 %v1583
  %4399 = vmatpush1.msra.mxu0 %v1582
  %4400 = vmatprep.subr.mxu0 %v1585
  %4401 = vmatpush1.msra.mxu0 %v1584
  %4402 = vmatprep.subr.mxu0 %v1587
  %4403 = vmatpush1.msra.mxu0 %v1586
  %4404 = vmatprep.subr.mxu0 %v1589
  %4405 = vmatpush1.msra.mxu0 %v1588
  %4406 = vmatprep.subr.mxu0 %v1591
  %4407 = vmatpush1.msra.mxu0 %v1590
  %4408 = vmatprep.subr.mxu0 %v1593
  %4409 = vmatpush1.msra.mxu0 %v1592
  %4410 = vmatprep.subr.mxu0 %v1595
  %4411 = vmatpush1.msra.mxu0 %v1594
  %4412 = vmatprep.subr.mxu0 %v1597
  %4413 = vmatpush1.msra.mxu0 %v1596
  %4414 = vmatprep.subr.mxu0 %v1599
  %4415 = vmatpush1.msra.mxu0 %v1598
  %4416 = vmatprep.subr.mxu0 %v1601
  %4417 = vmatpush1.msra.mxu0 %v1600
  %4418 = vmatprep.subr.mxu0 0.0
  %4419 = vmatpush1.msra.mxu0 0.0
  %4420 = vmatprep.subr.mxu0 0.0
  %4421 = vmatpush1.msra.mxu0 0.0
  %4422 = vmatprep.subr.mxu0 0.0
  %4423 = vmatpush1.msra.mxu0 0.0
  %4424 = vmatprep.subr.mxu0 0.0
  %4425 = vmatpush1.msra.mxu0 0.0
  %4426 = vmatprep.subr.mxu0 0.0
  %4427 = vmatpush1.msra.mxu0 0.0
  %4428 = vmatprep.subr.mxu0 0.0
  %4429 = vmatpush1.msra.mxu0 0.0
  %4430 = vmatprep.subr.mxu0 0.0
  %4431 = vmatpush1.msra.mxu0 0.0
  %4432 = vmatprep.subr.mxu0 0.0
  %4433 = vmatpush1.msra.mxu0 0.0
  %4434 = vmatprep.subr.mxu0 0.0
  %4435 = vmatpush1.msra.mxu0 0.0
  %4436 = vmatprep.subr.mxu0 0.0
  %4437 = vmatpush1.msra.mxu0 0.0
  %4438 = vmatprep.subr.mxu0 0.0
  %4439 = vmatpush1.msra.mxu0 0.0
  %4440 = vmatprep.subr.mxu0 0.0
  %4441 = vmatpush1.msra.mxu0 0.0
  %4442 = vmatprep.subr.mxu0 0.0
  %4443 = vmatpush1.msra.mxu0 0.0
  %4444 = vmatprep.subr.mxu0 0.0
  %4445 = vmatpush1.msra.mxu0 0.0
  %4446 = vmatprep.subr.mxu0 0.0
  %4447 = vmatpush1.msra.mxu0 0.0
  %4448 = vmatprep.subr.mxu0 0.0
  %4449 = vmatpush1.msra.mxu0 0.0
  %4450 = vmatprep.mubr.f32.mxu0 0.0
  %4451 = vmatmul.mubr.f32.gmra.mrb[0].mxu0 %v463
  %v4452 = vpop.f32.mrb[0].mxu0
  %v4453 = vadd.f32 0.0, %v4452
  %v4454 = vpop.f32.mrb[0].mxu0
  %v4455 = vadd.f32 0.0, %v4454
  %4456 = vdwg.mxu0
  %4457 = vmatprep.subr.mxu0 %v1603
  %4458 = vmatpush1.msra.mxu0 %v1602
  %4459 = vmatprep.subr.mxu0 %v1605
  %4460 = vmatpush1.msra.mxu0 %v1604
  %4461 = vmatprep.subr.mxu0 %v1607
  %4462 = vmatpush1.msra.mxu0 %v1606
  %4463 = vmatprep.subr.mxu0 %v1609
  %4464 = vmatpush1.msra.mxu0 %v1608
  %4465 = vmatprep.subr.mxu0 %v1611
  %4466 = vmatpush1.msra.mxu0 %v1610
  %4467 = vmatprep.subr.mxu0 %v1613
  %4468 = vmatpush1.msra.mxu0 %v1612
  %4469 = vmatprep.subr.mxu0 %v1615
  %4470 = vmatpush1.msra.mxu0 %v1614
  %4471 = vmatprep.subr.mxu0 %v1617
  %4472 = vmatpush1.msra.mxu0 %v1616
  %4473 = vmatprep.subr.mxu0 %v1619
  %4474 = vmatpush1.msra.mxu0 %v1618
  %4475 = vmatprep.subr.mxu0 %v1621
  %4476 = vmatpush1.msra.mxu0 %v1620
  %4477 = vmatprep.subr.mxu0 %v1623
  %4478 = vmatpush1.msra.mxu0 %v1622
  %4479 = vmatprep.subr.mxu0 %v1625
  %4480 = vmatpush1.msra.mxu0 %v1624
  %4481 = vmatprep.subr.mxu0 %v1627
  %4482 = vmatpush1.msra.mxu0 %v1626
  %4483 = vmatprep.subr.mxu0 %v1629
  %4484 = vmatpush1.msra.mxu0 %v1628
  %4485 = vmatprep.subr.mxu0 %v1631
  %4486 = vmatpush1.msra.mxu0 %v1630
  %4487 = vmatprep.subr.mxu0 %v1633
  %4488 = vmatpush1.msra.mxu0 %v1632
  %4489 = vmatprep.subr.mxu0 0.0
  %4490 = vmatpush1.msra.mxu0 0.0
  %4491 = vmatprep.subr.mxu0 0.0
  %4492 = vmatpush1.msra.mxu0 0.0
  %4493 = vmatprep.subr.mxu0 0.0
  %4494 = vmatpush1.msra.mxu0 0.0
  %4495 = vmatprep.subr.mxu0 0.0
  %4496 = vmatpush1.msra.mxu0 0.0
  %4497 = vmatprep.subr.mxu0 0.0
  %4498 = vmatpush1.msra.mxu0 0.0
  %4499 = vmatprep.subr.mxu0 0.0
  %4500 = vmatpush1.msra.mxu0 0.0
  %4501 = vmatprep.subr.mxu0 0.0
  %4502 = vmatpush1.msra.mxu0 0.0
  %4503 = vmatprep.subr.mxu0 0.0
  %4504 = vmatpush1.msra.mxu0 0.0
  %4505 = vmatprep.subr.mxu0 0.0
  %4506 = vmatpush1.msra.mxu0 0.0
  %4507 = vmatprep.subr.mxu0 0.0
  %4508 = vmatpush1.msra.mxu0 0.0
  %4509 = vmatprep.subr.mxu0 0.0
  %4510 = vmatpush1.msra.mxu0 0.0
  %4511 = vmatprep.subr.mxu0 0.0
  %4512 = vmatpush1.msra.mxu0 0.0
  %4513 = vmatprep.subr.mxu0 0.0
  %4514 = vmatpush1.msra.mxu0 0.0
  %4515 = vmatprep.subr.mxu0 0.0
  %4516 = vmatpush1.msra.mxu0 0.0
  %4517 = vmatprep.subr.mxu0 0.0
  %4518 = vmatpush1.msra.mxu0 0.0
  %4519 = vmatprep.subr.mxu0 0.0
  %4520 = vmatpush1.msra.mxu0 0.0
  %4521 = vmatprep.mubr.f32.mxu0 0.0
  %4522 = vmatmul.mubr.f32.gmra.mrb[0].mxu0 %v468
  %v4523 = vpop.f32.mrb[0].mxu0
  %v4524 = vadd.f32 0.0, %v4523
  %v4525 = vpop.f32.mrb[0].mxu0
  %v4526 = vadd.f32 0.0, %v4525
  %4527 = vdwg.mxu0
  %4528 = vmatprep.subr.mxu0 %v1635
  %4529 = vmatpush1.msra.mxu0 %v1634
  %4530 = vmatprep.subr.mxu0 %v1637
  %4531 = vmatpush1.msra.mxu0 %v1636
  %4532 = vmatprep.subr.mxu0 %v1639
  %4533 = vmatpush1.msra.mxu0 %v1638
  %4534 = vmatprep.subr.mxu0 %v1641
  %4535 = vmatpush1.msra.mxu0 %v1640
  %4536 = vmatprep.subr.mxu0 %v1643
  %4537 = vmatpush1.msra.mxu0 %v1642
  %4538 = vmatprep.subr.mxu0 %v1645
  %4539 = vmatpush1.msra.mxu0 %v1644
  %4540 = vmatprep.subr.mxu0 %v1647
  %4541 = vmatpush1.msra.mxu0 %v1646
  %4542 = vmatprep.subr.mxu0 %v1649
  %4543 = vmatpush1.msra.mxu0 %v1648
  %4544 = vmatprep.subr.mxu0 %v1651
  %4545 = vmatpush1.msra.mxu0 %v1650
  %4546 = vmatprep.subr.mxu0 %v1653
  %4547 = vmatpush1.msra.mxu0 %v1652
  %4548 = vmatprep.subr.mxu0 %v1655
  %4549 = vmatpush1.msra.mxu0 %v1654
  %4550 = vmatprep.subr.mxu0 %v1657
  %4551 = vmatpush1.msra.mxu0 %v1656
  %4552 = vmatprep.subr.mxu0 %v1659
  %4553 = vmatpush1.msra.mxu0 %v1658
  %4554 = vmatprep.subr.mxu0 %v1661
  %4555 = vmatpush1.msra.mxu0 %v1660
  %4556 = vmatprep.subr.mxu0 %v1663
  %4557 = vmatpush1.msra.mxu0 %v1662
  %4558 = vmatprep.subr.mxu0 %v1665
  %4559 = vmatpush1.msra.mxu0 %v1664
  %4560 = vmatprep.subr.mxu0 0.0
  %4561 = vmatpush1.msra.mxu0 0.0
  %4562 = vmatprep.subr.mxu0 0.0
  %4563 = vmatpush1.msra.mxu0 0.0
  %4564 = vmatprep.subr.mxu0 0.0
  %4565 = vmatpush1.msra.mxu0 0.0
  %4566 = vmatprep.subr.mxu0 0.0
  %4567 = vmatpush1.msra.mxu0 0.0
  %4568 = vmatprep.subr.mxu0 0.0
  %4569 = vmatpush1.msra.mxu0 0.0
  %4570 = vmatprep.subr.mxu0 0.0
  %4571 = vmatpush1.msra.mxu0 0.0
  %4572 = vmatprep.subr.mxu0 0.0
  %4573 = vmatpush1.msra.mxu0 0.0
  %4574 = vmatprep.subr.mxu0 0.0
  %4575 = vmatpush1.msra.mxu0 0.0
  %4576 = vmatprep.subr.mxu0 0.0
  %4577 = vmatpush1.msra.mxu0 0.0
  %4578 = vmatprep.subr.mxu0 0.0
  %4579 = vmatpush1.msra.mxu0 0.0
  %4580 = vmatprep.subr.mxu0 0.0
  %4581 = vmatpush1.msra.mxu0 0.0
  %4582 = vmatprep.subr.mxu0 0.0
  %4583 = vmatpush1.msra.mxu0 0.0
  %4584 = vmatprep.subr.mxu0 0.0
  %4585 = vmatpush1.msra.mxu0 0.0
  %4586 = vmatprep.subr.mxu0 0.0
  %4587 = vmatpush1.msra.mxu0 0.0
  %4588 = vmatprep.subr.mxu0 0.0
  %4589 = vmatpush1.msra.mxu0 0.0
  %4590 = vmatprep.subr.mxu0 0.0
  %4591 = vmatpush1.msra.mxu0 0.0
  %4592 = vmatprep.mubr.f32.mxu0 0.0
  %4593 = vmatmul.mubr.f32.gmra.mrb[0].mxu0 %v473
  %v4594 = vpop.f32.mrb[0].mxu0
  %v4595 = vadd.f32 0.0, %v4594
  %v4596 = vpop.f32.mrb[0].mxu0
  %v4597 = vadd.f32 0.0, %v4596
  %4598 = vdwg.mxu0
  %4599 = vmatprep.subr.mxu0 %v1667
  %4600 = vmatpush1.msra.mxu0 %v1666
  %4601 = vmatprep.subr.mxu0 %v1669
  %4602 = vmatpush1.msra.mxu0 %v1668
  %4603 = vmatprep.subr.mxu0 %v1671
  %4604 = vmatpush1.msra.mxu0 %v1670
  %4605 = vmatprep.subr.mxu0 %v1673
  %4606 = vmatpush1.msra.mxu0 %v1672
  %4607 = vmatprep.subr.mxu0 %v1675
  %4608 = vmatpush1.msra.mxu0 %v1674
  %4609 = vmatprep.subr.mxu0 %v1677
  %4610 = vmatpush1.msra.mxu0 %v1676
  %4611 = vmatprep.subr.mxu0 %v1679
  %4612 = vmatpush1.msra.mxu0 %v1678
  %4613 = vmatprep.subr.mxu0 %v1681
  %4614 = vmatpush1.msra.mxu0 %v1680
  %4615 = vmatprep.subr.mxu0 %v1683
  %4616 = vmatpush1.msra.mxu0 %v1682
  %4617 = vmatprep.subr.mxu0 %v1685
  %4618 = vmatpush1.msra.mxu0 %v1684
  %4619 = vmatprep.subr.mxu0 %v1687
  %4620 = vmatpush1.msra.mxu0 %v1686
  %4621 = vmatprep.subr.mxu0 %v1689
  %4622 = vmatpush1.msra.mxu0 %v1688
  %4623 = vmatprep.subr.mxu0 %v1691
  %4624 = vmatpush1.msra.mxu0 %v1690
  %4625 = vmatprep.subr.mxu0 %v1693
  %4626 = vmatpush1.msra.mxu0 %v1692
  %4627 = vmatprep.subr.mxu0 %v1695
  %4628 = vmatpush1.msra.mxu0 %v1694
  %4629 = vmatprep.subr.mxu0 %v1697
  %4630 = vmatpush1.msra.mxu0 %v1696
  %4631 = vmatprep.subr.mxu0 0.0
  %4632 = vmatpush1.msra.mxu0 0.0
  %4633 = vmatprep.subr.mxu0 0.0
  %4634 = vmatpush1.msra.mxu0 0.0
  %4635 = vmatprep.subr.mxu0 0.0
  %4636 = vmatpush1.msra.mxu0 0.0
  %4637 = vmatprep.subr.mxu0 0.0
  %4638 = vmatpush1.msra.mxu0 0.0
  %4639 = vmatprep.subr.mxu0 0.0
  %4640 = vmatpush1.msra.mxu0 0.0
  %4641 = vmatprep.subr.mxu0 0.0
  %4642 = vmatpush1.msra.mxu0 0.0
  %4643 = vmatprep.subr.mxu0 0.0
  %4644 = vmatpush1.msra.mxu0 0.0
  %4645 = vmatprep.subr.mxu0 0.0
  %4646 = vmatpush1.msra.mxu0 0.0
  %4647 = vmatprep.subr.mxu0 0.0
  %4648 = vmatpush1.msra.mxu0 0.0
  %4649 = vmatprep.subr.mxu0 0.0
  %4650 = vmatpush1.msra.mxu0 0.0
  %4651 = vmatprep.subr.mxu0 0.0
  %4652 = vmatpush1.msra.mxu0 0.0
  %4653 = vmatprep.subr.mxu0 0.0
  %4654 = vmatpush1.msra.mxu0 0.0
  %4655 = vmatprep.subr.mxu0 0.0
  %4656 = vmatpush1.msra.mxu0 0.0
  %4657 = vmatprep.subr.mxu0 0.0
  %4658 = vmatpush1.msra.mxu0 0.0
  %4659 = vmatprep.subr.mxu0 0.0
  %4660 = vmatpush1.msra.mxu0 0.0
  %4661 = vmatprep.subr.mxu0 0.0
  %4662 = vmatpush1.msra.mxu0 0.0
  %4663 = vmatprep.mubr.f32.mxu0 0.0
  %4664 = vmatmul.mubr.f32.gmra.mrb[0].mxu0 %v478
  %v4665 = vpop.f32.mrb[0].mxu0
  %v4666 = vadd.f32 0.0, %v4665
  %v4667 = vpop.f32.mrb[0].mxu0
  %v4668 = vadd.f32 0.0, %v4667
  %4669 = vdwg.mxu0
  %4670 = vmatprep.subr.mxu0 %v1699
  %4671 = vmatpush1.msra.mxu0 %v1698
  %4672 = vmatprep.subr.mxu0 %v1701
  %4673 = vmatpush1.msra.mxu0 %v1700
  %4674 = vmatprep.subr.mxu0 %v1703
  %4675 = vmatpush1.msra.mxu0 %v1702
  %4676 = vmatprep.subr.mxu0 %v1705
  %4677 = vmatpush1.msra.mxu0 %v1704
  %4678 = vmatprep.subr.mxu0 %v1707
  %4679 = vmatpush1.msra.mxu0 %v1706
  %4680 = vmatprep.subr.mxu0 %v1709
  %4681 = vmatpush1.msra.mxu0 %v1708
  %4682 = vmatprep.subr.mxu0 %v1711
  %4683 = vmatpush1.msra.mxu0 %v1710
  %4684 = vmatprep.subr.mxu0 %v1713
  %4685 = vmatpush1.msra.mxu0 %v1712
  %4686 = vmatprep.subr.mxu0 %v1715
  %4687 = vmatpush1.msra.mxu0 %v1714
  %4688 = vmatprep.subr.mxu0 %v1717
  %4689 = vmatpush1.msra.mxu0 %v1716
  %4690 = vmatprep.subr.mxu0 %v1719
  %4691 = vmatpush1.msra.mxu0 %v1718
  %4692 = vmatprep.subr.mxu0 %v1721
  %4693 = vmatpush1.msra.mxu0 %v1720
  %4694 = vmatprep.subr.mxu0 %v1723
  %4695 = vmatpush1.msra.mxu0 %v1722
  %4696 = vmatprep.subr.mxu0 %v1725
  %4697 = vmatpush1.msra.mxu0 %v1724
  %4698 = vmatprep.subr.mxu0 %v1727
  %4699 = vmatpush1.msra.mxu0 %v1726
  %4700 = vmatprep.subr.mxu0 %v1729
  %4701 = vmatpush1.msra.mxu0 %v1728
  %4702 = vmatprep.subr.mxu0 0.0
  %4703 = vmatpush1.msra.mxu0 0.0
  %4704 = vmatprep.subr.mxu0 0.0
  %4705 = vmatpush1.msra.mxu0 0.0
  %4706 = vmatprep.subr.mxu0 0.0
  %4707 = vmatpush1.msra.mxu0 0.0
  %4708 = vmatprep.subr.mxu0 0.0
  %4709 = vmatpush1.msra.mxu0 0.0
  %4710 = vmatprep.subr.mxu0 0.0
  %4711 = vmatpush1.msra.mxu0 0.0
  %4712 = vmatprep.subr.mxu0 0.0
  %4713 = vmatpush1.msra.mxu0 0.0
  %4714 = vmatprep.subr.mxu0 0.0
  %4715 = vmatpush1.msra.mxu0 0.0
  %4716 = vmatprep.subr.mxu0 0.0
  %4717 = vmatpush1.msra.mxu0 0.0
  %4718 = vmatprep.subr.mxu0 0.0
  %4719 = vmatpush1.msra.mxu0 0.0
  %4720 = vmatprep.subr.mxu0 0.0
  %4721 = vmatpush1.msra.mxu0 0.0
  %4722 = vmatprep.subr.mxu0 0.0
  %4723 = vmatpush1.msra.mxu0 0.0
  %4724 = vmatprep.subr.mxu0 0.0
  %4725 = vmatpush1.msra.mxu0 0.0
  %4726 = vmatprep.subr.mxu0 0.0
  %4727 = vmatpush1.msra.mxu0 0.0
  %4728 = vmatprep.subr.mxu0 0.0
  %4729 = vmatpush1.msra.mxu0 0.0
  %4730 = vmatprep.subr.mxu0 0.0
  %4731 = vmatpush1.msra.mxu0 0.0
  %4732 = vmatprep.subr.mxu0 0.0
  %4733 = vmatpush1.msra.mxu0 0.0
  %4734 = vmatprep.mubr.f32.mxu0 0.0
  %4735 = vmatmul.mubr.f32.gmra.mrb[0].mxu0 %v483
  %v4736 = vpop.f32.mrb[0].mxu0
  %v4737 = vadd.f32 0.0, %v4736
  %v4738 = vpop.f32.mrb[0].mxu0
  %v4739 = vadd.f32 0.0, %v4738
  %4740 = vdwg.mxu0
  %4741 = vmatprep.subr.mxu0 %v1731
  %4742 = vmatpush1.msra.mxu0 %v1730
  %4743 = vmatprep.subr.mxu0 %v1733
  %4744 = vmatpush1.msra.mxu0 %v1732
  %4745 = vmatprep.subr.mxu0 %v1735
  %4746 = vmatpush1.msra.mxu0 %v1734
  %4747 = vmatprep.subr.mxu0 %v1737
  %4748 = vmatpush1.msra.mxu0 %v1736
  %4749 = vmatprep.subr.mxu0 %v1739
  %4750 = vmatpush1.msra.mxu0 %v1738
  %4751 = vmatprep.subr.mxu0 %v1741
  %4752 = vmatpush1.msra.mxu0 %v1740
  %4753 = vmatprep.subr.mxu0 %v1743
  %4754 = vmatpush1.msra.mxu0 %v1742
  %4755 = vmatprep.subr.mxu0 %v1745
  %4756 = vmatpush1.msra.mxu0 %v1744
  %4757 = vmatprep.subr.mxu0 %v1747
  %4758 = vmatpush1.msra.mxu0 %v1746
  %4759 = vmatprep.subr.mxu0 %v1749
  %4760 = vmatpush1.msra.mxu0 %v1748
  %4761 = vmatprep.subr.mxu0 %v1751
  %4762 = vmatpush1.msra.mxu0 %v1750
  %4763 = vmatprep.subr.mxu0 %v1753
  %4764 = vmatpush1.msra.mxu0 %v1752
  %4765 = vmatprep.subr.mxu0 %v1755
  %4766 = vmatpush1.msra.mxu0 %v1754
  %4767 = vmatprep.subr.mxu0 %v1757
  %4768 = vmatpush1.msra.mxu0 %v1756
  %4769 = vmatprep.subr.mxu0 %v1759
  %4770 = vmatpush1.msra.mxu0 %v1758
  %4771 = vmatprep.subr.mxu0 %v1761
  %4772 = vmatpush1.msra.mxu0 %v1760
  %4773 = vmatprep.subr.mxu0 0.0
  %4774 = vmatpush1.msra.mxu0 0.0
  %4775 = vmatprep.subr.mxu0 0.0
  %4776 = vmatpush1.msra.mxu0 0.0
  %4777 = vmatprep.subr.mxu0 0.0
  %4778 = vmatpush1.msra.mxu0 0.0
  %4779 = vmatprep.subr.mxu0 0.0
  %4780 = vmatpush1.msra.mxu0 0.0
  %4781 = vmatprep.subr.mxu0 0.0
  %4782 = vmatpush1.msra.mxu0 0.0
  %4783 = vmatprep.subr.mxu0 0.0
  %4784 = vmatpush1.msra.mxu0 0.0
  %4785 = vmatprep.subr.mxu0 0.0
  %4786 = vmatpush1.msra.mxu0 0.0
  %4787 = vmatprep.subr.mxu0 0.0
  %4788 = vmatpush1.msra.mxu0 0.0
  %4789 = vmatprep.subr.mxu0 0.0
  %4790 = vmatpush1.msra.mxu0 0.0
  %4791 = vmatprep.subr.mxu0 0.0
  %4792 = vmatpush1.msra.mxu0 0.0
  %4793 = vmatprep.subr.mxu0 0.0
  %4794 = vmatpush1.msra.mxu0 0.0
  %4795 = vmatprep.subr.mxu0 0.0
  %4796 = vmatpush1.msra.mxu0 0.0
  %4797 = vmatprep.subr.mxu0 0.0
  %4798 = vmatpush1.msra.mxu0 0.0
  %4799 = vmatprep.subr.mxu0 0.0
  %4800 = vmatpush1.msra.mxu0 0.0
  %4801 = vmatprep.subr.mxu0 0.0
  %4802 = vmatpush1.msra.mxu0 0.0
  %4803 = vmatprep.subr.mxu0 0.0
  %4804 = vmatpush1.msra.mxu0 0.0
  %4805 = vmatprep.mubr.f32.mxu0 0.0
  %4806 = vmatmul.mubr.f32.gmra.mrb[0].mxu0 %v488
  %v4807 = vpop.f32.mrb[0].mxu0
  %v4808 = vadd.f32 0.0, %v4807
  %v4809 = vpop.f32.mrb[0].mxu0
  %v4810 = vadd.f32 0.0, %v4809
  %4811 = vdwg.mxu0
  %4812 = vmatprep.subr.mxu0 %v1763
  %4813 = vmatpush1.msra.mxu0 %v1762
  %4814 = vmatprep.subr.mxu0 %v1765
  %4815 = vmatpush1.msra.mxu0 %v1764
  %4816 = vmatprep.subr.mxu0 %v1767
  %4817 = vmatpush1.msra.mxu0 %v1766
  %4818 = vmatprep.subr.mxu0 %v1769
  %4819 = vmatpush1.msra.mxu0 %v1768
  %4820 = vmatprep.subr.mxu0 %v1771
  %4821 = vmatpush1.msra.mxu0 %v1770
  %4822 = vmatprep.subr.mxu0 %v1773
  %4823 = vmatpush1.msra.mxu0 %v1772
  %4824 = vmatprep.subr.mxu0 %v1775
  %4825 = vmatpush1.msra.mxu0 %v1774
  %4826 = vmatprep.subr.mxu0 %v1777
  %4827 = vmatpush1.msra.mxu0 %v1776
  %4828 = vmatprep.subr.mxu0 %v1779
  %4829 = vmatpush1.msra.mxu0 %v1778
  %4830 = vmatprep.subr.mxu0 %v1781
  %4831 = vmatpush1.msra.mxu0 %v1780
  %4832 = vmatprep.subr.mxu0 %v1783
  %4833 = vmatpush1.msra.mxu0 %v1782
  %4834 = vmatprep.subr.mxu0 %v1785
  %4835 = vmatpush1.msra.mxu0 %v1784
  %4836 = vmatprep.subr.mxu0 %v1787
  %4837 = vmatpush1.msra.mxu0 %v1786
  %4838 = vmatprep.subr.mxu0 %v1789
  %4839 = vmatpush1.msra.mxu0 %v1788
  %4840 = vmatprep.subr.mxu0 %v1791
  %4841 = vmatpush1.msra.mxu0 %v1790
  %4842 = vmatprep.subr.mxu0 %v1793
  %4843 = vmatpush1.msra.mxu0 %v1792
  %4844 = vmatprep.subr.mxu0 0.0
  %4845 = vmatpush1.msra.mxu0 0.0
  %4846 = vmatprep.subr.mxu0 0.0
  %4847 = vmatpush1.msra.mxu0 0.0
  %4848 = vmatprep.subr.mxu0 0.0
  %4849 = vmatpush1.msra.mxu0 0.0
  %4850 = vmatprep.subr.mxu0 0.0
  %4851 = vmatpush1.msra.mxu0 0.0
  %4852 = vmatprep.subr.mxu0 0.0
  %4853 = vmatpush1.msra.mxu0 0.0
  %4854 = vmatprep.subr.mxu0 0.0
  %4855 = vmatpush1.msra.mxu0 0.0
  %4856 = vmatprep.subr.mxu0 0.0
  %4857 = vmatpush1.msra.mxu0 0.0
  %4858 = vmatprep.subr.mxu0 0.0
  %4859 = vmatpush1.msra.mxu0 0.0
  %4860 = vmatprep.subr.mxu0 0.0
  %4861 = vmatpush1.msra.mxu0 0.0
  %4862 = vmatprep.subr.mxu0 0.0
  %4863 = vmatpush1.msra.mxu0 0.0
  %4864 = vmatprep.subr.mxu0 0.0
  %4865 = vmatpush1.msra.mxu0 0.0
  %4866 = vmatprep.subr.mxu0 0.0
  %4867 = vmatpush1.msra.mxu0 0.0
  %4868 = vmatprep.subr.mxu0 0.0
  %4869 = vmatpush1.msra.mxu0 0.0
  %4870 = vmatprep.subr.mxu0 0.0
  %4871 = vmatpush1.msra.mxu0 0.0
  %4872 = vmatprep.subr.mxu0 0.0
  %4873 = vmatpush1.msra.mxu0 0.0
  %4874 = vmatprep.subr.mxu0 0.0
  %4875 = vmatpush1.msra.mxu0 0.0
  %4876 = vmatprep.mubr.f32.mxu0 0.0
  %4877 = vmatmul.mubr.f32.gmra.mrb[0].mxu0 %v493
  %v4878 = vpop.f32.mrb[0].mxu0
  %v4879 = vadd.f32 0.0, %v4878
  %v4880 = vpop.f32.mrb[0].mxu0
  %v4881 = vadd.f32 0.0, %v4880
  %4882 = vdwg.mxu0
  %4883 = vmatprep.subr.mxu0 %v1795
  %4884 = vmatpush1.msra.mxu0 %v1794
  %4885 = vmatprep.subr.mxu0 %v1797
  %4886 = vmatpush1.msra.mxu0 %v1796
  %4887 = vmatprep.subr.mxu0 %v1799
  %4888 = vmatpush1.msra.mxu0 %v1798
  %4889 = vmatprep.subr.mxu0 %v1801
  %4890 = vmatpush1.msra.mxu0 %v1800
  %4891 = vmatprep.subr.mxu0 %v1803
  %4892 = vmatpush1.msra.mxu0 %v1802
  %4893 = vmatprep.subr.mxu0 %v1805
  %4894 = vmatpush1.msra.mxu0 %v1804
  %4895 = vmatprep.subr.mxu0 %v1807
  %4896 = vmatpush1.msra.mxu0 %v1806
  %4897 = vmatprep.subr.mxu0 %v1809
  %4898 = vmatpush1.msra.mxu0 %v1808
  %4899 = vmatprep.subr.mxu0 %v1811
  %4900 = vmatpush1.msra.mxu0 %v1810
  %4901 = vmatprep.subr.mxu0 %v1813
  %4902 = vmatpush1.msra.mxu0 %v1812
  %4903 = vmatprep.subr.mxu0 %v1815
  %4904 = vmatpush1.msra.mxu0 %v1814
  %4905 = vmatprep.subr.mxu0 %v1817
  %4906 = vmatpush1.msra.mxu0 %v1816
  %4907 = vmatprep.subr.mxu0 %v1819
  %4908 = vmatpush1.msra.mxu0 %v1818
  %4909 = vmatprep.subr.mxu0 %v1821
  %4910 = vmatpush1.msra.mxu0 %v1820
  %4911 = vmatprep.subr.mxu0 %v1823
  %4912 = vmatpush1.msra.mxu0 %v1822
  %4913 = vmatprep.subr.mxu0 %v1825
  %4914 = vmatpush1.msra.mxu0 %v1824
  %4915 = vmatprep.subr.mxu0 0.0
  %4916 = vmatpush1.msra.mxu0 0.0
  %4917 = vmatprep.subr.mxu0 0.0
  %4918 = vmatpush1.msra.mxu0 0.0
  %4919 = vmatprep.subr.mxu0 0.0
  %4920 = vmatpush1.msra.mxu0 0.0
  %4921 = vmatprep.subr.mxu0 0.0
  %4922 = vmatpush1.msra.mxu0 0.0
  %4923 = vmatprep.subr.mxu0 0.0
  %4924 = vmatpush1.msra.mxu0 0.0
  %4925 = vmatprep.subr.mxu0 0.0
  %4926 = vmatpush1.msra.mxu0 0.0
  %4927 = vmatprep.subr.mxu0 0.0
  %4928 = vmatpush1.msra.mxu0 0.0
  %4929 = vmatprep.subr.mxu0 0.0
  %4930 = vmatpush1.msra.mxu0 0.0
  %4931 = vmatprep.subr.mxu0 0.0
  %4932 = vmatpush1.msra.mxu0 0.0
  %4933 = vmatprep.subr.mxu0 0.0
  %4934 = vmatpush1.msra.mxu0 0.0
  %4935 = vmatprep.subr.mxu0 0.0
  %4936 = vmatpush1.msra.mxu0 0.0
  %4937 = vmatprep.subr.mxu0 0.0
  %4938 = vmatpush1.msra.mxu0 0.0
  %4939 = vmatprep.subr.mxu0 0.0
  %4940 = vmatpush1.msra.mxu0 0.0
  %4941 = vmatprep.subr.mxu0 0.0
  %4942 = vmatpush1.msra.mxu0 0.0
  %4943 = vmatprep.subr.mxu0 0.0
  %4944 = vmatpush1.msra.mxu0 0.0
  %4945 = vmatprep.subr.mxu0 0.0
  %4946 = vmatpush1.msra.mxu0 0.0
  %4947 = vmatprep.mubr.f32.mxu0 0.0
  %4948 = vmatmul.mubr.f32.gmra.mrb[0].mxu0 %v498
  %v4949 = vpop.f32.mrb[0].mxu0
  %v4950 = vadd.f32 0.0, %v4949
  %v4951 = vpop.f32.mrb[0].mxu0
  %v4952 = vadd.f32 0.0, %v4951
  %4953 = vdwg.mxu0
  %4954 = vmatprep.subr.mxu0 %v1827
  %4955 = vmatpush1.msra.mxu0 %v1826
  %4956 = vmatprep.subr.mxu0 %v1829
  %4957 = vmatpush1.msra.mxu0 %v1828
  %4958 = vmatprep.subr.mxu0 %v1831
  %4959 = vmatpush1.msra.mxu0 %v1830
  %4960 = vmatprep.subr.mxu0 %v1833
  %4961 = vmatpush1.msra.mxu0 %v1832
  %4962 = vmatprep.subr.mxu0 %v1835
  %4963 = vmatpush1.msra.mxu0 %v1834
  %4964 = vmatprep.subr.mxu0 %v1837
  %4965 = vmatpush1.msra.mxu0 %v1836
  %4966 = vmatprep.subr.mxu0 %v1839
  %4967 = vmatpush1.msra.mxu0 %v1838
  %4968 = vmatprep.subr.mxu0 %v1841
  %4969 = vmatpush1.msra.mxu0 %v1840
  %4970 = vmatprep.subr.mxu0 %v1843
  %4971 = vmatpush1.msra.mxu0 %v1842
  %4972 = vmatprep.subr.mxu0 %v1845
  %4973 = vmatpush1.msra.mxu0 %v1844
  %4974 = vmatprep.subr.mxu0 %v1847
  %4975 = vmatpush1.msra.mxu0 %v1846
  %4976 = vmatprep.subr.mxu0 %v1849
  %4977 = vmatpush1.msra.mxu0 %v1848
  %4978 = vmatprep.subr.mxu0 %v1851
  %4979 = vmatpush1.msra.mxu0 %v1850
  %4980 = vmatprep.subr.mxu0 %v1853
  %4981 = vmatpush1.msra.mxu0 %v1852
  %4982 = vmatprep.subr.mxu0 %v1855
  %4983 = vmatpush1.msra.mxu0 %v1854
  %4984 = vmatprep.subr.mxu0 %v1857
  %4985 = vmatpush1.msra.mxu0 %v1856
  %4986 = vmatprep.subr.mxu0 0.0
  %4987 = vmatpush1.msra.mxu0 0.0
  %4988 = vmatprep.subr.mxu0 0.0
  %4989 = vmatpush1.msra.mxu0 0.0
  %4990 = vmatprep.subr.mxu0 0.0
  %4991 = vmatpush1.msra.mxu0 0.0
  %4992 = vmatprep.subr.mxu0 0.0
  %4993 = vmatpush1.msra.mxu0 0.0
  %4994 = vmatprep.subr.mxu0 0.0
  %4995 = vmatpush1.msra.mxu0 0.0
  %4996 = vmatprep.subr.mxu0 0.0
  %4997 = vmatpush1.msra.mxu0 0.0
  %4998 = vmatprep.subr.mxu0 0.0
  %4999 = vmatpush1.msra.mxu0 0.0
  %5000 = vmatprep.subr.mxu0 0.0
  %5001 = vmatpush1.msra.mxu0 0.0
  %5002 = vmatprep.subr.mxu0 0.0
  %5003 = vmatpush1.msra.mxu0 0.0
  %5004 = vmatprep.subr.mxu0 0.0
  %5005 = vmatpush1.msra.mxu0 0.0
  %5006 = vmatprep.subr.mxu0 0.0
  %5007 = vmatpush1.msra.mxu0 0.0
  %5008 = vmatprep.subr.mxu0 0.0
  %5009 = vmatpush1.msra.mxu0 0.0
  %5010 = vmatprep.subr.mxu0 0.0
  %5011 = vmatpush1.msra.mxu0 0.0
  %5012 = vmatprep.subr.mxu0 0.0
  %5013 = vmatpush1.msra.mxu0 0.0
  %5014 = vmatprep.subr.mxu0 0.0
  %5015 = vmatpush1.msra.mxu0 0.0
  %5016 = vmatprep.subr.mxu0 0.0
  %5017 = vmatpush1.msra.mxu0 0.0
  %5018 = vmatprep.mubr.f32.mxu0 0.0
  %5019 = vmatmul.mubr.f32.gmra.mrb[0].mxu0 %v503
  %v5020 = vpop.f32.mrb[0].mxu0
  %v5021 = vadd.f32 0.0, %v5020
  %v5022 = vpop.f32.mrb[0].mxu0
  %v5023 = vadd.f32 0.0, %v5022
  %5024 = vdwg.mxu0
  %5025 = vmatprep.subr.mxu0 %v1859
  %5026 = vmatpush1.msra.mxu0 %v1858
  %5027 = vmatprep.subr.mxu0 %v1861
  %5028 = vmatpush1.msra.mxu0 %v1860
  %5029 = vmatprep.subr.mxu0 %v1863
  %5030 = vmatpush1.msra.mxu0 %v1862
  %5031 = vmatprep.subr.mxu0 %v1865
  %5032 = vmatpush1.msra.mxu0 %v1864
  %5033 = vmatprep.subr.mxu0 %v1867
  %5034 = vmatpush1.msra.mxu0 %v1866
  %5035 = vmatprep.subr.mxu0 %v1869
  %5036 = vmatpush1.msra.mxu0 %v1868
  %5037 = vmatprep.subr.mxu0 %v1871
  %5038 = vmatpush1.msra.mxu0 %v1870
  %5039 = vmatprep.subr.mxu0 %v1873
  %5040 = vmatpush1.msra.mxu0 %v1872
  %5041 = vmatprep.subr.mxu0 %v1875
  %5042 = vmatpush1.msra.mxu0 %v1874
  %5043 = vmatprep.subr.mxu0 %v1877
  %5044 = vmatpush1.msra.mxu0 %v1876
  %5045 = vmatprep.subr.mxu0 %v1879
  %5046 = vmatpush1.msra.mxu0 %v1878
  %5047 = vmatprep.subr.mxu0 %v1881
  %5048 = vmatpush1.msra.mxu0 %v1880
  %5049 = vmatprep.subr.mxu0 %v1883
  %5050 = vmatpush1.msra.mxu0 %v1882
  %5051 = vmatprep.subr.mxu0 %v1885
  %5052 = vmatpush1.msra.mxu0 %v1884
  %5053 = vmatprep.subr.mxu0 %v1887
  %5054 = vmatpush1.msra.mxu0 %v1886
  %5055 = vmatprep.subr.mxu0 %v1889
  %5056 = vmatpush1.msra.mxu0 %v1888
  %5057 = vmatprep.subr.mxu0 0.0
  %5058 = vmatpush1.msra.mxu0 0.0
  %5059 = vmatprep.subr.mxu0 0.0
  %5060 = vmatpush1.msra.mxu0 0.0
  %5061 = vmatprep.subr.mxu0 0.0
  %5062 = vmatpush1.msra.mxu0 0.0
  %5063 = vmatprep.subr.mxu0 0.0
  %5064 = vmatpush1.msra.mxu0 0.0
  %5065 = vmatprep.subr.mxu0 0.0
  %5066 = vmatpush1.msra.mxu0 0.0
  %5067 = vmatprep.subr.mxu0 0.0
  %5068 = vmatpush1.msra.mxu0 0.0
  %5069 = vmatprep.subr.mxu0 0.0
  %5070 = vmatpush1.msra.mxu0 0.0
  %5071 = vmatprep.subr.mxu0 0.0
  %5072 = vmatpush1.msra.mxu0 0.0
  %5073 = vmatprep.subr.mxu0 0.0
  %5074 = vmatpush1.msra.mxu0 0.0
  %5075 = vmatprep.subr.mxu0 0.0
  %5076 = vmatpush1.msra.mxu0 0.0
  %5077 = vmatprep.subr.mxu0 0.0
  %5078 = vmatpush1.msra.mxu0 0.0
  %5079 = vmatprep.subr.mxu0 0.0
  %5080 = vmatpush1.msra.mxu0 0.0
  %5081 = vmatprep.subr.mxu0 0.0
  %5082 = vmatpush1.msra.mxu0 0.0
  %5083 = vmatprep.subr.mxu0 0.0
  %5084 = vmatpush1.msra.mxu0 0.0
  %5085 = vmatprep.subr.mxu0 0.0
  %5086 = vmatpush1.msra.mxu0 0.0
  %5087 = vmatprep.subr.mxu0 0.0
  %5088 = vmatpush1.msra.mxu0 0.0
  %5089 = vmatprep.mubr.f32.mxu0 0.0
  %5090 = vmatmul.mubr.f32.gmra.mrb[0].mxu0 %v508
  %v5091 = vpop.f32.mrb[0].mxu0
  %v5092 = vadd.f32 0.0, %v5091
  %v5093 = vpop.f32.mrb[0].mxu0
  %v5094 = vadd.f32 0.0, %v5093
  %5095 = vdwg.mxu0
  %5096 = vmatprep.subr.mxu0 %v1891
  %5097 = vmatpush1.msra.mxu0 %v1890
  %5098 = vmatprep.subr.mxu0 %v1893
  %5099 = vmatpush1.msra.mxu0 %v1892
  %5100 = vmatprep.subr.mxu0 %v1895
  %5101 = vmatpush1.msra.mxu0 %v1894
  %5102 = vmatprep.subr.mxu0 %v1897
  %5103 = vmatpush1.msra.mxu0 %v1896
  %5104 = vmatprep.subr.mxu0 %v1899
  %5105 = vmatpush1.msra.mxu0 %v1898
  %5106 = vmatprep.subr.mxu0 %v1901
  %5107 = vmatpush1.msra.mxu0 %v1900
  %5108 = vmatprep.subr.mxu0 %v1903
  %5109 = vmatpush1.msra.mxu0 %v1902
  %5110 = vmatprep.subr.mxu0 %v1905
  %5111 = vmatpush1.msra.mxu0 %v1904
  %5112 = vmatprep.subr.mxu0 %v1907
  %5113 = vmatpush1.msra.mxu0 %v1906
  %5114 = vmatprep.subr.mxu0 %v1909
  %5115 = vmatpush1.msra.mxu0 %v1908
  %5116 = vmatprep.subr.mxu0 %v1911
  %5117 = vmatpush1.msra.mxu0 %v1910
  %5118 = vmatprep.subr.mxu0 %v1913
  %5119 = vmatpush1.msra.mxu0 %v1912
  %5120 = vmatprep.subr.mxu0 %v1915
  %5121 = vmatpush1.msra.mxu0 %v1914
  %5122 = vmatprep.subr.mxu0 %v1917
  %5123 = vmatpush1.msra.mxu0 %v1916
  %5124 = vmatprep.subr.mxu0 %v1919
  %5125 = vmatpush1.msra.mxu0 %v1918
  %5126 = vmatprep.subr.mxu0 %v1921
  %5127 = vmatpush1.msra.mxu0 %v1920
  %5128 = vmatprep.subr.mxu0 0.0
  %5129 = vmatpush1.msra.mxu0 0.0
  %5130 = vmatprep.subr.mxu0 0.0
  %5131 = vmatpush1.msra.mxu0 0.0
  %5132 = vmatprep.subr.mxu0 0.0
  %5133 = vmatpush1.msra.mxu0 0.0
  %5134 = vmatprep.subr.mxu0 0.0
  %5135 = vmatpush1.msra.mxu0 0.0
  %5136 = vmatprep.subr.mxu0 0.0
  %5137 = vmatpush1.msra.mxu0 0.0
  %5138 = vmatprep.subr.mxu0 0.0
  %5139 = vmatpush1.msra.mxu0 0.0
  %5140 = vmatprep.subr.mxu0 0.0
  %5141 = vmatpush1.msra.mxu0 0.0
  %5142 = vmatprep.subr.mxu0 0.0
  %5143 = vmatpush1.msra.mxu0 0.0
  %5144 = vmatprep.subr.mxu0 0.0
  %5145 = vmatpush1.msra.mxu0 0.0
  %5146 = vmatprep.subr.mxu0 0.0
  %5147 = vmatpush1.msra.mxu0 0.0
  %5148 = vmatprep.subr.mxu0 0.0
  %5149 = vmatpush1.msra.mxu0 0.0
  %5150 = vmatprep.subr.mxu0 0.0
  %5151 = vmatpush1.msra.mxu0 0.0
  %5152 = vmatprep.subr.mxu0 0.0
  %5153 = vmatpush1.msra.mxu0 0.0
  %5154 = vmatprep.subr.mxu0 0.0
  %5155 = vmatpush1.msra.mxu0 0.0
  %5156 = vmatprep.subr.mxu0 0.0
  %5157 = vmatpush1.msra.mxu0 0.0
  %5158 = vmatprep.subr.mxu0 0.0
  %5159 = vmatpush1.msra.mxu0 0.0
  %5160 = vmatprep.mubr.f32.mxu0 0.0
  %5161 = vmatmul.mubr.f32.gmra.mrb[0].mxu0 %v513
  %v5162 = vpop.f32.mrb[0].mxu0
  %v5163 = vadd.f32 0.0, %v5162
  %v5164 = vpop.f32.mrb[0].mxu0
  %v5165 = vadd.f32 0.0, %v5164
  %5166 = vdwg.mxu0
  %5167 = vmatprep.subr.mxu0 %v1923
  %5168 = vmatpush1.msra.mxu0 %v1922
  %5169 = vmatprep.subr.mxu0 %v1925
  %5170 = vmatpush1.msra.mxu0 %v1924
  %5171 = vmatprep.subr.mxu0 %v1927
  %5172 = vmatpush1.msra.mxu0 %v1926
  %5173 = vmatprep.subr.mxu0 %v1929
  %5174 = vmatpush1.msra.mxu0 %v1928
  %5175 = vmatprep.subr.mxu0 %v1931
  %5176 = vmatpush1.msra.mxu0 %v1930
  %5177 = vmatprep.subr.mxu0 %v1933
  %5178 = vmatpush1.msra.mxu0 %v1932
  %5179 = vmatprep.subr.mxu0 %v1935
  %5180 = vmatpush1.msra.mxu0 %v1934
  %5181 = vmatprep.subr.mxu0 %v1937
  %5182 = vmatpush1.msra.mxu0 %v1936
  %5183 = vmatprep.subr.mxu0 %v1939
  %5184 = vmatpush1.msra.mxu0 %v1938
  %5185 = vmatprep.subr.mxu0 %v1941
  %5186 = vmatpush1.msra.mxu0 %v1940
  %5187 = vmatprep.subr.mxu0 %v1943
  %5188 = vmatpush1.msra.mxu0 %v1942
  %5189 = vmatprep.subr.mxu0 %v1945
  %5190 = vmatpush1.msra.mxu0 %v1944
  %5191 = vmatprep.subr.mxu0 %v1947
  %5192 = vmatpush1.msra.mxu0 %v1946
  %5193 = vmatprep.subr.mxu0 %v1949
  %5194 = vmatpush1.msra.mxu0 %v1948
  %5195 = vmatprep.subr.mxu0 %v1951
  %5196 = vmatpush1.msra.mxu0 %v1950
  %5197 = vmatprep.subr.mxu0 %v1953
  %5198 = vmatpush1.msra.mxu0 %v1952
  %5199 = vmatprep.subr.mxu0 0.0
  %5200 = vmatpush1.msra.mxu0 0.0
  %5201 = vmatprep.subr.mxu0 0.0
  %5202 = vmatpush1.msra.mxu0 0.0
  %5203 = vmatprep.subr.mxu0 0.0
  %5204 = vmatpush1.msra.mxu0 0.0
  %5205 = vmatprep.subr.mxu0 0.0
  %5206 = vmatpush1.msra.mxu0 0.0
  %5207 = vmatprep.subr.mxu0 0.0
  %5208 = vmatpush1.msra.mxu0 0.0
  %5209 = vmatprep.subr.mxu0 0.0
  %5210 = vmatpush1.msra.mxu0 0.0
  %5211 = vmatprep.subr.mxu0 0.0
  %5212 = vmatpush1.msra.mxu0 0.0
  %5213 = vmatprep.subr.mxu0 0.0
  %5214 = vmatpush1.msra.mxu0 0.0
  %5215 = vmatprep.subr.mxu0 0.0
  %5216 = vmatpush1.msra.mxu0 0.0
  %5217 = vmatprep.subr.mxu0 0.0
  %5218 = vmatpush1.msra.mxu0 0.0
  %5219 = vmatprep.subr.mxu0 0.0
  %5220 = vmatpush1.msra.mxu0 0.0
  %5221 = vmatprep.subr.mxu0 0.0
  %5222 = vmatpush1.msra.mxu0 0.0
  %5223 = vmatprep.subr.mxu0 0.0
  %5224 = vmatpush1.msra.mxu0 0.0
  %5225 = vmatprep.subr.mxu0 0.0
  %5226 = vmatpush1.msra.mxu0 0.0
  %5227 = vmatprep.subr.mxu0 0.0
  %5228 = vmatpush1.msra.mxu0 0.0
  %5229 = vmatprep.subr.mxu0 0.0
  %5230 = vmatpush1.msra.mxu0 0.0
  %5231 = vmatprep.mubr.f32.mxu0 0.0
  %5232 = vmatmul.mubr.f32.gmra.mrb[0].mxu0 %v518
  %v5233 = vpop.f32.mrb[0].mxu0
  %v5234 = vadd.f32 0.0, %v5233
  %v5235 = vpop.f32.mrb[0].mxu0
  %v5236 = vadd.f32 0.0, %v5235
  %5237 = vdwg.mxu0
  %5238 = vmatprep.subr.mxu0 %v1955
  %5239 = vmatpush1.msra.mxu0 %v1954
  %5240 = vmatprep.subr.mxu0 %v1957
  %5241 = vmatpush1.msra.mxu0 %v1956
  %5242 = vmatprep.subr.mxu0 %v1959
  %5243 = vmatpush1.msra.mxu0 %v1958
  %5244 = vmatprep.subr.mxu0 %v1961
  %5245 = vmatpush1.msra.mxu0 %v1960
  %5246 = vmatprep.subr.mxu0 %v1963
  %5247 = vmatpush1.msra.mxu0 %v1962
  %5248 = vmatprep.subr.mxu0 %v1965
  %5249 = vmatpush1.msra.mxu0 %v1964
  %5250 = vmatprep.subr.mxu0 %v1967
  %5251 = vmatpush1.msra.mxu0 %v1966
  %5252 = vmatprep.subr.mxu0 %v1969
  %5253 = vmatpush1.msra.mxu0 %v1968
  %5254 = vmatprep.subr.mxu0 %v1971
  %5255 = vmatpush1.msra.mxu0 %v1970
  %5256 = vmatprep.subr.mxu0 %v1973
  %5257 = vmatpush1.msra.mxu0 %v1972
  %5258 = vmatprep.subr.mxu0 %v1975
  %5259 = vmatpush1.msra.mxu0 %v1974
  %5260 = vmatprep.subr.mxu0 %v1977
  %5261 = vmatpush1.msra.mxu0 %v1976
  %5262 = vmatprep.subr.mxu0 %v1979
  %5263 = vmatpush1.msra.mxu0 %v1978
  %5264 = vmatprep.subr.mxu0 %v1981
  %5265 = vmatpush1.msra.mxu0 %v1980
  %5266 = vmatprep.subr.mxu0 %v1983
  %5267 = vmatpush1.msra.mxu0 %v1982
  %5268 = vmatprep.subr.mxu0 %v1985
  %5269 = vmatpush1.msra.mxu0 %v1984
  %5270 = vmatprep.subr.mxu0 0.0
  %5271 = vmatpush1.msra.mxu0 0.0
  %5272 = vmatprep.subr.mxu0 0.0
  %5273 = vmatpush1.msra.mxu0 0.0
  %5274 = vmatprep.subr.mxu0 0.0
  %5275 = vmatpush1.msra.mxu0 0.0
  %5276 = vmatprep.subr.mxu0 0.0
  %5277 = vmatpush1.msra.mxu0 0.0
  %5278 = vmatprep.subr.mxu0 0.0
  %5279 = vmatpush1.msra.mxu0 0.0
  %5280 = vmatprep.subr.mxu0 0.0
  %5281 = vmatpush1.msra.mxu0 0.0
  %5282 = vmatprep.subr.mxu0 0.0
  %5283 = vmatpush1.msra.mxu0 0.0
  %5284 = vmatprep.subr.mxu0 0.0
  %5285 = vmatpush1.msra.mxu0 0.0
  %5286 = vmatprep.subr.mxu0 0.0
  %5287 = vmatpush1.msra.mxu0 0.0
  %5288 = vmatprep.subr.mxu0 0.0
  %5289 = vmatpush1.msra.mxu0 0.0
  %5290 = vmatprep.subr.mxu0 0.0
  %5291 = vmatpush1.msra.mxu0 0.0
  %5292 = vmatprep.subr.mxu0 0.0
  %5293 = vmatpush1.msra.mxu0 0.0
  %5294 = vmatprep.subr.mxu0 0.0
  %5295 = vmatpush1.msra.mxu0 0.0
  %5296 = vmatprep.subr.mxu0 0.0
  %5297 = vmatpush1.msra.mxu0 0.0
  %5298 = vmatprep.subr.mxu0 0.0
  %5299 = vmatpush1.msra.mxu0 0.0
  %5300 = vmatprep.subr.mxu0 0.0
  %5301 = vmatpush1.msra.mxu0 0.0
  %5302 = vmatprep.mubr.f32.mxu0 0.0
  %5303 = vmatmul.mubr.f32.gmra.mrb[0].mxu0 %v523
  %v5304 = vpop.f32.mrb[0].mxu0
  %v5305 = vadd.f32 0.0, %v5304
  %v5306 = vpop.f32.mrb[0].mxu0
  %v5307 = vadd.f32 0.0, %v5306
  %5308 = vdwg.mxu0
  %5309 = vmatprep.subr.mxu0 %v1987
  %5310 = vmatpush1.msra.mxu0 %v1986
  %5311 = vmatprep.subr.mxu0 %v1989
  %5312 = vmatpush1.msra.mxu0 %v1988
  %5313 = vmatprep.subr.mxu0 %v1991
  %5314 = vmatpush1.msra.mxu0 %v1990
  %5315 = vmatprep.subr.mxu0 %v1993
  %5316 = vmatpush1.msra.mxu0 %v1992
  %5317 = vmatprep.subr.mxu0 %v1995
  %5318 = vmatpush1.msra.mxu0 %v1994
  %5319 = vmatprep.subr.mxu0 %v1997
  %5320 = vmatpush1.msra.mxu0 %v1996
  %5321 = vmatprep.subr.mxu0 %v1999
  %5322 = vmatpush1.msra.mxu0 %v1998
  %5323 = vmatprep.subr.mxu0 %v2001
  %5324 = vmatpush1.msra.mxu0 %v2000
  %5325 = vmatprep.subr.mxu0 %v2003
  %5326 = vmatpush1.msra.mxu0 %v2002
  %5327 = vmatprep.subr.mxu0 %v2005
  %5328 = vmatpush1.msra.mxu0 %v2004
  %5329 = vmatprep.subr.mxu0 %v2007
  %5330 = vmatpush1.msra.mxu0 %v2006
  %5331 = vmatprep.subr.mxu0 %v2009
  %5332 = vmatpush1.msra.mxu0 %v2008
  %5333 = vmatprep.subr.mxu0 %v2011
  %5334 = vmatpush1.msra.mxu0 %v2010
  %5335 = vmatprep.subr.mxu0 %v2013
  %5336 = vmatpush1.msra.mxu0 %v2012
  %5337 = vmatprep.subr.mxu0 %v2015
  %5338 = vmatpush1.msra.mxu0 %v2014
  %5339 = vmatprep.subr.mxu0 %v2017
  %5340 = vmatpush1.msra.mxu0 %v2016
  %5341 = vmatprep.subr.mxu0 0.0
  %5342 = vmatpush1.msra.mxu0 0.0
  %5343 = vmatprep.subr.mxu0 0.0
  %5344 = vmatpush1.msra.mxu0 0.0
  %5345 = vmatprep.subr.mxu0 0.0
  %5346 = vmatpush1.msra.mxu0 0.0
  %5347 = vmatprep.subr.mxu0 0.0
  %5348 = vmatpush1.msra.mxu0 0.0
  %5349 = vmatprep.subr.mxu0 0.0
  %5350 = vmatpush1.msra.mxu0 0.0
  %5351 = vmatprep.subr.mxu0 0.0
  %5352 = vmatpush1.msra.mxu0 0.0
  %5353 = vmatprep.subr.mxu0 0.0
  %5354 = vmatpush1.msra.mxu0 0.0
  %5355 = vmatprep.subr.mxu0 0.0
  %5356 = vmatpush1.msra.mxu0 0.0
  %5357 = vmatprep.subr.mxu0 0.0
  %5358 = vmatpush1.msra.mxu0 0.0
  %5359 = vmatprep.subr.mxu0 0.0
  %5360 = vmatpush1.msra.mxu0 0.0
  %5361 = vmatprep.subr.mxu0 0.0
  %5362 = vmatpush1.msra.mxu0 0.0
  %5363 = vmatprep.subr.mxu0 0.0
  %5364 = vmatpush1.msra.mxu0 0.0
  %5365 = vmatprep.subr.mxu0 0.0
  %5366 = vmatpush1.msra.mxu0 0.0
  %5367 = vmatprep.subr.mxu0 0.0
  %5368 = vmatpush1.msra.mxu0 0.0
  %5369 = vmatprep.subr.mxu0 0.0
  %5370 = vmatpush1.msra.mxu0 0.0
  %5371 = vmatprep.subr.mxu0 0.0
  %5372 = vmatpush1.msra.mxu0 0.0
  %5373 = vmatprep.mubr.f32.mxu0 0.0
  %5374 = vmatmul.mubr.f32.gmra.mrb[0].mxu0 %v528
  %v5375 = vpop.f32.mrb[0].mxu0
  %v5376 = vadd.f32 0.0, %v5375
  %v5377 = vpop.f32.mrb[0].mxu0
  %v5378 = vadd.f32 0.0, %v5377
  %5379 = vdwg.mxu0
  %5380 = vmatprep.subr.mxu0 %v2019
  %5381 = vmatpush1.msra.mxu0 %v2018
  %5382 = vmatprep.subr.mxu0 %v2021
  %5383 = vmatpush1.msra.mxu0 %v2020
  %5384 = vmatprep.subr.mxu0 %v2023
  %5385 = vmatpush1.msra.mxu0 %v2022
  %5386 = vmatprep.subr.mxu0 %v2025
  %5387 = vmatpush1.msra.mxu0 %v2024
  %5388 = vmatprep.subr.mxu0 %v2027
  %5389 = vmatpush1.msra.mxu0 %v2026
  %5390 = vmatprep.subr.mxu0 %v2029
  %5391 = vmatpush1.msra.mxu0 %v2028
  %5392 = vmatprep.subr.mxu0 %v2031
  %5393 = vmatpush1.msra.mxu0 %v2030
  %5394 = vmatprep.subr.mxu0 %v2033
  %5395 = vmatpush1.msra.mxu0 %v2032
  %5396 = vmatprep.subr.mxu0 %v2035
  %5397 = vmatpush1.msra.mxu0 %v2034
  %5398 = vmatprep.subr.mxu0 %v2037
  %5399 = vmatpush1.msra.mxu0 %v2036
  %5400 = vmatprep.subr.mxu0 %v2039
  %5401 = vmatpush1.msra.mxu0 %v2038
  %5402 = vmatprep.subr.mxu0 %v2041
  %5403 = vmatpush1.msra.mxu0 %v2040
  %5404 = vmatprep.subr.mxu0 %v2043
  %5405 = vmatpush1.msra.mxu0 %v2042
  %5406 = vmatprep.subr.mxu0 %v2045
  %5407 = vmatpush1.msra.mxu0 %v2044
  %5408 = vmatprep.subr.mxu0 %v2047
  %5409 = vmatpush1.msra.mxu0 %v2046
  %5410 = vmatprep.subr.mxu0 %v2049
  %5411 = vmatpush1.msra.mxu0 %v2048
  %5412 = vmatprep.subr.mxu0 0.0
  %5413 = vmatpush1.msra.mxu0 0.0
  %5414 = vmatprep.subr.mxu0 0.0
  %5415 = vmatpush1.msra.mxu0 0.0
  %5416 = vmatprep.subr.mxu0 0.0
  %5417 = vmatpush1.msra.mxu0 0.0
  %5418 = vmatprep.subr.mxu0 0.0
  %5419 = vmatpush1.msra.mxu0 0.0
  %5420 = vmatprep.subr.mxu0 0.0
  %5421 = vmatpush1.msra.mxu0 0.0
  %5422 = vmatprep.subr.mxu0 0.0
  %5423 = vmatpush1.msra.mxu0 0.0
  %5424 = vmatprep.subr.mxu0 0.0
  %5425 = vmatpush1.msra.mxu0 0.0
  %5426 = vmatprep.subr.mxu0 0.0
  %5427 = vmatpush1.msra.mxu0 0.0
  %5428 = vmatprep.subr.mxu0 0.0
  %5429 = vmatpush1.msra.mxu0 0.0
  %5430 = vmatprep.subr.mxu0 0.0
  %5431 = vmatpush1.msra.mxu0 0.0
  %5432 = vmatprep.subr.mxu0 0.0
  %5433 = vmatpush1.msra.mxu0 0.0
  %5434 = vmatprep.subr.mxu0 0.0
  %5435 = vmatpush1.msra.mxu0 0.0
  %5436 = vmatprep.subr.mxu0 0.0
  %5437 = vmatpush1.msra.mxu0 0.0
  %5438 = vmatprep.subr.mxu0 0.0
  %5439 = vmatpush1.msra.mxu0 0.0
  %5440 = vmatprep.subr.mxu0 0.0
  %5441 = vmatpush1.msra.mxu0 0.0
  %5442 = vmatprep.subr.mxu0 0.0
  %5443 = vmatpush1.msra.mxu0 0.0
  %5444 = vmatprep.mubr.f32.mxu0 0.0
  %5445 = vmatmul.mubr.f32.gmra.mrb[0].mxu0 %v533
  %v5446 = vpop.f32.mrb[0].mxu0
  %v5447 = vadd.f32 0.0, %v5446
  %v5448 = vpop.f32.mrb[0].mxu0
  %v5449 = vadd.f32 0.0, %v5448
  %5450 = vdwg.mxu0
  %5451 = vmatprep.subr.mxu0 %v2051
  %5452 = vmatpush1.msra.mxu0 %v2050
  %5453 = vmatprep.subr.mxu0 %v2053
  %5454 = vmatpush1.msra.mxu0 %v2052
  %5455 = vmatprep.subr.mxu0 %v2055
  %5456 = vmatpush1.msra.mxu0 %v2054
  %5457 = vmatprep.subr.mxu0 %v2057
  %5458 = vmatpush1.msra.mxu0 %v2056
  %5459 = vmatprep.subr.mxu0 %v2059
  %5460 = vmatpush1.msra.mxu0 %v2058
  %5461 = vmatprep.subr.mxu0 %v2061
  %5462 = vmatpush1.msra.mxu0 %v2060
  %5463 = vmatprep.subr.mxu0 %v2063
  %5464 = vmatpush1.msra.mxu0 %v2062
  %5465 = vmatprep.subr.mxu0 %v2065
  %5466 = vmatpush1.msra.mxu0 %v2064
  %5467 = vmatprep.subr.mxu0 %v2067
  %5468 = vmatpush1.msra.mxu0 %v2066
  %5469 = vmatprep.subr.mxu0 %v2069
  %5470 = vmatpush1.msra.mxu0 %v2068
  %5471 = vmatprep.subr.mxu0 %v2071
  %5472 = vmatpush1.msra.mxu0 %v2070
  %5473 = vmatprep.subr.mxu0 %v2073
  %5474 = vmatpush1.msra.mxu0 %v2072
  %5475 = vmatprep.subr.mxu0 %v2075
  %5476 = vmatpush1.msra.mxu0 %v2074
  %5477 = vmatprep.subr.mxu0 %v2077
  %5478 = vmatpush1.msra.mxu0 %v2076
  %5479 = vmatprep.subr.mxu0 %v2079
  %5480 = vmatpush1.msra.mxu0 %v2078
  %5481 = vmatprep.subr.mxu0 %v2081
  %5482 = vmatpush1.msra.mxu0 %v2080
  %5483 = vmatprep.subr.mxu0 0.0
  %5484 = vmatpush1.msra.mxu0 0.0
  %5485 = vmatprep.subr.mxu0 0.0
  %5486 = vmatpush1.msra.mxu0 0.0
  %5487 = vmatprep.subr.mxu0 0.0
  %5488 = vmatpush1.msra.mxu0 0.0
  %5489 = vmatprep.subr.mxu0 0.0
  %5490 = vmatpush1.msra.mxu0 0.0
  %5491 = vmatprep.subr.mxu0 0.0
  %5492 = vmatpush1.msra.mxu0 0.0
  %5493 = vmatprep.subr.mxu0 0.0
  %5494 = vmatpush1.msra.mxu0 0.0
  %5495 = vmatprep.subr.mxu0 0.0
  %5496 = vmatpush1.msra.mxu0 0.0
  %5497 = vmatprep.subr.mxu0 0.0
  %5498 = vmatpush1.msra.mxu0 0.0
  %5499 = vmatprep.subr.mxu0 0.0
  %5500 = vmatpush1.msra.mxu0 0.0
  %5501 = vmatprep.subr.mxu0 0.0
  %5502 = vmatpush1.msra.mxu0 0.0
  %5503 = vmatprep.subr.mxu0 0.0
  %5504 = vmatpush1.msra.mxu0 0.0
  %5505 = vmatprep.subr.mxu0 0.0
  %5506 = vmatpush1.msra.mxu0 0.0
  %5507 = vmatprep.subr.mxu0 0.0
  %5508 = vmatpush1.msra.mxu0 0.0
  %5509 = vmatprep.subr.mxu0 0.0
  %5510 = vmatpush1.msra.mxu0 0.0
  %5511 = vmatprep.subr.mxu0 0.0
  %5512 = vmatpush1.msra.mxu0 0.0
  %5513 = vmatprep.subr.mxu0 0.0
  %5514 = vmatpush1.msra.mxu0 0.0
  %5515 = vmatprep.mubr.f32.mxu0 0.0
  %5516 = vmatmul.mubr.f32.gmra.mrb[0].mxu0 %v538
  %v5517 = vpop.f32.mrb[0].mxu0
  %v5518 = vadd.f32 0.0, %v5517
  %v5519 = vpop.f32.mrb[0].mxu0
  %v5520 = vadd.f32 0.0, %v5519
  %5521 = vdwg.mxu0
  %5522 = vmatprep.subr.mxu0 %v2083
  %5523 = vmatpush1.msra.mxu0 %v2082
  %5524 = vmatprep.subr.mxu0 %v2085
  %5525 = vmatpush1.msra.mxu0 %v2084
  %5526 = vmatprep.subr.mxu0 %v2087
  %5527 = vmatpush1.msra.mxu0 %v2086
  %5528 = vmatprep.subr.mxu0 %v2089
  %5529 = vmatpush1.msra.mxu0 %v2088
  %5530 = vmatprep.subr.mxu0 %v2091
  %5531 = vmatpush1.msra.mxu0 %v2090
  %5532 = vmatprep.subr.mxu0 %v2093
  %5533 = vmatpush1.msra.mxu0 %v2092
  %5534 = vmatprep.subr.mxu0 %v2095
  %5535 = vmatpush1.msra.mxu0 %v2094
  %5536 = vmatprep.subr.mxu0 %v2097
  %5537 = vmatpush1.msra.mxu0 %v2096
  %5538 = vmatprep.subr.mxu0 %v2099
  %5539 = vmatpush1.msra.mxu0 %v2098
  %5540 = vmatprep.subr.mxu0 %v2101
  %5541 = vmatpush1.msra.mxu0 %v2100
  %5542 = vmatprep.subr.mxu0 %v2103
  %5543 = vmatpush1.msra.mxu0 %v2102
  %5544 = vmatprep.subr.mxu0 %v2105
  %5545 = vmatpush1.msra.mxu0 %v2104
  %5546 = vmatprep.subr.mxu0 %v2107
  %5547 = vmatpush1.msra.mxu0 %v2106
  %5548 = vmatprep.subr.mxu0 %v2109
  %5549 = vmatpush1.msra.mxu0 %v2108
  %5550 = vmatprep.subr.mxu0 %v2111
  %5551 = vmatpush1.msra.mxu0 %v2110
  %5552 = vmatprep.subr.mxu0 %v2113
  %5553 = vmatpush1.msra.mxu0 %v2112
  %5554 = vmatprep.subr.mxu0 0.0
  %5555 = vmatpush1.msra.mxu0 0.0
  %5556 = vmatprep.subr.mxu0 0.0
  %5557 = vmatpush1.msra.mxu0 0.0
  %5558 = vmatprep.subr.mxu0 0.0
  %5559 = vmatpush1.msra.mxu0 0.0
  %5560 = vmatprep.subr.mxu0 0.0
  %5561 = vmatpush1.msra.mxu0 0.0
  %5562 = vmatprep.subr.mxu0 0.0
  %5563 = vmatpush1.msra.mxu0 0.0
  %5564 = vmatprep.subr.mxu0 0.0
  %5565 = vmatpush1.msra.mxu0 0.0
  %5566 = vmatprep.subr.mxu0 0.0
  %5567 = vmatpush1.msra.mxu0 0.0
  %5568 = vmatprep.subr.mxu0 0.0
  %5569 = vmatpush1.msra.mxu0 0.0
  %5570 = vmatprep.subr.mxu0 0.0
  %5571 = vmatpush1.msra.mxu0 0.0
  %5572 = vmatprep.subr.mxu0 0.0
  %5573 = vmatpush1.msra.mxu0 0.0
  %5574 = vmatprep.subr.mxu0 0.0
  %5575 = vmatpush1.msra.mxu0 0.0
  %5576 = vmatprep.subr.mxu0 0.0
  %5577 = vmatpush1.msra.mxu0 0.0
  %5578 = vmatprep.subr.mxu0 0.0
  %5579 = vmatpush1.msra.mxu0 0.0
  %5580 = vmatprep.subr.mxu0 0.0
  %5581 = vmatpush1.msra.mxu0 0.0
  %5582 = vmatprep.subr.mxu0 0.0
  %5583 = vmatpush1.msra.mxu0 0.0
  %5584 = vmatprep.subr.mxu0 0.0
  %5585 = vmatpush1.msra.mxu0 0.0
  %5586 = vmatprep.mubr.f32.mxu0 0.0
  %5587 = vmatmul.mubr.f32.gmra.mrb[0].mxu0 %v543
  %v5588 = vpop.f32.mrb[0].mxu0
  %v5589 = vadd.f32 0.0, %v5588
  %v5590 = vpop.f32.mrb[0].mxu0
  %v5591 = vadd.f32 0.0, %v5590
  %5592 = vdwg.mxu0
  %v5593 = vadd.f32 %v2181, %v2252
  %v5594 = vadd.f32 %v5593, %v2323
  %v5595 = vadd.f32 %v5594, %v2394
  %v5596 = vadd.f32 %v5595, %v2465
  %v5597 = vadd.f32 %v5596, %v2536
  %v5598 = vadd.f32 %v5597, %v2607
  %v5599 = vadd.f32 %v5598, %v2678
  %v5600 = vadd.f32 %v5599, %v2749
  %v5601 = vadd.f32 %v5600, %v2820
  %v5602 = vadd.f32 %v5601, %v2891
  %v5603 = vadd.f32 %v5602, %v2962
  %v5604 = vadd.f32 %v5603, %v3033
  %v5605 = vadd.f32 %v5604, %v3104
  %v5606 = vadd.f32 %v5605, %v3175
  %v5607 = vadd.f32 %v5606, %v3246
  %v5608 = vadd.f32 %v5607, %v3317
  %v5609 = vadd.f32 %v5608, %v3388
  %v5610 = vadd.f32 %v5609, %v3459
  %v5611 = vadd.f32 %v5610, %v3530
  %v5612 = vadd.f32 %v5611, %v3601
  %v5613 = vadd.f32 %v5612, %v3672
  %v5614 = vadd.f32 %v5613, %v3743
  %v5615 = vadd.f32 %v5614, %v3814
  %v5616 = vadd.f32 %v5615, %v3885
  %v5617 = vadd.f32 %v5616, %v3956
  %v5618 = vadd.f32 %v5617, %v4027
  %v5619 = vadd.f32 %v5618, %v4098
  %v5620 = vadd.f32 %v5619, %v4169
  %v5621 = vadd.f32 %v5620, %v4240
  %v5622 = vadd.f32 %v5621, %v4311
  %v5623 = vadd.f32 %v5622, %v4382
  %v5624 = vadd.f32 %v5623, %v4453
  %v5625 = vadd.f32 %v5624, %v4524
  %v5626 = vadd.f32 %v5625, %v4595
  %v5627 = vadd.f32 %v5626, %v4666
  %v5628 = vadd.f32 %v5627, %v4737
  %v5629 = vadd.f32 %v5628, %v4808
  %v5630 = vadd.f32 %v5629, %v4879
  %v5631 = vadd.f32 %v5630, %v4950
  %v5632 = vadd.f32 %v5631, %v5021
  %v5633 = vadd.f32 %v5632, %v5092
  %v5634 = vadd.f32 %v5633, %v5163
  %v5635 = vadd.f32 %v5634, %v5234
  %v5636 = vadd.f32 %v5635, %v5305
  %v5637 = vadd.f32 %v5636, %v5376
  %v5638 = vadd.f32 %v5637, %v5447
  %v5639 = vadd.f32 %v5638, %v5518
  %v5640 = vadd.f32 %v5639, %v5589
  %v5641 = vadd.f32 %v2183, %v2254
  %v5642 = vadd.f32 %v5641, %v2325
  %v5643 = vadd.f32 %v5642, %v2396
  %v5644 = vadd.f32 %v5643, %v2467
  %v5645 = vadd.f32 %v5644, %v2538
  %v5646 = vadd.f32 %v5645, %v2609
  %v5647 = vadd.f32 %v5646, %v2680
  %v5648 = vadd.f32 %v5647, %v2751
  %v5649 = vadd.f32 %v5648, %v2822
  %v5650 = vadd.f32 %v5649, %v2893
  %v5651 = vadd.f32 %v5650, %v2964
  %v5652 = vadd.f32 %v5651, %v3035
  %v5653 = vadd.f32 %v5652, %v3106
  %v5654 = vadd.f32 %v5653, %v3177
  %v5655 = vadd.f32 %v5654, %v3248
  %v5656 = vadd.f32 %v5655, %v3319
  %v5657 = vadd.f32 %v5656, %v3390
  %v5658 = vadd.f32 %v5657, %v3461
  %v5659 = vadd.f32 %v5658, %v3532
  %v5660 = vadd.f32 %v5659, %v3603
  %v5661 = vadd.f32 %v5660, %v3674
  %v5662 = vadd.f32 %v5661, %v3745
  %v5663 = vadd.f32 %v5662, %v3816
  %v5664 = vadd.f32 %v5663, %v3887
  %v5665 = vadd.f32 %v5664, %v3958
  %v5666 = vadd.f32 %v5665, %v4029
  %v5667 = vadd.f32 %v5666, %v4100
  %v5668 = vadd.f32 %v5667, %v4171
  %v5669 = vadd.f32 %v5668, %v4242
  %v5670 = vadd.f32 %v5669, %v4313
  %v5671 = vadd.f32 %v5670, %v4384
  %v5672 = vadd.f32 %v5671, %v4455
  %v5673 = vadd.f32 %v5672, %v4526
  %v5674 = vadd.f32 %v5673, %v4597
  %v5675 = vadd.f32 %v5674, %v4668
  %v5676 = vadd.f32 %v5675, %v4739
  %v5677 = vadd.f32 %v5676, %v4810
  %v5678 = vadd.f32 %v5677, %v4881
  %v5679 = vadd.f32 %v5678, %v4952
  %v5680 = vadd.f32 %v5679, %v5023
  %v5681 = vadd.f32 %v5680, %v5094
  %v5682 = vadd.f32 %v5681, %v5165
  %v5683 = vadd.f32 %v5682, %v5236
  %v5684 = vadd.f32 %v5683, %v5307
  %v5685 = vadd.f32 %v5684, %v5378
  %v5686 = vadd.f32 %v5685, %v5449
  %v5687 = vadd.f32 %v5686, %v5520
  %v5688 = vadd.f32 %v5687, %v5591
  %v5689 = vld [vmem:[%s3] sm:$0x3]
  %v5691 = vlaneseq
  %v5692 = vshrl.u32 %v5691, 7
  %v5693 = vsub.s32 0, %v5692
  %v5694 = vrot.slane %v5689, %v5693
  %v5695 = vlaneseq
  %v5696 = vshrl.u32 %v5695, 7
  %v5697 = vsub.s32 1, %v5696
  %v5698 = vrot.slane %v5689, %v5697
  %v5701 = vadd.f32 %v5640, %v5694
  %v5702 = vadd.f32 %v5688, %v5698
  %v5703 = vmax.f32 %v5701, 0.0
  %v5704 = vmax.f32 %v5702, 0.0
  %v5705 = vld [vmem:[%s4] sm:$0xff]
  %v5706 = vld [vmem:[%s4 + $0x8] sm:$0xff]
  %v5707 = vld [vmem:[%s4 + $0x10] sm:$0xff]
  %v5708 = vld [vmem:[%s4 + $0x18] sm:$0xff]
  %v5709 = vld [vmem:[%s4 + $0x20] sm:$0xff]
  %v5710 = vld [vmem:[%s4 + $0x28] sm:$0xff]
  %v5711 = vld [vmem:[%s4 + $0x30] sm:$0xff]
  %v5712 = vld [vmem:[%s4 + $0x38] sm:$0xff]
  %v5713 = vld [vmem:[%s4 + $0x40] sm:$0xff]
  %v5714 = vld [vmem:[%s4 + $0x48] sm:$0xff]
  %v5715 = vld [vmem:[%s4 + $0x50] sm:$0xff]
  %v5716 = vld [vmem:[%s4 + $0x58] sm:$0xff]
  %v5717 = vld [vmem:[%s4 + $0x60] sm:$0xff]
  %v5718 = vld [vmem:[%s4 + $0x68] sm:$0xff]
  %v5719 = vld [vmem:[%s4 + $0x70] sm:$0xff]
  %v5720 = vld [vmem:[%s4 + $0x78] sm:$0xff]
  %v5721 = vld [vmem:[%s4 + $0x80] sm:$0xff]
  %v5722 = vld [vmem:[%s4 + $0x88] sm:$0xff]
  %v5723 = vld [vmem:[%s4 + $0x90] sm:$0xff]
  %v5724 = vld [vmem:[%s4 + $0x98] sm:$0xff]
  %v5725 = vld [vmem:[%s4 + $0xa0] sm:$0xff]
  %v5726 = vld [vmem:[%s4 + $0xa8] sm:$0xff]
  %v5727 = vld [vmem:[%s4 + $0xb0] sm:$0xff]
  %v5728 = vld [vmem:[%s4 + $0xb8] sm:$0xff]
  %v5729 = vld [vmem:[%s4 + $0xc0] sm:$0xff]
  %v5730 = vld [vmem:[%s4 + $0xc8] sm:$0xff]
  %v5731 = vld [vmem:[%s4 + $0xd0] sm:$0xff]
  %v5732 = vld [vmem:[%s4 + $0xd8] sm:$0xff]
  %v5733 = vld [vmem:[%s4 + $0xe0] sm:$0xff]
  %v5734 = vld [vmem:[%s4 + $0xe8] sm:$0xff]
  %v5735 = vld [vmem:[%s4 + $0xf0] sm:$0xff]
  %v5736 = vld [vmem:[%s4 + $0xf8] sm:$0xff]
  %v5737 = vld [vmem:[%s5] sm:$0x1]
  %v5739 = vlaneseq
  %v5740 = vshrl.u32 %v5739, 7
  %v5741 = vsub.s32 0, %v5740
  %v5742 = vrot.slane %v5737, %v5741
  %5744 = vmatprep.subr.mxu0 0.0
  %5745 = vmatpush1.msra.mxu0 %v5705
  %5746 = vmatprep.subr.mxu0 0.0
  %5747 = vmatpush1.msra.mxu0 %v5706
  %5748 = vmatprep.subr.mxu0 0.0
  %5749 = vmatpush1.msra.mxu0 %v5707
  %5750 = vmatprep.subr.mxu0 0.0
  %5751 = vmatpush1.msra.mxu0 %v5708
  %5752 = vmatprep.subr.mxu0 0.0
  %5753 = vmatpush1.msra.mxu0 %v5709
  %5754 = vmatprep.subr.mxu0 0.0
  %5755 = vmatpush1.msra.mxu0 %v5710
  %5756 = vmatprep.subr.mxu0 0.0
  %5757 = vmatpush1.msra.mxu0 %v5711
  %5758 = vmatprep.subr.mxu0 0.0
  %5759 = vmatpush1.msra.mxu0 %v5712
  %5760 = vmatprep.subr.mxu0 0.0
  %5761 = vmatpush1.msra.mxu0 %v5713
  %5762 = vmatprep.subr.mxu0 0.0
  %5763 = vmatpush1.msra.mxu0 %v5714
  %5764 = vmatprep.subr.mxu0 0.0
  %5765 = vmatpush1.msra.mxu0 %v5715
  %5766 = vmatprep.subr.mxu0 0.0
  %5767 = vmatpush1.msra.mxu0 %v5716
  %5768 = vmatprep.subr.mxu0 0.0
  %5769 = vmatpush1.msra.mxu0 %v5717
  %5770 = vmatprep.subr.mxu0 0.0
  %5771 = vmatpush1.msra.mxu0 %v5718
  %5772 = vmatprep.subr.mxu0 0.0
  %5773 = vmatpush1.msra.mxu0 %v5719
  %5774 = vmatprep.subr.mxu0 0.0
  %5775 = vmatpush1.msra.mxu0 %v5720
  %5776 = vmatprep.subr.mxu0 0.0
  %5777 = vmatpush1.msra.mxu0 %v5721
  %5778 = vmatprep.subr.mxu0 0.0
  %5779 = vmatpush1.msra.mxu0 %v5722
  %5780 = vmatprep.subr.mxu0 0.0
  %5781 = vmatpush1.msra.mxu0 %v5723
  %5782 = vmatprep.subr.mxu0 0.0
  %5783 = vmatpush1.msra.mxu0 %v5724
  %5784 = vmatprep.subr.mxu0 0.0
  %5785 = vmatpush1.msra.mxu0 %v5725
  %5786 = vmatprep.subr.mxu0 0.0
  %5787 = vmatpush1.msra.mxu0 %v5726
  %5788 = vmatprep.subr.mxu0 0.0
  %5789 = vmatpush1.msra.mxu0 %v5727
  %5790 = vmatprep.subr.mxu0 0.0
  %5791 = vmatpush1.msra.mxu0 %v5728
  %5792 = vmatprep.subr.mxu0 0.0
  %5793 = vmatpush1.msra.mxu0 %v5729
  %5794 = vmatprep.subr.mxu0 0.0
  %5795 = vmatpush1.msra.mxu0 %v5730
  %5796 = vmatprep.subr.mxu0 0.0
  %5797 = vmatpush1.msra.mxu0 %v5731
  %5798 = vmatprep.subr.mxu0 0.0
  %5799 = vmatpush1.msra.mxu0 %v5732
  %5800 = vmatprep.subr.mxu0 0.0
  %5801 = vmatpush1.msra.mxu0 %v5733
  %5802 = vmatprep.subr.mxu0 0.0
  %5803 = vmatpush1.msra.mxu0 %v5734
  %5804 = vmatprep.subr.mxu0 0.0
  %5805 = vmatpush1.msra.mxu0 %v5735
  %5806 = vmatprep.subr.mxu0 0.0
  %5807 = vmatpush1.msra.mxu0 %v5736
  %5808 = vmatprep.mubr.f32.mxu0 %v5704
  %5809 = vmatmul.mubr.f32.gmra.mrb[0].mxu0 %v5703
  %v5810 = vpop.f32.mrb[0].mxu0
  %v5811 = vadd.f32 %v5742, %v5810
  %v5812 = vpop.f32.mrb[0].mxu0
  %5813 = vdwg.mxu0
  %5814 = vst [vmem:[%s6] sm:$0xff] %v5811
  // Predicated region
  $region26: #{key_head_detector_forward.3} parent=0 // pred_check
    _
  $region27: #{key_head_detector_forward.3} parent=0 // pred_check_branch
    %5816 = sbr.rel (0) target = $region29
  $region28: #{key_head_detector_forward.3} parent=0 // pred_region
    _
  $region29: #{key_head_detector_forward.3} parent=0 // pred_fallthru
    _
  // Predicated region
  $region30: #{key_head_detector_forward.3} parent=0 // pred_check
    _
  $region31: #{key_head_detector_forward.3} parent=0 // pred_check_branch
    %5818 = sbr.rel (0) target = $region33
  $region32: #{key_head_detector_forward.3} parent=0 // pred_region
    _
  $region33: #{key_head_detector_forward.3} parent=0 // pred_fallthru
    _

</llo_original>
